<compile_context>
chip_gen: v6e
topology: v6e:2x2x1
jax: 0.10.0
libtpu: 0.0.40
codegen_flags: <defaults>
</compile_context>

<pallas_src>
import functools

import jax
import jax.numpy as jnp
from jax.experimental import pallas as pl
from jax.experimental.pallas import tpu as pltpu


def _round_up(x, m):
    return ((x + m - 1) // m) * m


# ---------------------------------------------------------------------------
# Fused matmul + bias + ReLU kernel for the conv layers (tiled over M).
# ---------------------------------------------------------------------------
def _matmul_bias_relu_kernel(x_ref, w_ref, b_ref, o_ref):
    acc = jnp.dot(x_ref[...], w_ref[...], preferred_element_type=jnp.float32)
    acc = jnp.maximum(acc + b_ref[...], 0.0)      # (1, N) bias broadcasts over M
    o_ref[...] = acc.astype(o_ref.dtype)


def matmul_bias_relu(x, wp, bp, n_out, *, out_dtype=jnp.bfloat16):
    """x: (M, K); wp: (Kp, Np) bf16 pre-padded; bp: (1, Np) f32; n_out static.
    Returns relu(x @ w + b)[:, :n_out] in out_dtype."""
    M, K = x.shape
    Kp, Np = wp.shape

    # Adaptive M tiling: the big layer-1 matmul (M ~ 1922) uses 1024-row tiles
    # (2 grid steps, "parallel" so megacore / v7x can shard them); small M
    # uses a single 8-row-aligned tile.
    if M >= 512:
        bm = 1024
    else:
        bm = _round_up(max(M, 1), 8)
    Mp = _round_up(M, bm)

    xp = x.astype(jnp.bfloat16)
    if Mp != M or Kp != K:
        xp = jnp.pad(xp, ((0, Mp - M), (0, Kp - K)))

    out = pl.pallas_call(
        _matmul_bias_relu_kernel,
        out_shape=jax.ShapeDtypeStruct((Mp, Np), out_dtype),
        grid_spec=pltpu.PrefetchScalarGridSpec(
            num_scalar_prefetch=0,
            grid=(Mp // bm,),
            in_specs=[
                pl.BlockSpec((bm, Kp), lambda i: (i, 0)),   # patch-row tile
                pl.BlockSpec((Kp, Np), lambda i: (0, 0)),   # full weight, resident
                pl.BlockSpec((1, Np), lambda i: (0, 0)),    # bias row
            ],
            out_specs=pl.BlockSpec((bm, Np), lambda i: (i, 0)),
        ),
        compiler_params=pltpu.CompilerParams(
            dimension_semantics=("parallel",),
            vmem_limit_bytes=16 * 1024 * 1024,
        ),
    )(xp, wp, bp)
    return out[:M, :n_out]


# ---------------------------------------------------------------------------
# Fused head: relu(layer4) + tanh(layer5) + tanh(layer6) + tanh(layer7)
# in a single pallas_call (all weights VMEM-resident; one launch).
# ---------------------------------------------------------------------------
def _fused_head_kernel(x_ref, w4_ref, b4_ref, w5_ref, b5_ref,
                       w6_ref, b6_ref, w7_ref, b7_ref, o_ref):
    h = jnp.dot(x_ref[...], w4_ref[...], preferred_element_type=jnp.float32)
    h = jnp.maximum(h + b4_ref[...], 0.0)
    h = jnp.dot(h.astype(jnp.bfloat16), w5_ref[...],
                preferred_element_type=jnp.float32)
    h = jnp.tanh(h + b5_ref[...])
    h = jnp.dot(h.astype(jnp.bfloat16), w6_ref[...],
                preferred_element_type=jnp.float32)
    h = jnp.tanh(h + b6_ref[...])
    h = jnp.dot(h.astype(jnp.bfloat16), w7_ref[...],
                preferred_element_type=jnp.float32)
    h = jnp.tanh(h + b7_ref[...])
    o_ref[...] = h


def fused_conv4_mlp(x, prepped, n_out):
    """x: (B, 4096) = flattened NHWC layer-3 activation (== the layer-4 im2col
    patch matrix, since the 8x8 kernel covers the whole 8x8 map).  Padded
    weight columns stay exactly zero through relu/tanh, so chaining padded
    layers is exact.  No reduction crosses the padded M rows."""
    w4p, b4p = prepped["l4"]
    w5p, b5p = prepped["l5"]
    w6p, b6p = prepped["l6"]
    w7p, b7p = prepped["l7"]
    M, K = x.shape
    Mp = _round_up(M, 8)
    Kp = w4p.shape[0]
    Np = w7p.shape[1]
    xp = jnp.pad(x.astype(jnp.bfloat16), ((0, Mp - M), (0, Kp - K)))

    def full_spec(a):
        return pl.BlockSpec(a.shape, lambda i: (0, 0))

    # TODO(synk): the 4 MiB layer-4 weight DMA could additionally be hidden
    # behind layers 1-3 with a cross-pallas_call DMA future (P10); left out to
    # keep this kernel simple and robust.
    out = pl.pallas_call(
        _fused_head_kernel,
        out_shape=jax.ShapeDtypeStruct((Mp, Np), jnp.float32),
        grid_spec=pltpu.PrefetchScalarGridSpec(
            num_scalar_prefetch=0,
            grid=(1,),
            in_specs=[
                pl.BlockSpec((Mp, Kp), lambda i: (0, 0)),
                full_spec(w4p), full_spec(b4p),
                full_spec(w5p), full_spec(b5p),
                full_spec(w6p), full_spec(b6p),
                full_spec(w7p), full_spec(b7p),
            ],
            out_specs=pl.BlockSpec((Mp, Np), lambda i: (0, 0)),
        ),
        compiler_params=pltpu.CompilerParams(
            dimension_semantics=("arbitrary",),
            vmem_limit_bytes=24 * 1024 * 1024,
        ),
    )(xp, w4p, b4p, w5p, b5p, w6p, b6p, w7p, b7p)
    return out[:M, :n_out]


# ---------------------------------------------------------------------------
# Plain-JAX glue: NHWC im2col with (KH, KW, C) feature order.
# ---------------------------------------------------------------------------
def im2col_nhwc(x, kh, kw, stride, padding):
    """x: (B, H, W, C) -> patches (B*OH*OW, KH*KW*C), plus (OH, OW)."""
    if padding:
        x = jnp.pad(x, ((0, 0), (padding, padding), (padding, padding), (0, 0)))
    B, H, W, C = x.shape
    oh = (H - kh) // stride + 1
    ow = (W - kw) // stride + 1
    cols = [x[:, i:i + stride * oh:stride, j:j + stride * ow:stride, :]
            for i in range(kh) for j in range(kw)]
    patches = jnp.stack(cols, axis=3)             # (B, OH, OW, KH*KW, C)
    return patches.reshape(B * oh * ow, kh * kw * C), oh, ow


# ---------------------------------------------------------------------------
# Parameters: torch-style init, then one-time prep (reorder/pad/bf16-cast).
# ---------------------------------------------------------------------------
def init_params(key):
    """Deterministic init mimicking torch defaults: U(-1/sqrt(fan_in), ...)."""
    def conv_init(k, oc, ic, kh, kw):
        k1, k2 = jax.random.split(k)
        bound = 1.0 / jnp.sqrt(ic * kh * kw)
        return (jax.random.uniform(k1, (oc, ic, kh, kw), jnp.float32, -bound, bound),
                jax.random.uniform(k2, (oc,), jnp.float32, -bound, bound))

    def linear_init(k, out_f, in_f):
        k1, k2 = jax.random.split(k)
        bound = 1.0 / jnp.sqrt(in_f)
        return (jax.random.uniform(k1, (out_f, in_f), jnp.float32, -bound, bound),
                jax.random.uniform(k2, (out_f,), jnp.float32, -bound, bound))

    keys = jax.random.split(key, 8)
    return {
        "l1": conv_init(keys[0], 32, 2, 8, 8),
        "l2": conv_init(keys[1], 64, 32, 4, 4),
        "l3": conv_init(keys[2], 64, 64, 3, 3),
        "l4": conv_init(keys[3], 512, 64, 8, 8),
        "l5": linear_init(keys[4], 128, 512),
        "l6": linear_init(keys[5], 32, 128),
        "l7": linear_init(keys[6], 16, 32),
        # layer8 (16->3) and BCELoss exist in __init__ but are unused in forward().
        "l8": linear_init(keys[7], 3, 16),
    }


def prepare_params(params):
    """One-time weight prep (outside the per-forward hot path).  Only arrays
    end up in the returned pytree so it is safe to pass through jax.jit."""
    def prep(wmat, b):
        K, N = wmat.shape
        Kp, Np = _round_up(K, 128), _round_up(N, 128)
        wp = jnp.pad(wmat.astype(jnp.float32),
                     ((0, Kp - K), (0, Np - N))).astype(jnp.bfloat16)
        bp = jnp.pad(b.astype(jnp.float32), (0, Np - N)).reshape(1, Np)
        return wp, bp

    prepped = {}
    # Layer 1: reorder for the space-to-depth im2col. Patch features arrive in
    # (i, j, dh, dw, c) order where kh = 4*i + dh and kw = 4*j + dw.
    w1, b1 = params["l1"]
    oc, ic, _, _ = w1.shape                                  # (32, 2, 8, 8)
    w1m = (w1.reshape(oc, ic, 2, 4, 2, 4)                    # (oc, c, i, dh, j, dw)
             .transpose(2, 4, 3, 5, 1, 0)                    # (i, j, dh, dw, c, oc)
             .reshape(2 * 2 * 4 * 4 * ic, oc))               # (128, 32)
    prepped["l1"] = prep(w1m, b1)
    # Layers 2-4: standard (KH, KW, IC) -> OC ordering (matches im2col_nhwc).
    for name in ("l2", "l3", "l4"):
        w, b = params[name]
        oc, ic, kh, kw = w.shape
        wm = w.transpose(2, 3, 1, 0).reshape(kh * kw * ic, oc)
        prepped[name] = prep(wm, b)
    for name in ("l5", "l6", "l7"):
        w, b = params[name]
        prepped[name] = prep(w.T, b)
    # layer8 / BCELoss are not part of forward(); nothing to prepare.
    return prepped


# ---------------------------------------------------------------------------
# Forward pass (matches torch forward(): conv/relu x4, flatten, linear/tanh x3)
# ---------------------------------------------------------------------------
def red_or_green_forward(prepped, x):
    B = x.shape[0]
    # Layer 1: fold the NCHW->NHWC transpose and a stride-4 space-to-depth
    # into ONE reshape+transpose, turning the 8x8/stride-4 conv into a
    # 2x2/stride-1 conv over (B, 32, 32, 32) -> only 4 im2col slices.
    xb = x.astype(jnp.bfloat16)
    xs2d = (xb.reshape(B, 2, 32, 4, 32, 4)                   # (b, c, bh, dh, bw, dw)
              .transpose(0, 2, 4, 3, 5, 1)                   # (b, bh, bw, dh, dw, c)
              .reshape(B, 32, 32, 32))
    p1, oh1, ow1 = im2col_nhwc(xs2d, 2, 2, 1, 0)             # (B*31*31, 128)
    h1 = matmul_bias_relu(p1, *prepped["l1"], 32).reshape(B, oh1, ow1, 32)

    # Layer 2: 4x4, stride 3, pad 1 -> (B, 10, 10, 64)
    p2, oh2, ow2 = im2col_nhwc(h1, 4, 4, 3, 1)
    h2 = matmul_bias_relu(p2, *prepped["l2"], 64).reshape(B, oh2, ow2, 64)

    # Layer 3: 3x3, stride 1 -> (B, 8, 8, 64)
    p3, oh3, ow3 = im2col_nhwc(h2, 3, 3, 1, 0)
    h3 = matmul_bias_relu(p3, *prepped["l3"], 64).reshape(B, oh3, ow3, 64)

    # Layer 4 (8x8 kernel over the full 8x8 map -> its im2col patch matrix is
    # exactly the flattened NHWC activation) fused with the Linear+tanh head.
    return fused_conv4_mlp(h3.reshape(B, -1), prepped, n_out=16)   # (B, 16)


if __name__ == "__main__":
    key = jax.random.PRNGKey(0)
    pkey, xkey = jax.random.split(key)
    params = init_params(pkey)
    prepped = prepare_params(params)
    # Spatial size is fixed by the architecture: flatten to 512 features needs
    # a 1x1 output after layer 4, i.e. 128x128 -> 31 -> 10 -> 8 -> 1.
    x = jax.random.normal(xkey, (2, 2, 128, 128), jnp.float32)
    fwd = jax.jit(red_or_green_forward)
    out = jax.block_until_ready(fwd(prepped, x))
    assert out.shape == (2, 16), out.shape
    assert bool(jnp.all(jnp.isfinite(out)))
    assert bool(jnp.all(jnp.abs(out) <= 1.0))   # tanh output range
    print("KERNEL_OK")
</pallas_src>

<mosaic_0001>
module attributes {stable_mosaic.version = 11 : i64} {
  func.func @_matmul_bias_relu_kernel(%arg0: i32, %arg1: memref<1024x128xbf16, #tpu.memory_space<vmem>>, %arg2: memref<128x128xbf16, #tpu.memory_space<vmem>>, %arg3: memref<1x128xf32, #tpu.memory_space<vmem>>, %arg4: memref<1024x128xbf16, #tpu.memory_space<vmem>>) attributes {dimension_semantics = [#tpu.dimension_semantics<parallel>], iteration_bounds = array<i64: 2>, scalar_prefetch = 0 : i64, scratch_operands = 0 : i64, tpu.core_type = #tpu.core_type<tc>, window_params = [{transform_indices = @transform_0, window_bounds = array<i64: 1024, 128>}, {pipeline_mode = #tpu.pipeline_mode<synchronous>, transform_indices = @transform_1, window_bounds = array<i64: 128, 128>}, {pipeline_mode = #tpu.pipeline_mode<synchronous>, transform_indices = @transform_2, window_bounds = array<i64: 1, 128>}, {transform_indices = @transform_3, window_bounds = array<i64: 1024, 128>}]} {
    %c0 = arith.constant 0 : index
    %c0_0 = arith.constant 0 : index
    %0 = vector.load %arg1[%c0, %c0_0] : memref<1024x128xbf16, #tpu.memory_space<vmem>>, vector<1024x128xbf16>
    %c0_1 = arith.constant 0 : index
    %c0_2 = arith.constant 0 : index
    %1 = vector.load %arg2[%c0_1, %c0_2] : memref<128x128xbf16, #tpu.memory_space<vmem>>, vector<128x128xbf16>
    %cst = arith.constant dense<0.000000e+00> : vector<1024x128xf32>
    %2 = tpu.matmul %0, %1, %cst {dimension_numbers = #tpu.dot_dimension_numbers<[1], [0], [0], [1], [0, 0, 1, 1], [], []>} : vector<1024x128xbf16>, vector<128x128xbf16>, vector<1024x128xf32> -> vector<1024x128xf32>
    %c0_3 = arith.constant 0 : index
    %c0_4 = arith.constant 0 : index
    %3 = vector.load %arg3[%c0_3, %c0_4] : memref<1x128xf32, #tpu.memory_space<vmem>>, vector<1x128xf32>
    %4 = vector.broadcast %3 : vector<1x128xf32> to vector<1024x128xf32>
    %5 = arith.addf %2, %4 : vector<1024x128xf32>
    %cst_5 = arith.constant 0.000000e+00 : f32
    %6 = vector.broadcast %cst_5 : f32 to vector<1024x128xf32>
    %7 = arith.maximumf %5, %6 : vector<1024x128xf32>
    %8 = arith.truncf %7 : vector<1024x128xf32> to vector<1024x128xbf16>
    %c0_6 = arith.constant 0 : index
    %c0_7 = arith.constant 0 : index
    %9 = vector.load %arg4[%c0_6, %c0_7] : memref<1024x128xbf16, #tpu.memory_space<vmem>>, vector<1024x128xbf16>
    tpu.vector_store %arg4[%c0_6, %c0_7], %8 {strides = array<i32>} : memref<1024x128xbf16, #tpu.memory_space<vmem>>, vector<1024x128xbf16>,
    return
  }
  func.func @transform_0(%arg0: i32) -> (i32, i32) {
    %c0_i32 = arith.constant 0 : i32
    %c0_i32_0 = arith.constant 0 : i32
    return %arg0, %c0_i32 : i32, i32
  }
  func.func @transform_1(%arg0: i32) -> (i32, i32) {
    %c0_i32 = arith.constant 0 : i32
    %c0_i32_0 = arith.constant 0 : i32
    %c0_i32_1 = arith.constant 0 : i32
    return %c0_i32, %c0_i32_0 : i32, i32
  }
  func.func @transform_2(%arg0: i32) -> (i32, i32) {
    %c0_i32 = arith.constant 0 : i32
    %c0_i32_0 = arith.constant 0 : i32
    %c0_i32_1 = arith.constant 0 : i32
    return %c0_i32, %c0_i32_0 : i32, i32
  }
  func.func @transform_3(%arg0: i32) -> (i32, i32) {
    %c0_i32 = arith.constant 0 : i32
    %c0_i32_0 = arith.constant 0 : i32
    return %arg0, %c0_i32 : i32, i32
  }
}

module attributes {stable_mosaic.version = 11 : i64} {
  func.func @_matmul_bias_relu_kernel(%arg0: i32, %arg1: memref<200x512xbf16, #tpu.memory_space<vmem>>, %arg2: memref<512x128xbf16, #tpu.memory_space<vmem>>, %arg3: memref<1x128xf32, #tpu.memory_space<vmem>>, %arg4: memref<200x128xbf16, #tpu.memory_space<vmem>>) attributes {dimension_semantics = [#tpu.dimension_semantics<parallel>], iteration_bounds = array<i64: 1>, scalar_prefetch = 0 : i64, scratch_operands = 0 : i64, tpu.core_type = #tpu.core_type<tc>, window_params = [{transform_indices = @transform_0, window_bounds = array<i64: 200, 512>}, {pipeline_mode = #tpu.pipeline_mode<synchronous>, transform_indices = @transform_1, window_bounds = array<i64: 512, 128>}, {pipeline_mode = #tpu.pipeline_mode<synchronous>, transform_indices = @transform_2, window_bounds = array<i64: 1, 128>}, {transform_indices = @transform_3, window_bounds = array<i64: 200, 128>}]} {
    %c0 = arith.constant 0 : index
    %c0_0 = arith.constant 0 : index
    %0 = vector.load %arg1[%c0, %c0_0] : memref<200x512xbf16, #tpu.memory_space<vmem>>, vector<200x512xbf16>
    %c0_1 = arith.constant 0 : index
    %c0_2 = arith.constant 0 : index
    %1 = vector.load %arg2[%c0_1, %c0_2] : memref<512x128xbf16, #tpu.memory_space<vmem>>, vector<512x128xbf16>
    %cst = arith.constant dense<0.000000e+00> : vector<200x128xf32>
    %2 = tpu.matmul %0, %1, %cst {dimension_numbers = #tpu.dot_dimension_numbers<[1], [0], [0], [1], [0, 0, 1, 1], [], []>} : vector<200x512xbf16>, vector<512x128xbf16>, vector<200x128xf32> -> vector<200x128xf32>
    %c0_3 = arith.constant 0 : index
    %c0_4 = arith.constant 0 : index
    %3 = vector.load %arg3[%c0_3, %c0_4] : memref<1x128xf32, #tpu.memory_space<vmem>>, vector<1x128xf32>
    %4 = vector.broadcast %3 : vector<1x128xf32> to vector<200x128xf32>
    %5 = arith.addf %2, %4 : vector<200x128xf32>
    %cst_5 = arith.constant 0.000000e+00 : f32
    %6 = vector.broadcast %cst_5 : f32 to vector<200x128xf32>
    %7 = arith.maximumf %5, %6 : vector<200x128xf32>
    %8 = arith.truncf %7 : vector<200x128xf32> to vector<200x128xbf16>
    %c0_6 = arith.constant 0 : index
    %c0_7 = arith.constant 0 : index
    %9 = vector.load %arg4[%c0_6, %c0_7] : memref<200x128xbf16, #tpu.memory_space<vmem>>, vector<200x128xbf16>
    tpu.vector_store %arg4[%c0_6, %c0_7], %8 {strides = array<i32>} : memref<200x128xbf16, #tpu.memory_space<vmem>>, vector<200x128xbf16>,
    return
  }
  func.func @transform_0(%arg0: i32) -> (i32, i32) {
    %c0_i32 = arith.constant 0 : i32
    %c0_i32_0 = arith.constant 0 : i32
    return %arg0, %c0_i32 : i32, i32
  }
  func.func @transform_1(%arg0: i32) -> (i32, i32) {
    %c0_i32 = arith.constant 0 : i32
    %c0_i32_0 = arith.constant 0 : i32
    %c0_i32_1 = arith.constant 0 : i32
    return %c0_i32, %c0_i32_0 : i32, i32
  }
  func.func @transform_2(%arg0: i32) -> (i32, i32) {
    %c0_i32 = arith.constant 0 : i32
    %c0_i32_0 = arith.constant 0 : i32
    %c0_i32_1 = arith.constant 0 : i32
    return %c0_i32, %c0_i32_0 : i32, i32
  }
  func.func @transform_3(%arg0: i32) -> (i32, i32) {
    %c0_i32 = arith.constant 0 : i32
    %c0_i32_0 = arith.constant 0 : i32
    return %arg0, %c0_i32 : i32, i32
  }
}

module attributes {stable_mosaic.version = 11 : i64} {
  func.func @_matmul_bias_relu_kernel(%arg0: i32, %arg1: memref<128x640xbf16, #tpu.memory_space<vmem>>, %arg2: memref<640x128xbf16, #tpu.memory_space<vmem>>, %arg3: memref<1x128xf32, #tpu.memory_space<vmem>>, %arg4: memref<128x128xbf16, #tpu.memory_space<vmem>>) attributes {dimension_semantics = [#tpu.dimension_semantics<parallel>], iteration_bounds = array<i64: 1>, scalar_prefetch = 0 : i64, scratch_operands = 0 : i64, tpu.core_type = #tpu.core_type<tc>, window_params = [{transform_indices = @transform_0, window_bounds = array<i64: 128, 640>}, {pipeline_mode = #tpu.pipeline_mode<synchronous>, transform_indices = @transform_1, window_bounds = array<i64: 640, 128>}, {pipeline_mode = #tpu.pipeline_mode<synchronous>, transform_indices = @transform_2, window_bounds = array<i64: 1, 128>}, {transform_indices = @transform_3, window_bounds = array<i64: 128, 128>}]} {
    %c0 = arith.constant 0 : index
    %c0_0 = arith.constant 0 : index
    %0 = vector.load %arg1[%c0, %c0_0] : memref<128x640xbf16, #tpu.memory_space<vmem>>, vector<128x640xbf16>
    %c0_1 = arith.constant 0 : index
    %c0_2 = arith.constant 0 : index
    %1 = vector.load %arg2[%c0_1, %c0_2] : memref<640x128xbf16, #tpu.memory_space<vmem>>, vector<640x128xbf16>
    %cst = arith.constant dense<0.000000e+00> : vector<128x128xf32>
    %2 = tpu.matmul %0, %1, %cst {dimension_numbers = #tpu.dot_dimension_numbers<[1], [0], [0], [1], [0, 0, 1, 1], [], []>} : vector<128x640xbf16>, vector<640x128xbf16>, vector<128x128xf32> -> vector<128x128xf32>
    %c0_3 = arith.constant 0 : index
    %c0_4 = arith.constant 0 : index
    %3 = vector.load %arg3[%c0_3, %c0_4] : memref<1x128xf32, #tpu.memory_space<vmem>>, vector<1x128xf32>
    %4 = vector.broadcast %3 : vector<1x128xf32> to vector<128x128xf32>
    %5 = arith.addf %2, %4 : vector<128x128xf32>
    %cst_5 = arith.constant 0.000000e+00 : f32
    %6 = vector.broadcast %cst_5 : f32 to vector<128x128xf32>
    %7 = arith.maximumf %5, %6 : vector<128x128xf32>
    %8 = arith.truncf %7 : vector<128x128xf32> to vector<128x128xbf16>
    %c0_6 = arith.constant 0 : index
    %c0_7 = arith.constant 0 : index
    %9 = vector.load %arg4[%c0_6, %c0_7] : memref<128x128xbf16, #tpu.memory_space<vmem>>, vector<128x128xbf16>
    tpu.vector_store %arg4[%c0_6, %c0_7], %8 {strides = array<i32>} : memref<128x128xbf16, #tpu.memory_space<vmem>>, vector<128x128xbf16>,
    return
  }
  func.func @transform_0(%arg0: i32) -> (i32, i32) {
    %c0_i32 = arith.constant 0 : i32
    %c0_i32_0 = arith.constant 0 : i32
    return %arg0, %c0_i32 : i32, i32
  }
  func.func @transform_1(%arg0: i32) -> (i32, i32) {
    %c0_i32 = arith.constant 0 : i32
    %c0_i32_0 = arith.constant 0 : i32
    %c0_i32_1 = arith.constant 0 : i32
    return %c0_i32, %c0_i32_0 : i32, i32
  }
  func.func @transform_2(%arg0: i32) -> (i32, i32) {
    %c0_i32 = arith.constant 0 : i32
    %c0_i32_0 = arith.constant 0 : i32
    %c0_i32_1 = arith.constant 0 : i32
    return %c0_i32, %c0_i32_0 : i32, i32
  }
  func.func @transform_3(%arg0: i32) -> (i32, i32) {
    %c0_i32 = arith.constant 0 : i32
    %c0_i32_0 = arith.constant 0 : i32
    return %arg0, %c0_i32 : i32, i32
  }
}

module attributes {stable_mosaic.version = 11 : i64} {
  func.func @_fused_head_kernel(%arg0: i32, %arg1: memref<8x4096xbf16, #tpu.memory_space<vmem>>, %arg2: memref<4096x512xbf16, #tpu.memory_space<vmem>>, %arg3: memref<1x512xf32, #tpu.memory_space<vmem>>, %arg4: memref<512x128xbf16, #tpu.memory_space<vmem>>, %arg5: memref<1x128xf32, #tpu.memory_space<vmem>>, %arg6: memref<128x128xbf16, #tpu.memory_space<vmem>>, %arg7: memref<1x128xf32, #tpu.memory_space<vmem>>, %arg8: memref<128x128xbf16, #tpu.memory_space<vmem>>, %arg9: memref<1x128xf32, #tpu.memory_space<vmem>>, %arg10: memref<8x128xf32, #tpu.memory_space<vmem>>) attributes {dimension_semantics = [#tpu.dimension_semantics<arbitrary>], iteration_bounds = array<i64: 1>, scalar_prefetch = 0 : i64, scratch_operands = 0 : i64, tpu.core_type = #tpu.core_type<tc>, window_params = [{pipeline_mode = #tpu.pipeline_mode<synchronous>, transform_indices = @transform_0, window_bounds = array<i64: 8, 4096>}, {pipeline_mode = #tpu.pipeline_mode<synchronous>, transform_indices = @transform_1, window_bounds = array<i64: 4096, 512>}, {pipeline_mode = #tpu.pipeline_mode<synchronous>, transform_indices = @transform_2, window_bounds = array<i64: 1, 512>}, {pipeline_mode = #tpu.pipeline_mode<synchronous>, transform_indices = @transform_3, window_bounds = array<i64: 512, 128>}, {pipeline_mode = #tpu.pipeline_mode<synchronous>, transform_indices = @transform_4, window_bounds = array<i64: 1, 128>}, {pipeline_mode = #tpu.pipeline_mode<synchronous>, transform_indices = @transform_5, window_bounds = array<i64: 128, 128>}, {pipeline_mode = #tpu.pipeline_mode<synchronous>, transform_indices = @transform_6, window_bounds = array<i64: 1, 128>}, {pipeline_mode = #tpu.pipeline_mode<synchronous>, transform_indices = @transform_7, window_bounds = array<i64: 128, 128>}, {pipeline_mode = #tpu.pipeline_mode<synchronous>, transform_indices = @transform_8, window_bounds = array<i64: 1, 128>}, {pipeline_mode = #tpu.pipeline_mode<synchronous>, transform_indices = @transform_9, window_bounds = array<i64: 8, 128>}]} {
    %c0 = arith.constant 0 : index
    %c0_0 = arith.constant 0 : index
    %0 = vector.load %arg1[%c0, %c0_0] : memref<8x4096xbf16, #tpu.memory_space<vmem>>, vector<8x4096xbf16>
    %c0_1 = arith.constant 0 : index
    %c0_2 = arith.constant 0 : index
    %1 = vector.load %arg2[%c0_1, %c0_2] : memref<4096x512xbf16, #tpu.memory_space<vmem>>, vector<4096x512xbf16>
    %cst = arith.constant dense<0.000000e+00> : vector<8x512xf32>
    %2 = tpu.matmul %0, %1, %cst {dimension_numbers = #tpu.dot_dimension_numbers<[1], [0], [0], [1], [0, 0, 1, 1], [], []>} : vector<8x4096xbf16>, vector<4096x512xbf16>, vector<8x512xf32> -> vector<8x512xf32>
    %c0_3 = arith.constant 0 : index
    %c0_4 = arith.constant 0 : index
    %3 = vector.load %arg3[%c0_3, %c0_4] : memref<1x512xf32, #tpu.memory_space<vmem>>, vector<1x512xf32>
    %4 = vector.broadcast %3 : vector<1x512xf32> to vector<8x512xf32>
    %5 = arith.addf %2, %4 : vector<8x512xf32>
    %cst_5 = arith.constant 0.000000e+00 : f32
    %6 = vector.broadcast %cst_5 : f32 to vector<8x512xf32>
    %7 = arith.maximumf %5, %6 : vector<8x512xf32>
    %8 = arith.truncf %7 : vector<8x512xf32> to vector<8x512xbf16>
    %c0_6 = arith.constant 0 : index
    %c0_7 = arith.constant 0 : index
    %9 = vector.load %arg4[%c0_6, %c0_7] : memref<512x128xbf16, #tpu.memory_space<vmem>>, vector<512x128xbf16>
    %cst_8 = arith.constant dense<0.000000e+00> : vector<8x128xf32>
    %10 = tpu.matmul %8, %9, %cst_8 {dimension_numbers = #tpu.dot_dimension_numbers<[1], [0], [0], [1], [0, 0, 1, 1], [], []>} : vector<8x512xbf16>, vector<512x128xbf16>, vector<8x128xf32> -> vector<8x128xf32>
    %c0_9 = arith.constant 0 : index
    %c0_10 = arith.constant 0 : index
    %11 = vector.load %arg5[%c0_9, %c0_10] : memref<1x128xf32, #tpu.memory_space<vmem>>, vector<1x128xf32>
    %12 = vector.broadcast %11 : vector<1x128xf32> to vector<8x128xf32>
    %13 = arith.addf %10, %12 : vector<8x128xf32>
    %14 = math.tanh %13 : vector<8x128xf32>
    %15 = arith.truncf %14 : vector<8x128xf32> to vector<8x128xbf16>
    %c0_11 = arith.constant 0 : index
    %c0_12 = arith.constant 0 : index
    %16 = vector.load %arg6[%c0_11, %c0_12] : memref<128x128xbf16, #tpu.memory_space<vmem>>, vector<128x128xbf16>
    %cst_13 = arith.constant dense<0.000000e+00> : vector<8x128xf32>
    %17 = tpu.matmul %15, %16, %cst_13 {dimension_numbers = #tpu.dot_dimension_numbers<[1], [0], [0], [1], [0, 0, 1, 1], [], []>} : vector<8x128xbf16>, vector<128x128xbf16>, vector<8x128xf32> -> vector<8x128xf32>
    %c0_14 = arith.constant 0 : index
    %c0_15 = arith.constant 0 : index
    %18 = vector.load %arg7[%c0_14, %c0_15] : memref<1x128xf32, #tpu.memory_space<vmem>>, vector<1x128xf32>
    %19 = vector.broadcast %18 : vector<1x128xf32> to vector<8x128xf32>
    %20 = arith.addf %17, %19 : vector<8x128xf32>
    %21 = math.tanh %20 : vector<8x128xf32>
    %22 = arith.truncf %21 : vector<8x128xf32> to vector<8x128xbf16>
    %c0_16 = arith.constant 0 : index
    %c0_17 = arith.constant 0 : index
    %23 = vector.load %arg8[%c0_16, %c0_17] : memref<128x128xbf16, #tpu.memory_space<vmem>>, vector<128x128xbf16>
    %cst_18 = arith.constant dense<0.000000e+00> : vector<8x128xf32>
    %24 = tpu.matmul %22, %23, %cst_18 {dimension_numbers = #tpu.dot_dimension_numbers<[1], [0], [0], [1], [0, 0, 1, 1], [], []>} : vector<8x128xbf16>, vector<128x128xbf16>, vector<8x128xf32> -> vector<8x128xf32>
    %c0_19 = arith.constant 0 : index
    %c0_20 = arith.constant 0 : index
    %25 = vector.load %arg9[%c0_19, %c0_20] : memref<1x128xf32, #tpu.memory_space<vmem>>, vector<1x128xf32>
    %26 = vector.broadcast %25 : vector<1x128xf32> to vector<8x128xf32>
    %27 = arith.addf %24, %26 : vector<8x128xf32>
    %28 = math.tanh %27 : vector<8x128xf32>
    %c0_21 = arith.constant 0 : index
    %c0_22 = arith.constant 0 : index
    %29 = vector.load %arg10[%c0_21, %c0_22] : memref<8x128xf32, #tpu.memory_space<vmem>>, vector<8x128xf32>
    tpu.vector_store %arg10[%c0_21, %c0_22], %28 {strides = array<i32>} : memref<8x128xf32, #tpu.memory_space<vmem>>, vector<8x128xf32>,
    return
  }
  func.func @transform_0(%arg0: i32) -> (i32, i32) {
    %c0_i32 = arith.constant 0 : i32
    %c0_i32_0 = arith.constant 0 : i32
    %c0_i32_1 = arith.constant 0 : i32
    return %c0_i32, %c0_i32_0 : i32, i32
  }
  func.func @transform_1(%arg0: i32) -> (i32, i32) {
    %c0_i32 = arith.constant 0 : i32
    %c0_i32_0 = arith.constant 0 : i32
    %c0_i32_1 = arith.constant 0 : i32
    return %c0_i32, %c0_i32_0 : i32, i32
  }
  func.func @transform_2(%arg0: i32) -> (i32, i32) {
    %c0_i32 = arith.constant 0 : i32
    %c0_i32_0 = arith.constant 0 : i32
    %c0_i32_1 = arith.constant 0 : i32
    return %c0_i32, %c0_i32_0 : i32, i32
  }
  func.func @transform_3(%arg0: i32) -> (i32, i32) {
    %c0_i32 = arith.constant 0 : i32
    %c0_i32_0 = arith.constant 0 : i32
    %c0_i32_1 = arith.constant 0 : i32
    return %c0_i32, %c0_i32_0 : i32, i32
  }
  func.func @transform_4(%arg0: i32) -> (i32, i32) {
    %c0_i32 = arith.constant 0 : i32
    %c0_i32_0 = arith.constant 0 : i32
    %c0_i32_1 = arith.constant 0 : i32
    return %c0_i32, %c0_i32_0 : i32, i32
  }
  func.func @transform_5(%arg0: i32) -> (i32, i32) {
    %c0_i32 = arith.constant 0 : i32
    %c0_i32_0 = arith.constant 0 : i32
    %c0_i32_1 = arith.constant 0 : i32
    return %c0_i32, %c0_i32_0 : i32, i32
  }
  func.func @transform_6(%arg0: i32) -> (i32, i32) {
    %c0_i32 = arith.constant 0 : i32
    %c0_i32_0 = arith.constant 0 : i32
    %c0_i32_1 = arith.constant 0 : i32
    return %c0_i32, %c0_i32_0 : i32, i32
  }
  func.func @transform_7(%arg0: i32) -> (i32, i32) {
    %c0_i32 = arith.constant 0 : i32
    %c0_i32_0 = arith.constant 0 : i32
    %c0_i32_1 = arith.constant 0 : i32
    return %c0_i32, %c0_i32_0 : i32, i32
  }
  func.func @transform_8(%arg0: i32) -> (i32, i32) {
    %c0_i32 = arith.constant 0 : i32
    %c0_i32_0 = arith.constant 0 : i32
    %c0_i32_1 = arith.constant 0 : i32
    return %c0_i32, %c0_i32_0 : i32, i32
  }
  func.func @transform_9(%arg0: i32) -> (i32, i32) {
    %c0_i32 = arith.constant 0 : i32
    %c0_i32_0 = arith.constant 0 : i32
    %c0_i32_1 = arith.constant 0 : i32
    return %c0_i32, %c0_i32_0 : i32, i32
  }
}

</mosaic_0001>

<llo_original>
// kernel: red_or_green_forward.4
$region0: #{red_or_green_forward.4}
  #allocation0 [shape = 'u32[]', space=smem, size = 0x4, offset = 0x4, fixed_abs, tag = 'smem constant byte address 0x4 - core index']
  #allocation1 [shape = 'u32[144,128]{1,0:T(1,128)}', space=vmem, size = 0x12000, scoped, tag = 'internal scratch']
  %s0 = inlined_call_operand.vmem [shape: bf16[2048,128], index: 0, kind: input, shape index: {}]
  %s1 = inlined_call_operand.vmem [shape: bf16[128,128], index: 1, kind: input, shape index: {}]
  %s2 = inlined_call_operand.vmem [shape: f32[1,128], index: 2, kind: input, shape index: {}]
  %s3 = inlined_call_operand.vmem [shape: bf16[2048,128], index: 3, kind: output, shape index: {}]
  %s4 = sld [smem:[#allocation0]]
  $region45: #{red_or_green_forward.4} parent=0
    _
  %s6 = ssub.s32 1, %s4
  %s7 = scalar_select 0, %s6, %s4
  loop: start=0, step=1, limit=4
  $region2: #{red_or_green_forward.4} parent=0 // loop_pre_header
    _
  $region3: #{red_or_green_forward.4} parent=0 // loop_header
    %s9 = sphi 0, %s13
    %p10 = scmp.ge.s32.totalorder %s9, 4
    %s19 = sphi 0, %s21
    %s22 = sphi 0, %s19
    %s23 = sphi 0, %s22
    %s39 = sphi 0, %s23
    %s43 = sphi 0, %s43
    %s45 = sphi 0, %s43
    %s46 = sphi 0, %s45
    %s60 = sphi 0, %s46
    %s64 = sphi 0, %s64
    %s66 = sphi 0, %s64
    %s67 = sphi 0, %s66
    %s81 = sphi 0, %s67
    %s87 = sphi 0, %s89
    %s90 = sphi 0, %s87
    %s91 = sphi 0, %s90
    %s107 = sphi 0, %s91
  $region4: #{red_or_green_forward.4} parent=0 // loop_header_branch
    %12 = sbr.rel (%p10) target = $region8
  $region5: #{red_or_green_forward.4} parent=0 // loop_body
    %s14 = ssub.s32 %s9, 1
    %s15 = ssub.s32 %s9, 2
    %s16 = sadd.s32 %s9, 1
    %s17 = ssub.s32 %s9, %s16
    %p18 = scmp.eq.s32.totalorder %s17, 0
    %s20 = sadd.s32 %s19, 1
    %s21 = scalar_select %p18, %s19, %s20
    %p24 = pneg %p18
    %p25 = scmp.eq.s32.totalorder %s9, 1
    %p26 = por %p24, %p25
    %p27 = scmp.ne.s32.totalorder %s19, %s22
    %p28 = scmp.eq.s32.totalorder %s9, 0
    %p29 = por %p27, %p28
    %p30 = scmp.ne.s32.totalorder %s19, %s22
    %p31 = scmp.eq.s32.totalorder %s14, 1
    %p32 = por %p30, %p31
    %p33 = scmp.ne.s32.totalorder %s22, %s23
    %p34 = scmp.eq.s32.totalorder %s14, 0
    %p35 = por %p33, %p34
    %p36 = scmp.ne.s32.totalorder %s22, %s23
    %p37 = scmp.eq.s32.totalorder %s15, 1
    %p38 = por %p36, %p37
    %p40 = scmp.ne.s32.totalorder %s23, %s39
    %p41 = scmp.eq.s32.totalorder %s15, 0
    %p42 = por %p40, %p41
    %s44 = sadd.s32 %s43, 1
    %p47 = scmp.eq.s32.totalorder %s9, 1
    %p48 = scmp.ne.s32.totalorder %s43, %s45
    %p49 = scmp.eq.s32.totalorder %s9, 0
    %p50 = por %p48, %p49
    %p51 = scmp.ne.s32.totalorder %s43, %s45
    %p52 = scmp.eq.s32.totalorder %s14, 1
    %p53 = por %p51, %p52
    %p54 = scmp.ne.s32.totalorder %s45, %s46
    %p55 = scmp.eq.s32.totalorder %s14, 0
    %p56 = por %p54, %p55
    %p57 = scmp.ne.s32.totalorder %s45, %s46
    %p58 = scmp.eq.s32.totalorder %s15, 1
    %p59 = por %p57, %p58
    %p61 = scmp.ne.s32.totalorder %s46, %s60
    %p62 = scmp.eq.s32.totalorder %s15, 0
    %p63 = por %p61, %p62
    %s65 = sadd.s32 %s64, 1
    %p68 = scmp.eq.s32.totalorder %s9, 1
    %p69 = scmp.ne.s32.totalorder %s64, %s66
    %p70 = scmp.eq.s32.totalorder %s9, 0
    %p71 = por %p69, %p70
    %p72 = scmp.ne.s32.totalorder %s64, %s66
    %p73 = scmp.eq.s32.totalorder %s14, 1
    %p74 = por %p72, %p73
    %p75 = scmp.ne.s32.totalorder %s66, %s67
    %p76 = scmp.eq.s32.totalorder %s14, 0
    %p77 = por %p75, %p76
    %p78 = scmp.ne.s32.totalorder %s66, %s67
    %p79 = scmp.eq.s32.totalorder %s15, 1
    %p80 = por %p78, %p79
    %p82 = scmp.ne.s32.totalorder %s67, %s81
    %p83 = scmp.eq.s32.totalorder %s15, 0
    %p84 = por %p82, %p83
    %s85 = ssub.s32 %s9, %s16
    %p86 = scmp.eq.s32.totalorder %s85, 0
    %s88 = sadd.s32 %s87, 1
    %s89 = scalar_select %p86, %s87, %s88
    %p92 = pneg %p86
    %p93 = scmp.eq.s32.totalorder %s9, 1
    %p94 = por %p92, %p93
    %p95 = scmp.ne.s32.totalorder %s87, %s90
    %p96 = scmp.eq.s32.totalorder %s9, 0
    %p97 = por %p95, %p96
    %p98 = scmp.ne.s32.totalorder %s87, %s90
    %p99 = scmp.eq.s32.totalorder %s14, 1
    %p100 = por %p98, %p99
    %p101 = scmp.ne.s32.totalorder %s90, %s91
    %p102 = scmp.eq.s32.totalorder %s14, 0
    %p103 = por %p101, %p102
    %p104 = scmp.ne.s32.totalorder %s90, %s91
    %p105 = scmp.eq.s32.totalorder %s15, 1
    %p106 = por %p104, %p105
    %p108 = scmp.ne.s32.totalorder %s91, %s107
    %p109 = scmp.eq.s32.totalorder %s15, 0
    %p110 = por %p108, %p109
    %p111 = scmp.le.s32.totalorder 1, %s9
    %p112 = scmp.lt.s32.totalorder %s9, 3
    %p113 = pnand %p111, %p112
    %p114 = pneg %p113
    // Predicated region
    $region9: #{red_or_green_forward.4} parent=5 // pred_check
      _
    $region10: #{red_or_green_forward.4} parent=5 // pred_check_branch
      %116 = sbr.rel (%p113) target = $region12
    $region11: #{red_or_green_forward.4} parent=5 // pred_region
      %s117 = ssub.s32 %s9, 1
      // Predicated region
      $region13: #{red_or_green_forward.4} parent=11 // pred_check
        %p118 = pneg %p56
      $region14: #{red_or_green_forward.4} parent=11 // pred_check_branch
        %120 = sbr.rel (%p118) target = $region16
      $region15: #{red_or_green_forward.4} parent=11 // pred_region
        _
      $region16: #{red_or_green_forward.4} parent=11 // pred_fallthru
        _
      // Predicated region
      $region17: #{red_or_green_forward.4} parent=11 // pred_check
        %p121 = pneg %p77
      $region18: #{red_or_green_forward.4} parent=11 // pred_check_branch
        %123 = sbr.rel (%p121) target = $region20
      $region19: #{red_or_green_forward.4} parent=11 // pred_region
        _
      $region20: #{red_or_green_forward.4} parent=11 // pred_fallthru
        _
    $region12: #{red_or_green_forward.4} parent=5 // pred_fallthru
      _
    %p124 = scmp.lt.s32.totalorder %s9, 2
    // Predicated region
    $region21: #{red_or_green_forward.4} parent=5 // pred_check
      %p125 = pneg %p124
    $region22: #{red_or_green_forward.4} parent=5 // pred_check_branch
      %127 = sbr.rel (%p125) target = $region24
    $region23: #{red_or_green_forward.4} parent=5 // pred_region
      // Predicated region
      $region25: #{red_or_green_forward.4} parent=23 // pred_check
        %p128 = pneg %p29
      $region26: #{red_or_green_forward.4} parent=23 // pred_check_branch
        %130 = sbr.rel (%p128) target = $region28
      $region27: #{red_or_green_forward.4} parent=23 // pred_region
        %s131 = smul.u32 128, %s9
        %p132 = scmp.lt.s32.totalorder %s131, 255
        %s133 = scalar_select %p132, %s131, 255
        %s134 = smul.addr %s133, 4
        %s135 = scalar_lea.vmem %s0, %s134
        %s136 = smul.u32 128, %s9
      $region28: #{red_or_green_forward.4} parent=23 // pred_fallthru
        _
    $region24: #{red_or_green_forward.4} parent=5 // pred_fallthru
      _
    %p137 = scmp.le.s32.totalorder 1, %s9
    %p138 = scmp.lt.s32.totalorder %s9, 3
    %p139 = pnand %p137, %p138
    %p140 = pneg %p139
    // Predicated region
    $region29: #{red_or_green_forward.4} parent=5 // pred_check
      _
    $region30: #{red_or_green_forward.4} parent=5 // pred_check_branch
      %142 = sbr.rel (%p139) target = $region32
    $region31: #{red_or_green_forward.4} parent=5 // pred_region
      %s143 = ssub.s32 %s9, 1
      %s144 = smul.u32 128, %s14
      %p145 = scmp.lt.s32.totalorder %s144, 255
      %s146 = scalar_select %p145, %s144, 255
      %s147 = smul.addr %s146, 4
      %s148 = scalar_lea.vmem %s0, %s147
      %p149 = pneg %p35
      %p150 = pneg %p32
      %p151 = pneg %p56
      %p152 = pneg %p53
      %p153 = pneg %p77
      %p154 = pneg %p74
      %p155 = pneg %p103
      %p156 = pneg %p100
      %s157 = smul.u32 128, %s14
      %p158 = scmp.lt.s32.totalorder %s157, 255
      %s159 = scalar_select %p158, %s157, 255
      %s160 = smul.addr %s159, 4
      %s161 = scalar_lea.vmem %s3, %s160
      %s162 = smul.u32 128, %s14
      %p163 = scmp.lt.s32.totalorder %s162, 255
      %s164 = scalar_select %p163, %s162, 255
      %s165 = smul.addr %s164, 4
      %s166 = scalar_lea.vmem %s0, %s165
      %s167 = smul.u32 128, %s14
      %s168 = smul.u32 128, %s14
      %p169 = scmp.lt.s32.totalorder %s168, 255
      %s170 = scalar_select %p169, %s168, 255
      %s171 = smul.addr %s170, 4
      %s172 = scalar_lea.vmem %s3, %s171
      %s173 = smul.u32 128, %s14
      %v175 = vld [vmem:[%s166] sm:$0xf]
      %v176 = vld [vmem:[%s166 + $0x4] sm:$0xf]
      %v177 = vld [vmem:[%s166 + $0x8] sm:$0xf]
      %v178 = vld [vmem:[%s166 + $0xc] sm:$0xf]
      %v179 = vld [vmem:[%s166 + $0x10] sm:$0xf]
      %v180 = vld [vmem:[%s166 + $0x14] sm:$0xf]
      %v181 = vld [vmem:[%s166 + $0x18] sm:$0xf]
      %v182 = vld [vmem:[%s166 + $0x1c] sm:$0xf]
      %v183 = vld [vmem:[%s166 + $0x20] sm:$0xf]
      %v184 = vld [vmem:[%s166 + $0x24] sm:$0xf]
      %v185 = vld [vmem:[%s166 + $0x28] sm:$0xf]
      %v186 = vld [vmem:[%s166 + $0x2c] sm:$0xf]
      %v187 = vld [vmem:[%s166 + $0x30] sm:$0xf]
      %v188 = vld [vmem:[%s166 + $0x34] sm:$0xf]
      %v189 = vld [vmem:[%s166 + $0x38] sm:$0xf]
      %v190 = vld [vmem:[%s166 + $0x3c] sm:$0xf]
      %v191 = vld [vmem:[%s166 + $0x40] sm:$0xf]
      %v192 = vld [vmem:[%s166 + $0x44] sm:$0xf]
      %v193 = vld [vmem:[%s166 + $0x48] sm:$0xf]
      %v194 = vld [vmem:[%s166 + $0x4c] sm:$0xf]
      %v195 = vld [vmem:[%s166 + $0x50] sm:$0xf]
      %v196 = vld [vmem:[%s166 + $0x54] sm:$0xf]
      %v197 = vld [vmem:[%s166 + $0x58] sm:$0xf]
      %v198 = vld [vmem:[%s166 + $0x5c] sm:$0xf]
      %v199 = vld [vmem:[%s166 + $0x60] sm:$0xf]
      %v200 = vld [vmem:[%s166 + $0x64] sm:$0xf]
      %v201 = vld [vmem:[%s166 + $0x68] sm:$0xf]
      %v202 = vld [vmem:[%s166 + $0x6c] sm:$0xf]
      %v203 = vld [vmem:[%s166 + $0x70] sm:$0xf]
      %v204 = vld [vmem:[%s166 + $0x74] sm:$0xf]
      %v205 = vld [vmem:[%s166 + $0x78] sm:$0xf]
      %v206 = vld [vmem:[%s166 + $0x7c] sm:$0xf]
      %v207 = vld [vmem:[%s166 + $0x80] sm:$0xf]
      %v208 = vld [vmem:[%s166 + $0x84] sm:$0xf]
      %v209 = vld [vmem:[%s166 + $0x88] sm:$0xf]
      %v210 = vld [vmem:[%s166 + $0x8c] sm:$0xf]
      %v211 = vld [vmem:[%s166 + $0x90] sm:$0xf]
      %v212 = vld [vmem:[%s166 + $0x94] sm:$0xf]
      %v213 = vld [vmem:[%s166 + $0x98] sm:$0xf]
      %v214 = vld [vmem:[%s166 + $0x9c] sm:$0xf]
      %v215 = vld [vmem:[%s166 + $0xa0] sm:$0xf]
      %v216 = vld [vmem:[%s166 + $0xa4] sm:$0xf]
      %v217 = vld [vmem:[%s166 + $0xa8] sm:$0xf]
      %v218 = vld [vmem:[%s166 + $0xac] sm:$0xf]
      %v219 = vld [vmem:[%s166 + $0xb0] sm:$0xf]
      %v220 = vld [vmem:[%s166 + $0xb4] sm:$0xf]
      %v221 = vld [vmem:[%s166 + $0xb8] sm:$0xf]
      %v222 = vld [vmem:[%s166 + $0xbc] sm:$0xf]
      %v223 = vld [vmem:[%s166 + $0xc0] sm:$0xf]
      %v224 = vld [vmem:[%s166 + $0xc4] sm:$0xf]
      %v225 = vld [vmem:[%s166 + $0xc8] sm:$0xf]
      %v226 = vld [vmem:[%s166 + $0xcc] sm:$0xf]
      %v227 = vld [vmem:[%s166 + $0xd0] sm:$0xf]
      %v228 = vld [vmem:[%s166 + $0xd4] sm:$0xf]
      %v229 = vld [vmem:[%s166 + $0xd8] sm:$0xf]
      %v230 = vld [vmem:[%s166 + $0xdc] sm:$0xf]
      %v231 = vld [vmem:[%s166 + $0xe0] sm:$0xf]
      %v232 = vld [vmem:[%s166 + $0xe4] sm:$0xf]
      %v233 = vld [vmem:[%s166 + $0xe8] sm:$0xf]
      %v234 = vld [vmem:[%s166 + $0xec] sm:$0xf]
      %v235 = vld [vmem:[%s166 + $0xf0] sm:$0xf]
      %v236 = vld [vmem:[%s166 + $0xf4] sm:$0xf]
      %v237 = vld [vmem:[%s166 + $0xf8] sm:$0xf]
      %v238 = vld [vmem:[%s166 + $0xfc] sm:$0xf]
      %v239 = vld [vmem:[%s166 + $0x100] sm:$0xf]
      %v240 = vld [vmem:[%s166 + $0x104] sm:$0xf]
      %v241 = vld [vmem:[%s166 + $0x108] sm:$0xf]
      %v242 = vld [vmem:[%s166 + $0x10c] sm:$0xf]
      %v243 = vld [vmem:[%s166 + $0x110] sm:$0xf]
      %v244 = vld [vmem:[%s166 + $0x114] sm:$0xf]
      %v245 = vld [vmem:[%s166 + $0x118] sm:$0xf]
      %v246 = vld [vmem:[%s166 + $0x11c] sm:$0xf]
      %v247 = vld [vmem:[%s166 + $0x120] sm:$0xf]
      %v248 = vld [vmem:[%s166 + $0x124] sm:$0xf]
      %v249 = vld [vmem:[%s166 + $0x128] sm:$0xf]
      %v250 = vld [vmem:[%s166 + $0x12c] sm:$0xf]
      %v251 = vld [vmem:[%s166 + $0x130] sm:$0xf]
      %v252 = vld [vmem:[%s166 + $0x134] sm:$0xf]
      %v253 = vld [vmem:[%s166 + $0x138] sm:$0xf]
      %v254 = vld [vmem:[%s166 + $0x13c] sm:$0xf]
      %v255 = vld [vmem:[%s166 + $0x140] sm:$0xf]
      %v256 = vld [vmem:[%s166 + $0x144] sm:$0xf]
      %v257 = vld [vmem:[%s166 + $0x148] sm:$0xf]
      %v258 = vld [vmem:[%s166 + $0x14c] sm:$0xf]
      %v259 = vld [vmem:[%s166 + $0x150] sm:$0xf]
      %v260 = vld [vmem:[%s166 + $0x154] sm:$0xf]
      %v261 = vld [vmem:[%s166 + $0x158] sm:$0xf]
      %v262 = vld [vmem:[%s166 + $0x15c] sm:$0xf]
      %v263 = vld [vmem:[%s166 + $0x160] sm:$0xf]
      %v264 = vld [vmem:[%s166 + $0x164] sm:$0xf]
      %v265 = vld [vmem:[%s166 + $0x168] sm:$0xf]
      %v266 = vld [vmem:[%s166 + $0x16c] sm:$0xf]
      %v267 = vld [vmem:[%s166 + $0x170] sm:$0xf]
      %v268 = vld [vmem:[%s166 + $0x174] sm:$0xf]
      %v269 = vld [vmem:[%s166 + $0x178] sm:$0xf]
      %v270 = vld [vmem:[%s166 + $0x17c] sm:$0xf]
      %v271 = vld [vmem:[%s166 + $0x180] sm:$0xf]
      %v272 = vld [vmem:[%s166 + $0x184] sm:$0xf]
      %v273 = vld [vmem:[%s166 + $0x188] sm:$0xf]
      %v274 = vld [vmem:[%s166 + $0x18c] sm:$0xf]
      %v275 = vld [vmem:[%s166 + $0x190] sm:$0xf]
      %v276 = vld [vmem:[%s166 + $0x194] sm:$0xf]
      %v277 = vld [vmem:[%s166 + $0x198] sm:$0xf]
      %v278 = vld [vmem:[%s166 + $0x19c] sm:$0xf]
      %v279 = vld [vmem:[%s166 + $0x1a0] sm:$0xf]
      %v280 = vld [vmem:[%s166 + $0x1a4] sm:$0xf]
      %v281 = vld [vmem:[%s166 + $0x1a8] sm:$0xf]
      %v282 = vld [vmem:[%s166 + $0x1ac] sm:$0xf]
      %v283 = vld [vmem:[%s166 + $0x1b0] sm:$0xf]
      %v284 = vld [vmem:[%s166 + $0x1b4] sm:$0xf]
      %v285 = vld [vmem:[%s166 + $0x1b8] sm:$0xf]
      %v286 = vld [vmem:[%s166 + $0x1bc] sm:$0xf]
      %v287 = vld [vmem:[%s166 + $0x1c0] sm:$0xf]
      %v288 = vld [vmem:[%s166 + $0x1c4] sm:$0xf]
      %v289 = vld [vmem:[%s166 + $0x1c8] sm:$0xf]
      %v290 = vld [vmem:[%s166 + $0x1cc] sm:$0xf]
      %v291 = vld [vmem:[%s166 + $0x1d0] sm:$0xf]
      %v292 = vld [vmem:[%s166 + $0x1d4] sm:$0xf]
      %v293 = vld [vmem:[%s166 + $0x1d8] sm:$0xf]
      %v294 = vld [vmem:[%s166 + $0x1dc] sm:$0xf]
      %v295 = vld [vmem:[%s166 + $0x1e0] sm:$0xf]
      %v296 = vld [vmem:[%s166 + $0x1e4] sm:$0xf]
      %v297 = vld [vmem:[%s166 + $0x1e8] sm:$0xf]
      %v298 = vld [vmem:[%s166 + $0x1ec] sm:$0xf]
      %v299 = vld [vmem:[%s166 + $0x1f0] sm:$0xf]
      %v300 = vld [vmem:[%s166 + $0x1f4] sm:$0xf]
      %v301 = vld [vmem:[%s166 + $0x1f8] sm:$0xf]
      %v302 = vld [vmem:[%s166 + $0x1fc] sm:$0xf]
      %v303 = vld [vmem:[%s1] sm:$0xf]
      %v304 = vld [vmem:[%s1 + $0x4] sm:$0xf]
      %v305 = vld [vmem:[%s1 + $0x8] sm:$0xf]
      %v306 = vld [vmem:[%s1 + $0xc] sm:$0xf]
      %v307 = vld [vmem:[%s1 + $0x10] sm:$0xf]
      %v308 = vld [vmem:[%s1 + $0x14] sm:$0xf]
      %v309 = vld [vmem:[%s1 + $0x18] sm:$0xf]
      %v310 = vld [vmem:[%s1 + $0x1c] sm:$0xf]
      %v311 = vld [vmem:[%s1 + $0x20] sm:$0xf]
      %v312 = vld [vmem:[%s1 + $0x24] sm:$0xf]
      %v313 = vld [vmem:[%s1 + $0x28] sm:$0xf]
      %v314 = vld [vmem:[%s1 + $0x2c] sm:$0xf]
      %v315 = vld [vmem:[%s1 + $0x30] sm:$0xf]
      %v316 = vld [vmem:[%s1 + $0x34] sm:$0xf]
      %v317 = vld [vmem:[%s1 + $0x38] sm:$0xf]
      %v318 = vld [vmem:[%s1 + $0x3c] sm:$0xf]
      %v319 = vld [vmem:[%s2] sm:$0x1]
      %v321 = vlaneseq
      %v322 = vshrl.u32 %v321, 7
      %v323 = vsub.s32 0, %v322
      %v324 = vrot.slane %v319, %v323
      %v454 = vunpack.c.l.b16 %v175
      %v455 = vunpack.c.l.b16 %v176
      %v456 = vunpack.c.l.b16 %v177
      %v457 = vunpack.c.l.b16 %v178
      %v458 = vunpack.c.l.b16 %v179
      %v459 = vunpack.c.l.b16 %v180
      %v460 = vunpack.c.l.b16 %v181
      %v461 = vunpack.c.l.b16 %v182
      %v462 = vunpack.c.l.b16 %v183
      %v463 = vunpack.c.l.b16 %v184
      %v464 = vunpack.c.l.b16 %v185
      %v465 = vunpack.c.l.b16 %v186
      %v466 = vunpack.c.l.b16 %v187
      %v467 = vunpack.c.l.b16 %v188
      %v468 = vunpack.c.l.b16 %v189
      %v469 = vunpack.c.l.b16 %v190
      %v470 = vunpack.c.l.b16 %v191
      %v471 = vunpack.c.l.b16 %v192
      %v472 = vunpack.c.l.b16 %v193
      %v473 = vunpack.c.l.b16 %v194
      %v474 = vunpack.c.l.b16 %v195
      %v475 = vunpack.c.l.b16 %v196
      %v476 = vunpack.c.l.b16 %v197
      %v477 = vunpack.c.l.b16 %v198
      %v478 = vunpack.c.l.b16 %v199
      %v479 = vunpack.c.l.b16 %v200
      %v480 = vunpack.c.l.b16 %v201
      %v481 = vunpack.c.l.b16 %v202
      %v482 = vunpack.c.l.b16 %v203
      %v483 = vunpack.c.l.b16 %v204
      %v484 = vunpack.c.l.b16 %v205
      %v485 = vunpack.c.l.b16 %v206
      %v486 = vunpack.c.l.b16 %v207
      %v487 = vunpack.c.l.b16 %v208
      %v488 = vunpack.c.l.b16 %v209
      %v489 = vunpack.c.l.b16 %v210
      %v490 = vunpack.c.l.b16 %v211
      %v491 = vunpack.c.l.b16 %v212
      %v492 = vunpack.c.l.b16 %v213
      %v493 = vunpack.c.l.b16 %v214
      %v494 = vunpack.c.l.b16 %v215
      %v495 = vunpack.c.l.b16 %v216
      %v496 = vunpack.c.l.b16 %v217
      %v497 = vunpack.c.l.b16 %v218
      %v498 = vunpack.c.l.b16 %v219
      %v499 = vunpack.c.l.b16 %v220
      %v500 = vunpack.c.l.b16 %v221
      %v501 = vunpack.c.l.b16 %v222
      %v502 = vunpack.c.l.b16 %v223
      %v503 = vunpack.c.l.b16 %v224
      %v504 = vunpack.c.l.b16 %v225
      %v505 = vunpack.c.l.b16 %v226
      %v506 = vunpack.c.l.b16 %v227
      %v507 = vunpack.c.l.b16 %v228
      %v508 = vunpack.c.l.b16 %v229
      %v509 = vunpack.c.l.b16 %v230
      %v510 = vunpack.c.l.b16 %v231
      %v511 = vunpack.c.l.b16 %v232
      %v512 = vunpack.c.l.b16 %v233
      %v513 = vunpack.c.l.b16 %v234
      %v514 = vunpack.c.l.b16 %v235
      %v515 = vunpack.c.l.b16 %v236
      %v516 = vunpack.c.l.b16 %v237
      %v517 = vunpack.c.l.b16 %v238
      %v518 = vunpack.c.l.b16 %v239
      %v519 = vunpack.c.l.b16 %v240
      %v520 = vunpack.c.l.b16 %v241
      %v521 = vunpack.c.l.b16 %v242
      %v522 = vunpack.c.l.b16 %v243
      %v523 = vunpack.c.l.b16 %v244
      %v524 = vunpack.c.l.b16 %v245
      %v525 = vunpack.c.l.b16 %v246
      %v526 = vunpack.c.l.b16 %v247
      %v527 = vunpack.c.l.b16 %v248
      %v528 = vunpack.c.l.b16 %v249
      %v529 = vunpack.c.l.b16 %v250
      %v530 = vunpack.c.l.b16 %v251
      %v531 = vunpack.c.l.b16 %v252
      %v532 = vunpack.c.l.b16 %v253
      %v533 = vunpack.c.l.b16 %v254
      %v534 = vunpack.c.l.b16 %v255
      %v535 = vunpack.c.l.b16 %v256
      %v536 = vunpack.c.l.b16 %v257
      %v537 = vunpack.c.l.b16 %v258
      %v538 = vunpack.c.l.b16 %v259
      %v539 = vunpack.c.l.b16 %v260
      %v540 = vunpack.c.l.b16 %v261
      %v541 = vunpack.c.l.b16 %v262
      %v542 = vunpack.c.l.b16 %v263
      %v543 = vunpack.c.l.b16 %v264
      %v544 = vunpack.c.l.b16 %v265
      %v545 = vunpack.c.l.b16 %v266
      %v546 = vunpack.c.l.b16 %v267
      %v547 = vunpack.c.l.b16 %v268
      %v548 = vunpack.c.l.b16 %v269
      %v549 = vunpack.c.l.b16 %v270
      %v550 = vunpack.c.l.b16 %v271
      %v551 = vunpack.c.l.b16 %v272
      %v552 = vunpack.c.l.b16 %v273
      %v553 = vunpack.c.l.b16 %v274
      %v554 = vunpack.c.l.b16 %v275
      %v555 = vunpack.c.l.b16 %v276
      %v556 = vunpack.c.l.b16 %v277
      %v557 = vunpack.c.l.b16 %v278
      %v558 = vunpack.c.l.b16 %v279
      %v559 = vunpack.c.l.b16 %v280
      %v560 = vunpack.c.l.b16 %v281
      %v561 = vunpack.c.l.b16 %v282
      %v562 = vunpack.c.l.b16 %v283
      %v563 = vunpack.c.l.b16 %v284
      %v564 = vunpack.c.l.b16 %v285
      %v565 = vunpack.c.l.b16 %v286
      %v566 = vunpack.c.l.b16 %v287
      %v567 = vunpack.c.l.b16 %v288
      %v568 = vunpack.c.l.b16 %v289
      %v569 = vunpack.c.l.b16 %v290
      %v570 = vunpack.c.l.b16 %v291
      %v571 = vunpack.c.l.b16 %v292
      %v572 = vunpack.c.l.b16 %v293
      %v573 = vunpack.c.l.b16 %v294
      %v574 = vunpack.c.l.b16 %v295
      %v575 = vunpack.c.l.b16 %v296
      %v576 = vunpack.c.l.b16 %v297
      %v577 = vunpack.c.l.b16 %v298
      %v578 = vunpack.c.l.b16 %v299
      %v579 = vunpack.c.l.b16 %v300
      %v580 = vunpack.c.l.b16 %v301
      %v581 = vunpack.c.l.b16 %v302
      %v582 = vpack.c.b16 %v455, %v454
      %v583 = vpack.c.b16 %v457, %v456
      %v584 = vpack.c.b16 %v459, %v458
      %v585 = vpack.c.b16 %v461, %v460
      %v586 = vpack.c.b16 %v463, %v462
      %v587 = vpack.c.b16 %v465, %v464
      %v588 = vpack.c.b16 %v467, %v466
      %v589 = vpack.c.b16 %v469, %v468
      %v590 = vpack.c.b16 %v471, %v470
      %v591 = vpack.c.b16 %v473, %v472
      %v592 = vpack.c.b16 %v475, %v474
      %v593 = vpack.c.b16 %v477, %v476
      %v594 = vpack.c.b16 %v479, %v478
      %v595 = vpack.c.b16 %v481, %v480
      %v596 = vpack.c.b16 %v483, %v482
      %v597 = vpack.c.b16 %v485, %v484
      %v598 = vpack.c.b16 %v487, %v486
      %v599 = vpack.c.b16 %v489, %v488
      %v600 = vpack.c.b16 %v491, %v490
      %v601 = vpack.c.b16 %v493, %v492
      %v602 = vpack.c.b16 %v495, %v494
      %v603 = vpack.c.b16 %v497, %v496
      %v604 = vpack.c.b16 %v499, %v498
      %v605 = vpack.c.b16 %v501, %v500
      %v606 = vpack.c.b16 %v503, %v502
      %v607 = vpack.c.b16 %v505, %v504
      %v608 = vpack.c.b16 %v507, %v506
      %v609 = vpack.c.b16 %v509, %v508
      %v610 = vpack.c.b16 %v511, %v510
      %v611 = vpack.c.b16 %v513, %v512
      %v612 = vpack.c.b16 %v515, %v514
      %v613 = vpack.c.b16 %v517, %v516
      %v614 = vpack.c.b16 %v519, %v518
      %v615 = vpack.c.b16 %v521, %v520
      %v616 = vpack.c.b16 %v523, %v522
      %v617 = vpack.c.b16 %v525, %v524
      %v618 = vpack.c.b16 %v527, %v526
      %v619 = vpack.c.b16 %v529, %v528
      %v620 = vpack.c.b16 %v531, %v530
      %v621 = vpack.c.b16 %v533, %v532
      %v622 = vpack.c.b16 %v535, %v534
      %v623 = vpack.c.b16 %v537, %v536
      %v624 = vpack.c.b16 %v539, %v538
      %v625 = vpack.c.b16 %v541, %v540
      %v626 = vpack.c.b16 %v543, %v542
      %v627 = vpack.c.b16 %v545, %v544
      %v628 = vpack.c.b16 %v547, %v546
      %v629 = vpack.c.b16 %v549, %v548
      %v630 = vpack.c.b16 %v551, %v550
      %v631 = vpack.c.b16 %v553, %v552
      %v632 = vpack.c.b16 %v555, %v554
      %v633 = vpack.c.b16 %v557, %v556
      %v634 = vpack.c.b16 %v559, %v558
      %v635 = vpack.c.b16 %v561, %v560
      %v636 = vpack.c.b16 %v563, %v562
      %v637 = vpack.c.b16 %v565, %v564
      %v638 = vpack.c.b16 %v567, %v566
      %v639 = vpack.c.b16 %v569, %v568
      %v640 = vpack.c.b16 %v571, %v570
      %v641 = vpack.c.b16 %v573, %v572
      %v642 = vpack.c.b16 %v575, %v574
      %v643 = vpack.c.b16 %v577, %v576
      %v644 = vpack.c.b16 %v579, %v578
      %v645 = vpack.c.b16 %v581, %v580
      %v726 = vunpack.c.l.b16 %v303
      %v727 = vunpack.c.l.b16 %v304
      %v728 = vunpack.c.l.b16 %v305
      %v729 = vunpack.c.l.b16 %v306
      %v730 = vunpack.c.l.b16 %v307
      %v731 = vunpack.c.l.b16 %v308
      %v732 = vunpack.c.l.b16 %v309
      %v733 = vunpack.c.l.b16 %v310
      %v734 = vunpack.c.l.b16 %v311
      %v735 = vunpack.c.l.b16 %v312
      %v736 = vunpack.c.l.b16 %v313
      %v737 = vunpack.c.l.b16 %v314
      %v738 = vunpack.c.l.b16 %v315
      %v739 = vunpack.c.l.b16 %v316
      %v740 = vunpack.c.l.b16 %v317
      %v741 = vunpack.c.l.b16 %v318
      %v742 = vpack.c.b16 %v727, %v726
      %v743 = vpack.c.b16 %v729, %v728
      %v744 = vpack.c.b16 %v731, %v730
      %v745 = vpack.c.b16 %v733, %v732
      %v746 = vpack.c.b16 %v735, %v734
      %v747 = vpack.c.b16 %v737, %v736
      %v748 = vpack.c.b16 %v739, %v738
      %v749 = vpack.c.b16 %v741, %v740
      %758 = vmatprep.subr.bf16.mxu0 0
      %759 = vmatpush1.bf16.msra.mxu0 %v749
      %760 = vmatprep.subr.bf16.mxu0 0
      %761 = vmatpush1.bf16.msra.mxu0 %v748
      %762 = vmatprep.subr.bf16.mxu0 0
      %763 = vmatpush1.bf16.msra.mxu0 %v747
      %764 = vmatprep.subr.bf16.mxu0 0
      %765 = vmatpush1.bf16.msra.mxu0 %v746
      %766 = vmatprep.subr.bf16.mxu0 0
      %767 = vmatpush1.bf16.msra.mxu0 %v745
      %768 = vmatprep.subr.bf16.mxu0 0
      %769 = vmatpush1.bf16.msra.mxu0 %v744
      %770 = vmatprep.subr.bf16.mxu0 0
      %771 = vmatpush1.bf16.msra.mxu0 %v743
      %772 = vmatprep.subr.bf16.mxu0 0
      %773 = vmatpush1.bf16.msra.mxu0 %v742
      %774 = vmatprep.subr.bf16.mxu0 0
      %775 = vmatpush2.bf16.msra.mxu0 0
      %776 = vmatprep.subr.bf16.mxu0 0
      %777 = vmatpush2.bf16.msra.mxu0 0
      %778 = vmatprep.subr.bf16.mxu0 0
      %779 = vmatpush2.bf16.msra.mxu0 0
      %780 = vmatprep.subr.bf16.mxu0 0
      %781 = vmatpush2.bf16.msra.mxu0 0
      %782 = vmatprep.subr.bf16.mxu0 0
      %783 = vmatpush2.bf16.msra.mxu0 0
      %784 = vmatprep.subr.bf16.mxu0 0
      %785 = vmatpush2.bf16.msra.mxu0 0
      %786 = vmatprep.subr.bf16.mxu0 0
      %787 = vmatpush2.bf16.msra.mxu0 0
      %788 = vmatprep.subr.bf16.mxu0 0
      %789 = vmatpush2.bf16.msra.mxu0 0
      %790 = vmatprep.mubr.bf16.mxu0 0
      %791 = vmatmul.mubr.bf16.gmra.mxu0 %v582
      %v792 = vpop.f32.mrf.mxu0
      %v793 = vadd.f32 %v324, %v792
      %v794 = vpop.f32.mrf.mxu0
      %v795 = vpop.f32.mrf.mxu0
      %v796 = vadd.f32 %v324, %v795
      %v797 = vpop.f32.mrf.mxu0
      %798 = vmatprep.mubr.bf16.mxu0 0
      %799 = vmatmul.mubr.bf16.gmra.mxu0 %v583
      %v800 = vpop.f32.mrf.mxu0
      %v801 = vadd.f32 %v324, %v800
      %v802 = vpop.f32.mrf.mxu0
      %v803 = vpop.f32.mrf.mxu0
      %v804 = vadd.f32 %v324, %v803
      %v805 = vpop.f32.mrf.mxu0
      %806 = vmatprep.mubr.bf16.mxu0 0
      %807 = vmatmul.mubr.bf16.gmra.mxu0 %v584
      %v808 = vpop.f32.mrf.mxu0
      %v809 = vadd.f32 %v324, %v808
      %v810 = vpop.f32.mrf.mxu0
      %v811 = vpop.f32.mrf.mxu0
      %v812 = vadd.f32 %v324, %v811
      %v813 = vpop.f32.mrf.mxu0
      %814 = vmatprep.mubr.bf16.mxu0 0
      %815 = vmatmul.mubr.bf16.gmra.mxu0 %v585
      %v816 = vpop.f32.mrf.mxu0
      %v817 = vadd.f32 %v324, %v816
      %v818 = vpop.f32.mrf.mxu0
      %v819 = vpop.f32.mrf.mxu0
      %v820 = vadd.f32 %v324, %v819
      %v821 = vpop.f32.mrf.mxu0
      %822 = vmatprep.mubr.bf16.mxu0 0
      %823 = vmatmul.mubr.bf16.gmra.mxu0 %v586
      %v824 = vpop.f32.mrf.mxu0
      %v825 = vadd.f32 %v324, %v824
      %v826 = vpop.f32.mrf.mxu0
      %v827 = vpop.f32.mrf.mxu0
      %v828 = vadd.f32 %v324, %v827
      %v829 = vpop.f32.mrf.mxu0
      %830 = vmatprep.mubr.bf16.mxu0 0
      %831 = vmatmul.mubr.bf16.gmra.mxu0 %v587
      %v832 = vpop.f32.mrf.mxu0
      %v833 = vadd.f32 %v324, %v832
      %v834 = vpop.f32.mrf.mxu0
      %v835 = vpop.f32.mrf.mxu0
      %v836 = vadd.f32 %v324, %v835
      %v837 = vpop.f32.mrf.mxu0
      %838 = vmatprep.mubr.bf16.mxu0 0
      %839 = vmatmul.mubr.bf16.gmra.mxu0 %v588
      %v840 = vpop.f32.mrf.mxu0
      %v841 = vadd.f32 %v324, %v840
      %v842 = vpop.f32.mrf.mxu0
      %v843 = vpop.f32.mrf.mxu0
      %v844 = vadd.f32 %v324, %v843
      %v845 = vpop.f32.mrf.mxu0
      %846 = vmatprep.mubr.bf16.mxu0 0
      %847 = vmatmul.mubr.bf16.gmra.mxu0 %v589
      %v848 = vpop.f32.mrf.mxu0
      %v849 = vadd.f32 %v324, %v848
      %v850 = vpop.f32.mrf.mxu0
      %v851 = vpop.f32.mrf.mxu0
      %v852 = vadd.f32 %v324, %v851
      %v853 = vpop.f32.mrf.mxu0
      %854 = vmatprep.mubr.bf16.mxu0 0
      %855 = vmatmul.mubr.bf16.gmra.mxu0 %v590
      %v856 = vpop.f32.mrf.mxu0
      %v857 = vadd.f32 %v324, %v856
      %v858 = vpop.f32.mrf.mxu0
      %v859 = vpop.f32.mrf.mxu0
      %v860 = vadd.f32 %v324, %v859
      %v861 = vpop.f32.mrf.mxu0
      %862 = vmatprep.mubr.bf16.mxu0 0
      %863 = vmatmul.mubr.bf16.gmra.mxu0 %v591
      %v864 = vpop.f32.mrf.mxu0
      %v865 = vadd.f32 %v324, %v864
      %v866 = vpop.f32.mrf.mxu0
      %v867 = vpop.f32.mrf.mxu0
      %v868 = vadd.f32 %v324, %v867
      %v869 = vpop.f32.mrf.mxu0
      %870 = vmatprep.mubr.bf16.mxu0 0
      %871 = vmatmul.mubr.bf16.gmra.mxu0 %v592
      %v872 = vpop.f32.mrf.mxu0
      %v873 = vadd.f32 %v324, %v872
      %v874 = vpop.f32.mrf.mxu0
      %v875 = vpop.f32.mrf.mxu0
      %v876 = vadd.f32 %v324, %v875
      %v877 = vpop.f32.mrf.mxu0
      %878 = vmatprep.mubr.bf16.mxu0 0
      %879 = vmatmul.mubr.bf16.gmra.mxu0 %v593
      %v880 = vpop.f32.mrf.mxu0
      %v881 = vadd.f32 %v324, %v880
      %v882 = vpop.f32.mrf.mxu0
      %v883 = vpop.f32.mrf.mxu0
      %v884 = vadd.f32 %v324, %v883
      %v885 = vpop.f32.mrf.mxu0
      %886 = vmatprep.mubr.bf16.mxu0 0
      %887 = vmatmul.mubr.bf16.gmra.mxu0 %v594
      %v888 = vpop.f32.mrf.mxu0
      %v889 = vadd.f32 %v324, %v888
      %v890 = vpop.f32.mrf.mxu0
      %v891 = vpop.f32.mrf.mxu0
      %v892 = vadd.f32 %v324, %v891
      %v893 = vpop.f32.mrf.mxu0
      %894 = vmatprep.mubr.bf16.mxu0 0
      %895 = vmatmul.mubr.bf16.gmra.mxu0 %v595
      %v896 = vpop.f32.mrf.mxu0
      %v897 = vadd.f32 %v324, %v896
      %v898 = vpop.f32.mrf.mxu0
      %v899 = vpop.f32.mrf.mxu0
      %v900 = vadd.f32 %v324, %v899
      %v901 = vpop.f32.mrf.mxu0
      %902 = vmatprep.mubr.bf16.mxu0 0
      %903 = vmatmul.mubr.bf16.gmra.mxu0 %v596
      %v904 = vpop.f32.mrf.mxu0
      %v905 = vadd.f32 %v324, %v904
      %v906 = vpop.f32.mrf.mxu0
      %v907 = vpop.f32.mrf.mxu0
      %v908 = vadd.f32 %v324, %v907
      %v909 = vpop.f32.mrf.mxu0
      %910 = vmatprep.mubr.bf16.mxu0 0
      %911 = vmatmul.mubr.bf16.gmra.mxu0 %v597
      %v912 = vpop.f32.mrf.mxu0
      %v913 = vadd.f32 %v324, %v912
      %v914 = vpop.f32.mrf.mxu0
      %v915 = vpop.f32.mrf.mxu0
      %v916 = vadd.f32 %v324, %v915
      %v917 = vpop.f32.mrf.mxu0
      %918 = vmatprep.mubr.bf16.mxu0 0
      %919 = vmatmul.mubr.bf16.gmra.mxu0 %v598
      %v920 = vpop.f32.mrf.mxu0
      %v921 = vadd.f32 %v324, %v920
      %v922 = vpop.f32.mrf.mxu0
      %v923 = vpop.f32.mrf.mxu0
      %v924 = vadd.f32 %v324, %v923
      %v925 = vpop.f32.mrf.mxu0
      %926 = vmatprep.mubr.bf16.mxu0 0
      %927 = vmatmul.mubr.bf16.gmra.mxu0 %v599
      %v928 = vpop.f32.mrf.mxu0
      %v929 = vadd.f32 %v324, %v928
      %v930 = vpop.f32.mrf.mxu0
      %v931 = vpop.f32.mrf.mxu0
      %v932 = vadd.f32 %v324, %v931
      %v933 = vpop.f32.mrf.mxu0
      %934 = vmatprep.mubr.bf16.mxu0 0
      %935 = vmatmul.mubr.bf16.gmra.mxu0 %v600
      %v936 = vpop.f32.mrf.mxu0
      %v937 = vadd.f32 %v324, %v936
      %v938 = vpop.f32.mrf.mxu0
      %v939 = vpop.f32.mrf.mxu0
      %v940 = vadd.f32 %v324, %v939
      %v941 = vpop.f32.mrf.mxu0
      %942 = vmatprep.mubr.bf16.mxu0 0
      %943 = vmatmul.mubr.bf16.gmra.mxu0 %v601
      %v944 = vpop.f32.mrf.mxu0
      %v945 = vadd.f32 %v324, %v944
      %v946 = vpop.f32.mrf.mxu0
      %v947 = vpop.f32.mrf.mxu0
      %v948 = vadd.f32 %v324, %v947
      %v949 = vpop.f32.mrf.mxu0
      %950 = vmatprep.mubr.bf16.mxu0 0
      %951 = vmatmul.mubr.bf16.gmra.mxu0 %v602
      %v952 = vpop.f32.mrf.mxu0
      %v953 = vadd.f32 %v324, %v952
      %v954 = vpop.f32.mrf.mxu0
      %v955 = vpop.f32.mrf.mxu0
      %v956 = vadd.f32 %v324, %v955
      %v957 = vpop.f32.mrf.mxu0
      %958 = vmatprep.mubr.bf16.mxu0 0
      %959 = vmatmul.mubr.bf16.gmra.mxu0 %v603
      %v960 = vpop.f32.mrf.mxu0
      %v961 = vadd.f32 %v324, %v960
      %v962 = vpop.f32.mrf.mxu0
      %v963 = vpop.f32.mrf.mxu0
      %v964 = vadd.f32 %v324, %v963
      %v965 = vpop.f32.mrf.mxu0
      %966 = vmatprep.mubr.bf16.mxu0 0
      %967 = vmatmul.mubr.bf16.gmra.mxu0 %v604
      %v968 = vpop.f32.mrf.mxu0
      %v969 = vadd.f32 %v324, %v968
      %v970 = vpop.f32.mrf.mxu0
      %v971 = vpop.f32.mrf.mxu0
      %v972 = vadd.f32 %v324, %v971
      %v973 = vpop.f32.mrf.mxu0
      %974 = vmatprep.mubr.bf16.mxu0 0
      %975 = vmatmul.mubr.bf16.gmra.mxu0 %v605
      %v976 = vpop.f32.mrf.mxu0
      %v977 = vadd.f32 %v324, %v976
      %v978 = vpop.f32.mrf.mxu0
      %v979 = vpop.f32.mrf.mxu0
      %v980 = vadd.f32 %v324, %v979
      %v981 = vpop.f32.mrf.mxu0
      %982 = vmatprep.mubr.bf16.mxu0 0
      %983 = vmatmul.mubr.bf16.gmra.mxu0 %v606
      %v984 = vpop.f32.mrf.mxu0
      %v985 = vadd.f32 %v324, %v984
      %v986 = vpop.f32.mrf.mxu0
      %v987 = vpop.f32.mrf.mxu0
      %v988 = vadd.f32 %v324, %v987
      %v989 = vpop.f32.mrf.mxu0
      %990 = vmatprep.mubr.bf16.mxu0 0
      %991 = vmatmul.mubr.bf16.gmra.mxu0 %v607
      %v992 = vpop.f32.mrf.mxu0
      %v993 = vadd.f32 %v324, %v992
      %v994 = vpop.f32.mrf.mxu0
      %v995 = vpop.f32.mrf.mxu0
      %v996 = vadd.f32 %v324, %v995
      %v997 = vpop.f32.mrf.mxu0
      %998 = vmatprep.mubr.bf16.mxu0 0
      %999 = vmatmul.mubr.bf16.gmra.mxu0 %v608
      %v1000 = vpop.f32.mrf.mxu0
      %v1001 = vadd.f32 %v324, %v1000
      %v1002 = vpop.f32.mrf.mxu0
      %v1003 = vpop.f32.mrf.mxu0
      %v1004 = vadd.f32 %v324, %v1003
      %v1005 = vpop.f32.mrf.mxu0
      %1006 = vmatprep.mubr.bf16.mxu0 0
      %1007 = vmatmul.mubr.bf16.gmra.mxu0 %v609
      %v1008 = vpop.f32.mrf.mxu0
      %v1009 = vadd.f32 %v324, %v1008
      %v1010 = vpop.f32.mrf.mxu0
      %v1011 = vpop.f32.mrf.mxu0
      %v1012 = vadd.f32 %v324, %v1011
      %v1013 = vpop.f32.mrf.mxu0
      %1014 = vmatprep.mubr.bf16.mxu0 0
      %1015 = vmatmul.mubr.bf16.gmra.mxu0 %v610
      %v1016 = vpop.f32.mrf.mxu0
      %v1017 = vadd.f32 %v324, %v1016
      %v1018 = vpop.f32.mrf.mxu0
      %v1019 = vpop.f32.mrf.mxu0
      %v1020 = vadd.f32 %v324, %v1019
      %v1021 = vpop.f32.mrf.mxu0
      %1022 = vmatprep.mubr.bf16.mxu0 0
      %1023 = vmatmul.mubr.bf16.gmra.mxu0 %v611
      %v1024 = vpop.f32.mrf.mxu0
      %v1025 = vadd.f32 %v324, %v1024
      %v1026 = vpop.f32.mrf.mxu0
      %v1027 = vpop.f32.mrf.mxu0
      %v1028 = vadd.f32 %v324, %v1027
      %v1029 = vpop.f32.mrf.mxu0
      %1030 = vmatprep.mubr.bf16.mxu0 0
      %1031 = vmatmul.mubr.bf16.gmra.mxu0 %v612
      %v1032 = vpop.f32.mrf.mxu0
      %v1033 = vadd.f32 %v324, %v1032
      %v1034 = vpop.f32.mrf.mxu0
      %v1035 = vpop.f32.mrf.mxu0
      %v1036 = vadd.f32 %v324, %v1035
      %v1037 = vpop.f32.mrf.mxu0
      %1038 = vmatprep.mubr.bf16.mxu0 0
      %1039 = vmatmul.mubr.bf16.gmra.mxu0 %v613
      %v1040 = vpop.f32.mrf.mxu0
      %v1041 = vadd.f32 %v324, %v1040
      %v1042 = vpop.f32.mrf.mxu0
      %v1043 = vpop.f32.mrf.mxu0
      %v1044 = vadd.f32 %v324, %v1043
      %v1045 = vpop.f32.mrf.mxu0
      %1046 = vmatprep.mubr.bf16.mxu0 0
      %1047 = vmatmul.mubr.bf16.gmra.mxu0 %v614
      %v1048 = vpop.f32.mrf.mxu0
      %v1049 = vadd.f32 %v324, %v1048
      %v1050 = vpop.f32.mrf.mxu0
      %v1051 = vpop.f32.mrf.mxu0
      %v1052 = vadd.f32 %v324, %v1051
      %v1053 = vpop.f32.mrf.mxu0
      %1054 = vmatprep.mubr.bf16.mxu0 0
      %1055 = vmatmul.mubr.bf16.gmra.mxu0 %v615
      %v1056 = vpop.f32.mrf.mxu0
      %v1057 = vadd.f32 %v324, %v1056
      %v1058 = vpop.f32.mrf.mxu0
      %v1059 = vpop.f32.mrf.mxu0
      %v1060 = vadd.f32 %v324, %v1059
      %v1061 = vpop.f32.mrf.mxu0
      %1062 = vmatprep.mubr.bf16.mxu0 0
      %1063 = vmatmul.mubr.bf16.gmra.mxu0 %v616
      %v1064 = vpop.f32.mrf.mxu0
      %v1065 = vadd.f32 %v324, %v1064
      %v1066 = vpop.f32.mrf.mxu0
      %v1067 = vpop.f32.mrf.mxu0
      %v1068 = vadd.f32 %v324, %v1067
      %v1069 = vpop.f32.mrf.mxu0
      %1070 = vmatprep.mubr.bf16.mxu0 0
      %1071 = vmatmul.mubr.bf16.gmra.mxu0 %v617
      %v1072 = vpop.f32.mrf.mxu0
      %v1073 = vadd.f32 %v324, %v1072
      %v1074 = vpop.f32.mrf.mxu0
      %v1075 = vpop.f32.mrf.mxu0
      %v1076 = vadd.f32 %v324, %v1075
      %v1077 = vpop.f32.mrf.mxu0
      %1078 = vmatprep.mubr.bf16.mxu0 0
      %1079 = vmatmul.mubr.bf16.gmra.mxu0 %v618
      %v1080 = vpop.f32.mrf.mxu0
      %v1081 = vadd.f32 %v324, %v1080
      %v1082 = vpop.f32.mrf.mxu0
      %v1083 = vpop.f32.mrf.mxu0
      %v1084 = vadd.f32 %v324, %v1083
      %v1085 = vpop.f32.mrf.mxu0
      %1086 = vmatprep.mubr.bf16.mxu0 0
      %1087 = vmatmul.mubr.bf16.gmra.mxu0 %v619
      %v1088 = vpop.f32.mrf.mxu0
      %v1089 = vadd.f32 %v324, %v1088
      %v1090 = vpop.f32.mrf.mxu0
      %v1091 = vpop.f32.mrf.mxu0
      %v1092 = vadd.f32 %v324, %v1091
      %v1093 = vpop.f32.mrf.mxu0
      %1094 = vmatprep.mubr.bf16.mxu0 0
      %1095 = vmatmul.mubr.bf16.gmra.mxu0 %v620
      %v1096 = vpop.f32.mrf.mxu0
      %v1097 = vadd.f32 %v324, %v1096
      %v1098 = vpop.f32.mrf.mxu0
      %v1099 = vpop.f32.mrf.mxu0
      %v1100 = vadd.f32 %v324, %v1099
      %v1101 = vpop.f32.mrf.mxu0
      %1102 = vmatprep.mubr.bf16.mxu0 0
      %1103 = vmatmul.mubr.bf16.gmra.mxu0 %v621
      %v1104 = vpop.f32.mrf.mxu0
      %v1105 = vadd.f32 %v324, %v1104
      %v1106 = vpop.f32.mrf.mxu0
      %v1107 = vpop.f32.mrf.mxu0
      %v1108 = vadd.f32 %v324, %v1107
      %v1109 = vpop.f32.mrf.mxu0
      %1110 = vmatprep.mubr.bf16.mxu0 0
      %1111 = vmatmul.mubr.bf16.gmra.mxu0 %v622
      %v1112 = vpop.f32.mrf.mxu0
      %v1113 = vadd.f32 %v324, %v1112
      %v1114 = vpop.f32.mrf.mxu0
      %v1115 = vpop.f32.mrf.mxu0
      %v1116 = vadd.f32 %v324, %v1115
      %v1117 = vpop.f32.mrf.mxu0
      %1118 = vmatprep.mubr.bf16.mxu0 0
      %1119 = vmatmul.mubr.bf16.gmra.mxu0 %v623
      %v1120 = vpop.f32.mrf.mxu0
      %v1121 = vadd.f32 %v324, %v1120
      %v1122 = vpop.f32.mrf.mxu0
      %v1123 = vpop.f32.mrf.mxu0
      %v1124 = vadd.f32 %v324, %v1123
      %v1125 = vpop.f32.mrf.mxu0
      %1126 = vmatprep.mubr.bf16.mxu0 0
      %1127 = vmatmul.mubr.bf16.gmra.mxu0 %v624
      %v1128 = vpop.f32.mrf.mxu0
      %v1129 = vadd.f32 %v324, %v1128
      %v1130 = vpop.f32.mrf.mxu0
      %v1131 = vpop.f32.mrf.mxu0
      %v1132 = vadd.f32 %v324, %v1131
      %v1133 = vpop.f32.mrf.mxu0
      %1134 = vmatprep.mubr.bf16.mxu0 0
      %1135 = vmatmul.mubr.bf16.gmra.mxu0 %v625
      %v1136 = vpop.f32.mrf.mxu0
      %v1137 = vadd.f32 %v324, %v1136
      %v1138 = vpop.f32.mrf.mxu0
      %v1139 = vpop.f32.mrf.mxu0
      %v1140 = vadd.f32 %v324, %v1139
      %v1141 = vpop.f32.mrf.mxu0
      %1142 = vmatprep.mubr.bf16.mxu0 0
      %1143 = vmatmul.mubr.bf16.gmra.mxu0 %v626
      %v1144 = vpop.f32.mrf.mxu0
      %v1145 = vadd.f32 %v324, %v1144
      %v1146 = vpop.f32.mrf.mxu0
      %v1147 = vpop.f32.mrf.mxu0
      %v1148 = vadd.f32 %v324, %v1147
      %v1149 = vpop.f32.mrf.mxu0
      %1150 = vmatprep.mubr.bf16.mxu0 0
      %1151 = vmatmul.mubr.bf16.gmra.mxu0 %v627
      %v1152 = vpop.f32.mrf.mxu0
      %v1153 = vadd.f32 %v324, %v1152
      %v1154 = vpop.f32.mrf.mxu0
      %v1155 = vpop.f32.mrf.mxu0
      %v1156 = vadd.f32 %v324, %v1155
      %v1157 = vpop.f32.mrf.mxu0
      %1158 = vmatprep.mubr.bf16.mxu0 0
      %1159 = vmatmul.mubr.bf16.gmra.mxu0 %v628
      %v1160 = vpop.f32.mrf.mxu0
      %v1161 = vadd.f32 %v324, %v1160
      %v1162 = vpop.f32.mrf.mxu0
      %v1163 = vpop.f32.mrf.mxu0
      %v1164 = vadd.f32 %v324, %v1163
      %v1165 = vpop.f32.mrf.mxu0
      %1166 = vmatprep.mubr.bf16.mxu0 0
      %1167 = vmatmul.mubr.bf16.gmra.mxu0 %v629
      %v1168 = vpop.f32.mrf.mxu0
      %v1169 = vadd.f32 %v324, %v1168
      %v1170 = vpop.f32.mrf.mxu0
      %v1171 = vpop.f32.mrf.mxu0
      %v1172 = vadd.f32 %v324, %v1171
      %v1173 = vpop.f32.mrf.mxu0
      %1174 = vmatprep.mubr.bf16.mxu0 0
      %1175 = vmatmul.mubr.bf16.gmra.mxu0 %v630
      %v1176 = vpop.f32.mrf.mxu0
      %v1177 = vadd.f32 %v324, %v1176
      %v1178 = vpop.f32.mrf.mxu0
      %v1179 = vpop.f32.mrf.mxu0
      %v1180 = vadd.f32 %v324, %v1179
      %v1181 = vpop.f32.mrf.mxu0
      %1182 = vmatprep.mubr.bf16.mxu0 0
      %1183 = vmatmul.mubr.bf16.gmra.mxu0 %v631
      %v1184 = vpop.f32.mrf.mxu0
      %v1185 = vadd.f32 %v324, %v1184
      %v1186 = vpop.f32.mrf.mxu0
      %v1187 = vpop.f32.mrf.mxu0
      %v1188 = vadd.f32 %v324, %v1187
      %v1189 = vpop.f32.mrf.mxu0
      %1190 = vmatprep.mubr.bf16.mxu0 0
      %1191 = vmatmul.mubr.bf16.gmra.mxu0 %v632
      %v1192 = vpop.f32.mrf.mxu0
      %v1193 = vadd.f32 %v324, %v1192
      %v1194 = vpop.f32.mrf.mxu0
      %v1195 = vpop.f32.mrf.mxu0
      %v1196 = vadd.f32 %v324, %v1195
      %v1197 = vpop.f32.mrf.mxu0
      %1198 = vmatprep.mubr.bf16.mxu0 0
      %1199 = vmatmul.mubr.bf16.gmra.mxu0 %v633
      %v1200 = vpop.f32.mrf.mxu0
      %v1201 = vadd.f32 %v324, %v1200
      %v1202 = vpop.f32.mrf.mxu0
      %v1203 = vpop.f32.mrf.mxu0
      %v1204 = vadd.f32 %v324, %v1203
      %v1205 = vpop.f32.mrf.mxu0
      %1206 = vmatprep.mubr.bf16.mxu0 0
      %1207 = vmatmul.mubr.bf16.gmra.mxu0 %v634
      %v1208 = vpop.f32.mrf.mxu0
      %v1209 = vadd.f32 %v324, %v1208
      %v1210 = vpop.f32.mrf.mxu0
      %v1211 = vpop.f32.mrf.mxu0
      %v1212 = vadd.f32 %v324, %v1211
      %v1213 = vpop.f32.mrf.mxu0
      %1214 = vmatprep.mubr.bf16.mxu0 0
      %1215 = vmatmul.mubr.bf16.gmra.mxu0 %v635
      %v1216 = vpop.f32.mrf.mxu0
      %v1217 = vadd.f32 %v324, %v1216
      %v1218 = vpop.f32.mrf.mxu0
      %v1219 = vpop.f32.mrf.mxu0
      %v1220 = vadd.f32 %v324, %v1219
      %v1221 = vpop.f32.mrf.mxu0
      %1222 = vmatprep.mubr.bf16.mxu0 0
      %1223 = vmatmul.mubr.bf16.gmra.mxu0 %v636
      %v1224 = vpop.f32.mrf.mxu0
      %v1225 = vadd.f32 %v324, %v1224
      %v1226 = vpop.f32.mrf.mxu0
      %v1227 = vpop.f32.mrf.mxu0
      %v1228 = vadd.f32 %v324, %v1227
      %v1229 = vpop.f32.mrf.mxu0
      %1230 = vmatprep.mubr.bf16.mxu0 0
      %1231 = vmatmul.mubr.bf16.gmra.mxu0 %v637
      %v1232 = vpop.f32.mrf.mxu0
      %v1233 = vadd.f32 %v324, %v1232
      %v1234 = vpop.f32.mrf.mxu0
      %v1235 = vpop.f32.mrf.mxu0
      %v1236 = vadd.f32 %v324, %v1235
      %v1237 = vpop.f32.mrf.mxu0
      %1238 = vmatprep.mubr.bf16.mxu0 0
      %1239 = vmatmul.mubr.bf16.gmra.mxu0 %v638
      %v1240 = vpop.f32.mrf.mxu0
      %v1241 = vadd.f32 %v324, %v1240
      %v1242 = vpop.f32.mrf.mxu0
      %v1243 = vpop.f32.mrf.mxu0
      %v1244 = vadd.f32 %v324, %v1243
      %v1245 = vpop.f32.mrf.mxu0
      %1246 = vmatprep.mubr.bf16.mxu0 0
      %1247 = vmatmul.mubr.bf16.gmra.mxu0 %v639
      %v1248 = vpop.f32.mrf.mxu0
      %v1249 = vadd.f32 %v324, %v1248
      %v1250 = vpop.f32.mrf.mxu0
      %v1251 = vpop.f32.mrf.mxu0
      %v1252 = vadd.f32 %v324, %v1251
      %v1253 = vpop.f32.mrf.mxu0
      %1254 = vmatprep.mubr.bf16.mxu0 0
      %1255 = vmatmul.mubr.bf16.gmra.mxu0 %v640
      %v1256 = vpop.f32.mrf.mxu0
      %v1257 = vadd.f32 %v324, %v1256
      %v1258 = vpop.f32.mrf.mxu0
      %v1259 = vpop.f32.mrf.mxu0
      %v1260 = vadd.f32 %v324, %v1259
      %v1261 = vpop.f32.mrf.mxu0
      %1262 = vmatprep.mubr.bf16.mxu0 0
      %1263 = vmatmul.mubr.bf16.gmra.mxu0 %v641
      %v1264 = vpop.f32.mrf.mxu0
      %v1265 = vadd.f32 %v324, %v1264
      %v1266 = vpop.f32.mrf.mxu0
      %v1267 = vpop.f32.mrf.mxu0
      %v1268 = vadd.f32 %v324, %v1267
      %v1269 = vpop.f32.mrf.mxu0
      %1270 = vmatprep.mubr.bf16.mxu0 0
      %1271 = vmatmul.mubr.bf16.gmra.mxu0 %v642
      %v1272 = vpop.f32.mrf.mxu0
      %v1273 = vadd.f32 %v324, %v1272
      %v1274 = vpop.f32.mrf.mxu0
      %v1275 = vpop.f32.mrf.mxu0
      %v1276 = vadd.f32 %v324, %v1275
      %v1277 = vpop.f32.mrf.mxu0
      %1278 = vmatprep.mubr.bf16.mxu0 0
      %1279 = vmatmul.mubr.bf16.gmra.mxu0 %v643
      %v1280 = vpop.f32.mrf.mxu0
      %v1281 = vadd.f32 %v324, %v1280
      %v1282 = vpop.f32.mrf.mxu0
      %v1283 = vpop.f32.mrf.mxu0
      %v1284 = vadd.f32 %v324, %v1283
      %v1285 = vpop.f32.mrf.mxu0
      %1286 = vmatprep.mubr.bf16.mxu0 0
      %1287 = vmatmul.mubr.bf16.gmra.mxu0 %v644
      %v1288 = vpop.f32.mrf.mxu0
      %v1289 = vadd.f32 %v324, %v1288
      %v1290 = vpop.f32.mrf.mxu0
      %v1291 = vpop.f32.mrf.mxu0
      %v1292 = vadd.f32 %v324, %v1291
      %v1293 = vpop.f32.mrf.mxu0
      %1294 = vmatprep.mubr.bf16.mxu0 0
      %1295 = vmatmul.mubr.bf16.gmra.mxu0 %v645
      %v1296 = vpop.f32.mrf.mxu0
      %v1297 = vadd.f32 %v324, %v1296
      %v1298 = vpop.f32.mrf.mxu0
      %v1299 = vpop.f32.mrf.mxu0
      %v1300 = vadd.f32 %v324, %v1299
      %v1301 = vpop.f32.mrf.mxu0
      %1302 = vdwg.mxu0
      %v1303 = vmax.f32 %v793, 0.0
      %v1304 = vmax.f32 %v796, 0.0
      %v1305 = vmax.f32 %v801, 0.0
      %v1306 = vmax.f32 %v804, 0.0
      %v1307 = vmax.f32 %v809, 0.0
      %v1308 = vmax.f32 %v812, 0.0
      %v1309 = vmax.f32 %v817, 0.0
      %v1310 = vmax.f32 %v820, 0.0
      %v1311 = vmax.f32 %v825, 0.0
      %v1312 = vmax.f32 %v828, 0.0
      %v1313 = vmax.f32 %v833, 0.0
      %v1314 = vmax.f32 %v836, 0.0
      %v1315 = vmax.f32 %v841, 0.0
      %v1316 = vmax.f32 %v844, 0.0
      %v1317 = vmax.f32 %v849, 0.0
      %v1318 = vmax.f32 %v852, 0.0
      %v1319 = vmax.f32 %v857, 0.0
      %v1320 = vmax.f32 %v860, 0.0
      %v1321 = vmax.f32 %v865, 0.0
      %v1322 = vmax.f32 %v868, 0.0
      %v1323 = vmax.f32 %v873, 0.0
      %v1324 = vmax.f32 %v876, 0.0
      %v1325 = vmax.f32 %v881, 0.0
      %v1326 = vmax.f32 %v884, 0.0
      %v1327 = vmax.f32 %v889, 0.0
      %v1328 = vmax.f32 %v892, 0.0
      %v1329 = vmax.f32 %v897, 0.0
      %v1330 = vmax.f32 %v900, 0.0
      %v1331 = vmax.f32 %v905, 0.0
      %v1332 = vmax.f32 %v908, 0.0
      %v1333 = vmax.f32 %v913, 0.0
      %v1334 = vmax.f32 %v916, 0.0
      %v1335 = vmax.f32 %v921, 0.0
      %v1336 = vmax.f32 %v924, 0.0
      %v1337 = vmax.f32 %v929, 0.0
      %v1338 = vmax.f32 %v932, 0.0
      %v1339 = vmax.f32 %v937, 0.0
      %v1340 = vmax.f32 %v940, 0.0
      %v1341 = vmax.f32 %v945, 0.0
      %v1342 = vmax.f32 %v948, 0.0
      %v1343 = vmax.f32 %v953, 0.0
      %v1344 = vmax.f32 %v956, 0.0
      %v1345 = vmax.f32 %v961, 0.0
      %v1346 = vmax.f32 %v964, 0.0
      %v1347 = vmax.f32 %v969, 0.0
      %v1348 = vmax.f32 %v972, 0.0
      %v1349 = vmax.f32 %v977, 0.0
      %v1350 = vmax.f32 %v980, 0.0
      %v1351 = vmax.f32 %v985, 0.0
      %v1352 = vmax.f32 %v988, 0.0
      %v1353 = vmax.f32 %v993, 0.0
      %v1354 = vmax.f32 %v996, 0.0
      %v1355 = vmax.f32 %v1001, 0.0
      %v1356 = vmax.f32 %v1004, 0.0
      %v1357 = vmax.f32 %v1009, 0.0
      %v1358 = vmax.f32 %v1012, 0.0
      %v1359 = vmax.f32 %v1017, 0.0
      %v1360 = vmax.f32 %v1020, 0.0
      %v1361 = vmax.f32 %v1025, 0.0
      %v1362 = vmax.f32 %v1028, 0.0
      %v1363 = vmax.f32 %v1033, 0.0
      %v1364 = vmax.f32 %v1036, 0.0
      %v1365 = vmax.f32 %v1041, 0.0
      %v1366 = vmax.f32 %v1044, 0.0
      %v1367 = vmax.f32 %v1049, 0.0
      %v1368 = vmax.f32 %v1052, 0.0
      %v1369 = vmax.f32 %v1057, 0.0
      %v1370 = vmax.f32 %v1060, 0.0
      %v1371 = vmax.f32 %v1065, 0.0
      %v1372 = vmax.f32 %v1068, 0.0
      %v1373 = vmax.f32 %v1073, 0.0
      %v1374 = vmax.f32 %v1076, 0.0
      %v1375 = vmax.f32 %v1081, 0.0
      %v1376 = vmax.f32 %v1084, 0.0
      %v1377 = vmax.f32 %v1089, 0.0
      %v1378 = vmax.f32 %v1092, 0.0
      %v1379 = vmax.f32 %v1097, 0.0
      %v1380 = vmax.f32 %v1100, 0.0
      %v1381 = vmax.f32 %v1105, 0.0
      %v1382 = vmax.f32 %v1108, 0.0
      %v1383 = vmax.f32 %v1113, 0.0
      %v1384 = vmax.f32 %v1116, 0.0
      %v1385 = vmax.f32 %v1121, 0.0
      %v1386 = vmax.f32 %v1124, 0.0
      %v1387 = vmax.f32 %v1129, 0.0
      %v1388 = vmax.f32 %v1132, 0.0
      %v1389 = vmax.f32 %v1137, 0.0
      %v1390 = vmax.f32 %v1140, 0.0
      %v1391 = vmax.f32 %v1145, 0.0
      %v1392 = vmax.f32 %v1148, 0.0
      %v1393 = vmax.f32 %v1153, 0.0
      %v1394 = vmax.f32 %v1156, 0.0
      %v1395 = vmax.f32 %v1161, 0.0
      %v1396 = vmax.f32 %v1164, 0.0
      %v1397 = vmax.f32 %v1169, 0.0
      %v1398 = vmax.f32 %v1172, 0.0
      %v1399 = vmax.f32 %v1177, 0.0
      %v1400 = vmax.f32 %v1180, 0.0
      %v1401 = vmax.f32 %v1185, 0.0
      %v1402 = vmax.f32 %v1188, 0.0
      %v1403 = vmax.f32 %v1193, 0.0
      %v1404 = vmax.f32 %v1196, 0.0
      %v1405 = vmax.f32 %v1201, 0.0
      %v1406 = vmax.f32 %v1204, 0.0
      %v1407 = vmax.f32 %v1209, 0.0
      %v1408 = vmax.f32 %v1212, 0.0
      %v1409 = vmax.f32 %v1217, 0.0
      %v1410 = vmax.f32 %v1220, 0.0
      %v1411 = vmax.f32 %v1225, 0.0
      %v1412 = vmax.f32 %v1228, 0.0
      %v1413 = vmax.f32 %v1233, 0.0
      %v1414 = vmax.f32 %v1236, 0.0
      %v1415 = vmax.f32 %v1241, 0.0
      %v1416 = vmax.f32 %v1244, 0.0
      %v1417 = vmax.f32 %v1249, 0.0
      %v1418 = vmax.f32 %v1252, 0.0
      %v1419 = vmax.f32 %v1257, 0.0
      %v1420 = vmax.f32 %v1260, 0.0
      %v1421 = vmax.f32 %v1265, 0.0
      %v1422 = vmax.f32 %v1268, 0.0
      %v1423 = vmax.f32 %v1273, 0.0
      %v1424 = vmax.f32 %v1276, 0.0
      %v1425 = vmax.f32 %v1281, 0.0
      %v1426 = vmax.f32 %v1284, 0.0
      %v1427 = vmax.f32 %v1289, 0.0
      %v1428 = vmax.f32 %v1292, 0.0
      %v1429 = vmax.f32 %v1297, 0.0
      %v1430 = vmax.f32 %v1300, 0.0
      %v1431 = vpack.c.bf16 %v1304, %v1303
      %v1432 = vpack.c.bf16 %v1306, %v1305
      %v1433 = vpack.c.bf16 %v1308, %v1307
      %v1434 = vpack.c.bf16 %v1310, %v1309
      %v1435 = vpack.c.bf16 %v1312, %v1311
      %v1436 = vpack.c.bf16 %v1314, %v1313
      %v1437 = vpack.c.bf16 %v1316, %v1315
      %v1438 = vpack.c.bf16 %v1318, %v1317
      %v1439 = vpack.c.bf16 %v1320, %v1319
      %v1440 = vpack.c.bf16 %v1322, %v1321
      %v1441 = vpack.c.bf16 %v1324, %v1323
      %v1442 = vpack.c.bf16 %v1326, %v1325
      %v1443 = vpack.c.bf16 %v1328, %v1327
      %v1444 = vpack.c.bf16 %v1330, %v1329
      %v1445 = vpack.c.bf16 %v1332, %v1331
      %v1446 = vpack.c.bf16 %v1334, %v1333
      %v1447 = vpack.c.bf16 %v1336, %v1335
      %v1448 = vpack.c.bf16 %v1338, %v1337
      %v1449 = vpack.c.bf16 %v1340, %v1339
      %v1450 = vpack.c.bf16 %v1342, %v1341
      %v1451 = vpack.c.bf16 %v1344, %v1343
      %v1452 = vpack.c.bf16 %v1346, %v1345
      %v1453 = vpack.c.bf16 %v1348, %v1347
      %v1454 = vpack.c.bf16 %v1350, %v1349
      %v1455 = vpack.c.bf16 %v1352, %v1351
      %v1456 = vpack.c.bf16 %v1354, %v1353
      %v1457 = vpack.c.bf16 %v1356, %v1355
      %v1458 = vpack.c.bf16 %v1358, %v1357
      %v1459 = vpack.c.bf16 %v1360, %v1359
      %v1460 = vpack.c.bf16 %v1362, %v1361
      %v1461 = vpack.c.bf16 %v1364, %v1363
      %v1462 = vpack.c.bf16 %v1366, %v1365
      %v1463 = vpack.c.bf16 %v1368, %v1367
      %v1464 = vpack.c.bf16 %v1370, %v1369
      %v1465 = vpack.c.bf16 %v1372, %v1371
      %v1466 = vpack.c.bf16 %v1374, %v1373
      %v1467 = vpack.c.bf16 %v1376, %v1375
      %v1468 = vpack.c.bf16 %v1378, %v1377
      %v1469 = vpack.c.bf16 %v1380, %v1379
      %v1470 = vpack.c.bf16 %v1382, %v1381
      %v1471 = vpack.c.bf16 %v1384, %v1383
      %v1472 = vpack.c.bf16 %v1386, %v1385
      %v1473 = vpack.c.bf16 %v1388, %v1387
      %v1474 = vpack.c.bf16 %v1390, %v1389
      %v1475 = vpack.c.bf16 %v1392, %v1391
      %v1476 = vpack.c.bf16 %v1394, %v1393
      %v1477 = vpack.c.bf16 %v1396, %v1395
      %v1478 = vpack.c.bf16 %v1398, %v1397
      %v1479 = vpack.c.bf16 %v1400, %v1399
      %v1480 = vpack.c.bf16 %v1402, %v1401
      %v1481 = vpack.c.bf16 %v1404, %v1403
      %v1482 = vpack.c.bf16 %v1406, %v1405
      %v1483 = vpack.c.bf16 %v1408, %v1407
      %v1484 = vpack.c.bf16 %v1410, %v1409
      %v1485 = vpack.c.bf16 %v1412, %v1411
      %v1486 = vpack.c.bf16 %v1414, %v1413
      %v1487 = vpack.c.bf16 %v1416, %v1415
      %v1488 = vpack.c.bf16 %v1418, %v1417
      %v1489 = vpack.c.bf16 %v1420, %v1419
      %v1490 = vpack.c.bf16 %v1422, %v1421
      %v1491 = vpack.c.bf16 %v1424, %v1423
      %v1492 = vpack.c.bf16 %v1426, %v1425
      %v1493 = vpack.c.bf16 %v1428, %v1427
      %v1494 = vpack.c.bf16 %v1430, %v1429
      %v1559 = vunpack.c.l.b16 %v1431
      %v1560 = vunpack.c.h.b16 %v1431
      %v1561 = vunpack.c.l.b16 %v1432
      %v1562 = vunpack.c.h.b16 %v1432
      %v1563 = vunpack.c.l.b16 %v1433
      %v1564 = vunpack.c.h.b16 %v1433
      %v1565 = vunpack.c.l.b16 %v1434
      %v1566 = vunpack.c.h.b16 %v1434
      %v1567 = vunpack.c.l.b16 %v1435
      %v1568 = vunpack.c.h.b16 %v1435
      %v1569 = vunpack.c.l.b16 %v1436
      %v1570 = vunpack.c.h.b16 %v1436
      %v1571 = vunpack.c.l.b16 %v1437
      %v1572 = vunpack.c.h.b16 %v1437
      %v1573 = vunpack.c.l.b16 %v1438
      %v1574 = vunpack.c.h.b16 %v1438
      %v1575 = vunpack.c.l.b16 %v1439
      %v1576 = vunpack.c.h.b16 %v1439
      %v1577 = vunpack.c.l.b16 %v1440
      %v1578 = vunpack.c.h.b16 %v1440
      %v1579 = vunpack.c.l.b16 %v1441
      %v1580 = vunpack.c.h.b16 %v1441
      %v1581 = vunpack.c.l.b16 %v1442
      %v1582 = vunpack.c.h.b16 %v1442
      %v1583 = vunpack.c.l.b16 %v1443
      %v1584 = vunpack.c.h.b16 %v1443
      %v1585 = vunpack.c.l.b16 %v1444
      %v1586 = vunpack.c.h.b16 %v1444
      %v1587 = vunpack.c.l.b16 %v1445
      %v1588 = vunpack.c.h.b16 %v1445
      %v1589 = vunpack.c.l.b16 %v1446
      %v1590 = vunpack.c.h.b16 %v1446
      %v1591 = vunpack.c.l.b16 %v1447
      %v1592 = vunpack.c.h.b16 %v1447
      %v1593 = vunpack.c.l.b16 %v1448
      %v1594 = vunpack.c.h.b16 %v1448
      %v1595 = vunpack.c.l.b16 %v1449
      %v1596 = vunpack.c.h.b16 %v1449
      %v1597 = vunpack.c.l.b16 %v1450
      %v1598 = vunpack.c.h.b16 %v1450
      %v1599 = vunpack.c.l.b16 %v1451
      %v1600 = vunpack.c.h.b16 %v1451
      %v1601 = vunpack.c.l.b16 %v1452
      %v1602 = vunpack.c.h.b16 %v1452
      %v1603 = vunpack.c.l.b16 %v1453
      %v1604 = vunpack.c.h.b16 %v1453
      %v1605 = vunpack.c.l.b16 %v1454
      %v1606 = vunpack.c.h.b16 %v1454
      %v1607 = vunpack.c.l.b16 %v1455
      %v1608 = vunpack.c.h.b16 %v1455
      %v1609 = vunpack.c.l.b16 %v1456
      %v1610 = vunpack.c.h.b16 %v1456
      %v1611 = vunpack.c.l.b16 %v1457
      %v1612 = vunpack.c.h.b16 %v1457
      %v1613 = vunpack.c.l.b16 %v1458
      %v1614 = vunpack.c.h.b16 %v1458
      %v1615 = vunpack.c.l.b16 %v1459
      %v1616 = vunpack.c.h.b16 %v1459
      %v1617 = vunpack.c.l.b16 %v1460
      %v1618 = vunpack.c.h.b16 %v1460
      %v1619 = vunpack.c.l.b16 %v1461
      %v1620 = vunpack.c.h.b16 %v1461
      %v1621 = vunpack.c.l.b16 %v1462
      %v1622 = vunpack.c.h.b16 %v1462
      %v1623 = vunpack.c.l.b16 %v1463
      %v1624 = vunpack.c.h.b16 %v1463
      %v1625 = vunpack.c.l.b16 %v1464
      %v1626 = vunpack.c.h.b16 %v1464
      %v1627 = vunpack.c.l.b16 %v1465
      %v1628 = vunpack.c.h.b16 %v1465
      %v1629 = vunpack.c.l.b16 %v1466
      %v1630 = vunpack.c.h.b16 %v1466
      %v1631 = vunpack.c.l.b16 %v1467
      %v1632 = vunpack.c.h.b16 %v1467
      %v1633 = vunpack.c.l.b16 %v1468
      %v1634 = vunpack.c.h.b16 %v1468
      %v1635 = vunpack.c.l.b16 %v1469
      %v1636 = vunpack.c.h.b16 %v1469
      %v1637 = vunpack.c.l.b16 %v1470
      %v1638 = vunpack.c.h.b16 %v1470
      %v1639 = vunpack.c.l.b16 %v1471
      %v1640 = vunpack.c.h.b16 %v1471
      %v1641 = vunpack.c.l.b16 %v1472
      %v1642 = vunpack.c.h.b16 %v1472
      %v1643 = vunpack.c.l.b16 %v1473
      %v1644 = vunpack.c.h.b16 %v1473
      %v1645 = vunpack.c.l.b16 %v1474
      %v1646 = vunpack.c.h.b16 %v1474
      %v1647 = vunpack.c.l.b16 %v1475
      %v1648 = vunpack.c.h.b16 %v1475
      %v1649 = vunpack.c.l.b16 %v1476
      %v1650 = vunpack.c.h.b16 %v1476
      %v1651 = vunpack.c.l.b16 %v1477
      %v1652 = vunpack.c.h.b16 %v1477
      %v1653 = vunpack.c.l.b16 %v1478
      %v1654 = vunpack.c.h.b16 %v1478
      %v1655 = vunpack.c.l.b16 %v1479
      %v1656 = vunpack.c.h.b16 %v1479
      %v1657 = vunpack.c.l.b16 %v1480
      %v1658 = vunpack.c.h.b16 %v1480
      %v1659 = vunpack.c.l.b16 %v1481
      %v1660 = vunpack.c.h.b16 %v1481
      %v1661 = vunpack.c.l.b16 %v1482
      %v1662 = vunpack.c.h.b16 %v1482
      %v1663 = vunpack.c.l.b16 %v1483
      %v1664 = vunpack.c.h.b16 %v1483
      %v1665 = vunpack.c.l.b16 %v1484
      %v1666 = vunpack.c.h.b16 %v1484
      %v1667 = vunpack.c.l.b16 %v1485
      %v1668 = vunpack.c.h.b16 %v1485
      %v1669 = vunpack.c.l.b16 %v1486
      %v1670 = vunpack.c.h.b16 %v1486
      %v1671 = vunpack.c.l.b16 %v1487
      %v1672 = vunpack.c.h.b16 %v1487
      %v1673 = vunpack.c.l.b16 %v1488
      %v1674 = vunpack.c.h.b16 %v1488
      %v1675 = vunpack.c.l.b16 %v1489
      %v1676 = vunpack.c.h.b16 %v1489
      %v1677 = vunpack.c.l.b16 %v1490
      %v1678 = vunpack.c.h.b16 %v1490
      %v1679 = vunpack.c.l.b16 %v1491
      %v1680 = vunpack.c.h.b16 %v1491
      %v1681 = vunpack.c.l.b16 %v1492
      %v1682 = vunpack.c.h.b16 %v1492
      %v1683 = vunpack.c.l.b16 %v1493
      %v1684 = vunpack.c.h.b16 %v1493
      %v1685 = vunpack.c.l.b16 %v1494
      %v1686 = vunpack.c.h.b16 %v1494
      %v1687 = vpack.c.b16 %v1559, %v1559
      %v1688 = vpack.c.b16 %v1560, %v1560
      %v1689 = vpack.c.b16 %v1561, %v1561
      %v1690 = vpack.c.b16 %v1562, %v1562
      %v1691 = vpack.c.b16 %v1563, %v1563
      %v1692 = vpack.c.b16 %v1564, %v1564
      %v1693 = vpack.c.b16 %v1565, %v1565
      %v1694 = vpack.c.b16 %v1566, %v1566
      %v1695 = vpack.c.b16 %v1567, %v1567
      %v1696 = vpack.c.b16 %v1568, %v1568
      %v1697 = vpack.c.b16 %v1569, %v1569
      %v1698 = vpack.c.b16 %v1570, %v1570
      %v1699 = vpack.c.b16 %v1571, %v1571
      %v1700 = vpack.c.b16 %v1572, %v1572
      %v1701 = vpack.c.b16 %v1573, %v1573
      %v1702 = vpack.c.b16 %v1574, %v1574
      %v1703 = vpack.c.b16 %v1575, %v1575
      %v1704 = vpack.c.b16 %v1576, %v1576
      %v1705 = vpack.c.b16 %v1577, %v1577
      %v1706 = vpack.c.b16 %v1578, %v1578
      %v1707 = vpack.c.b16 %v1579, %v1579
      %v1708 = vpack.c.b16 %v1580, %v1580
      %v1709 = vpack.c.b16 %v1581, %v1581
      %v1710 = vpack.c.b16 %v1582, %v1582
      %v1711 = vpack.c.b16 %v1583, %v1583
      %v1712 = vpack.c.b16 %v1584, %v1584
      %v1713 = vpack.c.b16 %v1585, %v1585
      %v1714 = vpack.c.b16 %v1586, %v1586
      %v1715 = vpack.c.b16 %v1587, %v1587
      %v1716 = vpack.c.b16 %v1588, %v1588
      %v1717 = vpack.c.b16 %v1589, %v1589
      %v1718 = vpack.c.b16 %v1590, %v1590
      %v1719 = vpack.c.b16 %v1591, %v1591
      %v1720 = vpack.c.b16 %v1592, %v1592
      %v1721 = vpack.c.b16 %v1593, %v1593
      %v1722 = vpack.c.b16 %v1594, %v1594
      %v1723 = vpack.c.b16 %v1595, %v1595
      %v1724 = vpack.c.b16 %v1596, %v1596
      %v1725 = vpack.c.b16 %v1597, %v1597
      %v1726 = vpack.c.b16 %v1598, %v1598
      %v1727 = vpack.c.b16 %v1599, %v1599
      %v1728 = vpack.c.b16 %v1600, %v1600
      %v1729 = vpack.c.b16 %v1601, %v1601
      %v1730 = vpack.c.b16 %v1602, %v1602
      %v1731 = vpack.c.b16 %v1603, %v1603
      %v1732 = vpack.c.b16 %v1604, %v1604
      %v1733 = vpack.c.b16 %v1605, %v1605
      %v1734 = vpack.c.b16 %v1606, %v1606
      %v1735 = vpack.c.b16 %v1607, %v1607
      %v1736 = vpack.c.b16 %v1608, %v1608
      %v1737 = vpack.c.b16 %v1609, %v1609
      %v1738 = vpack.c.b16 %v1610, %v1610
      %v1739 = vpack.c.b16 %v1611, %v1611
      %v1740 = vpack.c.b16 %v1612, %v1612
      %v1741 = vpack.c.b16 %v1613, %v1613
      %v1742 = vpack.c.b16 %v1614, %v1614
      %v1743 = vpack.c.b16 %v1615, %v1615
      %v1744 = vpack.c.b16 %v1616, %v1616
      %v1745 = vpack.c.b16 %v1617, %v1617
      %v1746 = vpack.c.b16 %v1618, %v1618
      %v1747 = vpack.c.b16 %v1619, %v1619
      %v1748 = vpack.c.b16 %v1620, %v1620
      %v1749 = vpack.c.b16 %v1621, %v1621
      %v1750 = vpack.c.b16 %v1622, %v1622
      %v1751 = vpack.c.b16 %v1623, %v1623
      %v1752 = vpack.c.b16 %v1624, %v1624
      %v1753 = vpack.c.b16 %v1625, %v1625
      %v1754 = vpack.c.b16 %v1626, %v1626
      %v1755 = vpack.c.b16 %v1627, %v1627
      %v1756 = vpack.c.b16 %v1628, %v1628
      %v1757 = vpack.c.b16 %v1629, %v1629
      %v1758 = vpack.c.b16 %v1630, %v1630
      %v1759 = vpack.c.b16 %v1631, %v1631
      %v1760 = vpack.c.b16 %v1632, %v1632
      %v1761 = vpack.c.b16 %v1633, %v1633
      %v1762 = vpack.c.b16 %v1634, %v1634
      %v1763 = vpack.c.b16 %v1635, %v1635
      %v1764 = vpack.c.b16 %v1636, %v1636
      %v1765 = vpack.c.b16 %v1637, %v1637
      %v1766 = vpack.c.b16 %v1638, %v1638
      %v1767 = vpack.c.b16 %v1639, %v1639
      %v1768 = vpack.c.b16 %v1640, %v1640
      %v1769 = vpack.c.b16 %v1641, %v1641
      %v1770 = vpack.c.b16 %v1642, %v1642
      %v1771 = vpack.c.b16 %v1643, %v1643
      %v1772 = vpack.c.b16 %v1644, %v1644
      %v1773 = vpack.c.b16 %v1645, %v1645
      %v1774 = vpack.c.b16 %v1646, %v1646
      %v1775 = vpack.c.b16 %v1647, %v1647
      %v1776 = vpack.c.b16 %v1648, %v1648
      %v1777 = vpack.c.b16 %v1649, %v1649
      %v1778 = vpack.c.b16 %v1650, %v1650
      %v1779 = vpack.c.b16 %v1651, %v1651
      %v1780 = vpack.c.b16 %v1652, %v1652
      %v1781 = vpack.c.b16 %v1653, %v1653
      %v1782 = vpack.c.b16 %v1654, %v1654
      %v1783 = vpack.c.b16 %v1655, %v1655
      %v1784 = vpack.c.b16 %v1656, %v1656
      %v1785 = vpack.c.b16 %v1657, %v1657
      %v1786 = vpack.c.b16 %v1658, %v1658
      %v1787 = vpack.c.b16 %v1659, %v1659
      %v1788 = vpack.c.b16 %v1660, %v1660
      %v1789 = vpack.c.b16 %v1661, %v1661
      %v1790 = vpack.c.b16 %v1662, %v1662
      %v1791 = vpack.c.b16 %v1663, %v1663
      %v1792 = vpack.c.b16 %v1664, %v1664
      %v1793 = vpack.c.b16 %v1665, %v1665
      %v1794 = vpack.c.b16 %v1666, %v1666
      %v1795 = vpack.c.b16 %v1667, %v1667
      %v1796 = vpack.c.b16 %v1668, %v1668
      %v1797 = vpack.c.b16 %v1669, %v1669
      %v1798 = vpack.c.b16 %v1670, %v1670
      %v1799 = vpack.c.b16 %v1671, %v1671
      %v1800 = vpack.c.b16 %v1672, %v1672
      %v1801 = vpack.c.b16 %v1673, %v1673
      %v1802 = vpack.c.b16 %v1674, %v1674
      %v1803 = vpack.c.b16 %v1675, %v1675
      %v1804 = vpack.c.b16 %v1676, %v1676
      %v1805 = vpack.c.b16 %v1677, %v1677
      %v1806 = vpack.c.b16 %v1678, %v1678
      %v1807 = vpack.c.b16 %v1679, %v1679
      %v1808 = vpack.c.b16 %v1680, %v1680
      %v1809 = vpack.c.b16 %v1681, %v1681
      %v1810 = vpack.c.b16 %v1682, %v1682
      %v1811 = vpack.c.b16 %v1683, %v1683
      %v1812 = vpack.c.b16 %v1684, %v1684
      %v1813 = vpack.c.b16 %v1685, %v1685
      %v1814 = vpack.c.b16 %v1686, %v1686
      %1943 = vst [vmem:[%s172] sm:$0xf] %v1687
      %1944 = vst [vmem:[%s172 + $0x4] sm:$0xf] %v1688
      %1945 = vst [vmem:[%s172 + $0x8] sm:$0xf] %v1689
      %1946 = vst [vmem:[%s172 + $0xc] sm:$0xf] %v1690
      %1947 = vst [vmem:[%s172 + $0x10] sm:$0xf] %v1691
      %1948 = vst [vmem:[%s172 + $0x14] sm:$0xf] %v1692
      %1949 = vst [vmem:[%s172 + $0x18] sm:$0xf] %v1693
      %1950 = vst [vmem:[%s172 + $0x1c] sm:$0xf] %v1694
      %1951 = vst [vmem:[%s172 + $0x20] sm:$0xf] %v1695
      %1952 = vst [vmem:[%s172 + $0x24] sm:$0xf] %v1696
      %1953 = vst [vmem:[%s172 + $0x28] sm:$0xf] %v1697
      %1954 = vst [vmem:[%s172 + $0x2c] sm:$0xf] %v1698
      %1955 = vst [vmem:[%s172 + $0x30] sm:$0xf] %v1699
      %1956 = vst [vmem:[%s172 + $0x34] sm:$0xf] %v1700
      %1957 = vst [vmem:[%s172 + $0x38] sm:$0xf] %v1701
      %1958 = vst [vmem:[%s172 + $0x3c] sm:$0xf] %v1702
      %1959 = vst [vmem:[%s172 + $0x40] sm:$0xf] %v1703
      %1960 = vst [vmem:[%s172 + $0x44] sm:$0xf] %v1704
      %1961 = vst [vmem:[%s172 + $0x48] sm:$0xf] %v1705
      %1962 = vst [vmem:[%s172 + $0x4c] sm:$0xf] %v1706
      %1963 = vst [vmem:[%s172 + $0x50] sm:$0xf] %v1707
      %1964 = vst [vmem:[%s172 + $0x54] sm:$0xf] %v1708
      %1965 = vst [vmem:[%s172 + $0x58] sm:$0xf] %v1709
      %1966 = vst [vmem:[%s172 + $0x5c] sm:$0xf] %v1710
      %1967 = vst [vmem:[%s172 + $0x60] sm:$0xf] %v1711
      %1968 = vst [vmem:[%s172 + $0x64] sm:$0xf] %v1712
      %1969 = vst [vmem:[%s172 + $0x68] sm:$0xf] %v1713
      %1970 = vst [vmem:[%s172 + $0x6c] sm:$0xf] %v1714
      %1971 = vst [vmem:[%s172 + $0x70] sm:$0xf] %v1715
      %1972 = vst [vmem:[%s172 + $0x74] sm:$0xf] %v1716
      %1973 = vst [vmem:[%s172 + $0x78] sm:$0xf] %v1717
      %1974 = vst [vmem:[%s172 + $0x7c] sm:$0xf] %v1718
      %1975 = vst [vmem:[%s172 + $0x80] sm:$0xf] %v1719
      %1976 = vst [vmem:[%s172 + $0x84] sm:$0xf] %v1720
      %1977 = vst [vmem:[%s172 + $0x88] sm:$0xf] %v1721
      %1978 = vst [vmem:[%s172 + $0x8c] sm:$0xf] %v1722
      %1979 = vst [vmem:[%s172 + $0x90] sm:$0xf] %v1723
      %1980 = vst [vmem:[%s172 + $0x94] sm:$0xf] %v1724
      %1981 = vst [vmem:[%s172 + $0x98] sm:$0xf] %v1725
      %1982 = vst [vmem:[%s172 + $0x9c] sm:$0xf] %v1726
      %1983 = vst [vmem:[%s172 + $0xa0] sm:$0xf] %v1727
      %1984 = vst [vmem:[%s172 + $0xa4] sm:$0xf] %v1728
      %1985 = vst [vmem:[%s172 + $0xa8] sm:$0xf] %v1729
      %1986 = vst [vmem:[%s172 + $0xac] sm:$0xf] %v1730
      %1987 = vst [vmem:[%s172 + $0xb0] sm:$0xf] %v1731
      %1988 = vst [vmem:[%s172 + $0xb4] sm:$0xf] %v1732
      %1989 = vst [vmem:[%s172 + $0xb8] sm:$0xf] %v1733
      %1990 = vst [vmem:[%s172 + $0xbc] sm:$0xf] %v1734
      %1991 = vst [vmem:[%s172 + $0xc0] sm:$0xf] %v1735
      %1992 = vst [vmem:[%s172 + $0xc4] sm:$0xf] %v1736
      %1993 = vst [vmem:[%s172 + $0xc8] sm:$0xf] %v1737
      %1994 = vst [vmem:[%s172 + $0xcc] sm:$0xf] %v1738
      %1995 = vst [vmem:[%s172 + $0xd0] sm:$0xf] %v1739
      %1996 = vst [vmem:[%s172 + $0xd4] sm:$0xf] %v1740
      %1997 = vst [vmem:[%s172 + $0xd8] sm:$0xf] %v1741
      %1998 = vst [vmem:[%s172 + $0xdc] sm:$0xf] %v1742
      %1999 = vst [vmem:[%s172 + $0xe0] sm:$0xf] %v1743
      %2000 = vst [vmem:[%s172 + $0xe4] sm:$0xf] %v1744
      %2001 = vst [vmem:[%s172 + $0xe8] sm:$0xf] %v1745
      %2002 = vst [vmem:[%s172 + $0xec] sm:$0xf] %v1746
      %2003 = vst [vmem:[%s172 + $0xf0] sm:$0xf] %v1747
      %2004 = vst [vmem:[%s172 + $0xf4] sm:$0xf] %v1748
      %2005 = vst [vmem:[%s172 + $0xf8] sm:$0xf] %v1749
      %2006 = vst [vmem:[%s172 + $0xfc] sm:$0xf] %v1750
      %2007 = vst [vmem:[%s172 + $0x100] sm:$0xf] %v1751
      %2008 = vst [vmem:[%s172 + $0x104] sm:$0xf] %v1752
      %2009 = vst [vmem:[%s172 + $0x108] sm:$0xf] %v1753
      %2010 = vst [vmem:[%s172 + $0x10c] sm:$0xf] %v1754
      %2011 = vst [vmem:[%s172 + $0x110] sm:$0xf] %v1755
      %2012 = vst [vmem:[%s172 + $0x114] sm:$0xf] %v1756
      %2013 = vst [vmem:[%s172 + $0x118] sm:$0xf] %v1757
      %2014 = vst [vmem:[%s172 + $0x11c] sm:$0xf] %v1758
      %2015 = vst [vmem:[%s172 + $0x120] sm:$0xf] %v1759
      %2016 = vst [vmem:[%s172 + $0x124] sm:$0xf] %v1760
      %2017 = vst [vmem:[%s172 + $0x128] sm:$0xf] %v1761
      %2018 = vst [vmem:[%s172 + $0x12c] sm:$0xf] %v1762
      %2019 = vst [vmem:[%s172 + $0x130] sm:$0xf] %v1763
      %2020 = vst [vmem:[%s172 + $0x134] sm:$0xf] %v1764
      %2021 = vst [vmem:[%s172 + $0x138] sm:$0xf] %v1765
      %2022 = vst [vmem:[%s172 + $0x13c] sm:$0xf] %v1766
      %2023 = vst [vmem:[%s172 + $0x140] sm:$0xf] %v1767
      %2024 = vst [vmem:[%s172 + $0x144] sm:$0xf] %v1768
      %2025 = vst [vmem:[%s172 + $0x148] sm:$0xf] %v1769
      %2026 = vst [vmem:[%s172 + $0x14c] sm:$0xf] %v1770
      %2027 = vst [vmem:[%s172 + $0x150] sm:$0xf] %v1771
      %2028 = vst [vmem:[%s172 + $0x154] sm:$0xf] %v1772
      %2029 = vst [vmem:[%s172 + $0x158] sm:$0xf] %v1773
      %2030 = vst [vmem:[%s172 + $0x15c] sm:$0xf] %v1774
      %2031 = vst [vmem:[%s172 + $0x160] sm:$0xf] %v1775
      %2032 = vst [vmem:[%s172 + $0x164] sm:$0xf] %v1776
      %2033 = vst [vmem:[%s172 + $0x168] sm:$0xf] %v1777
      %2034 = vst [vmem:[%s172 + $0x16c] sm:$0xf] %v1778
      %2035 = vst [vmem:[%s172 + $0x170] sm:$0xf] %v1779
      %2036 = vst [vmem:[%s172 + $0x174] sm:$0xf] %v1780
      %2037 = vst [vmem:[%s172 + $0x178] sm:$0xf] %v1781
      %2038 = vst [vmem:[%s172 + $0x17c] sm:$0xf] %v1782
      %2039 = vst [vmem:[%s172 + $0x180] sm:$0xf] %v1783
      %2040 = vst [vmem:[%s172 + $0x184] sm:$0xf] %v1784
      %2041 = vst [vmem:[%s172 + $0x188] sm:$0xf] %v1785
      %2042 = vst [vmem:[%s172 + $0x18c] sm:$0xf] %v1786
      %2043 = vst [vmem:[%s172 + $0x190] sm:$0xf] %v1787
      %2044 = vst [vmem:[%s172 + $0x194] sm:$0xf] %v1788
      %2045 = vst [vmem:[%s172 + $0x198] sm:$0xf] %v1789
      %2046 = vst [vmem:[%s172 + $0x19c] sm:$0xf] %v1790
      %2047 = vst [vmem:[%s172 + $0x1a0] sm:$0xf] %v1791
      %2048 = vst [vmem:[%s172 + $0x1a4] sm:$0xf] %v1792
      %2049 = vst [vmem:[%s172 + $0x1a8] sm:$0xf] %v1793
      %2050 = vst [vmem:[%s172 + $0x1ac] sm:$0xf] %v1794
      %2051 = vst [vmem:[%s172 + $0x1b0] sm:$0xf] %v1795
      %2052 = vst [vmem:[%s172 + $0x1b4] sm:$0xf] %v1796
      %2053 = vst [vmem:[%s172 + $0x1b8] sm:$0xf] %v1797
      %2054 = vst [vmem:[%s172 + $0x1bc] sm:$0xf] %v1798
      %2055 = vst [vmem:[%s172 + $0x1c0] sm:$0xf] %v1799
      %2056 = vst [vmem:[%s172 + $0x1c4] sm:$0xf] %v1800
      %2057 = vst [vmem:[%s172 + $0x1c8] sm:$0xf] %v1801
      %2058 = vst [vmem:[%s172 + $0x1cc] sm:$0xf] %v1802
      %2059 = vst [vmem:[%s172 + $0x1d0] sm:$0xf] %v1803
      %2060 = vst [vmem:[%s172 + $0x1d4] sm:$0xf] %v1804
      %2061 = vst [vmem:[%s172 + $0x1d8] sm:$0xf] %v1805
      %2062 = vst [vmem:[%s172 + $0x1dc] sm:$0xf] %v1806
      %2063 = vst [vmem:[%s172 + $0x1e0] sm:$0xf] %v1807
      %2064 = vst [vmem:[%s172 + $0x1e4] sm:$0xf] %v1808
      %2065 = vst [vmem:[%s172 + $0x1e8] sm:$0xf] %v1809
      %2066 = vst [vmem:[%s172 + $0x1ec] sm:$0xf] %v1810
      %2067 = vst [vmem:[%s172 + $0x1f0] sm:$0xf] %v1811
      %2068 = vst [vmem:[%s172 + $0x1f4] sm:$0xf] %v1812
      %2069 = vst [vmem:[%s172 + $0x1f8] sm:$0xf] %v1813
      %2070 = vst [vmem:[%s172 + $0x1fc] sm:$0xf] %v1814
      %s2071 = smul.u32 128, %s14
      %p2072 = scmp.lt.s32.totalorder %s2071, 255
      %s2073 = scalar_select %p2072, %s2071, 255
      %s2074 = smul.addr %s2073, 4
      %s2075 = scalar_lea.vmem %s3, %s2074
      // Predicated region
      $region33: #{red_or_green_forward.4} parent=31 // pred_check
        %p2076 = pneg %p100
      $region34: #{red_or_green_forward.4} parent=31 // pred_check_branch
        %2078 = sbr.rel (%p2076) target = $region36
      $region35: #{red_or_green_forward.4} parent=31 // pred_region
        %s2079 = smul.u32 128, %s14
      $region36: #{red_or_green_forward.4} parent=31 // pred_fallthru
        _
    $region32: #{red_or_green_forward.4} parent=5 // pred_fallthru
      _
    %p2080 = scmp.le.s32.totalorder 2, %s9
    // Predicated region
    $region37: #{red_or_green_forward.4} parent=5 // pred_check
      %p2081 = pneg %p2080
    $region38: #{red_or_green_forward.4} parent=5 // pred_check_branch
      %2083 = sbr.rel (%p2081) target = $region40
    $region39: #{red_or_green_forward.4} parent=5 // pred_region
      %s2084 = ssub.s32 %s9, 2
      // Predicated region
      $region41: #{red_or_green_forward.4} parent=39 // pred_check
        %p2085 = pneg %p106
      $region42: #{red_or_green_forward.4} parent=39 // pred_check_branch
        %2087 = sbr.rel (%p2085) target = $region44
      $region43: #{red_or_green_forward.4} parent=39 // pred_region
        %s2088 = smul.u32 128, %s15
        %p2089 = scmp.lt.s32.totalorder %s2088, 255
        %s2090 = scalar_select %p2089, %s2088, 255
        %s2091 = smul.addr %s2090, 4
        %s2092 = scalar_lea.vmem %s3, %s2091
      $region44: #{red_or_green_forward.4} parent=39 // pred_fallthru
        _
    $region40: #{red_or_green_forward.4} parent=5 // pred_fallthru
      _
  $region6: #{red_or_green_forward.4} parent=0 // loop_footer
    %s13 = sadd.s32 1, %s9
  $region7: #{red_or_green_forward.4} parent=0 // loop_footer_branch
    %8 = sbr.rel target = $region3
  $region8: #{red_or_green_forward.4} parent=0 // loop_exit
    _

// kernel: red_or_green_forward.5
$region0: #{red_or_green_forward.5}
  #allocation0 [shape = 'u32[]', space=smem, size = 0x4, offset = 0x4, fixed_abs, tag = 'smem constant byte address 0x4 - core index']
  #allocation1 [shape = 'u32[144,128]{1,0:T(1,128)}', space=vmem, size = 0x12000, scoped, tag = 'internal scratch']
  %s0 = inlined_call_operand.vmem [shape: bf16[200,512], index: 0, kind: input, shape index: {}]
  %s1 = inlined_call_operand.vmem [shape: bf16[512,128], index: 1, kind: input, shape index: {}]
  %s2 = inlined_call_operand.vmem [shape: f32[1,128], index: 2, kind: input, shape index: {}]
  %s3 = inlined_call_operand.vmem [shape: bf16[200,128], index: 3, kind: output, shape index: {}]
  %s4 = sld [smem:[#allocation0]]
  $region22: #{red_or_green_forward.5} parent=0
    _
  %s6 = ssub.s32 1, %s4
  %s7 = scalar_select 0, %s6, %s4
  // Predicated region
  $region2: #{red_or_green_forward.5} parent=0 // pred_check
    _
  $region3: #{red_or_green_forward.5} parent=0 // pred_check_branch
    %9 = sbr.rel (0) target = $region5
  $region4: #{red_or_green_forward.5} parent=0 // pred_region
    _
  $region5: #{red_or_green_forward.5} parent=0 // pred_fallthru
    _
  // Predicated region
  $region6: #{red_or_green_forward.5} parent=0 // pred_check
    _
  $region7: #{red_or_green_forward.5} parent=0 // pred_check_branch
    %11 = sbr.rel (0) target = $region9
  $region8: #{red_or_green_forward.5} parent=0 // pred_region
    _
  $region9: #{red_or_green_forward.5} parent=0 // pred_fallthru
    _
  // Predicated region
  $region10: #{red_or_green_forward.5} parent=0 // pred_check
    _
  $region11: #{red_or_green_forward.5} parent=0 // pred_check_branch
    %13 = sbr.rel (0) target = $region13
  $region12: #{red_or_green_forward.5} parent=0 // pred_region
    _
  $region13: #{red_or_green_forward.5} parent=0 // pred_fallthru
    _
  %v15 = vld [vmem:[%s0] sm:$0xff]
  %v16 = vld [vmem:[%s0 + $0x8] sm:$0xff]
  %v17 = vld [vmem:[%s0 + $0x10] sm:$0xff]
  %v18 = vld [vmem:[%s0 + $0x18] sm:$0xff]
  %v19 = vld [vmem:[%s0 + $0x20] sm:$0xff]
  %v20 = vld [vmem:[%s0 + $0x28] sm:$0xff]
  %v21 = vld [vmem:[%s0 + $0x30] sm:$0xff]
  %v22 = vld [vmem:[%s0 + $0x38] sm:$0xff]
  %v23 = vld [vmem:[%s0 + $0x40] sm:$0xff]
  %v24 = vld [vmem:[%s0 + $0x48] sm:$0xff]
  %v25 = vld [vmem:[%s0 + $0x50] sm:$0xff]
  %v26 = vld [vmem:[%s0 + $0x58] sm:$0xff]
  %v27 = vld [vmem:[%s0 + $0x60] sm:$0xff]
  %v28 = vld [vmem:[%s0 + $0x68] sm:$0xff]
  %v29 = vld [vmem:[%s0 + $0x70] sm:$0xff]
  %v30 = vld [vmem:[%s0 + $0x78] sm:$0xff]
  %v31 = vld [vmem:[%s0 + $0x80] sm:$0xff]
  %v32 = vld [vmem:[%s0 + $0x88] sm:$0xff]
  %v33 = vld [vmem:[%s0 + $0x90] sm:$0xff]
  %v34 = vld [vmem:[%s0 + $0x98] sm:$0xff]
  %v35 = vld [vmem:[%s0 + $0xa0] sm:$0xff]
  %v36 = vld [vmem:[%s0 + $0xa8] sm:$0xff]
  %v37 = vld [vmem:[%s0 + $0xb0] sm:$0xff]
  %v38 = vld [vmem:[%s0 + $0xb8] sm:$0xff]
  %v39 = vld [vmem:[%s0 + $0xc0] sm:$0xff]
  %v40 = vld [vmem:[%s0 + $0xc8] sm:$0xff]
  %v41 = vld [vmem:[%s0 + $0xd0] sm:$0xff]
  %v42 = vld [vmem:[%s0 + $0xd8] sm:$0xff]
  %v43 = vld [vmem:[%s0 + $0xe0] sm:$0xff]
  %v44 = vld [vmem:[%s0 + $0xe8] sm:$0xff]
  %v45 = vld [vmem:[%s0 + $0xf0] sm:$0xff]
  %v46 = vld [vmem:[%s0 + $0xf8] sm:$0xff]
  %v47 = vld [vmem:[%s0 + $0x100] sm:$0xff]
  %v48 = vld [vmem:[%s0 + $0x108] sm:$0xff]
  %v49 = vld [vmem:[%s0 + $0x110] sm:$0xff]
  %v50 = vld [vmem:[%s0 + $0x118] sm:$0xff]
  %v51 = vld [vmem:[%s0 + $0x120] sm:$0xff]
  %v52 = vld [vmem:[%s0 + $0x128] sm:$0xff]
  %v53 = vld [vmem:[%s0 + $0x130] sm:$0xff]
  %v54 = vld [vmem:[%s0 + $0x138] sm:$0xff]
  %v55 = vld [vmem:[%s0 + $0x140] sm:$0xff]
  %v56 = vld [vmem:[%s0 + $0x148] sm:$0xff]
  %v57 = vld [vmem:[%s0 + $0x150] sm:$0xff]
  %v58 = vld [vmem:[%s0 + $0x158] sm:$0xff]
  %v59 = vld [vmem:[%s0 + $0x160] sm:$0xff]
  %v60 = vld [vmem:[%s0 + $0x168] sm:$0xff]
  %v61 = vld [vmem:[%s0 + $0x170] sm:$0xff]
  %v62 = vld [vmem:[%s0 + $0x178] sm:$0xff]
  %v63 = vld [vmem:[%s0 + $0x180] sm:$0xff]
  %v64 = vld [vmem:[%s0 + $0x188] sm:$0xff]
  %v65 = vld [vmem:[%s1] sm:$0xf]
  %v66 = vld [vmem:[%s1 + $0x4] sm:$0xf]
  %v67 = vld [vmem:[%s1 + $0x8] sm:$0xf]
  %v68 = vld [vmem:[%s1 + $0xc] sm:$0xf]
  %v69 = vld [vmem:[%s1 + $0x10] sm:$0xf]
  %v70 = vld [vmem:[%s1 + $0x14] sm:$0xf]
  %v71 = vld [vmem:[%s1 + $0x18] sm:$0xf]
  %v72 = vld [vmem:[%s1 + $0x1c] sm:$0xf]
  %v73 = vld [vmem:[%s1 + $0x20] sm:$0xf]
  %v74 = vld [vmem:[%s1 + $0x24] sm:$0xf]
  %v75 = vld [vmem:[%s1 + $0x28] sm:$0xf]
  %v76 = vld [vmem:[%s1 + $0x2c] sm:$0xf]
  %v77 = vld [vmem:[%s1 + $0x30] sm:$0xf]
  %v78 = vld [vmem:[%s1 + $0x34] sm:$0xf]
  %v79 = vld [vmem:[%s1 + $0x38] sm:$0xf]
  %v80 = vld [vmem:[%s1 + $0x3c] sm:$0xf]
  %v81 = vld [vmem:[%s1 + $0x40] sm:$0xf]
  %v82 = vld [vmem:[%s1 + $0x44] sm:$0xf]
  %v83 = vld [vmem:[%s1 + $0x48] sm:$0xf]
  %v84 = vld [vmem:[%s1 + $0x4c] sm:$0xf]
  %v85 = vld [vmem:[%s1 + $0x50] sm:$0xf]
  %v86 = vld [vmem:[%s1 + $0x54] sm:$0xf]
  %v87 = vld [vmem:[%s1 + $0x58] sm:$0xf]
  %v88 = vld [vmem:[%s1 + $0x5c] sm:$0xf]
  %v89 = vld [vmem:[%s1 + $0x60] sm:$0xf]
  %v90 = vld [vmem:[%s1 + $0x64] sm:$0xf]
  %v91 = vld [vmem:[%s1 + $0x68] sm:$0xf]
  %v92 = vld [vmem:[%s1 + $0x6c] sm:$0xf]
  %v93 = vld [vmem:[%s1 + $0x70] sm:$0xf]
  %v94 = vld [vmem:[%s1 + $0x74] sm:$0xf]
  %v95 = vld [vmem:[%s1 + $0x78] sm:$0xf]
  %v96 = vld [vmem:[%s1 + $0x7c] sm:$0xf]
  %v97 = vld [vmem:[%s1 + $0x80] sm:$0xf]
  %v98 = vld [vmem:[%s1 + $0x84] sm:$0xf]
  %v99 = vld [vmem:[%s1 + $0x88] sm:$0xf]
  %v100 = vld [vmem:[%s1 + $0x8c] sm:$0xf]
  %v101 = vld [vmem:[%s1 + $0x90] sm:$0xf]
  %v102 = vld [vmem:[%s1 + $0x94] sm:$0xf]
  %v103 = vld [vmem:[%s1 + $0x98] sm:$0xf]
  %v104 = vld [vmem:[%s1 + $0x9c] sm:$0xf]
  %v105 = vld [vmem:[%s1 + $0xa0] sm:$0xf]
  %v106 = vld [vmem:[%s1 + $0xa4] sm:$0xf]
  %v107 = vld [vmem:[%s1 + $0xa8] sm:$0xf]
  %v108 = vld [vmem:[%s1 + $0xac] sm:$0xf]
  %v109 = vld [vmem:[%s1 + $0xb0] sm:$0xf]
  %v110 = vld [vmem:[%s1 + $0xb4] sm:$0xf]
  %v111 = vld [vmem:[%s1 + $0xb8] sm:$0xf]
  %v112 = vld [vmem:[%s1 + $0xbc] sm:$0xf]
  %v113 = vld [vmem:[%s1 + $0xc0] sm:$0xf]
  %v114 = vld [vmem:[%s1 + $0xc4] sm:$0xf]
  %v115 = vld [vmem:[%s1 + $0xc8] sm:$0xf]
  %v116 = vld [vmem:[%s1 + $0xcc] sm:$0xf]
  %v117 = vld [vmem:[%s1 + $0xd0] sm:$0xf]
  %v118 = vld [vmem:[%s1 + $0xd4] sm:$0xf]
  %v119 = vld [vmem:[%s1 + $0xd8] sm:$0xf]
  %v120 = vld [vmem:[%s1 + $0xdc] sm:$0xf]
  %v121 = vld [vmem:[%s1 + $0xe0] sm:$0xf]
  %v122 = vld [vmem:[%s1 + $0xe4] sm:$0xf]
  %v123 = vld [vmem:[%s1 + $0xe8] sm:$0xf]
  %v124 = vld [vmem:[%s1 + $0xec] sm:$0xf]
  %v125 = vld [vmem:[%s1 + $0xf0] sm:$0xf]
  %v126 = vld [vmem:[%s1 + $0xf4] sm:$0xf]
  %v127 = vld [vmem:[%s1 + $0xf8] sm:$0xf]
  %v128 = vld [vmem:[%s1 + $0xfc] sm:$0xf]
  %v129 = vld [vmem:[%s2] sm:$0x1]
  %v131 = vlaneseq
  %v132 = vshrl.u32 %v131, 7
  %v133 = vsub.s32 0, %v132
  %v134 = vrot.slane %v129, %v133
  %v186 = vunpack.c.l.b16 %v15
  %v187 = vunpack.c.h.b16 %v15
  %v188 = vunpack.c.l.b16 %v16
  %v189 = vunpack.c.h.b16 %v16
  %v190 = vunpack.c.l.b16 %v17
  %v191 = vunpack.c.h.b16 %v17
  %v192 = vunpack.c.l.b16 %v18
  %v193 = vunpack.c.h.b16 %v18
  %v194 = vunpack.c.l.b16 %v19
  %v195 = vunpack.c.h.b16 %v19
  %v196 = vunpack.c.l.b16 %v20
  %v197 = vunpack.c.h.b16 %v20
  %v198 = vunpack.c.l.b16 %v21
  %v199 = vunpack.c.h.b16 %v21
  %v200 = vunpack.c.l.b16 %v22
  %v201 = vunpack.c.h.b16 %v22
  %v202 = vunpack.c.l.b16 %v23
  %v203 = vunpack.c.h.b16 %v23
  %v204 = vunpack.c.l.b16 %v24
  %v205 = vunpack.c.h.b16 %v24
  %v206 = vunpack.c.l.b16 %v25
  %v207 = vunpack.c.h.b16 %v25
  %v208 = vunpack.c.l.b16 %v26
  %v209 = vunpack.c.h.b16 %v26
  %v210 = vunpack.c.l.b16 %v27
  %v211 = vunpack.c.h.b16 %v27
  %v212 = vunpack.c.l.b16 %v28
  %v213 = vunpack.c.h.b16 %v28
  %v214 = vunpack.c.l.b16 %v29
  %v215 = vunpack.c.h.b16 %v29
  %v216 = vunpack.c.l.b16 %v30
  %v217 = vunpack.c.h.b16 %v30
  %v218 = vunpack.c.l.b16 %v31
  %v219 = vunpack.c.h.b16 %v31
  %v220 = vunpack.c.l.b16 %v32
  %v221 = vunpack.c.h.b16 %v32
  %v222 = vunpack.c.l.b16 %v33
  %v223 = vunpack.c.h.b16 %v33
  %v224 = vunpack.c.l.b16 %v34
  %v225 = vunpack.c.h.b16 %v34
  %v226 = vunpack.c.l.b16 %v35
  %v227 = vunpack.c.h.b16 %v35
  %v228 = vunpack.c.l.b16 %v36
  %v229 = vunpack.c.h.b16 %v36
  %v230 = vunpack.c.l.b16 %v37
  %v231 = vunpack.c.h.b16 %v37
  %v232 = vunpack.c.l.b16 %v38
  %v233 = vunpack.c.h.b16 %v38
  %v234 = vunpack.c.l.b16 %v39
  %v235 = vunpack.c.h.b16 %v39
  %v236 = vunpack.c.l.b16 %v40
  %v237 = vunpack.c.h.b16 %v40
  %v238 = vunpack.c.l.b16 %v41
  %v239 = vunpack.c.h.b16 %v41
  %v240 = vunpack.c.l.b16 %v42
  %v241 = vunpack.c.h.b16 %v42
  %v242 = vunpack.c.l.b16 %v43
  %v243 = vunpack.c.h.b16 %v43
  %v244 = vunpack.c.l.b16 %v44
  %v245 = vunpack.c.h.b16 %v44
  %v246 = vunpack.c.l.b16 %v45
  %v247 = vunpack.c.h.b16 %v45
  %v248 = vunpack.c.l.b16 %v46
  %v249 = vunpack.c.h.b16 %v46
  %v250 = vunpack.c.l.b16 %v47
  %v251 = vunpack.c.h.b16 %v47
  %v252 = vunpack.c.l.b16 %v48
  %v253 = vunpack.c.h.b16 %v48
  %v254 = vunpack.c.l.b16 %v49
  %v255 = vunpack.c.h.b16 %v49
  %v256 = vunpack.c.l.b16 %v50
  %v257 = vunpack.c.h.b16 %v50
  %v258 = vunpack.c.l.b16 %v51
  %v259 = vunpack.c.h.b16 %v51
  %v260 = vunpack.c.l.b16 %v52
  %v261 = vunpack.c.h.b16 %v52
  %v262 = vunpack.c.l.b16 %v53
  %v263 = vunpack.c.h.b16 %v53
  %v264 = vunpack.c.l.b16 %v54
  %v265 = vunpack.c.h.b16 %v54
  %v266 = vunpack.c.l.b16 %v55
  %v267 = vunpack.c.h.b16 %v55
  %v268 = vunpack.c.l.b16 %v56
  %v269 = vunpack.c.h.b16 %v56
  %v270 = vunpack.c.l.b16 %v57
  %v271 = vunpack.c.h.b16 %v57
  %v272 = vunpack.c.l.b16 %v58
  %v273 = vunpack.c.h.b16 %v58
  %v274 = vunpack.c.l.b16 %v59
  %v275 = vunpack.c.h.b16 %v59
  %v276 = vunpack.c.l.b16 %v60
  %v277 = vunpack.c.h.b16 %v60
  %v278 = vunpack.c.l.b16 %v61
  %v279 = vunpack.c.h.b16 %v61
  %v280 = vunpack.c.l.b16 %v62
  %v281 = vunpack.c.h.b16 %v62
  %v282 = vunpack.c.l.b16 %v63
  %v283 = vunpack.c.h.b16 %v63
  %v284 = vunpack.c.l.b16 %v64
  %v285 = vunpack.c.h.b16 %v64
  %v286 = vpack.c.b16 %v190, %v186
  %v287 = vpack.c.b16 %v191, %v187
  %v288 = vpack.c.b16 %v192, %v188
  %v289 = vpack.c.b16 %v193, %v189
  %v290 = vpack.c.b16 %v198, %v194
  %v291 = vpack.c.b16 %v199, %v195
  %v292 = vpack.c.b16 %v200, %v196
  %v293 = vpack.c.b16 %v201, %v197
  %v294 = vpack.c.b16 %v206, %v202
  %v295 = vpack.c.b16 %v207, %v203
  %v296 = vpack.c.b16 %v208, %v204
  %v297 = vpack.c.b16 %v209, %v205
  %v298 = vpack.c.b16 %v214, %v210
  %v299 = vpack.c.b16 %v215, %v211
  %v300 = vpack.c.b16 %v216, %v212
  %v301 = vpack.c.b16 %v217, %v213
  %v302 = vpack.c.b16 %v222, %v218
  %v303 = vpack.c.b16 %v223, %v219
  %v304 = vpack.c.b16 %v224, %v220
  %v305 = vpack.c.b16 %v225, %v221
  %v306 = vpack.c.b16 %v230, %v226
  %v307 = vpack.c.b16 %v231, %v227
  %v308 = vpack.c.b16 %v232, %v228
  %v309 = vpack.c.b16 %v233, %v229
  %v310 = vpack.c.b16 %v238, %v234
  %v311 = vpack.c.b16 %v239, %v235
  %v312 = vpack.c.b16 %v240, %v236
  %v313 = vpack.c.b16 %v241, %v237
  %v314 = vpack.c.b16 %v246, %v242
  %v315 = vpack.c.b16 %v247, %v243
  %v316 = vpack.c.b16 %v248, %v244
  %v317 = vpack.c.b16 %v249, %v245
  %v318 = vpack.c.b16 %v254, %v250
  %v319 = vpack.c.b16 %v255, %v251
  %v320 = vpack.c.b16 %v256, %v252
  %v321 = vpack.c.b16 %v257, %v253
  %v322 = vpack.c.b16 %v262, %v258
  %v323 = vpack.c.b16 %v263, %v259
  %v324 = vpack.c.b16 %v264, %v260
  %v325 = vpack.c.b16 %v265, %v261
  %v326 = vpack.c.b16 %v270, %v266
  %v327 = vpack.c.b16 %v271, %v267
  %v328 = vpack.c.b16 %v272, %v268
  %v329 = vpack.c.b16 %v273, %v269
  %v330 = vpack.c.b16 %v278, %v274
  %v331 = vpack.c.b16 %v279, %v275
  %v332 = vpack.c.b16 %v280, %v276
  %v333 = vpack.c.b16 %v281, %v277
  %v334 = vpack.c.b16 %v282, %v282
  %v335 = vpack.c.b16 %v283, %v283
  %v336 = vpack.c.b16 %v284, %v284
  %v337 = vpack.c.b16 %v285, %v285
  %v454 = vunpack.c.l.b16 %v65
  %v455 = vunpack.c.l.b16 %v66
  %v456 = vunpack.c.l.b16 %v67
  %v457 = vunpack.c.l.b16 %v68
  %v458 = vunpack.c.l.b16 %v69
  %v459 = vunpack.c.l.b16 %v70
  %v460 = vunpack.c.l.b16 %v71
  %v461 = vunpack.c.l.b16 %v72
  %v462 = vunpack.c.l.b16 %v73
  %v463 = vunpack.c.l.b16 %v74
  %v464 = vunpack.c.l.b16 %v75
  %v465 = vunpack.c.l.b16 %v76
  %v466 = vunpack.c.l.b16 %v77
  %v467 = vunpack.c.l.b16 %v78
  %v468 = vunpack.c.l.b16 %v79
  %v469 = vunpack.c.l.b16 %v80
  %v470 = vunpack.c.l.b16 %v81
  %v471 = vunpack.c.l.b16 %v82
  %v472 = vunpack.c.l.b16 %v83
  %v473 = vunpack.c.l.b16 %v84
  %v474 = vunpack.c.l.b16 %v85
  %v475 = vunpack.c.l.b16 %v86
  %v476 = vunpack.c.l.b16 %v87
  %v477 = vunpack.c.l.b16 %v88
  %v478 = vunpack.c.l.b16 %v89
  %v479 = vunpack.c.l.b16 %v90
  %v480 = vunpack.c.l.b16 %v91
  %v481 = vunpack.c.l.b16 %v92
  %v482 = vunpack.c.l.b16 %v93
  %v483 = vunpack.c.l.b16 %v94
  %v484 = vunpack.c.l.b16 %v95
  %v485 = vunpack.c.l.b16 %v96
  %v486 = vunpack.c.l.b16 %v97
  %v487 = vunpack.c.l.b16 %v98
  %v488 = vunpack.c.l.b16 %v99
  %v489 = vunpack.c.l.b16 %v100
  %v490 = vunpack.c.l.b16 %v101
  %v491 = vunpack.c.l.b16 %v102
  %v492 = vunpack.c.l.b16 %v103
  %v493 = vunpack.c.l.b16 %v104
  %v494 = vunpack.c.l.b16 %v105
  %v495 = vunpack.c.l.b16 %v106
  %v496 = vunpack.c.l.b16 %v107
  %v497 = vunpack.c.l.b16 %v108
  %v498 = vunpack.c.l.b16 %v109
  %v499 = vunpack.c.l.b16 %v110
  %v500 = vunpack.c.l.b16 %v111
  %v501 = vunpack.c.l.b16 %v112
  %v502 = vunpack.c.l.b16 %v113
  %v503 = vunpack.c.l.b16 %v114
  %v504 = vunpack.c.l.b16 %v115
  %v505 = vunpack.c.l.b16 %v116
  %v506 = vunpack.c.l.b16 %v117
  %v507 = vunpack.c.l.b16 %v118
  %v508 = vunpack.c.l.b16 %v119
  %v509 = vunpack.c.l.b16 %v120
  %v510 = vunpack.c.l.b16 %v121
  %v511 = vunpack.c.l.b16 %v122
  %v512 = vunpack.c.l.b16 %v123
  %v513 = vunpack.c.l.b16 %v124
  %v514 = vunpack.c.l.b16 %v125
  %v515 = vunpack.c.l.b16 %v126
  %v516 = vunpack.c.l.b16 %v127
  %v517 = vunpack.c.l.b16 %v128
  %v518 = vpack.c.b16 %v455, %v454
  %v519 = vpack.c.b16 %v457, %v456
  %v520 = vpack.c.b16 %v459, %v458
  %v521 = vpack.c.b16 %v461, %v460
  %v522 = vpack.c.b16 %v463, %v462
  %v523 = vpack.c.b16 %v465, %v464
  %v524 = vpack.c.b16 %v467, %v466
  %v525 = vpack.c.b16 %v469, %v468
  %v526 = vpack.c.b16 %v471, %v470
  %v527 = vpack.c.b16 %v473, %v472
  %v528 = vpack.c.b16 %v475, %v474
  %v529 = vpack.c.b16 %v477, %v476
  %v530 = vpack.c.b16 %v479, %v478
  %v531 = vpack.c.b16 %v481, %v480
  %v532 = vpack.c.b16 %v483, %v482
  %v533 = vpack.c.b16 %v485, %v484
  %v534 = vpack.c.b16 %v487, %v486
  %v535 = vpack.c.b16 %v489, %v488
  %v536 = vpack.c.b16 %v491, %v490
  %v537 = vpack.c.b16 %v493, %v492
  %v538 = vpack.c.b16 %v495, %v494
  %v539 = vpack.c.b16 %v497, %v496
  %v540 = vpack.c.b16 %v499, %v498
  %v541 = vpack.c.b16 %v501, %v500
  %v542 = vpack.c.b16 %v503, %v502
  %v543 = vpack.c.b16 %v505, %v504
  %v544 = vpack.c.b16 %v507, %v506
  %v545 = vpack.c.b16 %v509, %v508
  %v546 = vpack.c.b16 %v511, %v510
  %v547 = vpack.c.b16 %v513, %v512
  %v548 = vpack.c.b16 %v515, %v514
  %v549 = vpack.c.b16 %v517, %v516
  %582 = vmatprep.subr.bf16.mxu0 0
  %583 = vmatpush1.bf16.msra.mxu0 %v525
  %584 = vmatprep.subr.bf16.mxu0 0
  %585 = vmatpush1.bf16.msra.mxu0 %v524
  %586 = vmatprep.subr.bf16.mxu0 0
  %587 = vmatpush1.bf16.msra.mxu0 %v523
  %588 = vmatprep.subr.bf16.mxu0 0
  %589 = vmatpush1.bf16.msra.mxu0 %v522
  %590 = vmatprep.subr.bf16.mxu0 0
  %591 = vmatpush1.bf16.msra.mxu0 %v521
  %592 = vmatprep.subr.bf16.mxu0 0
  %593 = vmatpush1.bf16.msra.mxu0 %v520
  %594 = vmatprep.subr.bf16.mxu0 0
  %595 = vmatpush1.bf16.msra.mxu0 %v519
  %596 = vmatprep.subr.bf16.mxu0 0
  %597 = vmatpush1.bf16.msra.mxu0 %v518
  %598 = vmatprep.subr.bf16.mxu0 0
  %599 = vmatpush2.bf16.msra.mxu0 %v533
  %600 = vmatprep.subr.bf16.mxu0 0
  %601 = vmatpush2.bf16.msra.mxu0 %v532
  %602 = vmatprep.subr.bf16.mxu0 0
  %603 = vmatpush2.bf16.msra.mxu0 %v531
  %604 = vmatprep.subr.bf16.mxu0 0
  %605 = vmatpush2.bf16.msra.mxu0 %v530
  %606 = vmatprep.subr.bf16.mxu0 0
  %607 = vmatpush2.bf16.msra.mxu0 %v529
  %608 = vmatprep.subr.bf16.mxu0 0
  %609 = vmatpush2.bf16.msra.mxu0 %v528
  %610 = vmatprep.subr.bf16.mxu0 0
  %611 = vmatpush2.bf16.msra.mxu0 %v527
  %612 = vmatprep.subr.bf16.mxu0 0
  %613 = vmatpush2.bf16.msra.mxu0 %v526
  %614 = vmatprep.mubr.bf16.mxu0 %v287
  %615 = vmatmul.mubr.bf16.gmra.mxu0 %v286
  %v616 = vpop.f32.mrf.mxu0
  %v617 = vadd.f32 %v134, %v616
  %v618 = vpop.f32.mrf.mxu0
  %v619 = vpop.f32.mrf.mxu0
  %v620 = vadd.f32 %v134, %v619
  %v621 = vpop.f32.mrf.mxu0
  %622 = vmatprep.mubr.bf16.mxu0 %v291
  %623 = vmatmul.mubr.bf16.gmra.mxu0 %v290
  %v624 = vpop.f32.mrf.mxu0
  %v625 = vadd.f32 %v134, %v624
  %v626 = vpop.f32.mrf.mxu0
  %v627 = vpop.f32.mrf.mxu0
  %v628 = vadd.f32 %v134, %v627
  %v629 = vpop.f32.mrf.mxu0
  %630 = vmatprep.mubr.bf16.mxu0 %v295
  %631 = vmatmul.mubr.bf16.gmra.mxu0 %v294
  %v632 = vpop.f32.mrf.mxu0
  %v633 = vadd.f32 %v134, %v632
  %v634 = vpop.f32.mrf.mxu0
  %v635 = vpop.f32.mrf.mxu0
  %v636 = vadd.f32 %v134, %v635
  %v637 = vpop.f32.mrf.mxu0
  %638 = vmatprep.mubr.bf16.mxu0 %v299
  %639 = vmatmul.mubr.bf16.gmra.mxu0 %v298
  %v640 = vpop.f32.mrf.mxu0
  %v641 = vadd.f32 %v134, %v640
  %v642 = vpop.f32.mrf.mxu0
  %v643 = vpop.f32.mrf.mxu0
  %v644 = vadd.f32 %v134, %v643
  %v645 = vpop.f32.mrf.mxu0
  %646 = vmatprep.mubr.bf16.mxu0 %v303
  %647 = vmatmul.mubr.bf16.gmra.mxu0 %v302
  %v648 = vpop.f32.mrf.mxu0
  %v649 = vadd.f32 %v134, %v648
  %v650 = vpop.f32.mrf.mxu0
  %v651 = vpop.f32.mrf.mxu0
  %v652 = vadd.f32 %v134, %v651
  %v653 = vpop.f32.mrf.mxu0
  %654 = vmatprep.mubr.bf16.mxu0 %v307
  %655 = vmatmul.mubr.bf16.gmra.mxu0 %v306
  %v656 = vpop.f32.mrf.mxu0
  %v657 = vadd.f32 %v134, %v656
  %v658 = vpop.f32.mrf.mxu0
  %v659 = vpop.f32.mrf.mxu0
  %v660 = vadd.f32 %v134, %v659
  %v661 = vpop.f32.mrf.mxu0
  %662 = vmatprep.mubr.bf16.mxu0 %v311
  %663 = vmatmul.mubr.bf16.gmra.mxu0 %v310
  %v664 = vpop.f32.mrf.mxu0
  %v665 = vadd.f32 %v134, %v664
  %v666 = vpop.f32.mrf.mxu0
  %v667 = vpop.f32.mrf.mxu0
  %v668 = vadd.f32 %v134, %v667
  %v669 = vpop.f32.mrf.mxu0
  %670 = vmatprep.mubr.bf16.mxu0 %v315
  %671 = vmatmul.mubr.bf16.gmra.mxu0 %v314
  %v672 = vpop.f32.mrf.mxu0
  %v673 = vadd.f32 %v134, %v672
  %v674 = vpop.f32.mrf.mxu0
  %v675 = vpop.f32.mrf.mxu0
  %v676 = vadd.f32 %v134, %v675
  %v677 = vpop.f32.mrf.mxu0
  %678 = vmatprep.mubr.bf16.mxu0 %v319
  %679 = vmatmul.mubr.bf16.gmra.mxu0 %v318
  %v680 = vpop.f32.mrf.mxu0
  %v681 = vadd.f32 %v134, %v680
  %v682 = vpop.f32.mrf.mxu0
  %v683 = vpop.f32.mrf.mxu0
  %v684 = vadd.f32 %v134, %v683
  %v685 = vpop.f32.mrf.mxu0
  %686 = vmatprep.mubr.bf16.mxu0 %v323
  %687 = vmatmul.mubr.bf16.gmra.mxu0 %v322
  %v688 = vpop.f32.mrf.mxu0
  %v689 = vadd.f32 %v134, %v688
  %v690 = vpop.f32.mrf.mxu0
  %v691 = vpop.f32.mrf.mxu0
  %v692 = vadd.f32 %v134, %v691
  %v693 = vpop.f32.mrf.mxu0
  %694 = vmatprep.mubr.bf16.mxu0 %v327
  %695 = vmatmul.mubr.bf16.gmra.mxu0 %v326
  %v696 = vpop.f32.mrf.mxu0
  %v697 = vadd.f32 %v134, %v696
  %v698 = vpop.f32.mrf.mxu0
  %v699 = vpop.f32.mrf.mxu0
  %v700 = vadd.f32 %v134, %v699
  %v701 = vpop.f32.mrf.mxu0
  %702 = vmatprep.mubr.bf16.mxu0 %v331
  %703 = vmatmul.mubr.bf16.gmra.mxu0 %v330
  %v704 = vpop.f32.mrf.mxu0
  %v705 = vadd.f32 %v134, %v704
  %v706 = vpop.f32.mrf.mxu0
  %v707 = vpop.f32.mrf.mxu0
  %v708 = vadd.f32 %v134, %v707
  %v709 = vpop.f32.mrf.mxu0
  %710 = vmatprep.mubr.bf16.mxu0 %v335
  %711 = vmatmul.mubr.bf16.gmra.mxu0 %v334
  %v712 = vpop.f32.mrf.mxu0
  %v713 = vadd.f32 %v134, %v712
  %v714 = vpop.f32.mrf.mxu0
  %v715 = vpop.f32.mrf.mxu0
  %v716 = vpop.f32.mrf.mxu0
  %717 = vdwg.mxu0
  %718 = vmatprep.subr.bf16.mxu0 0
  %719 = vmatpush1.bf16.msra.mxu0 %v541
  %720 = vmatprep.subr.bf16.mxu0 0
  %721 = vmatpush1.bf16.msra.mxu0 %v540
  %722 = vmatprep.subr.bf16.mxu0 0
  %723 = vmatpush1.bf16.msra.mxu0 %v539
  %724 = vmatprep.subr.bf16.mxu0 0
  %725 = vmatpush1.bf16.msra.mxu0 %v538
  %726 = vmatprep.subr.bf16.mxu0 0
  %727 = vmatpush1.bf16.msra.mxu0 %v537
  %728 = vmatprep.subr.bf16.mxu0 0
  %729 = vmatpush1.bf16.msra.mxu0 %v536
  %730 = vmatprep.subr.bf16.mxu0 0
  %731 = vmatpush1.bf16.msra.mxu0 %v535
  %732 = vmatprep.subr.bf16.mxu0 0
  %733 = vmatpush1.bf16.msra.mxu0 %v534
  %734 = vmatprep.subr.bf16.mxu0 0
  %735 = vmatpush2.bf16.msra.mxu0 %v549
  %736 = vmatprep.subr.bf16.mxu0 0
  %737 = vmatpush2.bf16.msra.mxu0 %v548
  %738 = vmatprep.subr.bf16.mxu0 0
  %739 = vmatpush2.bf16.msra.mxu0 %v547
  %740 = vmatprep.subr.bf16.mxu0 0
  %741 = vmatpush2.bf16.msra.mxu0 %v546
  %742 = vmatprep.subr.bf16.mxu0 0
  %743 = vmatpush2.bf16.msra.mxu0 %v545
  %744 = vmatprep.subr.bf16.mxu0 0
  %745 = vmatpush2.bf16.msra.mxu0 %v544
  %746 = vmatprep.subr.bf16.mxu0 0
  %747 = vmatpush2.bf16.msra.mxu0 %v543
  %748 = vmatprep.subr.bf16.mxu0 0
  %749 = vmatpush2.bf16.msra.mxu0 %v542
  %750 = vmatprep.mubr.bf16.mxu0 %v289
  %751 = vmatmul.mubr.bf16.gmra.mxu0 %v288
  %v752 = vpop.f32.mrf.mxu0
  %v753 = vadd.f32 %v617, %v752
  %v754 = vpop.f32.mrf.mxu0
  %v755 = vpop.f32.mrf.mxu0
  %v756 = vadd.f32 %v620, %v755
  %v757 = vpop.f32.mrf.mxu0
  %758 = vmatprep.mubr.bf16.mxu0 %v293
  %759 = vmatmul.mubr.bf16.gmra.mxu0 %v292
  %v760 = vpop.f32.mrf.mxu0
  %v761 = vadd.f32 %v625, %v760
  %v762 = vpop.f32.mrf.mxu0
  %v763 = vpop.f32.mrf.mxu0
  %v764 = vadd.f32 %v628, %v763
  %v765 = vpop.f32.mrf.mxu0
  %766 = vmatprep.mubr.bf16.mxu0 %v297
  %767 = vmatmul.mubr.bf16.gmra.mxu0 %v296
  %v768 = vpop.f32.mrf.mxu0
  %v769 = vadd.f32 %v633, %v768
  %v770 = vpop.f32.mrf.mxu0
  %v771 = vpop.f32.mrf.mxu0
  %v772 = vadd.f32 %v636, %v771
  %v773 = vpop.f32.mrf.mxu0
  %774 = vmatprep.mubr.bf16.mxu0 %v301
  %775 = vmatmul.mubr.bf16.gmra.mxu0 %v300
  %v776 = vpop.f32.mrf.mxu0
  %v777 = vadd.f32 %v641, %v776
  %v778 = vpop.f32.mrf.mxu0
  %v779 = vpop.f32.mrf.mxu0
  %v780 = vadd.f32 %v644, %v779
  %v781 = vpop.f32.mrf.mxu0
  %782 = vmatprep.mubr.bf16.mxu0 %v305
  %783 = vmatmul.mubr.bf16.gmra.mxu0 %v304
  %v784 = vpop.f32.mrf.mxu0
  %v785 = vadd.f32 %v649, %v784
  %v786 = vpop.f32.mrf.mxu0
  %v787 = vpop.f32.mrf.mxu0
  %v788 = vadd.f32 %v652, %v787
  %v789 = vpop.f32.mrf.mxu0
  %790 = vmatprep.mubr.bf16.mxu0 %v309
  %791 = vmatmul.mubr.bf16.gmra.mxu0 %v308
  %v792 = vpop.f32.mrf.mxu0
  %v793 = vadd.f32 %v657, %v792
  %v794 = vpop.f32.mrf.mxu0
  %v795 = vpop.f32.mrf.mxu0
  %v796 = vadd.f32 %v660, %v795
  %v797 = vpop.f32.mrf.mxu0
  %798 = vmatprep.mubr.bf16.mxu0 %v313
  %799 = vmatmul.mubr.bf16.gmra.mxu0 %v312
  %v800 = vpop.f32.mrf.mxu0
  %v801 = vadd.f32 %v665, %v800
  %v802 = vpop.f32.mrf.mxu0
  %v803 = vpop.f32.mrf.mxu0
  %v804 = vadd.f32 %v668, %v803
  %v805 = vpop.f32.mrf.mxu0
  %806 = vmatprep.mubr.bf16.mxu0 %v317
  %807 = vmatmul.mubr.bf16.gmra.mxu0 %v316
  %v808 = vpop.f32.mrf.mxu0
  %v809 = vadd.f32 %v673, %v808
  %v810 = vpop.f32.mrf.mxu0
  %v811 = vpop.f32.mrf.mxu0
  %v812 = vadd.f32 %v676, %v811
  %v813 = vpop.f32.mrf.mxu0
  %814 = vmatprep.mubr.bf16.mxu0 %v321
  %815 = vmatmul.mubr.bf16.gmra.mxu0 %v320
  %v816 = vpop.f32.mrf.mxu0
  %v817 = vadd.f32 %v681, %v816
  %v818 = vpop.f32.mrf.mxu0
  %v819 = vpop.f32.mrf.mxu0
  %v820 = vadd.f32 %v684, %v819
  %v821 = vpop.f32.mrf.mxu0
  %822 = vmatprep.mubr.bf16.mxu0 %v325
  %823 = vmatmul.mubr.bf16.gmra.mxu0 %v324
  %v824 = vpop.f32.mrf.mxu0
  %v825 = vadd.f32 %v689, %v824
  %v826 = vpop.f32.mrf.mxu0
  %v827 = vpop.f32.mrf.mxu0
  %v828 = vadd.f32 %v692, %v827
  %v829 = vpop.f32.mrf.mxu0
  %830 = vmatprep.mubr.bf16.mxu0 %v329
  %831 = vmatmul.mubr.bf16.gmra.mxu0 %v328
  %v832 = vpop.f32.mrf.mxu0
  %v833 = vadd.f32 %v697, %v832
  %v834 = vpop.f32.mrf.mxu0
  %v835 = vpop.f32.mrf.mxu0
  %v836 = vadd.f32 %v700, %v835
  %v837 = vpop.f32.mrf.mxu0
  %838 = vmatprep.mubr.bf16.mxu0 %v333
  %839 = vmatmul.mubr.bf16.gmra.mxu0 %v332
  %v840 = vpop.f32.mrf.mxu0
  %v841 = vadd.f32 %v705, %v840
  %v842 = vpop.f32.mrf.mxu0
  %v843 = vpop.f32.mrf.mxu0
  %v844 = vadd.f32 %v708, %v843
  %v845 = vpop.f32.mrf.mxu0
  %846 = vmatprep.mubr.bf16.mxu0 %v337
  %847 = vmatmul.mubr.bf16.gmra.mxu0 %v336
  %v848 = vpop.f32.mrf.mxu0
  %v849 = vadd.f32 %v713, %v848
  %v850 = vpop.f32.mrf.mxu0
  %v851 = vpop.f32.mrf.mxu0
  %v852 = vpop.f32.mrf.mxu0
  %853 = vdwg.mxu0
  %v854 = vmax.f32 %v753, 0.0
  %v855 = vmax.f32 %v756, 0.0
  %v856 = vmax.f32 %v761, 0.0
  %v857 = vmax.f32 %v764, 0.0
  %v858 = vmax.f32 %v769, 0.0
  %v859 = vmax.f32 %v772, 0.0
  %v860 = vmax.f32 %v777, 0.0
  %v861 = vmax.f32 %v780, 0.0
  %v862 = vmax.f32 %v785, 0.0
  %v863 = vmax.f32 %v788, 0.0
  %v864 = vmax.f32 %v793, 0.0
  %v865 = vmax.f32 %v796, 0.0
  %v866 = vmax.f32 %v801, 0.0
  %v867 = vmax.f32 %v804, 0.0
  %v868 = vmax.f32 %v809, 0.0
  %v869 = vmax.f32 %v812, 0.0
  %v870 = vmax.f32 %v817, 0.0
  %v871 = vmax.f32 %v820, 0.0
  %v872 = vmax.f32 %v825, 0.0
  %v873 = vmax.f32 %v828, 0.0
  %v874 = vmax.f32 %v833, 0.0
  %v875 = vmax.f32 %v836, 0.0
  %v876 = vmax.f32 %v841, 0.0
  %v877 = vmax.f32 %v844, 0.0
  %v878 = vmax.f32 %v849, 0.0
  %v879 = vpack.c.bf16 %v855, %v854
  %v880 = vpack.c.bf16 %v857, %v856
  %v881 = vpack.c.bf16 %v859, %v858
  %v882 = vpack.c.bf16 %v861, %v860
  %v883 = vpack.c.bf16 %v863, %v862
  %v884 = vpack.c.bf16 %v865, %v864
  %v885 = vpack.c.bf16 %v867, %v866
  %v886 = vpack.c.bf16 %v869, %v868
  %v887 = vpack.c.bf16 %v871, %v870
  %v888 = vpack.c.bf16 %v873, %v872
  %v889 = vpack.c.bf16 %v875, %v874
  %v890 = vpack.c.bf16 %v877, %v876
  %v891 = vpack.c.bf16 %v878, %v878
  %v905 = vunpack.c.l.b16 %v879
  %v906 = vunpack.c.h.b16 %v879
  %v907 = vunpack.c.l.b16 %v880
  %v908 = vunpack.c.h.b16 %v880
  %v909 = vunpack.c.l.b16 %v881
  %v910 = vunpack.c.h.b16 %v881
  %v911 = vunpack.c.l.b16 %v882
  %v912 = vunpack.c.h.b16 %v882
  %v913 = vunpack.c.l.b16 %v883
  %v914 = vunpack.c.h.b16 %v883
  %v915 = vunpack.c.l.b16 %v884
  %v916 = vunpack.c.h.b16 %v884
  %v917 = vunpack.c.l.b16 %v885
  %v918 = vunpack.c.h.b16 %v885
  %v919 = vunpack.c.l.b16 %v886
  %v920 = vunpack.c.h.b16 %v886
  %v921 = vunpack.c.l.b16 %v887
  %v922 = vunpack.c.h.b16 %v887
  %v923 = vunpack.c.l.b16 %v888
  %v924 = vunpack.c.h.b16 %v888
  %v925 = vunpack.c.l.b16 %v889
  %v926 = vunpack.c.h.b16 %v889
  %v927 = vunpack.c.l.b16 %v890
  %v928 = vunpack.c.h.b16 %v890
  %v929 = vunpack.c.l.b16 %v891
  %v930 = vpack.c.b16 %v905, %v905
  %v931 = vpack.c.b16 %v906, %v906
  %v932 = vpack.c.b16 %v907, %v907
  %v933 = vpack.c.b16 %v908, %v908
  %v934 = vpack.c.b16 %v909, %v909
  %v935 = vpack.c.b16 %v910, %v910
  %v936 = vpack.c.b16 %v911, %v911
  %v937 = vpack.c.b16 %v912, %v912
  %v938 = vpack.c.b16 %v913, %v913
  %v939 = vpack.c.b16 %v914, %v914
  %v940 = vpack.c.b16 %v915, %v915
  %v941 = vpack.c.b16 %v916, %v916
  %v942 = vpack.c.b16 %v917, %v917
  %v943 = vpack.c.b16 %v918, %v918
  %v944 = vpack.c.b16 %v919, %v919
  %v945 = vpack.c.b16 %v920, %v920
  %v946 = vpack.c.b16 %v921, %v921
  %v947 = vpack.c.b16 %v922, %v922
  %v948 = vpack.c.b16 %v923, %v923
  %v949 = vpack.c.b16 %v924, %v924
  %v950 = vpack.c.b16 %v925, %v925
  %v951 = vpack.c.b16 %v926, %v926
  %v952 = vpack.c.b16 %v927, %v927
  %v953 = vpack.c.b16 %v928, %v928
  %v954 = vpack.c.b16 %v929, %v929
  %980 = vst [vmem:[%s3] sm:$0xf] %v930
  %981 = vst [vmem:[%s3 + $0x4] sm:$0xf] %v931
  %982 = vst [vmem:[%s3 + $0x8] sm:$0xf] %v932
  %983 = vst [vmem:[%s3 + $0xc] sm:$0xf] %v933
  %984 = vst [vmem:[%s3 + $0x10] sm:$0xf] %v934
  %985 = vst [vmem:[%s3 + $0x14] sm:$0xf] %v935
  %986 = vst [vmem:[%s3 + $0x18] sm:$0xf] %v936
  %987 = vst [vmem:[%s3 + $0x1c] sm:$0xf] %v937
  %988 = vst [vmem:[%s3 + $0x20] sm:$0xf] %v938
  %989 = vst [vmem:[%s3 + $0x24] sm:$0xf] %v939
  %990 = vst [vmem:[%s3 + $0x28] sm:$0xf] %v940
  %991 = vst [vmem:[%s3 + $0x2c] sm:$0xf] %v941
  %992 = vst [vmem:[%s3 + $0x30] sm:$0xf] %v942
  %993 = vst [vmem:[%s3 + $0x34] sm:$0xf] %v943
  %994 = vst [vmem:[%s3 + $0x38] sm:$0xf] %v944
  %995 = vst [vmem:[%s3 + $0x3c] sm:$0xf] %v945
  %996 = vst [vmem:[%s3 + $0x40] sm:$0xf] %v946
  %997 = vst [vmem:[%s3 + $0x44] sm:$0xf] %v947
  %998 = vst [vmem:[%s3 + $0x48] sm:$0xf] %v948
  %999 = vst [vmem:[%s3 + $0x4c] sm:$0xf] %v949
  %1000 = vst [vmem:[%s3 + $0x50] sm:$0xf] %v950
  %1001 = vst [vmem:[%s3 + $0x54] sm:$0xf] %v951
  %1002 = vst [vmem:[%s3 + $0x58] sm:$0xf] %v952
  %1003 = vst [vmem:[%s3 + $0x5c] sm:$0xf] %v953
  %1004 = vst [vmem:[%s3 + $0x60] sm:$0xf] %v954
  // Predicated region
  $region14: #{red_or_green_forward.5} parent=0 // pred_check
    _
  $region15: #{red_or_green_forward.5} parent=0 // pred_check_branch
    %1006 = sbr.rel (0) target = $region17
  $region16: #{red_or_green_forward.5} parent=0 // pred_region
    _
  $region17: #{red_or_green_forward.5} parent=0 // pred_fallthru
    _
  // Predicated region
  $region18: #{red_or_green_forward.5} parent=0 // pred_check
    _
  $region19: #{red_or_green_forward.5} parent=0 // pred_check_branch
    %1008 = sbr.rel (0) target = $region21
  $region20: #{red_or_green_forward.5} parent=0 // pred_region
    _
  $region21: #{red_or_green_forward.5} parent=0 // pred_fallthru
    _

// kernel: red_or_green_forward.6
$region0: #{red_or_green_forward.6}
  #allocation0 [shape = 'u32[]', space=smem, size = 0x4, offset = 0x4, fixed_abs, tag = 'smem constant byte address 0x4 - core index']
  #allocation1 [shape = 'u32[144,128]{1,0:T(1,128)}', space=vmem, size = 0x12000, scoped, tag = 'internal scratch']
  %s0 = inlined_call_operand.vmem [shape: bf16[128,640], index: 0, kind: input, shape index: {}]
  %s1 = inlined_call_operand.vmem [shape: bf16[640,128], index: 1, kind: input, shape index: {}]
  %s2 = inlined_call_operand.vmem [shape: f32[1,128], index: 2, kind: input, shape index: {}]
  %s3 = inlined_call_operand.vmem [shape: bf16[128,128], index: 3, kind: output, shape index: {}]
  %s4 = sld [smem:[#allocation0]]
  $region22: #{red_or_green_forward.6} parent=0
    _
  %s6 = ssub.s32 1, %s4
  %s7 = scalar_select 0, %s6, %s4
  // Predicated region
  $region2: #{red_or_green_forward.6} parent=0 // pred_check
    _
  $region3: #{red_or_green_forward.6} parent=0 // pred_check_branch
    %9 = sbr.rel (0) target = $region5
  $region4: #{red_or_green_forward.6} parent=0 // pred_region
    _
  $region5: #{red_or_green_forward.6} parent=0 // pred_fallthru
    _
  // Predicated region
  $region6: #{red_or_green_forward.6} parent=0 // pred_check
    _
  $region7: #{red_or_green_forward.6} parent=0 // pred_check_branch
    %11 = sbr.rel (0) target = $region9
  $region8: #{red_or_green_forward.6} parent=0 // pred_region
    _
  $region9: #{red_or_green_forward.6} parent=0 // pred_fallthru
    _
  // Predicated region
  $region10: #{red_or_green_forward.6} parent=0 // pred_check
    _
  $region11: #{red_or_green_forward.6} parent=0 // pred_check_branch
    %13 = sbr.rel (0) target = $region13
  $region12: #{red_or_green_forward.6} parent=0 // pred_region
    _
  $region13: #{red_or_green_forward.6} parent=0 // pred_fallthru
    _
  %v15 = vld [vmem:[%s0] sm:$0xff]
  %v16 = vld [vmem:[%s0 + $0x8] sm:$0xff]
  %v17 = vld [vmem:[%s0 + $0x10] sm:$0xf]
  %v18 = vld [vmem:[%s0 + $0x14] sm:$0xff]
  %v19 = vld [vmem:[%s0 + $0x1c] sm:$0xff]
  %v20 = vld [vmem:[%s0 + $0x24] sm:$0xf]
  %v21 = vld [vmem:[%s0 + $0x28] sm:$0xff]
  %v22 = vld [vmem:[%s0 + $0x30] sm:$0xff]
  %v23 = vld [vmem:[%s0 + $0x38] sm:$0xf]
  %v24 = vld [vmem:[%s0 + $0x3c] sm:$0xff]
  %v25 = vld [vmem:[%s0 + $0x44] sm:$0xff]
  %v26 = vld [vmem:[%s0 + $0x4c] sm:$0xf]
  %v27 = vld [vmem:[%s0 + $0x50] sm:$0xff]
  %v28 = vld [vmem:[%s0 + $0x58] sm:$0xff]
  %v29 = vld [vmem:[%s0 + $0x60] sm:$0xf]
  %v30 = vld [vmem:[%s0 + $0x64] sm:$0xff]
  %v31 = vld [vmem:[%s0 + $0x6c] sm:$0xff]
  %v32 = vld [vmem:[%s0 + $0x74] sm:$0xf]
  %v33 = vld [vmem:[%s0 + $0x78] sm:$0xff]
  %v34 = vld [vmem:[%s0 + $0x80] sm:$0xff]
  %v35 = vld [vmem:[%s0 + $0x88] sm:$0xf]
  %v36 = vld [vmem:[%s0 + $0x8c] sm:$0xff]
  %v37 = vld [vmem:[%s0 + $0x94] sm:$0xff]
  %v38 = vld [vmem:[%s0 + $0x9c] sm:$0xf]
  %v39 = vld [vmem:[%s0 + $0xa0] sm:$0xff]
  %v40 = vld [vmem:[%s0 + $0xa8] sm:$0xff]
  %v41 = vld [vmem:[%s0 + $0xb0] sm:$0xf]
  %v42 = vld [vmem:[%s0 + $0xb4] sm:$0xff]
  %v43 = vld [vmem:[%s0 + $0xbc] sm:$0xff]
  %v44 = vld [vmem:[%s0 + $0xc4] sm:$0xf]
  %v45 = vld [vmem:[%s0 + $0xc8] sm:$0xff]
  %v46 = vld [vmem:[%s0 + $0xd0] sm:$0xff]
  %v47 = vld [vmem:[%s0 + $0xd8] sm:$0xf]
  %v48 = vld [vmem:[%s0 + $0xdc] sm:$0xff]
  %v49 = vld [vmem:[%s0 + $0xe4] sm:$0xff]
  %v50 = vld [vmem:[%s0 + $0xec] sm:$0xf]
  %v51 = vld [vmem:[%s0 + $0xf0] sm:$0xff]
  %v52 = vld [vmem:[%s0 + $0xf8] sm:$0xff]
  %v53 = vld [vmem:[%s0 + $0x100] sm:$0xf]
  %v54 = vld [vmem:[%s0 + $0x104] sm:$0xff]
  %v55 = vld [vmem:[%s0 + $0x10c] sm:$0xff]
  %v56 = vld [vmem:[%s0 + $0x114] sm:$0xf]
  %v57 = vld [vmem:[%s0 + $0x118] sm:$0xff]
  %v58 = vld [vmem:[%s0 + $0x120] sm:$0xff]
  %v59 = vld [vmem:[%s0 + $0x128] sm:$0xf]
  %v60 = vld [vmem:[%s0 + $0x12c] sm:$0xff]
  %v61 = vld [vmem:[%s0 + $0x134] sm:$0xff]
  %v62 = vld [vmem:[%s0 + $0x13c] sm:$0xf]
  %v63 = vld [vmem:[%s1] sm:$0xf]
  %v64 = vld [vmem:[%s1 + $0x4] sm:$0xf]
  %v65 = vld [vmem:[%s1 + $0x8] sm:$0xf]
  %v66 = vld [vmem:[%s1 + $0xc] sm:$0xf]
  %v67 = vld [vmem:[%s1 + $0x10] sm:$0xf]
  %v68 = vld [vmem:[%s1 + $0x14] sm:$0xf]
  %v69 = vld [vmem:[%s1 + $0x18] sm:$0xf]
  %v70 = vld [vmem:[%s1 + $0x1c] sm:$0xf]
  %v71 = vld [vmem:[%s1 + $0x20] sm:$0xf]
  %v72 = vld [vmem:[%s1 + $0x24] sm:$0xf]
  %v73 = vld [vmem:[%s1 + $0x28] sm:$0xf]
  %v74 = vld [vmem:[%s1 + $0x2c] sm:$0xf]
  %v75 = vld [vmem:[%s1 + $0x30] sm:$0xf]
  %v76 = vld [vmem:[%s1 + $0x34] sm:$0xf]
  %v77 = vld [vmem:[%s1 + $0x38] sm:$0xf]
  %v78 = vld [vmem:[%s1 + $0x3c] sm:$0xf]
  %v79 = vld [vmem:[%s1 + $0x40] sm:$0xf]
  %v80 = vld [vmem:[%s1 + $0x44] sm:$0xf]
  %v81 = vld [vmem:[%s1 + $0x48] sm:$0xf]
  %v82 = vld [vmem:[%s1 + $0x4c] sm:$0xf]
  %v83 = vld [vmem:[%s1 + $0x50] sm:$0xf]
  %v84 = vld [vmem:[%s1 + $0x54] sm:$0xf]
  %v85 = vld [vmem:[%s1 + $0x58] sm:$0xf]
  %v86 = vld [vmem:[%s1 + $0x5c] sm:$0xf]
  %v87 = vld [vmem:[%s1 + $0x60] sm:$0xf]
  %v88 = vld [vmem:[%s1 + $0x64] sm:$0xf]
  %v89 = vld [vmem:[%s1 + $0x68] sm:$0xf]
  %v90 = vld [vmem:[%s1 + $0x6c] sm:$0xf]
  %v91 = vld [vmem:[%s1 + $0x70] sm:$0xf]
  %v92 = vld [vmem:[%s1 + $0x74] sm:$0xf]
  %v93 = vld [vmem:[%s1 + $0x78] sm:$0xf]
  %v94 = vld [vmem:[%s1 + $0x7c] sm:$0xf]
  %v95 = vld [vmem:[%s1 + $0x80] sm:$0xf]
  %v96 = vld [vmem:[%s1 + $0x84] sm:$0xf]
  %v97 = vld [vmem:[%s1 + $0x88] sm:$0xf]
  %v98 = vld [vmem:[%s1 + $0x8c] sm:$0xf]
  %v99 = vld [vmem:[%s1 + $0x90] sm:$0xf]
  %v100 = vld [vmem:[%s1 + $0x94] sm:$0xf]
  %v101 = vld [vmem:[%s1 + $0x98] sm:$0xf]
  %v102 = vld [vmem:[%s1 + $0x9c] sm:$0xf]
  %v103 = vld [vmem:[%s1 + $0xa0] sm:$0xf]
  %v104 = vld [vmem:[%s1 + $0xa4] sm:$0xf]
  %v105 = vld [vmem:[%s1 + $0xa8] sm:$0xf]
  %v106 = vld [vmem:[%s1 + $0xac] sm:$0xf]
  %v107 = vld [vmem:[%s1 + $0xb0] sm:$0xf]
  %v108 = vld [vmem:[%s1 + $0xb4] sm:$0xf]
  %v109 = vld [vmem:[%s1 + $0xb8] sm:$0xf]
  %v110 = vld [vmem:[%s1 + $0xbc] sm:$0xf]
  %v111 = vld [vmem:[%s1 + $0xc0] sm:$0xf]
  %v112 = vld [vmem:[%s1 + $0xc4] sm:$0xf]
  %v113 = vld [vmem:[%s1 + $0xc8] sm:$0xf]
  %v114 = vld [vmem:[%s1 + $0xcc] sm:$0xf]
  %v115 = vld [vmem:[%s1 + $0xd0] sm:$0xf]
  %v116 = vld [vmem:[%s1 + $0xd4] sm:$0xf]
  %v117 = vld [vmem:[%s1 + $0xd8] sm:$0xf]
  %v118 = vld [vmem:[%s1 + $0xdc] sm:$0xf]
  %v119 = vld [vmem:[%s1 + $0xe0] sm:$0xf]
  %v120 = vld [vmem:[%s1 + $0xe4] sm:$0xf]
  %v121 = vld [vmem:[%s1 + $0xe8] sm:$0xf]
  %v122 = vld [vmem:[%s1 + $0xec] sm:$0xf]
  %v123 = vld [vmem:[%s1 + $0xf0] sm:$0xf]
  %v124 = vld [vmem:[%s1 + $0xf4] sm:$0xf]
  %v125 = vld [vmem:[%s1 + $0xf8] sm:$0xf]
  %v126 = vld [vmem:[%s1 + $0xfc] sm:$0xf]
  %v127 = vld [vmem:[%s1 + $0x100] sm:$0xf]
  %v128 = vld [vmem:[%s1 + $0x104] sm:$0xf]
  %v129 = vld [vmem:[%s1 + $0x108] sm:$0xf]
  %v130 = vld [vmem:[%s1 + $0x10c] sm:$0xf]
  %v131 = vld [vmem:[%s1 + $0x110] sm:$0xf]
  %v132 = vld [vmem:[%s1 + $0x114] sm:$0xf]
  %v133 = vld [vmem:[%s1 + $0x118] sm:$0xf]
  %v134 = vld [vmem:[%s1 + $0x11c] sm:$0xf]
  %v135 = vld [vmem:[%s1 + $0x120] sm:$0xf]
  %v136 = vld [vmem:[%s1 + $0x124] sm:$0xf]
  %v137 = vld [vmem:[%s1 + $0x128] sm:$0xf]
  %v138 = vld [vmem:[%s1 + $0x12c] sm:$0xf]
  %v139 = vld [vmem:[%s1 + $0x130] sm:$0xf]
  %v140 = vld [vmem:[%s1 + $0x134] sm:$0xf]
  %v141 = vld [vmem:[%s1 + $0x138] sm:$0xf]
  %v142 = vld [vmem:[%s1 + $0x13c] sm:$0xf]
  %v143 = vld [vmem:[%s2] sm:$0x1]
  %v145 = vlaneseq
  %v146 = vshrl.u32 %v145, 7
  %v147 = vsub.s32 0, %v146
  %v148 = vrot.slane %v143, %v147
  %v198 = vunpack.c.l.b16 %v15
  %v199 = vunpack.c.h.b16 %v15
  %v200 = vunpack.c.l.b16 %v16
  %v201 = vunpack.c.h.b16 %v16
  %v202 = vunpack.c.l.b16 %v17
  %v203 = vunpack.c.l.b16 %v18
  %v204 = vunpack.c.h.b16 %v18
  %v205 = vunpack.c.l.b16 %v19
  %v206 = vunpack.c.h.b16 %v19
  %v207 = vunpack.c.l.b16 %v20
  %v208 = vunpack.c.l.b16 %v21
  %v209 = vunpack.c.h.b16 %v21
  %v210 = vunpack.c.l.b16 %v22
  %v211 = vunpack.c.h.b16 %v22
  %v212 = vunpack.c.l.b16 %v23
  %v213 = vunpack.c.l.b16 %v24
  %v214 = vunpack.c.h.b16 %v24
  %v215 = vunpack.c.l.b16 %v25
  %v216 = vunpack.c.h.b16 %v25
  %v217 = vunpack.c.l.b16 %v26
  %v218 = vunpack.c.l.b16 %v27
  %v219 = vunpack.c.h.b16 %v27
  %v220 = vunpack.c.l.b16 %v28
  %v221 = vunpack.c.h.b16 %v28
  %v222 = vunpack.c.l.b16 %v29
  %v223 = vunpack.c.l.b16 %v30
  %v224 = vunpack.c.h.b16 %v30
  %v225 = vunpack.c.l.b16 %v31
  %v226 = vunpack.c.h.b16 %v31
  %v227 = vunpack.c.l.b16 %v32
  %v228 = vunpack.c.l.b16 %v33
  %v229 = vunpack.c.h.b16 %v33
  %v230 = vunpack.c.l.b16 %v34
  %v231 = vunpack.c.h.b16 %v34
  %v232 = vunpack.c.l.b16 %v35
  %v233 = vunpack.c.l.b16 %v36
  %v234 = vunpack.c.h.b16 %v36
  %v235 = vunpack.c.l.b16 %v37
  %v236 = vunpack.c.h.b16 %v37
  %v237 = vunpack.c.l.b16 %v38
  %v238 = vunpack.c.l.b16 %v39
  %v239 = vunpack.c.h.b16 %v39
  %v240 = vunpack.c.l.b16 %v40
  %v241 = vunpack.c.h.b16 %v40
  %v242 = vunpack.c.l.b16 %v41
  %v243 = vunpack.c.l.b16 %v42
  %v244 = vunpack.c.h.b16 %v42
  %v245 = vunpack.c.l.b16 %v43
  %v246 = vunpack.c.h.b16 %v43
  %v247 = vunpack.c.l.b16 %v44
  %v248 = vunpack.c.l.b16 %v45
  %v249 = vunpack.c.h.b16 %v45
  %v250 = vunpack.c.l.b16 %v46
  %v251 = vunpack.c.h.b16 %v46
  %v252 = vunpack.c.l.b16 %v47
  %v253 = vunpack.c.l.b16 %v48
  %v254 = vunpack.c.h.b16 %v48
  %v255 = vunpack.c.l.b16 %v49
  %v256 = vunpack.c.h.b16 %v49
  %v257 = vunpack.c.l.b16 %v50
  %v258 = vunpack.c.l.b16 %v51
  %v259 = vunpack.c.h.b16 %v51
  %v260 = vunpack.c.l.b16 %v52
  %v261 = vunpack.c.h.b16 %v52
  %v262 = vunpack.c.l.b16 %v53
  %v263 = vunpack.c.l.b16 %v54
  %v264 = vunpack.c.h.b16 %v54
  %v265 = vunpack.c.l.b16 %v55
  %v266 = vunpack.c.h.b16 %v55
  %v267 = vunpack.c.l.b16 %v56
  %v268 = vunpack.c.l.b16 %v57
  %v269 = vunpack.c.h.b16 %v57
  %v270 = vunpack.c.l.b16 %v58
  %v271 = vunpack.c.h.b16 %v58
  %v272 = vunpack.c.l.b16 %v59
  %v273 = vunpack.c.l.b16 %v60
  %v274 = vunpack.c.h.b16 %v60
  %v275 = vunpack.c.l.b16 %v61
  %v276 = vunpack.c.h.b16 %v61
  %v277 = vunpack.c.l.b16 %v62
  %v278 = vpack.c.b16 %v203, %v198
  %v279 = vpack.c.b16 %v204, %v199
  %v280 = vpack.c.b16 %v205, %v200
  %v281 = vpack.c.b16 %v206, %v201
  %v282 = vpack.c.b16 %v207, %v202
  %v283 = vpack.c.b16 %v213, %v208
  %v284 = vpack.c.b16 %v214, %v209
  %v285 = vpack.c.b16 %v215, %v210
  %v286 = vpack.c.b16 %v216, %v211
  %v287 = vpack.c.b16 %v217, %v212
  %v288 = vpack.c.b16 %v223, %v218
  %v289 = vpack.c.b16 %v224, %v219
  %v290 = vpack.c.b16 %v225, %v220
  %v291 = vpack.c.b16 %v226, %v221
  %v292 = vpack.c.b16 %v227, %v222
  %v293 = vpack.c.b16 %v233, %v228
  %v294 = vpack.c.b16 %v234, %v229
  %v295 = vpack.c.b16 %v235, %v230
  %v296 = vpack.c.b16 %v236, %v231
  %v297 = vpack.c.b16 %v237, %v232
  %v298 = vpack.c.b16 %v243, %v238
  %v299 = vpack.c.b16 %v244, %v239
  %v300 = vpack.c.b16 %v245, %v240
  %v301 = vpack.c.b16 %v246, %v241
  %v302 = vpack.c.b16 %v247, %v242
  %v303 = vpack.c.b16 %v253, %v248
  %v304 = vpack.c.b16 %v254, %v249
  %v305 = vpack.c.b16 %v255, %v250
  %v306 = vpack.c.b16 %v256, %v251
  %v307 = vpack.c.b16 %v257, %v252
  %v308 = vpack.c.b16 %v263, %v258
  %v309 = vpack.c.b16 %v264, %v259
  %v310 = vpack.c.b16 %v265, %v260
  %v311 = vpack.c.b16 %v266, %v261
  %v312 = vpack.c.b16 %v267, %v262
  %v313 = vpack.c.b16 %v273, %v268
  %v314 = vpack.c.b16 %v274, %v269
  %v315 = vpack.c.b16 %v275, %v270
  %v316 = vpack.c.b16 %v276, %v271
  %v317 = vpack.c.b16 %v277, %v272
  %v438 = vunpack.c.l.b16 %v63
  %v439 = vunpack.c.l.b16 %v64
  %v440 = vunpack.c.l.b16 %v65
  %v441 = vunpack.c.l.b16 %v66
  %v442 = vunpack.c.l.b16 %v67
  %v443 = vunpack.c.l.b16 %v68
  %v444 = vunpack.c.l.b16 %v69
  %v445 = vunpack.c.l.b16 %v70
  %v446 = vunpack.c.l.b16 %v71
  %v447 = vunpack.c.l.b16 %v72
  %v448 = vunpack.c.l.b16 %v73
  %v449 = vunpack.c.l.b16 %v74
  %v450 = vunpack.c.l.b16 %v75
  %v451 = vunpack.c.l.b16 %v76
  %v452 = vunpack.c.l.b16 %v77
  %v453 = vunpack.c.l.b16 %v78
  %v454 = vunpack.c.l.b16 %v79
  %v455 = vunpack.c.l.b16 %v80
  %v456 = vunpack.c.l.b16 %v81
  %v457 = vunpack.c.l.b16 %v82
  %v458 = vunpack.c.l.b16 %v83
  %v459 = vunpack.c.l.b16 %v84
  %v460 = vunpack.c.l.b16 %v85
  %v461 = vunpack.c.l.b16 %v86
  %v462 = vunpack.c.l.b16 %v87
  %v463 = vunpack.c.l.b16 %v88
  %v464 = vunpack.c.l.b16 %v89
  %v465 = vunpack.c.l.b16 %v90
  %v466 = vunpack.c.l.b16 %v91
  %v467 = vunpack.c.l.b16 %v92
  %v468 = vunpack.c.l.b16 %v93
  %v469 = vunpack.c.l.b16 %v94
  %v470 = vunpack.c.l.b16 %v95
  %v471 = vunpack.c.l.b16 %v96
  %v472 = vunpack.c.l.b16 %v97
  %v473 = vunpack.c.l.b16 %v98
  %v474 = vunpack.c.l.b16 %v99
  %v475 = vunpack.c.l.b16 %v100
  %v476 = vunpack.c.l.b16 %v101
  %v477 = vunpack.c.l.b16 %v102
  %v478 = vunpack.c.l.b16 %v103
  %v479 = vunpack.c.l.b16 %v104
  %v480 = vunpack.c.l.b16 %v105
  %v481 = vunpack.c.l.b16 %v106
  %v482 = vunpack.c.l.b16 %v107
  %v483 = vunpack.c.l.b16 %v108
  %v484 = vunpack.c.l.b16 %v109
  %v485 = vunpack.c.l.b16 %v110
  %v486 = vunpack.c.l.b16 %v111
  %v487 = vunpack.c.l.b16 %v112
  %v488 = vunpack.c.l.b16 %v113
  %v489 = vunpack.c.l.b16 %v114
  %v490 = vunpack.c.l.b16 %v115
  %v491 = vunpack.c.l.b16 %v116
  %v492 = vunpack.c.l.b16 %v117
  %v493 = vunpack.c.l.b16 %v118
  %v494 = vunpack.c.l.b16 %v119
  %v495 = vunpack.c.l.b16 %v120
  %v496 = vunpack.c.l.b16 %v121
  %v497 = vunpack.c.l.b16 %v122
  %v498 = vunpack.c.l.b16 %v123
  %v499 = vunpack.c.l.b16 %v124
  %v500 = vunpack.c.l.b16 %v125
  %v501 = vunpack.c.l.b16 %v126
  %v502 = vunpack.c.l.b16 %v127
  %v503 = vunpack.c.l.b16 %v128
  %v504 = vunpack.c.l.b16 %v129
  %v505 = vunpack.c.l.b16 %v130
  %v506 = vunpack.c.l.b16 %v131
  %v507 = vunpack.c.l.b16 %v132
  %v508 = vunpack.c.l.b16 %v133
  %v509 = vunpack.c.l.b16 %v134
  %v510 = vunpack.c.l.b16 %v135
  %v511 = vunpack.c.l.b16 %v136
  %v512 = vunpack.c.l.b16 %v137
  %v513 = vunpack.c.l.b16 %v138
  %v514 = vunpack.c.l.b16 %v139
  %v515 = vunpack.c.l.b16 %v140
  %v516 = vunpack.c.l.b16 %v141
  %v517 = vunpack.c.l.b16 %v142
  %v518 = vpack.c.b16 %v439, %v438
  %v519 = vpack.c.b16 %v441, %v440
  %v520 = vpack.c.b16 %v443, %v442
  %v521 = vpack.c.b16 %v445, %v444
  %v522 = vpack.c.b16 %v447, %v446
  %v523 = vpack.c.b16 %v449, %v448
  %v524 = vpack.c.b16 %v451, %v450
  %v525 = vpack.c.b16 %v453, %v452
  %v526 = vpack.c.b16 %v455, %v454
  %v527 = vpack.c.b16 %v457, %v456
  %v528 = vpack.c.b16 %v459, %v458
  %v529 = vpack.c.b16 %v461, %v460
  %v530 = vpack.c.b16 %v463, %v462
  %v531 = vpack.c.b16 %v465, %v464
  %v532 = vpack.c.b16 %v467, %v466
  %v533 = vpack.c.b16 %v469, %v468
  %v534 = vpack.c.b16 %v471, %v470
  %v535 = vpack.c.b16 %v473, %v472
  %v536 = vpack.c.b16 %v475, %v474
  %v537 = vpack.c.b16 %v477, %v476
  %v538 = vpack.c.b16 %v479, %v478
  %v539 = vpack.c.b16 %v481, %v480
  %v540 = vpack.c.b16 %v483, %v482
  %v541 = vpack.c.b16 %v485, %v484
  %v542 = vpack.c.b16 %v487, %v486
  %v543 = vpack.c.b16 %v489, %v488
  %v544 = vpack.c.b16 %v491, %v490
  %v545 = vpack.c.b16 %v493, %v492
  %v546 = vpack.c.b16 %v495, %v494
  %v547 = vpack.c.b16 %v497, %v496
  %v548 = vpack.c.b16 %v499, %v498
  %v549 = vpack.c.b16 %v501, %v500
  %v550 = vpack.c.b16 %v503, %v502
  %v551 = vpack.c.b16 %v505, %v504
  %v552 = vpack.c.b16 %v507, %v506
  %v553 = vpack.c.b16 %v509, %v508
  %v554 = vpack.c.b16 %v511, %v510
  %v555 = vpack.c.b16 %v513, %v512
  %v556 = vpack.c.b16 %v515, %v514
  %v557 = vpack.c.b16 %v517, %v516
  %598 = vmatprep.subr.bf16.mxu0 0
  %599 = vmatpush1.bf16.msra.mxu0 %v525
  %600 = vmatprep.subr.bf16.mxu0 0
  %601 = vmatpush1.bf16.msra.mxu0 %v524
  %602 = vmatprep.subr.bf16.mxu0 0
  %603 = vmatpush1.bf16.msra.mxu0 %v523
  %604 = vmatprep.subr.bf16.mxu0 0
  %605 = vmatpush1.bf16.msra.mxu0 %v522
  %606 = vmatprep.subr.bf16.mxu0 0
  %607 = vmatpush1.bf16.msra.mxu0 %v521
  %608 = vmatprep.subr.bf16.mxu0 0
  %609 = vmatpush1.bf16.msra.mxu0 %v520
  %610 = vmatprep.subr.bf16.mxu0 0
  %611 = vmatpush1.bf16.msra.mxu0 %v519
  %612 = vmatprep.subr.bf16.mxu0 0
  %613 = vmatpush1.bf16.msra.mxu0 %v518
  %614 = vmatprep.subr.bf16.mxu0 0
  %615 = vmatpush2.bf16.msra.mxu0 %v533
  %616 = vmatprep.subr.bf16.mxu0 0
  %617 = vmatpush2.bf16.msra.mxu0 %v532
  %618 = vmatprep.subr.bf16.mxu0 0
  %619 = vmatpush2.bf16.msra.mxu0 %v531
  %620 = vmatprep.subr.bf16.mxu0 0
  %621 = vmatpush2.bf16.msra.mxu0 %v530
  %622 = vmatprep.subr.bf16.mxu0 0
  %623 = vmatpush2.bf16.msra.mxu0 %v529
  %624 = vmatprep.subr.bf16.mxu0 0
  %625 = vmatpush2.bf16.msra.mxu0 %v528
  %626 = vmatprep.subr.bf16.mxu0 0
  %627 = vmatpush2.bf16.msra.mxu0 %v527
  %628 = vmatprep.subr.bf16.mxu0 0
  %629 = vmatpush2.bf16.msra.mxu0 %v526
  %630 = vmatprep.mubr.bf16.mxu0 %v279
  %631 = vmatmul.mubr.bf16.gmra.mxu0 %v278
  %v632 = vpop.f32.mrf.mxu0
  %v633 = vadd.f32 %v148, %v632
  %v634 = vpop.f32.mrf.mxu0
  %v635 = vpop.f32.mrf.mxu0
  %v636 = vadd.f32 %v148, %v635
  %v637 = vpop.f32.mrf.mxu0
  %638 = vmatprep.mubr.bf16.mxu0 %v284
  %639 = vmatmul.mubr.bf16.gmra.mxu0 %v283
  %v640 = vpop.f32.mrf.mxu0
  %v641 = vadd.f32 %v148, %v640
  %v642 = vpop.f32.mrf.mxu0
  %v643 = vpop.f32.mrf.mxu0
  %v644 = vadd.f32 %v148, %v643
  %v645 = vpop.f32.mrf.mxu0
  %646 = vmatprep.mubr.bf16.mxu0 %v289
  %647 = vmatmul.mubr.bf16.gmra.mxu0 %v288
  %v648 = vpop.f32.mrf.mxu0
  %v649 = vadd.f32 %v148, %v648
  %v650 = vpop.f32.mrf.mxu0
  %v651 = vpop.f32.mrf.mxu0
  %v652 = vadd.f32 %v148, %v651
  %v653 = vpop.f32.mrf.mxu0
  %654 = vmatprep.mubr.bf16.mxu0 %v294
  %655 = vmatmul.mubr.bf16.gmra.mxu0 %v293
  %v656 = vpop.f32.mrf.mxu0
  %v657 = vadd.f32 %v148, %v656
  %v658 = vpop.f32.mrf.mxu0
  %v659 = vpop.f32.mrf.mxu0
  %v660 = vadd.f32 %v148, %v659
  %v661 = vpop.f32.mrf.mxu0
  %662 = vmatprep.mubr.bf16.mxu0 %v299
  %663 = vmatmul.mubr.bf16.gmra.mxu0 %v298
  %v664 = vpop.f32.mrf.mxu0
  %v665 = vadd.f32 %v148, %v664
  %v666 = vpop.f32.mrf.mxu0
  %v667 = vpop.f32.mrf.mxu0
  %v668 = vadd.f32 %v148, %v667
  %v669 = vpop.f32.mrf.mxu0
  %670 = vmatprep.mubr.bf16.mxu0 %v304
  %671 = vmatmul.mubr.bf16.gmra.mxu0 %v303
  %v672 = vpop.f32.mrf.mxu0
  %v673 = vadd.f32 %v148, %v672
  %v674 = vpop.f32.mrf.mxu0
  %v675 = vpop.f32.mrf.mxu0
  %v676 = vadd.f32 %v148, %v675
  %v677 = vpop.f32.mrf.mxu0
  %678 = vmatprep.mubr.bf16.mxu0 %v309
  %679 = vmatmul.mubr.bf16.gmra.mxu0 %v308
  %v680 = vpop.f32.mrf.mxu0
  %v681 = vadd.f32 %v148, %v680
  %v682 = vpop.f32.mrf.mxu0
  %v683 = vpop.f32.mrf.mxu0
  %v684 = vadd.f32 %v148, %v683
  %v685 = vpop.f32.mrf.mxu0
  %686 = vmatprep.mubr.bf16.mxu0 %v314
  %687 = vmatmul.mubr.bf16.gmra.mxu0 %v313
  %v688 = vpop.f32.mrf.mxu0
  %v689 = vadd.f32 %v148, %v688
  %v690 = vpop.f32.mrf.mxu0
  %v691 = vpop.f32.mrf.mxu0
  %v692 = vadd.f32 %v148, %v691
  %v693 = vpop.f32.mrf.mxu0
  %694 = vdwg.mxu0
  %695 = vmatprep.subr.bf16.mxu0 0
  %696 = vmatpush1.bf16.msra.mxu0 %v541
  %697 = vmatprep.subr.bf16.mxu0 0
  %698 = vmatpush1.bf16.msra.mxu0 %v540
  %699 = vmatprep.subr.bf16.mxu0 0
  %700 = vmatpush1.bf16.msra.mxu0 %v539
  %701 = vmatprep.subr.bf16.mxu0 0
  %702 = vmatpush1.bf16.msra.mxu0 %v538
  %703 = vmatprep.subr.bf16.mxu0 0
  %704 = vmatpush1.bf16.msra.mxu0 %v537
  %705 = vmatprep.subr.bf16.mxu0 0
  %706 = vmatpush1.bf16.msra.mxu0 %v536
  %707 = vmatprep.subr.bf16.mxu0 0
  %708 = vmatpush1.bf16.msra.mxu0 %v535
  %709 = vmatprep.subr.bf16.mxu0 0
  %710 = vmatpush1.bf16.msra.mxu0 %v534
  %711 = vmatprep.subr.bf16.mxu0 0
  %712 = vmatpush2.bf16.msra.mxu0 %v549
  %713 = vmatprep.subr.bf16.mxu0 0
  %714 = vmatpush2.bf16.msra.mxu0 %v548
  %715 = vmatprep.subr.bf16.mxu0 0
  %716 = vmatpush2.bf16.msra.mxu0 %v547
  %717 = vmatprep.subr.bf16.mxu0 0
  %718 = vmatpush2.bf16.msra.mxu0 %v546
  %719 = vmatprep.subr.bf16.mxu0 0
  %720 = vmatpush2.bf16.msra.mxu0 %v545
  %721 = vmatprep.subr.bf16.mxu0 0
  %722 = vmatpush2.bf16.msra.mxu0 %v544
  %723 = vmatprep.subr.bf16.mxu0 0
  %724 = vmatpush2.bf16.msra.mxu0 %v543
  %725 = vmatprep.subr.bf16.mxu0 0
  %726 = vmatpush2.bf16.msra.mxu0 %v542
  %727 = vmatprep.mubr.bf16.mxu0 %v281
  %728 = vmatmul.mubr.bf16.gmra.mxu0 %v280
  %v729 = vpop.f32.mrf.mxu0
  %v730 = vadd.f32 %v633, %v729
  %v731 = vpop.f32.mrf.mxu0
  %v732 = vpop.f32.mrf.mxu0
  %v733 = vadd.f32 %v636, %v732
  %v734 = vpop.f32.mrf.mxu0
  %735 = vmatprep.mubr.bf16.mxu0 %v286
  %736 = vmatmul.mubr.bf16.gmra.mxu0 %v285
  %v737 = vpop.f32.mrf.mxu0
  %v738 = vadd.f32 %v641, %v737
  %v739 = vpop.f32.mrf.mxu0
  %v740 = vpop.f32.mrf.mxu0
  %v741 = vadd.f32 %v644, %v740
  %v742 = vpop.f32.mrf.mxu0
  %743 = vmatprep.mubr.bf16.mxu0 %v291
  %744 = vmatmul.mubr.bf16.gmra.mxu0 %v290
  %v745 = vpop.f32.mrf.mxu0
  %v746 = vadd.f32 %v649, %v745
  %v747 = vpop.f32.mrf.mxu0
  %v748 = vpop.f32.mrf.mxu0
  %v749 = vadd.f32 %v652, %v748
  %v750 = vpop.f32.mrf.mxu0
  %751 = vmatprep.mubr.bf16.mxu0 %v296
  %752 = vmatmul.mubr.bf16.gmra.mxu0 %v295
  %v753 = vpop.f32.mrf.mxu0
  %v754 = vadd.f32 %v657, %v753
  %v755 = vpop.f32.mrf.mxu0
  %v756 = vpop.f32.mrf.mxu0
  %v757 = vadd.f32 %v660, %v756
  %v758 = vpop.f32.mrf.mxu0
  %759 = vmatprep.mubr.bf16.mxu0 %v301
  %760 = vmatmul.mubr.bf16.gmra.mxu0 %v300
  %v761 = vpop.f32.mrf.mxu0
  %v762 = vadd.f32 %v665, %v761
  %v763 = vpop.f32.mrf.mxu0
  %v764 = vpop.f32.mrf.mxu0
  %v765 = vadd.f32 %v668, %v764
  %v766 = vpop.f32.mrf.mxu0
  %767 = vmatprep.mubr.bf16.mxu0 %v306
  %768 = vmatmul.mubr.bf16.gmra.mxu0 %v305
  %v769 = vpop.f32.mrf.mxu0
  %v770 = vadd.f32 %v673, %v769
  %v771 = vpop.f32.mrf.mxu0
  %v772 = vpop.f32.mrf.mxu0
  %v773 = vadd.f32 %v676, %v772
  %v774 = vpop.f32.mrf.mxu0
  %775 = vmatprep.mubr.bf16.mxu0 %v311
  %776 = vmatmul.mubr.bf16.gmra.mxu0 %v310
  %v777 = vpop.f32.mrf.mxu0
  %v778 = vadd.f32 %v681, %v777
  %v779 = vpop.f32.mrf.mxu0
  %v780 = vpop.f32.mrf.mxu0
  %v781 = vadd.f32 %v684, %v780
  %v782 = vpop.f32.mrf.mxu0
  %783 = vmatprep.mubr.bf16.mxu0 %v316
  %784 = vmatmul.mubr.bf16.gmra.mxu0 %v315
  %v785 = vpop.f32.mrf.mxu0
  %v786 = vadd.f32 %v689, %v785
  %v787 = vpop.f32.mrf.mxu0
  %v788 = vpop.f32.mrf.mxu0
  %v789 = vadd.f32 %v692, %v788
  %v790 = vpop.f32.mrf.mxu0
  %791 = vdwg.mxu0
  %792 = vmatprep.subr.bf16.mxu0 0
  %793 = vmatpush1.bf16.msra.mxu0 %v557
  %794 = vmatprep.subr.bf16.mxu0 0
  %795 = vmatpush1.bf16.msra.mxu0 %v556
  %796 = vmatprep.subr.bf16.mxu0 0
  %797 = vmatpush1.bf16.msra.mxu0 %v555
  %798 = vmatprep.subr.bf16.mxu0 0
  %799 = vmatpush1.bf16.msra.mxu0 %v554
  %800 = vmatprep.subr.bf16.mxu0 0
  %801 = vmatpush1.bf16.msra.mxu0 %v553
  %802 = vmatprep.subr.bf16.mxu0 0
  %803 = vmatpush1.bf16.msra.mxu0 %v552
  %804 = vmatprep.subr.bf16.mxu0 0
  %805 = vmatpush1.bf16.msra.mxu0 %v551
  %806 = vmatprep.subr.bf16.mxu0 0
  %807 = vmatpush1.bf16.msra.mxu0 %v550
  %808 = vmatprep.subr.bf16.mxu0 0
  %809 = vmatpush2.bf16.msra.mxu0 0
  %810 = vmatprep.subr.bf16.mxu0 0
  %811 = vmatpush2.bf16.msra.mxu0 0
  %812 = vmatprep.subr.bf16.mxu0 0
  %813 = vmatpush2.bf16.msra.mxu0 0
  %814 = vmatprep.subr.bf16.mxu0 0
  %815 = vmatpush2.bf16.msra.mxu0 0
  %816 = vmatprep.subr.bf16.mxu0 0
  %817 = vmatpush2.bf16.msra.mxu0 0
  %818 = vmatprep.subr.bf16.mxu0 0
  %819 = vmatpush2.bf16.msra.mxu0 0
  %820 = vmatprep.subr.bf16.mxu0 0
  %821 = vmatpush2.bf16.msra.mxu0 0
  %822 = vmatprep.subr.bf16.mxu0 0
  %823 = vmatpush2.bf16.msra.mxu0 0
  %824 = vmatprep.mubr.bf16.mxu0 0
  %825 = vmatmul.mubr.bf16.gmra.mxu0 %v282
  %v826 = vpop.f32.mrf.mxu0
  %v827 = vadd.f32 %v730, %v826
  %v828 = vpop.f32.mrf.mxu0
  %v829 = vpop.f32.mrf.mxu0
  %v830 = vadd.f32 %v733, %v829
  %v831 = vpop.f32.mrf.mxu0
  %832 = vmatprep.mubr.bf16.mxu0 0
  %833 = vmatmul.mubr.bf16.gmra.mxu0 %v287
  %v834 = vpop.f32.mrf.mxu0
  %v835 = vadd.f32 %v738, %v834
  %v836 = vpop.f32.mrf.mxu0
  %v837 = vpop.f32.mrf.mxu0
  %v838 = vadd.f32 %v741, %v837
  %v839 = vpop.f32.mrf.mxu0
  %840 = vmatprep.mubr.bf16.mxu0 0
  %841 = vmatmul.mubr.bf16.gmra.mxu0 %v292
  %v842 = vpop.f32.mrf.mxu0
  %v843 = vadd.f32 %v746, %v842
  %v844 = vpop.f32.mrf.mxu0
  %v845 = vpop.f32.mrf.mxu0
  %v846 = vadd.f32 %v749, %v845
  %v847 = vpop.f32.mrf.mxu0
  %848 = vmatprep.mubr.bf16.mxu0 0
  %849 = vmatmul.mubr.bf16.gmra.mxu0 %v297
  %v850 = vpop.f32.mrf.mxu0
  %v851 = vadd.f32 %v754, %v850
  %v852 = vpop.f32.mrf.mxu0
  %v853 = vpop.f32.mrf.mxu0
  %v854 = vadd.f32 %v757, %v853
  %v855 = vpop.f32.mrf.mxu0
  %856 = vmatprep.mubr.bf16.mxu0 0
  %857 = vmatmul.mubr.bf16.gmra.mxu0 %v302
  %v858 = vpop.f32.mrf.mxu0
  %v859 = vadd.f32 %v762, %v858
  %v860 = vpop.f32.mrf.mxu0
  %v861 = vpop.f32.mrf.mxu0
  %v862 = vadd.f32 %v765, %v861
  %v863 = vpop.f32.mrf.mxu0
  %864 = vmatprep.mubr.bf16.mxu0 0
  %865 = vmatmul.mubr.bf16.gmra.mxu0 %v307
  %v866 = vpop.f32.mrf.mxu0
  %v867 = vadd.f32 %v770, %v866
  %v868 = vpop.f32.mrf.mxu0
  %v869 = vpop.f32.mrf.mxu0
  %v870 = vadd.f32 %v773, %v869
  %v871 = vpop.f32.mrf.mxu0
  %872 = vmatprep.mubr.bf16.mxu0 0
  %873 = vmatmul.mubr.bf16.gmra.mxu0 %v312
  %v874 = vpop.f32.mrf.mxu0
  %v875 = vadd.f32 %v778, %v874
  %v876 = vpop.f32.mrf.mxu0
  %v877 = vpop.f32.mrf.mxu0
  %v878 = vadd.f32 %v781, %v877
  %v879 = vpop.f32.mrf.mxu0
  %880 = vmatprep.mubr.bf16.mxu0 0
  %881 = vmatmul.mubr.bf16.gmra.mxu0 %v317
  %v882 = vpop.f32.mrf.mxu0
  %v883 = vadd.f32 %v786, %v882
  %v884 = vpop.f32.mrf.mxu0
  %v885 = vpop.f32.mrf.mxu0
  %v886 = vadd.f32 %v789, %v885
  %v887 = vpop.f32.mrf.mxu0
  %888 = vdwg.mxu0
  %v889 = vmax.f32 %v827, 0.0
  %v890 = vmax.f32 %v830, 0.0
  %v891 = vmax.f32 %v835, 0.0
  %v892 = vmax.f32 %v838, 0.0
  %v893 = vmax.f32 %v843, 0.0
  %v894 = vmax.f32 %v846, 0.0
  %v895 = vmax.f32 %v851, 0.0
  %v896 = vmax.f32 %v854, 0.0
  %v897 = vmax.f32 %v859, 0.0
  %v898 = vmax.f32 %v862, 0.0
  %v899 = vmax.f32 %v867, 0.0
  %v900 = vmax.f32 %v870, 0.0
  %v901 = vmax.f32 %v875, 0.0
  %v902 = vmax.f32 %v878, 0.0
  %v903 = vmax.f32 %v883, 0.0
  %v904 = vmax.f32 %v886, 0.0
  %v905 = vpack.c.bf16 %v890, %v889
  %v906 = vpack.c.bf16 %v892, %v891
  %v907 = vpack.c.bf16 %v894, %v893
  %v908 = vpack.c.bf16 %v896, %v895
  %v909 = vpack.c.bf16 %v898, %v897
  %v910 = vpack.c.bf16 %v900, %v899
  %v911 = vpack.c.bf16 %v902, %v901
  %v912 = vpack.c.bf16 %v904, %v903
  %v921 = vunpack.c.l.b16 %v905
  %v922 = vunpack.c.h.b16 %v905
  %v923 = vunpack.c.l.b16 %v906
  %v924 = vunpack.c.h.b16 %v906
  %v925 = vunpack.c.l.b16 %v907
  %v926 = vunpack.c.h.b16 %v907
  %v927 = vunpack.c.l.b16 %v908
  %v928 = vunpack.c.h.b16 %v908
  %v929 = vunpack.c.l.b16 %v909
  %v930 = vunpack.c.h.b16 %v909
  %v931 = vunpack.c.l.b16 %v910
  %v932 = vunpack.c.h.b16 %v910
  %v933 = vunpack.c.l.b16 %v911
  %v934 = vunpack.c.h.b16 %v911
  %v935 = vunpack.c.l.b16 %v912
  %v936 = vunpack.c.h.b16 %v912
  %v937 = vpack.c.b16 %v921, %v921
  %v938 = vpack.c.b16 %v922, %v922
  %v939 = vpack.c.b16 %v923, %v923
  %v940 = vpack.c.b16 %v924, %v924
  %v941 = vpack.c.b16 %v925, %v925
  %v942 = vpack.c.b16 %v926, %v926
  %v943 = vpack.c.b16 %v927, %v927
  %v944 = vpack.c.b16 %v928, %v928
  %v945 = vpack.c.b16 %v929, %v929
  %v946 = vpack.c.b16 %v930, %v930
  %v947 = vpack.c.b16 %v931, %v931
  %v948 = vpack.c.b16 %v932, %v932
  %v949 = vpack.c.b16 %v933, %v933
  %v950 = vpack.c.b16 %v934, %v934
  %v951 = vpack.c.b16 %v935, %v935
  %v952 = vpack.c.b16 %v936, %v936
  %969 = vst [vmem:[%s3] sm:$0xf] %v937
  %970 = vst [vmem:[%s3 + $0x4] sm:$0xf] %v938
  %971 = vst [vmem:[%s3 + $0x8] sm:$0xf] %v939
  %972 = vst [vmem:[%s3 + $0xc] sm:$0xf] %v940
  %973 = vst [vmem:[%s3 + $0x10] sm:$0xf] %v941
  %974 = vst [vmem:[%s3 + $0x14] sm:$0xf] %v942
  %975 = vst [vmem:[%s3 + $0x18] sm:$0xf] %v943
  %976 = vst [vmem:[%s3 + $0x1c] sm:$0xf] %v944
  %977 = vst [vmem:[%s3 + $0x20] sm:$0xf] %v945
  %978 = vst [vmem:[%s3 + $0x24] sm:$0xf] %v946
  %979 = vst [vmem:[%s3 + $0x28] sm:$0xf] %v947
  %980 = vst [vmem:[%s3 + $0x2c] sm:$0xf] %v948
  %981 = vst [vmem:[%s3 + $0x30] sm:$0xf] %v949
  %982 = vst [vmem:[%s3 + $0x34] sm:$0xf] %v950
  %983 = vst [vmem:[%s3 + $0x38] sm:$0xf] %v951
  %984 = vst [vmem:[%s3 + $0x3c] sm:$0xf] %v952
  // Predicated region
  $region14: #{red_or_green_forward.6} parent=0 // pred_check
    _
  $region15: #{red_or_green_forward.6} parent=0 // pred_check_branch
    %986 = sbr.rel (0) target = $region17
  $region16: #{red_or_green_forward.6} parent=0 // pred_region
    _
  $region17: #{red_or_green_forward.6} parent=0 // pred_fallthru
    _
  // Predicated region
  $region18: #{red_or_green_forward.6} parent=0 // pred_check
    _
  $region19: #{red_or_green_forward.6} parent=0 // pred_check_branch
    %988 = sbr.rel (0) target = $region21
  $region20: #{red_or_green_forward.6} parent=0 // pred_region
    _
  $region21: #{red_or_green_forward.6} parent=0 // pred_fallthru
    _

// kernel: red_or_green_forward.7
$region0: #{red_or_green_forward.7}
  #allocation0 [shape = 'u32[]', space=smem, size = 0x4, offset = 0x4, fixed_abs, tag = 'smem constant byte address 0x4 - core index']
  #allocation1 [shape = 'u32[144,128]{1,0:T(1,128)}', space=vmem, size = 0x12000, scoped, tag = 'internal scratch']
  %s0 = inlined_call_operand.vmem [shape: bf16[8,4096], index: 0, kind: input, shape index: {}]
  %s1 = inlined_call_operand.vmem [shape: bf16[4096,512], index: 1, kind: input, shape index: {}]
  %s2 = inlined_call_operand.vmem [shape: f32[1,512], index: 2, kind: input, shape index: {}]
  %s3 = inlined_call_operand.vmem [shape: bf16[512,128], index: 3, kind: input, shape index: {}]
  %s4 = inlined_call_operand.vmem [shape: f32[1,128], index: 4, kind: input, shape index: {}]
  %s5 = inlined_call_operand.vmem [shape: bf16[128,128], index: 5, kind: input, shape index: {}]
  %s6 = inlined_call_operand.vmem [shape: f32[1,128], index: 6, kind: input, shape index: {}]
  %s7 = inlined_call_operand.vmem [shape: bf16[128,128], index: 7, kind: input, shape index: {}]
  %s8 = inlined_call_operand.vmem [shape: f32[1,128], index: 8, kind: input, shape index: {}]
  %s9 = inlined_call_operand.vmem [shape: f32[8,128], index: 9, kind: output, shape index: {}]
  %s10 = sld [smem:[#allocation0]]
  $region46: #{red_or_green_forward.7} parent=0
    _
  %s12 = ssub.s32 1, %s10
  %s13 = scalar_select 0, %s12, %s10
  // Predicated region
  $region2: #{red_or_green_forward.7} parent=0 // pred_check
    _
  $region3: #{red_or_green_forward.7} parent=0 // pred_check_branch
    %15 = sbr.rel (0) target = $region5
  $region4: #{red_or_green_forward.7} parent=0 // pred_region
    _
  $region5: #{red_or_green_forward.7} parent=0 // pred_fallthru
    _
  // Predicated region
  $region6: #{red_or_green_forward.7} parent=0 // pred_check
    _
  $region7: #{red_or_green_forward.7} parent=0 // pred_check_branch
    %17 = sbr.rel (0) target = $region9
  $region8: #{red_or_green_forward.7} parent=0 // pred_region
    _
  $region9: #{red_or_green_forward.7} parent=0 // pred_fallthru
    _
  // Predicated region
  $region10: #{red_or_green_forward.7} parent=0 // pred_check
    _
  $region11: #{red_or_green_forward.7} parent=0 // pred_check_branch
    %19 = sbr.rel (0) target = $region13
  $region12: #{red_or_green_forward.7} parent=0 // pred_region
    _
  $region13: #{red_or_green_forward.7} parent=0 // pred_fallthru
    _
  // Predicated region
  $region14: #{red_or_green_forward.7} parent=0 // pred_check
    _
  $region15: #{red_or_green_forward.7} parent=0 // pred_check_branch
    %21 = sbr.rel (0) target = $region17
  $region16: #{red_or_green_forward.7} parent=0 // pred_region
    _
  $region17: #{red_or_green_forward.7} parent=0 // pred_fallthru
    _
  // Predicated region
  $region18: #{red_or_green_forward.7} parent=0 // pred_check
    _
  $region19: #{red_or_green_forward.7} parent=0 // pred_check_branch
    %23 = sbr.rel (0) target = $region21
  $region20: #{red_or_green_forward.7} parent=0 // pred_region
    _
  $region21: #{red_or_green_forward.7} parent=0 // pred_fallthru
    _
  // Predicated region
  $region22: #{red_or_green_forward.7} parent=0 // pred_check
    _
  $region23: #{red_or_green_forward.7} parent=0 // pred_check_branch
    %25 = sbr.rel (0) target = $region25
  $region24: #{red_or_green_forward.7} parent=0 // pred_region
    _
  $region25: #{red_or_green_forward.7} parent=0 // pred_fallthru
    _
  // Predicated region
  $region26: #{red_or_green_forward.7} parent=0 // pred_check
    _
  $region27: #{red_or_green_forward.7} parent=0 // pred_check_branch
    %27 = sbr.rel (0) target = $region29
  $region28: #{red_or_green_forward.7} parent=0 // pred_region
    _
  $region29: #{red_or_green_forward.7} parent=0 // pred_fallthru
    _
  // Predicated region
  $region30: #{red_or_green_forward.7} parent=0 // pred_check
    _
  $region31: #{red_or_green_forward.7} parent=0 // pred_check_branch
    %29 = sbr.rel (0) target = $region33
  $region32: #{red_or_green_forward.7} parent=0 // pred_region
    _
  $region33: #{red_or_green_forward.7} parent=0 // pred_fallthru
    _
  // Predicated region
  $region34: #{red_or_green_forward.7} parent=0 // pred_check
    _
  $region35: #{red_or_green_forward.7} parent=0 // pred_check_branch
    %31 = sbr.rel (0) target = $region37
  $region36: #{red_or_green_forward.7} parent=0 // pred_region
    _
  $region37: #{red_or_green_forward.7} parent=0 // pred_fallthru
    _
  %v33 = vld [vmem:[%s0] sm:$0xff]
  %v34 = vld [vmem:[%s0 + $0x8] sm:$0xff]
  %v35 = vld [vmem:[%s0 + $0x10] sm:$0xff]
  %v36 = vld [vmem:[%s0 + $0x18] sm:$0xff]
  %v37 = vld [vmem:[%s0 + $0x20] sm:$0xff]
  %v38 = vld [vmem:[%s0 + $0x28] sm:$0xff]
  %v39 = vld [vmem:[%s0 + $0x30] sm:$0xff]
  %v40 = vld [vmem:[%s0 + $0x38] sm:$0xff]
  %v41 = vld [vmem:[%s0 + $0x40] sm:$0xff]
  %v42 = vld [vmem:[%s0 + $0x48] sm:$0xff]
  %v43 = vld [vmem:[%s0 + $0x50] sm:$0xff]
  %v44 = vld [vmem:[%s0 + $0x58] sm:$0xff]
  %v45 = vld [vmem:[%s0 + $0x60] sm:$0xff]
  %v46 = vld [vmem:[%s0 + $0x68] sm:$0xff]
  %v47 = vld [vmem:[%s0 + $0x70] sm:$0xff]
  %v48 = vld [vmem:[%s0 + $0x78] sm:$0xff]
  %v49 = vld [vmem:[%s1] sm:$0xff]
  %v50 = vld [vmem:[%s1 + $0x8] sm:$0xff]
  %v51 = vld [vmem:[%s1 + $0x10] sm:$0xff]
  %v52 = vld [vmem:[%s1 + $0x18] sm:$0xff]
  %v53 = vld [vmem:[%s1 + $0x20] sm:$0xff]
  %v54 = vld [vmem:[%s1 + $0x28] sm:$0xff]
  %v55 = vld [vmem:[%s1 + $0x30] sm:$0xff]
  %v56 = vld [vmem:[%s1 + $0x38] sm:$0xff]
  %v57 = vld [vmem:[%s1 + $0x40] sm:$0xff]
  %v58 = vld [vmem:[%s1 + $0x48] sm:$0xff]
  %v59 = vld [vmem:[%s1 + $0x50] sm:$0xff]
  %v60 = vld [vmem:[%s1 + $0x58] sm:$0xff]
  %v61 = vld [vmem:[%s1 + $0x60] sm:$0xff]
  %v62 = vld [vmem:[%s1 + $0x68] sm:$0xff]
  %v63 = vld [vmem:[%s1 + $0x70] sm:$0xff]
  %v64 = vld [vmem:[%s1 + $0x78] sm:$0xff]
  %v65 = vld [vmem:[%s1 + $0x80] sm:$0xff]
  %v66 = vld [vmem:[%s1 + $0x88] sm:$0xff]
  %v67 = vld [vmem:[%s1 + $0x90] sm:$0xff]
  %v68 = vld [vmem:[%s1 + $0x98] sm:$0xff]
  %v69 = vld [vmem:[%s1 + $0xa0] sm:$0xff]
  %v70 = vld [vmem:[%s1 + $0xa8] sm:$0xff]
  %v71 = vld [vmem:[%s1 + $0xb0] sm:$0xff]
  %v72 = vld [vmem:[%s1 + $0xb8] sm:$0xff]
  %v73 = vld [vmem:[%s1 + $0xc0] sm:$0xff]
  %v74 = vld [vmem:[%s1 + $0xc8] sm:$0xff]
  %v75 = vld [vmem:[%s1 + $0xd0] sm:$0xff]
  %v76 = vld [vmem:[%s1 + $0xd8] sm:$0xff]
  %v77 = vld [vmem:[%s1 + $0xe0] sm:$0xff]
  %v78 = vld [vmem:[%s1 + $0xe8] sm:$0xff]
  %v79 = vld [vmem:[%s1 + $0xf0] sm:$0xff]
  %v80 = vld [vmem:[%s1 + $0xf8] sm:$0xff]
  %v81 = vld [vmem:[%s1 + $0x100] sm:$0xff]
  %v82 = vld [vmem:[%s1 + $0x108] sm:$0xff]
  %v83 = vld [vmem:[%s1 + $0x110] sm:$0xff]
  %v84 = vld [vmem:[%s1 + $0x118] sm:$0xff]
  %v85 = vld [vmem:[%s1 + $0x120] sm:$0xff]
  %v86 = vld [vmem:[%s1 + $0x128] sm:$0xff]
  %v87 = vld [vmem:[%s1 + $0x130] sm:$0xff]
  %v88 = vld [vmem:[%s1 + $0x138] sm:$0xff]
  %v89 = vld [vmem:[%s1 + $0x140] sm:$0xff]
  %v90 = vld [vmem:[%s1 + $0x148] sm:$0xff]
  %v91 = vld [vmem:[%s1 + $0x150] sm:$0xff]
  %v92 = vld [vmem:[%s1 + $0x158] sm:$0xff]
  %v93 = vld [vmem:[%s1 + $0x160] sm:$0xff]
  %v94 = vld [vmem:[%s1 + $0x168] sm:$0xff]
  %v95 = vld [vmem:[%s1 + $0x170] sm:$0xff]
  %v96 = vld [vmem:[%s1 + $0x178] sm:$0xff]
  %v97 = vld [vmem:[%s1 + $0x180] sm:$0xff]
  %v98 = vld [vmem:[%s1 + $0x188] sm:$0xff]
  %v99 = vld [vmem:[%s1 + $0x190] sm:$0xff]
  %v100 = vld [vmem:[%s1 + $0x198] sm:$0xff]
  %v101 = vld [vmem:[%s1 + $0x1a0] sm:$0xff]
  %v102 = vld [vmem:[%s1 + $0x1a8] sm:$0xff]
  %v103 = vld [vmem:[%s1 + $0x1b0] sm:$0xff]
  %v104 = vld [vmem:[%s1 + $0x1b8] sm:$0xff]
  %v105 = vld [vmem:[%s1 + $0x1c0] sm:$0xff]
  %v106 = vld [vmem:[%s1 + $0x1c8] sm:$0xff]
  %v107 = vld [vmem:[%s1 + $0x1d0] sm:$0xff]
  %v108 = vld [vmem:[%s1 + $0x1d8] sm:$0xff]
  %v109 = vld [vmem:[%s1 + $0x1e0] sm:$0xff]
  %v110 = vld [vmem:[%s1 + $0x1e8] sm:$0xff]
  %v111 = vld [vmem:[%s1 + $0x1f0] sm:$0xff]
  %v112 = vld [vmem:[%s1 + $0x1f8] sm:$0xff]
  %v113 = vld [vmem:[%s1 + $0x200] sm:$0xff]
  %v114 = vld [vmem:[%s1 + $0x208] sm:$0xff]
  %v115 = vld [vmem:[%s1 + $0x210] sm:$0xff]
  %v116 = vld [vmem:[%s1 + $0x218] sm:$0xff]
  %v117 = vld [vmem:[%s1 + $0x220] sm:$0xff]
  %v118 = vld [vmem:[%s1 + $0x228] sm:$0xff]
  %v119 = vld [vmem:[%s1 + $0x230] sm:$0xff]
  %v120 = vld [vmem:[%s1 + $0x238] sm:$0xff]
  %v121 = vld [vmem:[%s1 + $0x240] sm:$0xff]
  %v122 = vld [vmem:[%s1 + $0x248] sm:$0xff]
  %v123 = vld [vmem:[%s1 + $0x250] sm:$0xff]
  %v124 = vld [vmem:[%s1 + $0x258] sm:$0xff]
  %v125 = vld [vmem:[%s1 + $0x260] sm:$0xff]
  %v126 = vld [vmem:[%s1 + $0x268] sm:$0xff]
  %v127 = vld [vmem:[%s1 + $0x270] sm:$0xff]
  %v128 = vld [vmem:[%s1 + $0x278] sm:$0xff]
  %v129 = vld [vmem:[%s1 + $0x280] sm:$0xff]
  %v130 = vld [vmem:[%s1 + $0x288] sm:$0xff]
  %v131 = vld [vmem:[%s1 + $0x290] sm:$0xff]
  %v132 = vld [vmem:[%s1 + $0x298] sm:$0xff]
  %v133 = vld [vmem:[%s1 + $0x2a0] sm:$0xff]
  %v134 = vld [vmem:[%s1 + $0x2a8] sm:$0xff]
  %v135 = vld [vmem:[%s1 + $0x2b0] sm:$0xff]
  %v136 = vld [vmem:[%s1 + $0x2b8] sm:$0xff]
  %v137 = vld [vmem:[%s1 + $0x2c0] sm:$0xff]
  %v138 = vld [vmem:[%s1 + $0x2c8] sm:$0xff]
  %v139 = vld [vmem:[%s1 + $0x2d0] sm:$0xff]
  %v140 = vld [vmem:[%s1 + $0x2d8] sm:$0xff]
  %v141 = vld [vmem:[%s1 + $0x2e0] sm:$0xff]
  %v142 = vld [vmem:[%s1 + $0x2e8] sm:$0xff]
  %v143 = vld [vmem:[%s1 + $0x2f0] sm:$0xff]
  %v144 = vld [vmem:[%s1 + $0x2f8] sm:$0xff]
  %v145 = vld [vmem:[%s1 + $0x300] sm:$0xff]
  %v146 = vld [vmem:[%s1 + $0x308] sm:$0xff]
  %v147 = vld [vmem:[%s1 + $0x310] sm:$0xff]
  %v148 = vld [vmem:[%s1 + $0x318] sm:$0xff]
  %v149 = vld [vmem:[%s1 + $0x320] sm:$0xff]
  %v150 = vld [vmem:[%s1 + $0x328] sm:$0xff]
  %v151 = vld [vmem:[%s1 + $0x330] sm:$0xff]
  %v152 = vld [vmem:[%s1 + $0x338] sm:$0xff]
  %v153 = vld [vmem:[%s1 + $0x340] sm:$0xff]
  %v154 = vld [vmem:[%s1 + $0x348] sm:$0xff]
  %v155 = vld [vmem:[%s1 + $0x350] sm:$0xff]
  %v156 = vld [vmem:[%s1 + $0x358] sm:$0xff]
  %v157 = vld [vmem:[%s1 + $0x360] sm:$0xff]
  %v158 = vld [vmem:[%s1 + $0x368] sm:$0xff]
  %v159 = vld [vmem:[%s1 + $0x370] sm:$0xff]
  %v160 = vld [vmem:[%s1 + $0x378] sm:$0xff]
  %v161 = vld [vmem:[%s1 + $0x380] sm:$0xff]
  %v162 = vld [vmem:[%s1 + $0x388] sm:$0xff]
  %v163 = vld [vmem:[%s1 + $0x390] sm:$0xff]
  %v164 = vld [vmem:[%s1 + $0x398] sm:$0xff]
  %v165 = vld [vmem:[%s1 + $0x3a0] sm:$0xff]
  %v166 = vld [vmem:[%s1 + $0x3a8] sm:$0xff]
  %v167 = vld [vmem:[%s1 + $0x3b0] sm:$0xff]
  %v168 = vld [vmem:[%s1 + $0x3b8] sm:$0xff]
  %v169 = vld [vmem:[%s1 + $0x3c0] sm:$0xff]
  %v170 = vld [vmem:[%s1 + $0x3c8] sm:$0xff]
  %v171 = vld [vmem:[%s1 + $0x3d0] sm:$0xff]
  %v172 = vld [vmem:[%s1 + $0x3d8] sm:$0xff]
  %v173 = vld [vmem:[%s1 + $0x3e0] sm:$0xff]
  %v174 = vld [vmem:[%s1 + $0x3e8] sm:$0xff]
  %v175 = vld [vmem:[%s1 + $0x3f0] sm:$0xff]
  %v176 = vld [vmem:[%s1 + $0x3f8] sm:$0xff]
  %v177 = vld [vmem:[%s1 + $0x400] sm:$0xff]
  %v178 = vld [vmem:[%s1 + $0x408] sm:$0xff]
  %v179 = vld [vmem:[%s1 + $0x410] sm:$0xff]
  %v180 = vld [vmem:[%s1 + $0x418] sm:$0xff]
  %v181 = vld [vmem:[%s1 + $0x420] sm:$0xff]
  %v182 = vld [vmem:[%s1 + $0x428] sm:$0xff]
  %v183 = vld [vmem:[%s1 + $0x430] sm:$0xff]
  %v184 = vld [vmem:[%s1 + $0x438] sm:$0xff]
  %v185 = vld [vmem:[%s1 + $0x440] sm:$0xff]
  %v186 = vld [vmem:[%s1 + $0x448] sm:$0xff]
  %v187 = vld [vmem:[%s1 + $0x450] sm:$0xff]
  %v188 = vld [vmem:[%s1 + $0x458] sm:$0xff]
  %v189 = vld [vmem:[%s1 + $0x460] sm:$0xff]
  %v190 = vld [vmem:[%s1 + $0x468] sm:$0xff]
  %v191 = vld [vmem:[%s1 + $0x470] sm:$0xff]
  %v192 = vld [vmem:[%s1 + $0x478] sm:$0xff]
  %v193 = vld [vmem:[%s1 + $0x480] sm:$0xff]
  %v194 = vld [vmem:[%s1 + $0x488] sm:$0xff]
  %v195 = vld [vmem:[%s1 + $0x490] sm:$0xff]
  %v196 = vld [vmem:[%s1 + $0x498] sm:$0xff]
  %v197 = vld [vmem:[%s1 + $0x4a0] sm:$0xff]
  %v198 = vld [vmem:[%s1 + $0x4a8] sm:$0xff]
  %v199 = vld [vmem:[%s1 + $0x4b0] sm:$0xff]
  %v200 = vld [vmem:[%s1 + $0x4b8] sm:$0xff]
  %v201 = vld [vmem:[%s1 + $0x4c0] sm:$0xff]
  %v202 = vld [vmem:[%s1 + $0x4c8] sm:$0xff]
  %v203 = vld [vmem:[%s1 + $0x4d0] sm:$0xff]
  %v204 = vld [vmem:[%s1 + $0x4d8] sm:$0xff]
  %v205 = vld [vmem:[%s1 + $0x4e0] sm:$0xff]
  %v206 = vld [vmem:[%s1 + $0x4e8] sm:$0xff]
  %v207 = vld [vmem:[%s1 + $0x4f0] sm:$0xff]
  %v208 = vld [vmem:[%s1 + $0x4f8] sm:$0xff]
  %v209 = vld [vmem:[%s1 + $0x500] sm:$0xff]
  %v210 = vld [vmem:[%s1 + $0x508] sm:$0xff]
  %v211 = vld [vmem:[%s1 + $0x510] sm:$0xff]
  %v212 = vld [vmem:[%s1 + $0x518] sm:$0xff]
  %v213 = vld [vmem:[%s1 + $0x520] sm:$0xff]
  %v214 = vld [vmem:[%s1 + $0x528] sm:$0xff]
  %v215 = vld [vmem:[%s1 + $0x530] sm:$0xff]
  %v216 = vld [vmem:[%s1 + $0x538] sm:$0xff]
  %v217 = vld [vmem:[%s1 + $0x540] sm:$0xff]
  %v218 = vld [vmem:[%s1 + $0x548] sm:$0xff]
  %v219 = vld [vmem:[%s1 + $0x550] sm:$0xff]
  %v220 = vld [vmem:[%s1 + $0x558] sm:$0xff]
  %v221 = vld [vmem:[%s1 + $0x560] sm:$0xff]
  %v222 = vld [vmem:[%s1 + $0x568] sm:$0xff]
  %v223 = vld [vmem:[%s1 + $0x570] sm:$0xff]
  %v224 = vld [vmem:[%s1 + $0x578] sm:$0xff]
  %v225 = vld [vmem:[%s1 + $0x580] sm:$0xff]
  %v226 = vld [vmem:[%s1 + $0x588] sm:$0xff]
  %v227 = vld [vmem:[%s1 + $0x590] sm:$0xff]
  %v228 = vld [vmem:[%s1 + $0x598] sm:$0xff]
  %v229 = vld [vmem:[%s1 + $0x5a0] sm:$0xff]
  %v230 = vld [vmem:[%s1 + $0x5a8] sm:$0xff]
  %v231 = vld [vmem:[%s1 + $0x5b0] sm:$0xff]
  %v232 = vld [vmem:[%s1 + $0x5b8] sm:$0xff]
  %v233 = vld [vmem:[%s1 + $0x5c0] sm:$0xff]
  %v234 = vld [vmem:[%s1 + $0x5c8] sm:$0xff]
  %v235 = vld [vmem:[%s1 + $0x5d0] sm:$0xff]
  %v236 = vld [vmem:[%s1 + $0x5d8] sm:$0xff]
  %v237 = vld [vmem:[%s1 + $0x5e0] sm:$0xff]
  %v238 = vld [vmem:[%s1 + $0x5e8] sm:$0xff]
  %v239 = vld [vmem:[%s1 + $0x5f0] sm:$0xff]
  %v240 = vld [vmem:[%s1 + $0x5f8] sm:$0xff]
  %v241 = vld [vmem:[%s1 + $0x600] sm:$0xff]
  %v242 = vld [vmem:[%s1 + $0x608] sm:$0xff]
  %v243 = vld [vmem:[%s1 + $0x610] sm:$0xff]
  %v244 = vld [vmem:[%s1 + $0x618] sm:$0xff]
  %v245 = vld [vmem:[%s1 + $0x620] sm:$0xff]
  %v246 = vld [vmem:[%s1 + $0x628] sm:$0xff]
  %v247 = vld [vmem:[%s1 + $0x630] sm:$0xff]
  %v248 = vld [vmem:[%s1 + $0x638] sm:$0xff]
  %v249 = vld [vmem:[%s1 + $0x640] sm:$0xff]
  %v250 = vld [vmem:[%s1 + $0x648] sm:$0xff]
  %v251 = vld [vmem:[%s1 + $0x650] sm:$0xff]
  %v252 = vld [vmem:[%s1 + $0x658] sm:$0xff]
  %v253 = vld [vmem:[%s1 + $0x660] sm:$0xff]
  %v254 = vld [vmem:[%s1 + $0x668] sm:$0xff]
  %v255 = vld [vmem:[%s1 + $0x670] sm:$0xff]
  %v256 = vld [vmem:[%s1 + $0x678] sm:$0xff]
  %v257 = vld [vmem:[%s1 + $0x680] sm:$0xff]
  %v258 = vld [vmem:[%s1 + $0x688] sm:$0xff]
  %v259 = vld [vmem:[%s1 + $0x690] sm:$0xff]
  %v260 = vld [vmem:[%s1 + $0x698] sm:$0xff]
  %v261 = vld [vmem:[%s1 + $0x6a0] sm:$0xff]
  %v262 = vld [vmem:[%s1 + $0x6a8] sm:$0xff]
  %v263 = vld [vmem:[%s1 + $0x6b0] sm:$0xff]
  %v264 = vld [vmem:[%s1 + $0x6b8] sm:$0xff]
  %v265 = vld [vmem:[%s1 + $0x6c0] sm:$0xff]
  %v266 = vld [vmem:[%s1 + $0x6c8] sm:$0xff]
  %v267 = vld [vmem:[%s1 + $0x6d0] sm:$0xff]
  %v268 = vld [vmem:[%s1 + $0x6d8] sm:$0xff]
  %v269 = vld [vmem:[%s1 + $0x6e0] sm:$0xff]
  %v270 = vld [vmem:[%s1 + $0x6e8] sm:$0xff]
  %v271 = vld [vmem:[%s1 + $0x6f0] sm:$0xff]
  %v272 = vld [vmem:[%s1 + $0x6f8] sm:$0xff]
  %v273 = vld [vmem:[%s1 + $0x700] sm:$0xff]
  %v274 = vld [vmem:[%s1 + $0x708] sm:$0xff]
  %v275 = vld [vmem:[%s1 + $0x710] sm:$0xff]
  %v276 = vld [vmem:[%s1 + $0x718] sm:$0xff]
  %v277 = vld [vmem:[%s1 + $0x720] sm:$0xff]
  %v278 = vld [vmem:[%s1 + $0x728] sm:$0xff]
  %v279 = vld [vmem:[%s1 + $0x730] sm:$0xff]
  %v280 = vld [vmem:[%s1 + $0x738] sm:$0xff]
  %v281 = vld [vmem:[%s1 + $0x740] sm:$0xff]
  %v282 = vld [vmem:[%s1 + $0x748] sm:$0xff]
  %v283 = vld [vmem:[%s1 + $0x750] sm:$0xff]
  %v284 = vld [vmem:[%s1 + $0x758] sm:$0xff]
  %v285 = vld [vmem:[%s1 + $0x760] sm:$0xff]
  %v286 = vld [vmem:[%s1 + $0x768] sm:$0xff]
  %v287 = vld [vmem:[%s1 + $0x770] sm:$0xff]
  %v288 = vld [vmem:[%s1 + $0x778] sm:$0xff]
  %v289 = vld [vmem:[%s1 + $0x780] sm:$0xff]
  %v290 = vld [vmem:[%s1 + $0x788] sm:$0xff]
  %v291 = vld [vmem:[%s1 + $0x790] sm:$0xff]
  %v292 = vld [vmem:[%s1 + $0x798] sm:$0xff]
  %v293 = vld [vmem:[%s1 + $0x7a0] sm:$0xff]
  %v294 = vld [vmem:[%s1 + $0x7a8] sm:$0xff]
  %v295 = vld [vmem:[%s1 + $0x7b0] sm:$0xff]
  %v296 = vld [vmem:[%s1 + $0x7b8] sm:$0xff]
  %v297 = vld [vmem:[%s1 + $0x7c0] sm:$0xff]
  %v298 = vld [vmem:[%s1 + $0x7c8] sm:$0xff]
  %v299 = vld [vmem:[%s1 + $0x7d0] sm:$0xff]
  %v300 = vld [vmem:[%s1 + $0x7d8] sm:$0xff]
  %v301 = vld [vmem:[%s1 + $0x7e0] sm:$0xff]
  %v302 = vld [vmem:[%s1 + $0x7e8] sm:$0xff]
  %v303 = vld [vmem:[%s1 + $0x7f0] sm:$0xff]
  %v304 = vld [vmem:[%s1 + $0x7f8] sm:$0xff]
  %v305 = vld [vmem:[%s1 + $0x800] sm:$0xff]
  %v306 = vld [vmem:[%s1 + $0x808] sm:$0xff]
  %v307 = vld [vmem:[%s1 + $0x810] sm:$0xff]
  %v308 = vld [vmem:[%s1 + $0x818] sm:$0xff]
  %v309 = vld [vmem:[%s1 + $0x820] sm:$0xff]
  %v310 = vld [vmem:[%s1 + $0x828] sm:$0xff]
  %v311 = vld [vmem:[%s1 + $0x830] sm:$0xff]
  %v312 = vld [vmem:[%s1 + $0x838] sm:$0xff]
  %v313 = vld [vmem:[%s1 + $0x840] sm:$0xff]
  %v314 = vld [vmem:[%s1 + $0x848] sm:$0xff]
  %v315 = vld [vmem:[%s1 + $0x850] sm:$0xff]
  %v316 = vld [vmem:[%s1 + $0x858] sm:$0xff]
  %v317 = vld [vmem:[%s1 + $0x860] sm:$0xff]
  %v318 = vld [vmem:[%s1 + $0x868] sm:$0xff]
  %v319 = vld [vmem:[%s1 + $0x870] sm:$0xff]
  %v320 = vld [vmem:[%s1 + $0x878] sm:$0xff]
  %v321 = vld [vmem:[%s1 + $0x880] sm:$0xff]
  %v322 = vld [vmem:[%s1 + $0x888] sm:$0xff]
  %v323 = vld [vmem:[%s1 + $0x890] sm:$0xff]
  %v324 = vld [vmem:[%s1 + $0x898] sm:$0xff]
  %v325 = vld [vmem:[%s1 + $0x8a0] sm:$0xff]
  %v326 = vld [vmem:[%s1 + $0x8a8] sm:$0xff]
  %v327 = vld [vmem:[%s1 + $0x8b0] sm:$0xff]
  %v328 = vld [vmem:[%s1 + $0x8b8] sm:$0xff]
  %v329 = vld [vmem:[%s1 + $0x8c0] sm:$0xff]
  %v330 = vld [vmem:[%s1 + $0x8c8] sm:$0xff]
  %v331 = vld [vmem:[%s1 + $0x8d0] sm:$0xff]
  %v332 = vld [vmem:[%s1 + $0x8d8] sm:$0xff]
  %v333 = vld [vmem:[%s1 + $0x8e0] sm:$0xff]
  %v334 = vld [vmem:[%s1 + $0x8e8] sm:$0xff]
  %v335 = vld [vmem:[%s1 + $0x8f0] sm:$0xff]
  %v336 = vld [vmem:[%s1 + $0x8f8] sm:$0xff]
  %v337 = vld [vmem:[%s1 + $0x900] sm:$0xff]
  %v338 = vld [vmem:[%s1 + $0x908] sm:$0xff]
  %v339 = vld [vmem:[%s1 + $0x910] sm:$0xff]
  %v340 = vld [vmem:[%s1 + $0x918] sm:$0xff]
  %v341 = vld [vmem:[%s1 + $0x920] sm:$0xff]
  %v342 = vld [vmem:[%s1 + $0x928] sm:$0xff]
  %v343 = vld [vmem:[%s1 + $0x930] sm:$0xff]
  %v344 = vld [vmem:[%s1 + $0x938] sm:$0xff]
  %v345 = vld [vmem:[%s1 + $0x940] sm:$0xff]
  %v346 = vld [vmem:[%s1 + $0x948] sm:$0xff]
  %v347 = vld [vmem:[%s1 + $0x950] sm:$0xff]
  %v348 = vld [vmem:[%s1 + $0x958] sm:$0xff]
  %v349 = vld [vmem:[%s1 + $0x960] sm:$0xff]
  %v350 = vld [vmem:[%s1 + $0x968] sm:$0xff]
  %v351 = vld [vmem:[%s1 + $0x970] sm:$0xff]
  %v352 = vld [vmem:[%s1 + $0x978] sm:$0xff]
  %v353 = vld [vmem:[%s1 + $0x980] sm:$0xff]
  %v354 = vld [vmem:[%s1 + $0x988] sm:$0xff]
  %v355 = vld [vmem:[%s1 + $0x990] sm:$0xff]
  %v356 = vld [vmem:[%s1 + $0x998] sm:$0xff]
  %v357 = vld [vmem:[%s1 + $0x9a0] sm:$0xff]
  %v358 = vld [vmem:[%s1 + $0x9a8] sm:$0xff]
  %v359 = vld [vmem:[%s1 + $0x9b0] sm:$0xff]
  %v360 = vld [vmem:[%s1 + $0x9b8] sm:$0xff]
  %v361 = vld [vmem:[%s1 + $0x9c0] sm:$0xff]
  %v362 = vld [vmem:[%s1 + $0x9c8] sm:$0xff]
  %v363 = vld [vmem:[%s1 + $0x9d0] sm:$0xff]
  %v364 = vld [vmem:[%s1 + $0x9d8] sm:$0xff]
  %v365 = vld [vmem:[%s1 + $0x9e0] sm:$0xff]
  %v366 = vld [vmem:[%s1 + $0x9e8] sm:$0xff]
  %v367 = vld [vmem:[%s1 + $0x9f0] sm:$0xff]
  %v368 = vld [vmem:[%s1 + $0x9f8] sm:$0xff]
  %v369 = vld [vmem:[%s1 + $0xa00] sm:$0xff]
  %v370 = vld [vmem:[%s1 + $0xa08] sm:$0xff]
  %v371 = vld [vmem:[%s1 + $0xa10] sm:$0xff]
  %v372 = vld [vmem:[%s1 + $0xa18] sm:$0xff]
  %v373 = vld [vmem:[%s1 + $0xa20] sm:$0xff]
  %v374 = vld [vmem:[%s1 + $0xa28] sm:$0xff]
  %v375 = vld [vmem:[%s1 + $0xa30] sm:$0xff]
  %v376 = vld [vmem:[%s1 + $0xa38] sm:$0xff]
  %v377 = vld [vmem:[%s1 + $0xa40] sm:$0xff]
  %v378 = vld [vmem:[%s1 + $0xa48] sm:$0xff]
  %v379 = vld [vmem:[%s1 + $0xa50] sm:$0xff]
  %v380 = vld [vmem:[%s1 + $0xa58] sm:$0xff]
  %v381 = vld [vmem:[%s1 + $0xa60] sm:$0xff]
  %v382 = vld [vmem:[%s1 + $0xa68] sm:$0xff]
  %v383 = vld [vmem:[%s1 + $0xa70] sm:$0xff]
  %v384 = vld [vmem:[%s1 + $0xa78] sm:$0xff]
  %v385 = vld [vmem:[%s1 + $0xa80] sm:$0xff]
  %v386 = vld [vmem:[%s1 + $0xa88] sm:$0xff]
  %v387 = vld [vmem:[%s1 + $0xa90] sm:$0xff]
  %v388 = vld [vmem:[%s1 + $0xa98] sm:$0xff]
  %v389 = vld [vmem:[%s1 + $0xaa0] sm:$0xff]
  %v390 = vld [vmem:[%s1 + $0xaa8] sm:$0xff]
  %v391 = vld [vmem:[%s1 + $0xab0] sm:$0xff]
  %v392 = vld [vmem:[%s1 + $0xab8] sm:$0xff]
  %v393 = vld [vmem:[%s1 + $0xac0] sm:$0xff]
  %v394 = vld [vmem:[%s1 + $0xac8] sm:$0xff]
  %v395 = vld [vmem:[%s1 + $0xad0] sm:$0xff]
  %v396 = vld [vmem:[%s1 + $0xad8] sm:$0xff]
  %v397 = vld [vmem:[%s1 + $0xae0] sm:$0xff]
  %v398 = vld [vmem:[%s1 + $0xae8] sm:$0xff]
  %v399 = vld [vmem:[%s1 + $0xaf0] sm:$0xff]
  %v400 = vld [vmem:[%s1 + $0xaf8] sm:$0xff]
  %v401 = vld [vmem:[%s1 + $0xb00] sm:$0xff]
  %v402 = vld [vmem:[%s1 + $0xb08] sm:$0xff]
  %v403 = vld [vmem:[%s1 + $0xb10] sm:$0xff]
  %v404 = vld [vmem:[%s1 + $0xb18] sm:$0xff]
  %v405 = vld [vmem:[%s1 + $0xb20] sm:$0xff]
  %v406 = vld [vmem:[%s1 + $0xb28] sm:$0xff]
  %v407 = vld [vmem:[%s1 + $0xb30] sm:$0xff]
  %v408 = vld [vmem:[%s1 + $0xb38] sm:$0xff]
  %v409 = vld [vmem:[%s1 + $0xb40] sm:$0xff]
  %v410 = vld [vmem:[%s1 + $0xb48] sm:$0xff]
  %v411 = vld [vmem:[%s1 + $0xb50] sm:$0xff]
  %v412 = vld [vmem:[%s1 + $0xb58] sm:$0xff]
  %v413 = vld [vmem:[%s1 + $0xb60] sm:$0xff]
  %v414 = vld [vmem:[%s1 + $0xb68] sm:$0xff]
  %v415 = vld [vmem:[%s1 + $0xb70] sm:$0xff]
  %v416 = vld [vmem:[%s1 + $0xb78] sm:$0xff]
  %v417 = vld [vmem:[%s1 + $0xb80] sm:$0xff]
  %v418 = vld [vmem:[%s1 + $0xb88] sm:$0xff]
  %v419 = vld [vmem:[%s1 + $0xb90] sm:$0xff]
  %v420 = vld [vmem:[%s1 + $0xb98] sm:$0xff]
  %v421 = vld [vmem:[%s1 + $0xba0] sm:$0xff]
  %v422 = vld [vmem:[%s1 + $0xba8] sm:$0xff]
  %v423 = vld [vmem:[%s1 + $0xbb0] sm:$0xff]
  %v424 = vld [vmem:[%s1 + $0xbb8] sm:$0xff]
  %v425 = vld [vmem:[%s1 + $0xbc0] sm:$0xff]
  %v426 = vld [vmem:[%s1 + $0xbc8] sm:$0xff]
  %v427 = vld [vmem:[%s1 + $0xbd0] sm:$0xff]
  %v428 = vld [vmem:[%s1 + $0xbd8] sm:$0xff]
  %v429 = vld [vmem:[%s1 + $0xbe0] sm:$0xff]
  %v430 = vld [vmem:[%s1 + $0xbe8] sm:$0xff]
  %v431 = vld [vmem:[%s1 + $0xbf0] sm:$0xff]
  %v432 = vld [vmem:[%s1 + $0xbf8] sm:$0xff]
  %v433 = vld [vmem:[%s1 + $0xc00] sm:$0xff]
  %v434 = vld [vmem:[%s1 + $0xc08] sm:$0xff]
  %v435 = vld [vmem:[%s1 + $0xc10] sm:$0xff]
  %v436 = vld [vmem:[%s1 + $0xc18] sm:$0xff]
  %v437 = vld [vmem:[%s1 + $0xc20] sm:$0xff]
  %v438 = vld [vmem:[%s1 + $0xc28] sm:$0xff]
  %v439 = vld [vmem:[%s1 + $0xc30] sm:$0xff]
  %v440 = vld [vmem:[%s1 + $0xc38] sm:$0xff]
  %v441 = vld [vmem:[%s1 + $0xc40] sm:$0xff]
  %v442 = vld [vmem:[%s1 + $0xc48] sm:$0xff]
  %v443 = vld [vmem:[%s1 + $0xc50] sm:$0xff]
  %v444 = vld [vmem:[%s1 + $0xc58] sm:$0xff]
  %v445 = vld [vmem:[%s1 + $0xc60] sm:$0xff]
  %v446 = vld [vmem:[%s1 + $0xc68] sm:$0xff]
  %v447 = vld [vmem:[%s1 + $0xc70] sm:$0xff]
  %v448 = vld [vmem:[%s1 + $0xc78] sm:$0xff]
  %v449 = vld [vmem:[%s1 + $0xc80] sm:$0xff]
  %v450 = vld [vmem:[%s1 + $0xc88] sm:$0xff]
  %v451 = vld [vmem:[%s1 + $0xc90] sm:$0xff]
  %v452 = vld [vmem:[%s1 + $0xc98] sm:$0xff]
  %v453 = vld [vmem:[%s1 + $0xca0] sm:$0xff]
  %v454 = vld [vmem:[%s1 + $0xca8] sm:$0xff]
  %v455 = vld [vmem:[%s1 + $0xcb0] sm:$0xff]
  %v456 = vld [vmem:[%s1 + $0xcb8] sm:$0xff]
  %v457 = vld [vmem:[%s1 + $0xcc0] sm:$0xff]
  %v458 = vld [vmem:[%s1 + $0xcc8] sm:$0xff]
  %v459 = vld [vmem:[%s1 + $0xcd0] sm:$0xff]
  %v460 = vld [vmem:[%s1 + $0xcd8] sm:$0xff]
  %v461 = vld [vmem:[%s1 + $0xce0] sm:$0xff]
  %v462 = vld [vmem:[%s1 + $0xce8] sm:$0xff]
  %v463 = vld [vmem:[%s1 + $0xcf0] sm:$0xff]
  %v464 = vld [vmem:[%s1 + $0xcf8] sm:$0xff]
  %v465 = vld [vmem:[%s1 + $0xd00] sm:$0xff]
  %v466 = vld [vmem:[%s1 + $0xd08] sm:$0xff]
  %v467 = vld [vmem:[%s1 + $0xd10] sm:$0xff]
  %v468 = vld [vmem:[%s1 + $0xd18] sm:$0xff]
  %v469 = vld [vmem:[%s1 + $0xd20] sm:$0xff]
  %v470 = vld [vmem:[%s1 + $0xd28] sm:$0xff]
  %v471 = vld [vmem:[%s1 + $0xd30] sm:$0xff]
  %v472 = vld [vmem:[%s1 + $0xd38] sm:$0xff]
  %v473 = vld [vmem:[%s1 + $0xd40] sm:$0xff]
  %v474 = vld [vmem:[%s1 + $0xd48] sm:$0xff]
  %v475 = vld [vmem:[%s1 + $0xd50] sm:$0xff]
  %v476 = vld [vmem:[%s1 + $0xd58] sm:$0xff]
  %v477 = vld [vmem:[%s1 + $0xd60] sm:$0xff]
  %v478 = vld [vmem:[%s1 + $0xd68] sm:$0xff]
  %v479 = vld [vmem:[%s1 + $0xd70] sm:$0xff]
  %v480 = vld [vmem:[%s1 + $0xd78] sm:$0xff]
  %v481 = vld [vmem:[%s1 + $0xd80] sm:$0xff]
  %v482 = vld [vmem:[%s1 + $0xd88] sm:$0xff]
  %v483 = vld [vmem:[%s1 + $0xd90] sm:$0xff]
  %v484 = vld [vmem:[%s1 + $0xd98] sm:$0xff]
  %v485 = vld [vmem:[%s1 + $0xda0] sm:$0xff]
  %v486 = vld [vmem:[%s1 + $0xda8] sm:$0xff]
  %v487 = vld [vmem:[%s1 + $0xdb0] sm:$0xff]
  %v488 = vld [vmem:[%s1 + $0xdb8] sm:$0xff]
  %v489 = vld [vmem:[%s1 + $0xdc0] sm:$0xff]
  %v490 = vld [vmem:[%s1 + $0xdc8] sm:$0xff]
  %v491 = vld [vmem:[%s1 + $0xdd0] sm:$0xff]
  %v492 = vld [vmem:[%s1 + $0xdd8] sm:$0xff]
  %v493 = vld [vmem:[%s1 + $0xde0] sm:$0xff]
  %v494 = vld [vmem:[%s1 + $0xde8] sm:$0xff]
  %v495 = vld [vmem:[%s1 + $0xdf0] sm:$0xff]
  %v496 = vld [vmem:[%s1 + $0xdf8] sm:$0xff]
  %v497 = vld [vmem:[%s1 + $0xe00] sm:$0xff]
  %v498 = vld [vmem:[%s1 + $0xe08] sm:$0xff]
  %v499 = vld [vmem:[%s1 + $0xe10] sm:$0xff]
  %v500 = vld [vmem:[%s1 + $0xe18] sm:$0xff]
  %v501 = vld [vmem:[%s1 + $0xe20] sm:$0xff]
  %v502 = vld [vmem:[%s1 + $0xe28] sm:$0xff]
  %v503 = vld [vmem:[%s1 + $0xe30] sm:$0xff]
  %v504 = vld [vmem:[%s1 + $0xe38] sm:$0xff]
  %v505 = vld [vmem:[%s1 + $0xe40] sm:$0xff]
  %v506 = vld [vmem:[%s1 + $0xe48] sm:$0xff]
  %v507 = vld [vmem:[%s1 + $0xe50] sm:$0xff]
  %v508 = vld [vmem:[%s1 + $0xe58] sm:$0xff]
  %v509 = vld [vmem:[%s1 + $0xe60] sm:$0xff]
  %v510 = vld [vmem:[%s1 + $0xe68] sm:$0xff]
  %v511 = vld [vmem:[%s1 + $0xe70] sm:$0xff]
  %v512 = vld [vmem:[%s1 + $0xe78] sm:$0xff]
  %v513 = vld [vmem:[%s1 + $0xe80] sm:$0xff]
  %v514 = vld [vmem:[%s1 + $0xe88] sm:$0xff]
  %v515 = vld [vmem:[%s1 + $0xe90] sm:$0xff]
  %v516 = vld [vmem:[%s1 + $0xe98] sm:$0xff]
  %v517 = vld [vmem:[%s1 + $0xea0] sm:$0xff]
  %v518 = vld [vmem:[%s1 + $0xea8] sm:$0xff]
  %v519 = vld [vmem:[%s1 + $0xeb0] sm:$0xff]
  %v520 = vld [vmem:[%s1 + $0xeb8] sm:$0xff]
  %v521 = vld [vmem:[%s1 + $0xec0] sm:$0xff]
  %v522 = vld [vmem:[%s1 + $0xec8] sm:$0xff]
  %v523 = vld [vmem:[%s1 + $0xed0] sm:$0xff]
  %v524 = vld [vmem:[%s1 + $0xed8] sm:$0xff]
  %v525 = vld [vmem:[%s1 + $0xee0] sm:$0xff]
  %v526 = vld [vmem:[%s1 + $0xee8] sm:$0xff]
  %v527 = vld [vmem:[%s1 + $0xef0] sm:$0xff]
  %v528 = vld [vmem:[%s1 + $0xef8] sm:$0xff]
  %v529 = vld [vmem:[%s1 + $0xf00] sm:$0xff]
  %v530 = vld [vmem:[%s1 + $0xf08] sm:$0xff]
  %v531 = vld [vmem:[%s1 + $0xf10] sm:$0xff]
  %v532 = vld [vmem:[%s1 + $0xf18] sm:$0xff]
  %v533 = vld [vmem:[%s1 + $0xf20] sm:$0xff]
  %v534 = vld [vmem:[%s1 + $0xf28] sm:$0xff]
  %v535 = vld [vmem:[%s1 + $0xf30] sm:$0xff]
  %v536 = vld [vmem:[%s1 + $0xf38] sm:$0xff]
  %v537 = vld [vmem:[%s1 + $0xf40] sm:$0xff]
  %v538 = vld [vmem:[%s1 + $0xf48] sm:$0xff]
  %v539 = vld [vmem:[%s1 + $0xf50] sm:$0xff]
  %v540 = vld [vmem:[%s1 + $0xf58] sm:$0xff]
  %v541 = vld [vmem:[%s1 + $0xf60] sm:$0xff]
  %v542 = vld [vmem:[%s1 + $0xf68] sm:$0xff]
  %v543 = vld [vmem:[%s1 + $0xf70] sm:$0xff]
  %v544 = vld [vmem:[%s1 + $0xf78] sm:$0xff]
  %v545 = vld [vmem:[%s1 + $0xf80] sm:$0xff]
  %v546 = vld [vmem:[%s1 + $0xf88] sm:$0xff]
  %v547 = vld [vmem:[%s1 + $0xf90] sm:$0xff]
  %v548 = vld [vmem:[%s1 + $0xf98] sm:$0xff]
  %v549 = vld [vmem:[%s1 + $0xfa0] sm:$0xff]
  %v550 = vld [vmem:[%s1 + $0xfa8] sm:$0xff]
  %v551 = vld [vmem:[%s1 + $0xfb0] sm:$0xff]
  %v552 = vld [vmem:[%s1 + $0xfb8] sm:$0xff]
  %v553 = vld [vmem:[%s1 + $0xfc0] sm:$0xff]
  %v554 = vld [vmem:[%s1 + $0xfc8] sm:$0xff]
  %v555 = vld [vmem:[%s1 + $0xfd0] sm:$0xff]
  %v556 = vld [vmem:[%s1 + $0xfd8] sm:$0xff]
  %v557 = vld [vmem:[%s1 + $0xfe0] sm:$0xff]
  %v558 = vld [vmem:[%s1 + $0xfe8] sm:$0xff]
  %v559 = vld [vmem:[%s1 + $0xff0] sm:$0xff]
  %v560 = vld [vmem:[%s1 + $0xff8] sm:$0xff]
  %v561 = vld [vmem:[%s1 + $0x1000] sm:$0xff]
  %v562 = vld [vmem:[%s1 + $0x1008] sm:$0xff]
  %v563 = vld [vmem:[%s1 + $0x1010] sm:$0xff]
  %v564 = vld [vmem:[%s1 + $0x1018] sm:$0xff]
  %v565 = vld [vmem:[%s1 + $0x1020] sm:$0xff]
  %v566 = vld [vmem:[%s1 + $0x1028] sm:$0xff]
  %v567 = vld [vmem:[%s1 + $0x1030] sm:$0xff]
  %v568 = vld [vmem:[%s1 + $0x1038] sm:$0xff]
  %v569 = vld [vmem:[%s1 + $0x1040] sm:$0xff]
  %v570 = vld [vmem:[%s1 + $0x1048] sm:$0xff]
  %v571 = vld [vmem:[%s1 + $0x1050] sm:$0xff]
  %v572 = vld [vmem:[%s1 + $0x1058] sm:$0xff]
  %v573 = vld [vmem:[%s1 + $0x1060] sm:$0xff]
  %v574 = vld [vmem:[%s1 + $0x1068] sm:$0xff]
  %v575 = vld [vmem:[%s1 + $0x1070] sm:$0xff]
  %v576 = vld [vmem:[%s1 + $0x1078] sm:$0xff]
  %v577 = vld [vmem:[%s1 + $0x1080] sm:$0xff]
  %v578 = vld [vmem:[%s1 + $0x1088] sm:$0xff]
  %v579 = vld [vmem:[%s1 + $0x1090] sm:$0xff]
  %v580 = vld [vmem:[%s1 + $0x1098] sm:$0xff]
  %v581 = vld [vmem:[%s1 + $0x10a0] sm:$0xff]
  %v582 = vld [vmem:[%s1 + $0x10a8] sm:$0xff]
  %v583 = vld [vmem:[%s1 + $0x10b0] sm:$0xff]
  %v584 = vld [vmem:[%s1 + $0x10b8] sm:$0xff]
  %v585 = vld [vmem:[%s1 + $0x10c0] sm:$0xff]
  %v586 = vld [vmem:[%s1 + $0x10c8] sm:$0xff]
  %v587 = vld [vmem:[%s1 + $0x10d0] sm:$0xff]
  %v588 = vld [vmem:[%s1 + $0x10d8] sm:$0xff]
  %v589 = vld [vmem:[%s1 + $0x10e0] sm:$0xff]
  %v590 = vld [vmem:[%s1 + $0x10e8] sm:$0xff]
  %v591 = vld [vmem:[%s1 + $0x10f0] sm:$0xff]
  %v592 = vld [vmem:[%s1 + $0x10f8] sm:$0xff]
  %v593 = vld [vmem:[%s1 + $0x1100] sm:$0xff]
  %v594 = vld [vmem:[%s1 + $0x1108] sm:$0xff]
  %v595 = vld [vmem:[%s1 + $0x1110] sm:$0xff]
  %v596 = vld [vmem:[%s1 + $0x1118] sm:$0xff]
  %v597 = vld [vmem:[%s1 + $0x1120] sm:$0xff]
  %v598 = vld [vmem:[%s1 + $0x1128] sm:$0xff]
  %v599 = vld [vmem:[%s1 + $0x1130] sm:$0xff]
  %v600 = vld [vmem:[%s1 + $0x1138] sm:$0xff]
  %v601 = vld [vmem:[%s1 + $0x1140] sm:$0xff]
  %v602 = vld [vmem:[%s1 + $0x1148] sm:$0xff]
  %v603 = vld [vmem:[%s1 + $0x1150] sm:$0xff]
  %v604 = vld [vmem:[%s1 + $0x1158] sm:$0xff]
  %v605 = vld [vmem:[%s1 + $0x1160] sm:$0xff]
  %v606 = vld [vmem:[%s1 + $0x1168] sm:$0xff]
  %v607 = vld [vmem:[%s1 + $0x1170] sm:$0xff]
  %v608 = vld [vmem:[%s1 + $0x1178] sm:$0xff]
  %v609 = vld [vmem:[%s1 + $0x1180] sm:$0xff]
  %v610 = vld [vmem:[%s1 + $0x1188] sm:$0xff]
  %v611 = vld [vmem:[%s1 + $0x1190] sm:$0xff]
  %v612 = vld [vmem:[%s1 + $0x1198] sm:$0xff]
  %v613 = vld [vmem:[%s1 + $0x11a0] sm:$0xff]
  %v614 = vld [vmem:[%s1 + $0x11a8] sm:$0xff]
  %v615 = vld [vmem:[%s1 + $0x11b0] sm:$0xff]
  %v616 = vld [vmem:[%s1 + $0x11b8] sm:$0xff]
  %v617 = vld [vmem:[%s1 + $0x11c0] sm:$0xff]
  %v618 = vld [vmem:[%s1 + $0x11c8] sm:$0xff]
  %v619 = vld [vmem:[%s1 + $0x11d0] sm:$0xff]
  %v620 = vld [vmem:[%s1 + $0x11d8] sm:$0xff]
  %v621 = vld [vmem:[%s1 + $0x11e0] sm:$0xff]
  %v622 = vld [vmem:[%s1 + $0x11e8] sm:$0xff]
  %v623 = vld [vmem:[%s1 + $0x11f0] sm:$0xff]
  %v624 = vld [vmem:[%s1 + $0x11f8] sm:$0xff]
  %v625 = vld [vmem:[%s1 + $0x1200] sm:$0xff]
  %v626 = vld [vmem:[%s1 + $0x1208] sm:$0xff]
  %v627 = vld [vmem:[%s1 + $0x1210] sm:$0xff]
  %v628 = vld [vmem:[%s1 + $0x1218] sm:$0xff]
  %v629 = vld [vmem:[%s1 + $0x1220] sm:$0xff]
  %v630 = vld [vmem:[%s1 + $0x1228] sm:$0xff]
  %v631 = vld [vmem:[%s1 + $0x1230] sm:$0xff]
  %v632 = vld [vmem:[%s1 + $0x1238] sm:$0xff]
  %v633 = vld [vmem:[%s1 + $0x1240] sm:$0xff]
  %v634 = vld [vmem:[%s1 + $0x1248] sm:$0xff]
  %v635 = vld [vmem:[%s1 + $0x1250] sm:$0xff]
  %v636 = vld [vmem:[%s1 + $0x1258] sm:$0xff]
  %v637 = vld [vmem:[%s1 + $0x1260] sm:$0xff]
  %v638 = vld [vmem:[%s1 + $0x1268] sm:$0xff]
  %v639 = vld [vmem:[%s1 + $0x1270] sm:$0xff]
  %v640 = vld [vmem:[%s1 + $0x1278] sm:$0xff]
  %v641 = vld [vmem:[%s1 + $0x1280] sm:$0xff]
  %v642 = vld [vmem:[%s1 + $0x1288] sm:$0xff]
  %v643 = vld [vmem:[%s1 + $0x1290] sm:$0xff]
  %v644 = vld [vmem:[%s1 + $0x1298] sm:$0xff]
  %v645 = vld [vmem:[%s1 + $0x12a0] sm:$0xff]
  %v646 = vld [vmem:[%s1 + $0x12a8] sm:$0xff]
  %v647 = vld [vmem:[%s1 + $0x12b0] sm:$0xff]
  %v648 = vld [vmem:[%s1 + $0x12b8] sm:$0xff]
  %v649 = vld [vmem:[%s1 + $0x12c0] sm:$0xff]
  %v650 = vld [vmem:[%s1 + $0x12c8] sm:$0xff]
  %v651 = vld [vmem:[%s1 + $0x12d0] sm:$0xff]
  %v652 = vld [vmem:[%s1 + $0x12d8] sm:$0xff]
  %v653 = vld [vmem:[%s1 + $0x12e0] sm:$0xff]
  %v654 = vld [vmem:[%s1 + $0x12e8] sm:$0xff]
  %v655 = vld [vmem:[%s1 + $0x12f0] sm:$0xff]
  %v656 = vld [vmem:[%s1 + $0x12f8] sm:$0xff]
  %v657 = vld [vmem:[%s1 + $0x1300] sm:$0xff]
  %v658 = vld [vmem:[%s1 + $0x1308] sm:$0xff]
  %v659 = vld [vmem:[%s1 + $0x1310] sm:$0xff]
  %v660 = vld [vmem:[%s1 + $0x1318] sm:$0xff]
  %v661 = vld [vmem:[%s1 + $0x1320] sm:$0xff]
  %v662 = vld [vmem:[%s1 + $0x1328] sm:$0xff]
  %v663 = vld [vmem:[%s1 + $0x1330] sm:$0xff]
  %v664 = vld [vmem:[%s1 + $0x1338] sm:$0xff]
  %v665 = vld [vmem:[%s1 + $0x1340] sm:$0xff]
  %v666 = vld [vmem:[%s1 + $0x1348] sm:$0xff]
  %v667 = vld [vmem:[%s1 + $0x1350] sm:$0xff]
  %v668 = vld [vmem:[%s1 + $0x1358] sm:$0xff]
  %v669 = vld [vmem:[%s1 + $0x1360] sm:$0xff]
  %v670 = vld [vmem:[%s1 + $0x1368] sm:$0xff]
  %v671 = vld [vmem:[%s1 + $0x1370] sm:$0xff]
  %v672 = vld [vmem:[%s1 + $0x1378] sm:$0xff]
  %v673 = vld [vmem:[%s1 + $0x1380] sm:$0xff]
  %v674 = vld [vmem:[%s1 + $0x1388] sm:$0xff]
  %v675 = vld [vmem:[%s1 + $0x1390] sm:$0xff]
  %v676 = vld [vmem:[%s1 + $0x1398] sm:$0xff]
  %v677 = vld [vmem:[%s1 + $0x13a0] sm:$0xff]
  %v678 = vld [vmem:[%s1 + $0x13a8] sm:$0xff]
  %v679 = vld [vmem:[%s1 + $0x13b0] sm:$0xff]
  %v680 = vld [vmem:[%s1 + $0x13b8] sm:$0xff]
  %v681 = vld [vmem:[%s1 + $0x13c0] sm:$0xff]
  %v682 = vld [vmem:[%s1 + $0x13c8] sm:$0xff]
  %v683 = vld [vmem:[%s1 + $0x13d0] sm:$0xff]
  %v684 = vld [vmem:[%s1 + $0x13d8] sm:$0xff]
  %v685 = vld [vmem:[%s1 + $0x13e0] sm:$0xff]
  %v686 = vld [vmem:[%s1 + $0x13e8] sm:$0xff]
  %v687 = vld [vmem:[%s1 + $0x13f0] sm:$0xff]
  %v688 = vld [vmem:[%s1 + $0x13f8] sm:$0xff]
  %v689 = vld [vmem:[%s1 + $0x1400] sm:$0xff]
  %v690 = vld [vmem:[%s1 + $0x1408] sm:$0xff]
  %v691 = vld [vmem:[%s1 + $0x1410] sm:$0xff]
  %v692 = vld [vmem:[%s1 + $0x1418] sm:$0xff]
  %v693 = vld [vmem:[%s1 + $0x1420] sm:$0xff]
  %v694 = vld [vmem:[%s1 + $0x1428] sm:$0xff]
  %v695 = vld [vmem:[%s1 + $0x1430] sm:$0xff]
  %v696 = vld [vmem:[%s1 + $0x1438] sm:$0xff]
  %v697 = vld [vmem:[%s1 + $0x1440] sm:$0xff]
  %v698 = vld [vmem:[%s1 + $0x1448] sm:$0xff]
  %v699 = vld [vmem:[%s1 + $0x1450] sm:$0xff]
  %v700 = vld [vmem:[%s1 + $0x1458] sm:$0xff]
  %v701 = vld [vmem:[%s1 + $0x1460] sm:$0xff]
  %v702 = vld [vmem:[%s1 + $0x1468] sm:$0xff]
  %v703 = vld [vmem:[%s1 + $0x1470] sm:$0xff]
  %v704 = vld [vmem:[%s1 + $0x1478] sm:$0xff]
  %v705 = vld [vmem:[%s1 + $0x1480] sm:$0xff]
  %v706 = vld [vmem:[%s1 + $0x1488] sm:$0xff]
  %v707 = vld [vmem:[%s1 + $0x1490] sm:$0xff]
  %v708 = vld [vmem:[%s1 + $0x1498] sm:$0xff]
  %v709 = vld [vmem:[%s1 + $0x14a0] sm:$0xff]
  %v710 = vld [vmem:[%s1 + $0x14a8] sm:$0xff]
  %v711 = vld [vmem:[%s1 + $0x14b0] sm:$0xff]
  %v712 = vld [vmem:[%s1 + $0x14b8] sm:$0xff]
  %v713 = vld [vmem:[%s1 + $0x14c0] sm:$0xff]
  %v714 = vld [vmem:[%s1 + $0x14c8] sm:$0xff]
  %v715 = vld [vmem:[%s1 + $0x14d0] sm:$0xff]
  %v716 = vld [vmem:[%s1 + $0x14d8] sm:$0xff]
  %v717 = vld [vmem:[%s1 + $0x14e0] sm:$0xff]
  %v718 = vld [vmem:[%s1 + $0x14e8] sm:$0xff]
  %v719 = vld [vmem:[%s1 + $0x14f0] sm:$0xff]
  %v720 = vld [vmem:[%s1 + $0x14f8] sm:$0xff]
  %v721 = vld [vmem:[%s1 + $0x1500] sm:$0xff]
  %v722 = vld [vmem:[%s1 + $0x1508] sm:$0xff]
  %v723 = vld [vmem:[%s1 + $0x1510] sm:$0xff]
  %v724 = vld [vmem:[%s1 + $0x1518] sm:$0xff]
  %v725 = vld [vmem:[%s1 + $0x1520] sm:$0xff]
  %v726 = vld [vmem:[%s1 + $0x1528] sm:$0xff]
  %v727 = vld [vmem:[%s1 + $0x1530] sm:$0xff]
  %v728 = vld [vmem:[%s1 + $0x1538] sm:$0xff]
  %v729 = vld [vmem:[%s1 + $0x1540] sm:$0xff]
  %v730 = vld [vmem:[%s1 + $0x1548] sm:$0xff]
  %v731 = vld [vmem:[%s1 + $0x1550] sm:$0xff]
  %v732 = vld [vmem:[%s1 + $0x1558] sm:$0xff]
  %v733 = vld [vmem:[%s1 + $0x1560] sm:$0xff]
  %v734 = vld [vmem:[%s1 + $0x1568] sm:$0xff]
  %v735 = vld [vmem:[%s1 + $0x1570] sm:$0xff]
  %v736 = vld [vmem:[%s1 + $0x1578] sm:$0xff]
  %v737 = vld [vmem:[%s1 + $0x1580] sm:$0xff]
  %v738 = vld [vmem:[%s1 + $0x1588] sm:$0xff]
  %v739 = vld [vmem:[%s1 + $0x1590] sm:$0xff]
  %v740 = vld [vmem:[%s1 + $0x1598] sm:$0xff]
  %v741 = vld [vmem:[%s1 + $0x15a0] sm:$0xff]
  %v742 = vld [vmem:[%s1 + $0x15a8] sm:$0xff]
  %v743 = vld [vmem:[%s1 + $0x15b0] sm:$0xff]
  %v744 = vld [vmem:[%s1 + $0x15b8] sm:$0xff]
  %v745 = vld [vmem:[%s1 + $0x15c0] sm:$0xff]
  %v746 = vld [vmem:[%s1 + $0x15c8] sm:$0xff]
  %v747 = vld [vmem:[%s1 + $0x15d0] sm:$0xff]
  %v748 = vld [vmem:[%s1 + $0x15d8] sm:$0xff]
  %v749 = vld [vmem:[%s1 + $0x15e0] sm:$0xff]
  %v750 = vld [vmem:[%s1 + $0x15e8] sm:$0xff]
  %v751 = vld [vmem:[%s1 + $0x15f0] sm:$0xff]
  %v752 = vld [vmem:[%s1 + $0x15f8] sm:$0xff]
  %v753 = vld [vmem:[%s1 + $0x1600] sm:$0xff]
  %v754 = vld [vmem:[%s1 + $0x1608] sm:$0xff]
  %v755 = vld [vmem:[%s1 + $0x1610] sm:$0xff]
  %v756 = vld [vmem:[%s1 + $0x1618] sm:$0xff]
  %v757 = vld [vmem:[%s1 + $0x1620] sm:$0xff]
  %v758 = vld [vmem:[%s1 + $0x1628] sm:$0xff]
  %v759 = vld [vmem:[%s1 + $0x1630] sm:$0xff]
  %v760 = vld [vmem:[%s1 + $0x1638] sm:$0xff]
  %v761 = vld [vmem:[%s1 + $0x1640] sm:$0xff]
  %v762 = vld [vmem:[%s1 + $0x1648] sm:$0xff]
  %v763 = vld [vmem:[%s1 + $0x1650] sm:$0xff]
  %v764 = vld [vmem:[%s1 + $0x1658] sm:$0xff]
  %v765 = vld [vmem:[%s1 + $0x1660] sm:$0xff]
  %v766 = vld [vmem:[%s1 + $0x1668] sm:$0xff]
  %v767 = vld [vmem:[%s1 + $0x1670] sm:$0xff]
  %v768 = vld [vmem:[%s1 + $0x1678] sm:$0xff]
  %v769 = vld [vmem:[%s1 + $0x1680] sm:$0xff]
  %v770 = vld [vmem:[%s1 + $0x1688] sm:$0xff]
  %v771 = vld [vmem:[%s1 + $0x1690] sm:$0xff]
  %v772 = vld [vmem:[%s1 + $0x1698] sm:$0xff]
  %v773 = vld [vmem:[%s1 + $0x16a0] sm:$0xff]
  %v774 = vld [vmem:[%s1 + $0x16a8] sm:$0xff]
  %v775 = vld [vmem:[%s1 + $0x16b0] sm:$0xff]
  %v776 = vld [vmem:[%s1 + $0x16b8] sm:$0xff]
  %v777 = vld [vmem:[%s1 + $0x16c0] sm:$0xff]
  %v778 = vld [vmem:[%s1 + $0x16c8] sm:$0xff]
  %v779 = vld [vmem:[%s1 + $0x16d0] sm:$0xff]
  %v780 = vld [vmem:[%s1 + $0x16d8] sm:$0xff]
  %v781 = vld [vmem:[%s1 + $0x16e0] sm:$0xff]
  %v782 = vld [vmem:[%s1 + $0x16e8] sm:$0xff]
  %v783 = vld [vmem:[%s1 + $0x16f0] sm:$0xff]
  %v784 = vld [vmem:[%s1 + $0x16f8] sm:$0xff]
  %v785 = vld [vmem:[%s1 + $0x1700] sm:$0xff]
  %v786 = vld [vmem:[%s1 + $0x1708] sm:$0xff]
  %v787 = vld [vmem:[%s1 + $0x1710] sm:$0xff]
  %v788 = vld [vmem:[%s1 + $0x1718] sm:$0xff]
  %v789 = vld [vmem:[%s1 + $0x1720] sm:$0xff]
  %v790 = vld [vmem:[%s1 + $0x1728] sm:$0xff]
  %v791 = vld [vmem:[%s1 + $0x1730] sm:$0xff]
  %v792 = vld [vmem:[%s1 + $0x1738] sm:$0xff]
  %v793 = vld [vmem:[%s1 + $0x1740] sm:$0xff]
  %v794 = vld [vmem:[%s1 + $0x1748] sm:$0xff]
  %v795 = vld [vmem:[%s1 + $0x1750] sm:$0xff]
  %v796 = vld [vmem:[%s1 + $0x1758] sm:$0xff]
  %v797 = vld [vmem:[%s1 + $0x1760] sm:$0xff]
  %v798 = vld [vmem:[%s1 + $0x1768] sm:$0xff]
  %v799 = vld [vmem:[%s1 + $0x1770] sm:$0xff]
  %v800 = vld [vmem:[%s1 + $0x1778] sm:$0xff]
  %v801 = vld [vmem:[%s1 + $0x1780] sm:$0xff]
  %v802 = vld [vmem:[%s1 + $0x1788] sm:$0xff]
  %v803 = vld [vmem:[%s1 + $0x1790] sm:$0xff]
  %v804 = vld [vmem:[%s1 + $0x1798] sm:$0xff]
  %v805 = vld [vmem:[%s1 + $0x17a0] sm:$0xff]
  %v806 = vld [vmem:[%s1 + $0x17a8] sm:$0xff]
  %v807 = vld [vmem:[%s1 + $0x17b0] sm:$0xff]
  %v808 = vld [vmem:[%s1 + $0x17b8] sm:$0xff]
  %v809 = vld [vmem:[%s1 + $0x17c0] sm:$0xff]
  %v810 = vld [vmem:[%s1 + $0x17c8] sm:$0xff]
  %v811 = vld [vmem:[%s1 + $0x17d0] sm:$0xff]
  %v812 = vld [vmem:[%s1 + $0x17d8] sm:$0xff]
  %v813 = vld [vmem:[%s1 + $0x17e0] sm:$0xff]
  %v814 = vld [vmem:[%s1 + $0x17e8] sm:$0xff]
  %v815 = vld [vmem:[%s1 + $0x17f0] sm:$0xff]
  %v816 = vld [vmem:[%s1 + $0x17f8] sm:$0xff]
  %v817 = vld [vmem:[%s1 + $0x1800] sm:$0xff]
  %v818 = vld [vmem:[%s1 + $0x1808] sm:$0xff]
  %v819 = vld [vmem:[%s1 + $0x1810] sm:$0xff]
  %v820 = vld [vmem:[%s1 + $0x1818] sm:$0xff]
  %v821 = vld [vmem:[%s1 + $0x1820] sm:$0xff]
  %v822 = vld [vmem:[%s1 + $0x1828] sm:$0xff]
  %v823 = vld [vmem:[%s1 + $0x1830] sm:$0xff]
  %v824 = vld [vmem:[%s1 + $0x1838] sm:$0xff]
  %v825 = vld [vmem:[%s1 + $0x1840] sm:$0xff]
  %v826 = vld [vmem:[%s1 + $0x1848] sm:$0xff]
  %v827 = vld [vmem:[%s1 + $0x1850] sm:$0xff]
  %v828 = vld [vmem:[%s1 + $0x1858] sm:$0xff]
  %v829 = vld [vmem:[%s1 + $0x1860] sm:$0xff]
  %v830 = vld [vmem:[%s1 + $0x1868] sm:$0xff]
  %v831 = vld [vmem:[%s1 + $0x1870] sm:$0xff]
  %v832 = vld [vmem:[%s1 + $0x1878] sm:$0xff]
  %v833 = vld [vmem:[%s1 + $0x1880] sm:$0xff]
  %v834 = vld [vmem:[%s1 + $0x1888] sm:$0xff]
  %v835 = vld [vmem:[%s1 + $0x1890] sm:$0xff]
  %v836 = vld [vmem:[%s1 + $0x1898] sm:$0xff]
  %v837 = vld [vmem:[%s1 + $0x18a0] sm:$0xff]
  %v838 = vld [vmem:[%s1 + $0x18a8] sm:$0xff]
  %v839 = vld [vmem:[%s1 + $0x18b0] sm:$0xff]
  %v840 = vld [vmem:[%s1 + $0x18b8] sm:$0xff]
  %v841 = vld [vmem:[%s1 + $0x18c0] sm:$0xff]
  %v842 = vld [vmem:[%s1 + $0x18c8] sm:$0xff]
  %v843 = vld [vmem:[%s1 + $0x18d0] sm:$0xff]
  %v844 = vld [vmem:[%s1 + $0x18d8] sm:$0xff]
  %v845 = vld [vmem:[%s1 + $0x18e0] sm:$0xff]
  %v846 = vld [vmem:[%s1 + $0x18e8] sm:$0xff]
  %v847 = vld [vmem:[%s1 + $0x18f0] sm:$0xff]
  %v848 = vld [vmem:[%s1 + $0x18f8] sm:$0xff]
  %v849 = vld [vmem:[%s1 + $0x1900] sm:$0xff]
  %v850 = vld [vmem:[%s1 + $0x1908] sm:$0xff]
  %v851 = vld [vmem:[%s1 + $0x1910] sm:$0xff]
  %v852 = vld [vmem:[%s1 + $0x1918] sm:$0xff]
  %v853 = vld [vmem:[%s1 + $0x1920] sm:$0xff]
  %v854 = vld [vmem:[%s1 + $0x1928] sm:$0xff]
  %v855 = vld [vmem:[%s1 + $0x1930] sm:$0xff]
  %v856 = vld [vmem:[%s1 + $0x1938] sm:$0xff]
  %v857 = vld [vmem:[%s1 + $0x1940] sm:$0xff]
  %v858 = vld [vmem:[%s1 + $0x1948] sm:$0xff]
  %v859 = vld [vmem:[%s1 + $0x1950] sm:$0xff]
  %v860 = vld [vmem:[%s1 + $0x1958] sm:$0xff]
  %v861 = vld [vmem:[%s1 + $0x1960] sm:$0xff]
  %v862 = vld [vmem:[%s1 + $0x1968] sm:$0xff]
  %v863 = vld [vmem:[%s1 + $0x1970] sm:$0xff]
  %v864 = vld [vmem:[%s1 + $0x1978] sm:$0xff]
  %v865 = vld [vmem:[%s1 + $0x1980] sm:$0xff]
  %v866 = vld [vmem:[%s1 + $0x1988] sm:$0xff]
  %v867 = vld [vmem:[%s1 + $0x1990] sm:$0xff]
  %v868 = vld [vmem:[%s1 + $0x1998] sm:$0xff]
  %v869 = vld [vmem:[%s1 + $0x19a0] sm:$0xff]
  %v870 = vld [vmem:[%s1 + $0x19a8] sm:$0xff]
  %v871 = vld [vmem:[%s1 + $0x19b0] sm:$0xff]
  %v872 = vld [vmem:[%s1 + $0x19b8] sm:$0xff]
  %v873 = vld [vmem:[%s1 + $0x19c0] sm:$0xff]
  %v874 = vld [vmem:[%s1 + $0x19c8] sm:$0xff]
  %v875 = vld [vmem:[%s1 + $0x19d0] sm:$0xff]
  %v876 = vld [vmem:[%s1 + $0x19d8] sm:$0xff]
  %v877 = vld [vmem:[%s1 + $0x19e0] sm:$0xff]
  %v878 = vld [vmem:[%s1 + $0x19e8] sm:$0xff]
  %v879 = vld [vmem:[%s1 + $0x19f0] sm:$0xff]
  %v880 = vld [vmem:[%s1 + $0x19f8] sm:$0xff]
  %v881 = vld [vmem:[%s1 + $0x1a00] sm:$0xff]
  %v882 = vld [vmem:[%s1 + $0x1a08] sm:$0xff]
  %v883 = vld [vmem:[%s1 + $0x1a10] sm:$0xff]
  %v884 = vld [vmem:[%s1 + $0x1a18] sm:$0xff]
  %v885 = vld [vmem:[%s1 + $0x1a20] sm:$0xff]
  %v886 = vld [vmem:[%s1 + $0x1a28] sm:$0xff]
  %v887 = vld [vmem:[%s1 + $0x1a30] sm:$0xff]
  %v888 = vld [vmem:[%s1 + $0x1a38] sm:$0xff]
  %v889 = vld [vmem:[%s1 + $0x1a40] sm:$0xff]
  %v890 = vld [vmem:[%s1 + $0x1a48] sm:$0xff]
  %v891 = vld [vmem:[%s1 + $0x1a50] sm:$0xff]
  %v892 = vld [vmem:[%s1 + $0x1a58] sm:$0xff]
  %v893 = vld [vmem:[%s1 + $0x1a60] sm:$0xff]
  %v894 = vld [vmem:[%s1 + $0x1a68] sm:$0xff]
  %v895 = vld [vmem:[%s1 + $0x1a70] sm:$0xff]
  %v896 = vld [vmem:[%s1 + $0x1a78] sm:$0xff]
  %v897 = vld [vmem:[%s1 + $0x1a80] sm:$0xff]
  %v898 = vld [vmem:[%s1 + $0x1a88] sm:$0xff]
  %v899 = vld [vmem:[%s1 + $0x1a90] sm:$0xff]
  %v900 = vld [vmem:[%s1 + $0x1a98] sm:$0xff]
  %v901 = vld [vmem:[%s1 + $0x1aa0] sm:$0xff]
  %v902 = vld [vmem:[%s1 + $0x1aa8] sm:$0xff]
  %v903 = vld [vmem:[%s1 + $0x1ab0] sm:$0xff]
  %v904 = vld [vmem:[%s1 + $0x1ab8] sm:$0xff]
  %v905 = vld [vmem:[%s1 + $0x1ac0] sm:$0xff]
  %v906 = vld [vmem:[%s1 + $0x1ac8] sm:$0xff]
  %v907 = vld [vmem:[%s1 + $0x1ad0] sm:$0xff]
  %v908 = vld [vmem:[%s1 + $0x1ad8] sm:$0xff]
  %v909 = vld [vmem:[%s1 + $0x1ae0] sm:$0xff]
  %v910 = vld [vmem:[%s1 + $0x1ae8] sm:$0xff]
  %v911 = vld [vmem:[%s1 + $0x1af0] sm:$0xff]
  %v912 = vld [vmem:[%s1 + $0x1af8] sm:$0xff]
  %v913 = vld [vmem:[%s1 + $0x1b00] sm:$0xff]
  %v914 = vld [vmem:[%s1 + $0x1b08] sm:$0xff]
  %v915 = vld [vmem:[%s1 + $0x1b10] sm:$0xff]
  %v916 = vld [vmem:[%s1 + $0x1b18] sm:$0xff]
  %v917 = vld [vmem:[%s1 + $0x1b20] sm:$0xff]
  %v918 = vld [vmem:[%s1 + $0x1b28] sm:$0xff]
  %v919 = vld [vmem:[%s1 + $0x1b30] sm:$0xff]
  %v920 = vld [vmem:[%s1 + $0x1b38] sm:$0xff]
  %v921 = vld [vmem:[%s1 + $0x1b40] sm:$0xff]
  %v922 = vld [vmem:[%s1 + $0x1b48] sm:$0xff]
  %v923 = vld [vmem:[%s1 + $0x1b50] sm:$0xff]
  %v924 = vld [vmem:[%s1 + $0x1b58] sm:$0xff]
  %v925 = vld [vmem:[%s1 + $0x1b60] sm:$0xff]
  %v926 = vld [vmem:[%s1 + $0x1b68] sm:$0xff]
  %v927 = vld [vmem:[%s1 + $0x1b70] sm:$0xff]
  %v928 = vld [vmem:[%s1 + $0x1b78] sm:$0xff]
  %v929 = vld [vmem:[%s1 + $0x1b80] sm:$0xff]
  %v930 = vld [vmem:[%s1 + $0x1b88] sm:$0xff]
  %v931 = vld [vmem:[%s1 + $0x1b90] sm:$0xff]
  %v932 = vld [vmem:[%s1 + $0x1b98] sm:$0xff]
  %v933 = vld [vmem:[%s1 + $0x1ba0] sm:$0xff]
  %v934 = vld [vmem:[%s1 + $0x1ba8] sm:$0xff]
  %v935 = vld [vmem:[%s1 + $0x1bb0] sm:$0xff]
  %v936 = vld [vmem:[%s1 + $0x1bb8] sm:$0xff]
  %v937 = vld [vmem:[%s1 + $0x1bc0] sm:$0xff]
  %v938 = vld [vmem:[%s1 + $0x1bc8] sm:$0xff]
  %v939 = vld [vmem:[%s1 + $0x1bd0] sm:$0xff]
  %v940 = vld [vmem:[%s1 + $0x1bd8] sm:$0xff]
  %v941 = vld [vmem:[%s1 + $0x1be0] sm:$0xff]
  %v942 = vld [vmem:[%s1 + $0x1be8] sm:$0xff]
  %v943 = vld [vmem:[%s1 + $0x1bf0] sm:$0xff]
  %v944 = vld [vmem:[%s1 + $0x1bf8] sm:$0xff]
  %v945 = vld [vmem:[%s1 + $0x1c00] sm:$0xff]
  %v946 = vld [vmem:[%s1 + $0x1c08] sm:$0xff]
  %v947 = vld [vmem:[%s1 + $0x1c10] sm:$0xff]
  %v948 = vld [vmem:[%s1 + $0x1c18] sm:$0xff]
  %v949 = vld [vmem:[%s1 + $0x1c20] sm:$0xff]
  %v950 = vld [vmem:[%s1 + $0x1c28] sm:$0xff]
  %v951 = vld [vmem:[%s1 + $0x1c30] sm:$0xff]
  %v952 = vld [vmem:[%s1 + $0x1c38] sm:$0xff]
  %v953 = vld [vmem:[%s1 + $0x1c40] sm:$0xff]
  %v954 = vld [vmem:[%s1 + $0x1c48] sm:$0xff]
  %v955 = vld [vmem:[%s1 + $0x1c50] sm:$0xff]
  %v956 = vld [vmem:[%s1 + $0x1c58] sm:$0xff]
  %v957 = vld [vmem:[%s1 + $0x1c60] sm:$0xff]
  %v958 = vld [vmem:[%s1 + $0x1c68] sm:$0xff]
  %v959 = vld [vmem:[%s1 + $0x1c70] sm:$0xff]
  %v960 = vld [vmem:[%s1 + $0x1c78] sm:$0xff]
  %v961 = vld [vmem:[%s1 + $0x1c80] sm:$0xff]
  %v962 = vld [vmem:[%s1 + $0x1c88] sm:$0xff]
  %v963 = vld [vmem:[%s1 + $0x1c90] sm:$0xff]
  %v964 = vld [vmem:[%s1 + $0x1c98] sm:$0xff]
  %v965 = vld [vmem:[%s1 + $0x1ca0] sm:$0xff]
  %v966 = vld [vmem:[%s1 + $0x1ca8] sm:$0xff]
  %v967 = vld [vmem:[%s1 + $0x1cb0] sm:$0xff]
  %v968 = vld [vmem:[%s1 + $0x1cb8] sm:$0xff]
  %v969 = vld [vmem:[%s1 + $0x1cc0] sm:$0xff]
  %v970 = vld [vmem:[%s1 + $0x1cc8] sm:$0xff]
  %v971 = vld [vmem:[%s1 + $0x1cd0] sm:$0xff]
  %v972 = vld [vmem:[%s1 + $0x1cd8] sm:$0xff]
  %v973 = vld [vmem:[%s1 + $0x1ce0] sm:$0xff]
  %v974 = vld [vmem:[%s1 + $0x1ce8] sm:$0xff]
  %v975 = vld [vmem:[%s1 + $0x1cf0] sm:$0xff]
  %v976 = vld [vmem:[%s1 + $0x1cf8] sm:$0xff]
  %v977 = vld [vmem:[%s1 + $0x1d00] sm:$0xff]
  %v978 = vld [vmem:[%s1 + $0x1d08] sm:$0xff]
  %v979 = vld [vmem:[%s1 + $0x1d10] sm:$0xff]
  %v980 = vld [vmem:[%s1 + $0x1d18] sm:$0xff]
  %v981 = vld [vmem:[%s1 + $0x1d20] sm:$0xff]
  %v982 = vld [vmem:[%s1 + $0x1d28] sm:$0xff]
  %v983 = vld [vmem:[%s1 + $0x1d30] sm:$0xff]
  %v984 = vld [vmem:[%s1 + $0x1d38] sm:$0xff]
  %v985 = vld [vmem:[%s1 + $0x1d40] sm:$0xff]
  %v986 = vld [vmem:[%s1 + $0x1d48] sm:$0xff]
  %v987 = vld [vmem:[%s1 + $0x1d50] sm:$0xff]
  %v988 = vld [vmem:[%s1 + $0x1d58] sm:$0xff]
  %v989 = vld [vmem:[%s1 + $0x1d60] sm:$0xff]
  %v990 = vld [vmem:[%s1 + $0x1d68] sm:$0xff]
  %v991 = vld [vmem:[%s1 + $0x1d70] sm:$0xff]
  %v992 = vld [vmem:[%s1 + $0x1d78] sm:$0xff]
  %v993 = vld [vmem:[%s1 + $0x1d80] sm:$0xff]
  %v994 = vld [vmem:[%s1 + $0x1d88] sm:$0xff]
  %v995 = vld [vmem:[%s1 + $0x1d90] sm:$0xff]
  %v996 = vld [vmem:[%s1 + $0x1d98] sm:$0xff]
  %v997 = vld [vmem:[%s1 + $0x1da0] sm:$0xff]
  %v998 = vld [vmem:[%s1 + $0x1da8] sm:$0xff]
  %v999 = vld [vmem:[%s1 + $0x1db0] sm:$0xff]
  %v1000 = vld [vmem:[%s1 + $0x1db8] sm:$0xff]
  %v1001 = vld [vmem:[%s1 + $0x1dc0] sm:$0xff]
  %v1002 = vld [vmem:[%s1 + $0x1dc8] sm:$0xff]
  %v1003 = vld [vmem:[%s1 + $0x1dd0] sm:$0xff]
  %v1004 = vld [vmem:[%s1 + $0x1dd8] sm:$0xff]
  %v1005 = vld [vmem:[%s1 + $0x1de0] sm:$0xff]
  %v1006 = vld [vmem:[%s1 + $0x1de8] sm:$0xff]
  %v1007 = vld [vmem:[%s1 + $0x1df0] sm:$0xff]
  %v1008 = vld [vmem:[%s1 + $0x1df8] sm:$0xff]
  %v1009 = vld [vmem:[%s1 + $0x1e00] sm:$0xff]
  %v1010 = vld [vmem:[%s1 + $0x1e08] sm:$0xff]
  %v1011 = vld [vmem:[%s1 + $0x1e10] sm:$0xff]
  %v1012 = vld [vmem:[%s1 + $0x1e18] sm:$0xff]
  %v1013 = vld [vmem:[%s1 + $0x1e20] sm:$0xff]
  %v1014 = vld [vmem:[%s1 + $0x1e28] sm:$0xff]
  %v1015 = vld [vmem:[%s1 + $0x1e30] sm:$0xff]
  %v1016 = vld [vmem:[%s1 + $0x1e38] sm:$0xff]
  %v1017 = vld [vmem:[%s1 + $0x1e40] sm:$0xff]
  %v1018 = vld [vmem:[%s1 + $0x1e48] sm:$0xff]
  %v1019 = vld [vmem:[%s1 + $0x1e50] sm:$0xff]
  %v1020 = vld [vmem:[%s1 + $0x1e58] sm:$0xff]
  %v1021 = vld [vmem:[%s1 + $0x1e60] sm:$0xff]
  %v1022 = vld [vmem:[%s1 + $0x1e68] sm:$0xff]
  %v1023 = vld [vmem:[%s1 + $0x1e70] sm:$0xff]
  %v1024 = vld [vmem:[%s1 + $0x1e78] sm:$0xff]
  %v1025 = vld [vmem:[%s1 + $0x1e80] sm:$0xff]
  %v1026 = vld [vmem:[%s1 + $0x1e88] sm:$0xff]
  %v1027 = vld [vmem:[%s1 + $0x1e90] sm:$0xff]
  %v1028 = vld [vmem:[%s1 + $0x1e98] sm:$0xff]
  %v1029 = vld [vmem:[%s1 + $0x1ea0] sm:$0xff]
  %v1030 = vld [vmem:[%s1 + $0x1ea8] sm:$0xff]
  %v1031 = vld [vmem:[%s1 + $0x1eb0] sm:$0xff]
  %v1032 = vld [vmem:[%s1 + $0x1eb8] sm:$0xff]
  %v1033 = vld [vmem:[%s1 + $0x1ec0] sm:$0xff]
  %v1034 = vld [vmem:[%s1 + $0x1ec8] sm:$0xff]
  %v1035 = vld [vmem:[%s1 + $0x1ed0] sm:$0xff]
  %v1036 = vld [vmem:[%s1 + $0x1ed8] sm:$0xff]
  %v1037 = vld [vmem:[%s1 + $0x1ee0] sm:$0xff]
  %v1038 = vld [vmem:[%s1 + $0x1ee8] sm:$0xff]
  %v1039 = vld [vmem:[%s1 + $0x1ef0] sm:$0xff]
  %v1040 = vld [vmem:[%s1 + $0x1ef8] sm:$0xff]
  %v1041 = vld [vmem:[%s1 + $0x1f00] sm:$0xff]
  %v1042 = vld [vmem:[%s1 + $0x1f08] sm:$0xff]
  %v1043 = vld [vmem:[%s1 + $0x1f10] sm:$0xff]
  %v1044 = vld [vmem:[%s1 + $0x1f18] sm:$0xff]
  %v1045 = vld [vmem:[%s1 + $0x1f20] sm:$0xff]
  %v1046 = vld [vmem:[%s1 + $0x1f28] sm:$0xff]
  %v1047 = vld [vmem:[%s1 + $0x1f30] sm:$0xff]
  %v1048 = vld [vmem:[%s1 + $0x1f38] sm:$0xff]
  %v1049 = vld [vmem:[%s1 + $0x1f40] sm:$0xff]
  %v1050 = vld [vmem:[%s1 + $0x1f48] sm:$0xff]
  %v1051 = vld [vmem:[%s1 + $0x1f50] sm:$0xff]
  %v1052 = vld [vmem:[%s1 + $0x1f58] sm:$0xff]
  %v1053 = vld [vmem:[%s1 + $0x1f60] sm:$0xff]
  %v1054 = vld [vmem:[%s1 + $0x1f68] sm:$0xff]
  %v1055 = vld [vmem:[%s1 + $0x1f70] sm:$0xff]
  %v1056 = vld [vmem:[%s1 + $0x1f78] sm:$0xff]
  %v1057 = vld [vmem:[%s1 + $0x1f80] sm:$0xff]
  %v1058 = vld [vmem:[%s1 + $0x1f88] sm:$0xff]
  %v1059 = vld [vmem:[%s1 + $0x1f90] sm:$0xff]
  %v1060 = vld [vmem:[%s1 + $0x1f98] sm:$0xff]
  %v1061 = vld [vmem:[%s1 + $0x1fa0] sm:$0xff]
  %v1062 = vld [vmem:[%s1 + $0x1fa8] sm:$0xff]
  %v1063 = vld [vmem:[%s1 + $0x1fb0] sm:$0xff]
  %v1064 = vld [vmem:[%s1 + $0x1fb8] sm:$0xff]
  %v1065 = vld [vmem:[%s1 + $0x1fc0] sm:$0xff]
  %v1066 = vld [vmem:[%s1 + $0x1fc8] sm:$0xff]
  %v1067 = vld [vmem:[%s1 + $0x1fd0] sm:$0xff]
  %v1068 = vld [vmem:[%s1 + $0x1fd8] sm:$0xff]
  %v1069 = vld [vmem:[%s1 + $0x1fe0] sm:$0xff]
  %v1070 = vld [vmem:[%s1 + $0x1fe8] sm:$0xff]
  %v1071 = vld [vmem:[%s1 + $0x1ff0] sm:$0xff]
  %v1072 = vld [vmem:[%s1 + $0x1ff8] sm:$0xff]
  %v1073 = vld [vmem:[%s2] sm:$0xf]
  %v1075 = vlaneseq
  %v1076 = vshrl.u32 %v1075, 7
  %v1077 = vsub.s32 0, %v1076
  %v1078 = vrot.slane %v1073, %v1077
  %v1079 = vlaneseq
  %v1080 = vshrl.u32 %v1079, 7
  %v1081 = vsub.s32 1, %v1080
  %v1082 = vrot.slane %v1073, %v1081
  %v1083 = vlaneseq
  %v1084 = vshrl.u32 %v1083, 7
  %v1085 = vsub.s32 2, %v1084
  %v1086 = vrot.slane %v1073, %v1085
  %v1087 = vlaneseq
  %v1088 = vshrl.u32 %v1087, 7
  %v1089 = vsub.s32 3, %v1088
  %v1090 = vrot.slane %v1073, %v1089
  %v1111 = vunpack.c.l.b16 %v33
  %v1112 = vunpack.c.h.b16 %v33
  %v1113 = vunpack.c.l.b16 %v34
  %v1114 = vunpack.c.h.b16 %v34
  %v1115 = vunpack.c.l.b16 %v35
  %v1116 = vunpack.c.h.b16 %v35
  %v1117 = vunpack.c.l.b16 %v36
  %v1118 = vunpack.c.h.b16 %v36
  %v1119 = vunpack.c.l.b16 %v37
  %v1120 = vunpack.c.h.b16 %v37
  %v1121 = vunpack.c.l.b16 %v38
  %v1122 = vunpack.c.h.b16 %v38
  %v1123 = vunpack.c.l.b16 %v39
  %v1124 = vunpack.c.h.b16 %v39
  %v1125 = vunpack.c.l.b16 %v40
  %v1126 = vunpack.c.h.b16 %v40
  %v1127 = vunpack.c.l.b16 %v41
  %v1128 = vunpack.c.h.b16 %v41
  %v1129 = vunpack.c.l.b16 %v42
  %v1130 = vunpack.c.h.b16 %v42
  %v1131 = vunpack.c.l.b16 %v43
  %v1132 = vunpack.c.h.b16 %v43
  %v1133 = vunpack.c.l.b16 %v44
  %v1134 = vunpack.c.h.b16 %v44
  %v1135 = vunpack.c.l.b16 %v45
  %v1136 = vunpack.c.h.b16 %v45
  %v1137 = vunpack.c.l.b16 %v46
  %v1138 = vunpack.c.h.b16 %v46
  %v1139 = vunpack.c.l.b16 %v47
  %v1140 = vunpack.c.h.b16 %v47
  %v1141 = vunpack.c.l.b16 %v48
  %v1142 = vunpack.c.h.b16 %v48
  %v1143 = vpack.c.b16 %v1111, %v1111
  %v1144 = vpack.c.b16 %v1112, %v1112
  %v1145 = vpack.c.b16 %v1113, %v1113
  %v1146 = vpack.c.b16 %v1114, %v1114
  %v1147 = vpack.c.b16 %v1115, %v1115
  %v1148 = vpack.c.b16 %v1116, %v1116
  %v1149 = vpack.c.b16 %v1117, %v1117
  %v1150 = vpack.c.b16 %v1118, %v1118
  %v1151 = vpack.c.b16 %v1119, %v1119
  %v1152 = vpack.c.b16 %v1120, %v1120
  %v1153 = vpack.c.b16 %v1121, %v1121
  %v1154 = vpack.c.b16 %v1122, %v1122
  %v1155 = vpack.c.b16 %v1123, %v1123
  %v1156 = vpack.c.b16 %v1124, %v1124
  %v1157 = vpack.c.b16 %v1125, %v1125
  %v1158 = vpack.c.b16 %v1126, %v1126
  %v1159 = vpack.c.b16 %v1127, %v1127
  %v1160 = vpack.c.b16 %v1128, %v1128
  %v1161 = vpack.c.b16 %v1129, %v1129
  %v1162 = vpack.c.b16 %v1130, %v1130
  %v1163 = vpack.c.b16 %v1131, %v1131
  %v1164 = vpack.c.b16 %v1132, %v1132
  %v1165 = vpack.c.b16 %v1133, %v1133
  %v1166 = vpack.c.b16 %v1134, %v1134
  %v1167 = vpack.c.b16 %v1135, %v1135
  %v1168 = vpack.c.b16 %v1136, %v1136
  %v1169 = vpack.c.b16 %v1137, %v1137
  %v1170 = vpack.c.b16 %v1138, %v1138
  %v1171 = vpack.c.b16 %v1139, %v1139
  %v1172 = vpack.c.b16 %v1140, %v1140
  %v1173 = vpack.c.b16 %v1141, %v1141
  %v1174 = vpack.c.b16 %v1142, %v1142
  %v2231 = vunpack.c.l.b16 %v49
  %v2232 = vunpack.c.h.b16 %v49
  %v2233 = vunpack.c.l.b16 %v50
  %v2234 = vunpack.c.h.b16 %v50
  %v2235 = vunpack.c.l.b16 %v51
  %v2236 = vunpack.c.h.b16 %v51
  %v2237 = vunpack.c.l.b16 %v52
  %v2238 = vunpack.c.h.b16 %v52
  %v2239 = vunpack.c.l.b16 %v53
  %v2240 = vunpack.c.h.b16 %v53
  %v2241 = vunpack.c.l.b16 %v54
  %v2242 = vunpack.c.h.b16 %v54
  %v2243 = vunpack.c.l.b16 %v55
  %v2244 = vunpack.c.h.b16 %v55
  %v2245 = vunpack.c.l.b16 %v56
  %v2246 = vunpack.c.h.b16 %v56
  %v2247 = vunpack.c.l.b16 %v57
  %v2248 = vunpack.c.h.b16 %v57
  %v2249 = vunpack.c.l.b16 %v58
  %v2250 = vunpack.c.h.b16 %v58
  %v2251 = vunpack.c.l.b16 %v59
  %v2252 = vunpack.c.h.b16 %v59
  %v2253 = vunpack.c.l.b16 %v60
  %v2254 = vunpack.c.h.b16 %v60
  %v2255 = vunpack.c.l.b16 %v61
  %v2256 = vunpack.c.h.b16 %v61
  %v2257 = vunpack.c.l.b16 %v62
  %v2258 = vunpack.c.h.b16 %v62
  %v2259 = vunpack.c.l.b16 %v63
  %v2260 = vunpack.c.h.b16 %v63
  %v2261 = vunpack.c.l.b16 %v64
  %v2262 = vunpack.c.h.b16 %v64
  %v2263 = vunpack.c.l.b16 %v65
  %v2264 = vunpack.c.h.b16 %v65
  %v2265 = vunpack.c.l.b16 %v66
  %v2266 = vunpack.c.h.b16 %v66
  %v2267 = vunpack.c.l.b16 %v67
  %v2268 = vunpack.c.h.b16 %v67
  %v2269 = vunpack.c.l.b16 %v68
  %v2270 = vunpack.c.h.b16 %v68
  %v2271 = vunpack.c.l.b16 %v69
  %v2272 = vunpack.c.h.b16 %v69
  %v2273 = vunpack.c.l.b16 %v70
  %v2274 = vunpack.c.h.b16 %v70
  %v2275 = vunpack.c.l.b16 %v71
  %v2276 = vunpack.c.h.b16 %v71
  %v2277 = vunpack.c.l.b16 %v72
  %v2278 = vunpack.c.h.b16 %v72
  %v2279 = vunpack.c.l.b16 %v73
  %v2280 = vunpack.c.h.b16 %v73
  %v2281 = vunpack.c.l.b16 %v74
  %v2282 = vunpack.c.h.b16 %v74
  %v2283 = vunpack.c.l.b16 %v75
  %v2284 = vunpack.c.h.b16 %v75
  %v2285 = vunpack.c.l.b16 %v76
  %v2286 = vunpack.c.h.b16 %v76
  %v2287 = vunpack.c.l.b16 %v77
  %v2288 = vunpack.c.h.b16 %v77
  %v2289 = vunpack.c.l.b16 %v78
  %v2290 = vunpack.c.h.b16 %v78
  %v2291 = vunpack.c.l.b16 %v79
  %v2292 = vunpack.c.h.b16 %v79
  %v2293 = vunpack.c.l.b16 %v80
  %v2294 = vunpack.c.h.b16 %v80
  %v2295 = vunpack.c.l.b16 %v81
  %v2296 = vunpack.c.h.b16 %v81
  %v2297 = vunpack.c.l.b16 %v82
  %v2298 = vunpack.c.h.b16 %v82
  %v2299 = vunpack.c.l.b16 %v83
  %v2300 = vunpack.c.h.b16 %v83
  %v2301 = vunpack.c.l.b16 %v84
  %v2302 = vunpack.c.h.b16 %v84
  %v2303 = vunpack.c.l.b16 %v85
  %v2304 = vunpack.c.h.b16 %v85
  %v2305 = vunpack.c.l.b16 %v86
  %v2306 = vunpack.c.h.b16 %v86
  %v2307 = vunpack.c.l.b16 %v87
  %v2308 = vunpack.c.h.b16 %v87
  %v2309 = vunpack.c.l.b16 %v88
  %v2310 = vunpack.c.h.b16 %v88
  %v2311 = vunpack.c.l.b16 %v89
  %v2312 = vunpack.c.h.b16 %v89
  %v2313 = vunpack.c.l.b16 %v90
  %v2314 = vunpack.c.h.b16 %v90
  %v2315 = vunpack.c.l.b16 %v91
  %v2316 = vunpack.c.h.b16 %v91
  %v2317 = vunpack.c.l.b16 %v92
  %v2318 = vunpack.c.h.b16 %v92
  %v2319 = vunpack.c.l.b16 %v93
  %v2320 = vunpack.c.h.b16 %v93
  %v2321 = vunpack.c.l.b16 %v94
  %v2322 = vunpack.c.h.b16 %v94
  %v2323 = vunpack.c.l.b16 %v95
  %v2324 = vunpack.c.h.b16 %v95
  %v2325 = vunpack.c.l.b16 %v96
  %v2326 = vunpack.c.h.b16 %v96
  %v2327 = vunpack.c.l.b16 %v97
  %v2328 = vunpack.c.h.b16 %v97
  %v2329 = vunpack.c.l.b16 %v98
  %v2330 = vunpack.c.h.b16 %v98
  %v2331 = vunpack.c.l.b16 %v99
  %v2332 = vunpack.c.h.b16 %v99
  %v2333 = vunpack.c.l.b16 %v100
  %v2334 = vunpack.c.h.b16 %v100
  %v2335 = vunpack.c.l.b16 %v101
  %v2336 = vunpack.c.h.b16 %v101
  %v2337 = vunpack.c.l.b16 %v102
  %v2338 = vunpack.c.h.b16 %v102
  %v2339 = vunpack.c.l.b16 %v103
  %v2340 = vunpack.c.h.b16 %v103
  %v2341 = vunpack.c.l.b16 %v104
  %v2342 = vunpack.c.h.b16 %v104
  %v2343 = vunpack.c.l.b16 %v105
  %v2344 = vunpack.c.h.b16 %v105
  %v2345 = vunpack.c.l.b16 %v106
  %v2346 = vunpack.c.h.b16 %v106
  %v2347 = vunpack.c.l.b16 %v107
  %v2348 = vunpack.c.h.b16 %v107
  %v2349 = vunpack.c.l.b16 %v108
  %v2350 = vunpack.c.h.b16 %v108
  %v2351 = vunpack.c.l.b16 %v109
  %v2352 = vunpack.c.h.b16 %v109
  %v2353 = vunpack.c.l.b16 %v110
  %v2354 = vunpack.c.h.b16 %v110
  %v2355 = vunpack.c.l.b16 %v111
  %v2356 = vunpack.c.h.b16 %v111
  %v2357 = vunpack.c.l.b16 %v112
  %v2358 = vunpack.c.h.b16 %v112
  %v2359 = vunpack.c.l.b16 %v113
  %v2360 = vunpack.c.h.b16 %v113
  %v2361 = vunpack.c.l.b16 %v114
  %v2362 = vunpack.c.h.b16 %v114
  %v2363 = vunpack.c.l.b16 %v115
  %v2364 = vunpack.c.h.b16 %v115
  %v2365 = vunpack.c.l.b16 %v116
  %v2366 = vunpack.c.h.b16 %v116
  %v2367 = vunpack.c.l.b16 %v117
  %v2368 = vunpack.c.h.b16 %v117
  %v2369 = vunpack.c.l.b16 %v118
  %v2370 = vunpack.c.h.b16 %v118
  %v2371 = vunpack.c.l.b16 %v119
  %v2372 = vunpack.c.h.b16 %v119
  %v2373 = vunpack.c.l.b16 %v120
  %v2374 = vunpack.c.h.b16 %v120
  %v2375 = vunpack.c.l.b16 %v121
  %v2376 = vunpack.c.h.b16 %v121
  %v2377 = vunpack.c.l.b16 %v122
  %v2378 = vunpack.c.h.b16 %v122
  %v2379 = vunpack.c.l.b16 %v123
  %v2380 = vunpack.c.h.b16 %v123
  %v2381 = vunpack.c.l.b16 %v124
  %v2382 = vunpack.c.h.b16 %v124
  %v2383 = vunpack.c.l.b16 %v125
  %v2384 = vunpack.c.h.b16 %v125
  %v2385 = vunpack.c.l.b16 %v126
  %v2386 = vunpack.c.h.b16 %v126
  %v2387 = vunpack.c.l.b16 %v127
  %v2388 = vunpack.c.h.b16 %v127
  %v2389 = vunpack.c.l.b16 %v128
  %v2390 = vunpack.c.h.b16 %v128
  %v2391 = vunpack.c.l.b16 %v129
  %v2392 = vunpack.c.h.b16 %v129
  %v2393 = vunpack.c.l.b16 %v130
  %v2394 = vunpack.c.h.b16 %v130
  %v2395 = vunpack.c.l.b16 %v131
  %v2396 = vunpack.c.h.b16 %v131
  %v2397 = vunpack.c.l.b16 %v132
  %v2398 = vunpack.c.h.b16 %v132
  %v2399 = vunpack.c.l.b16 %v133
  %v2400 = vunpack.c.h.b16 %v133
  %v2401 = vunpack.c.l.b16 %v134
  %v2402 = vunpack.c.h.b16 %v134
  %v2403 = vunpack.c.l.b16 %v135
  %v2404 = vunpack.c.h.b16 %v135
  %v2405 = vunpack.c.l.b16 %v136
  %v2406 = vunpack.c.h.b16 %v136
  %v2407 = vunpack.c.l.b16 %v137
  %v2408 = vunpack.c.h.b16 %v137
  %v2409 = vunpack.c.l.b16 %v138
  %v2410 = vunpack.c.h.b16 %v138
  %v2411 = vunpack.c.l.b16 %v139
  %v2412 = vunpack.c.h.b16 %v139
  %v2413 = vunpack.c.l.b16 %v140
  %v2414 = vunpack.c.h.b16 %v140
  %v2415 = vunpack.c.l.b16 %v141
  %v2416 = vunpack.c.h.b16 %v141
  %v2417 = vunpack.c.l.b16 %v142
  %v2418 = vunpack.c.h.b16 %v142
  %v2419 = vunpack.c.l.b16 %v143
  %v2420 = vunpack.c.h.b16 %v143
  %v2421 = vunpack.c.l.b16 %v144
  %v2422 = vunpack.c.h.b16 %v144
  %v2423 = vunpack.c.l.b16 %v145
  %v2424 = vunpack.c.h.b16 %v145
  %v2425 = vunpack.c.l.b16 %v146
  %v2426 = vunpack.c.h.b16 %v146
  %v2427 = vunpack.c.l.b16 %v147
  %v2428 = vunpack.c.h.b16 %v147
  %v2429 = vunpack.c.l.b16 %v148
  %v2430 = vunpack.c.h.b16 %v148
  %v2431 = vunpack.c.l.b16 %v149
  %v2432 = vunpack.c.h.b16 %v149
  %v2433 = vunpack.c.l.b16 %v150
  %v2434 = vunpack.c.h.b16 %v150
  %v2435 = vunpack.c.l.b16 %v151
  %v2436 = vunpack.c.h.b16 %v151
  %v2437 = vunpack.c.l.b16 %v152
  %v2438 = vunpack.c.h.b16 %v152
  %v2439 = vunpack.c.l.b16 %v153
  %v2440 = vunpack.c.h.b16 %v153
  %v2441 = vunpack.c.l.b16 %v154
  %v2442 = vunpack.c.h.b16 %v154
  %v2443 = vunpack.c.l.b16 %v155
  %v2444 = vunpack.c.h.b16 %v155
  %v2445 = vunpack.c.l.b16 %v156
  %v2446 = vunpack.c.h.b16 %v156
  %v2447 = vunpack.c.l.b16 %v157
  %v2448 = vunpack.c.h.b16 %v157
  %v2449 = vunpack.c.l.b16 %v158
  %v2450 = vunpack.c.h.b16 %v158
  %v2451 = vunpack.c.l.b16 %v159
  %v2452 = vunpack.c.h.b16 %v159
  %v2453 = vunpack.c.l.b16 %v160
  %v2454 = vunpack.c.h.b16 %v160
  %v2455 = vunpack.c.l.b16 %v161
  %v2456 = vunpack.c.h.b16 %v161
  %v2457 = vunpack.c.l.b16 %v162
  %v2458 = vunpack.c.h.b16 %v162
  %v2459 = vunpack.c.l.b16 %v163
  %v2460 = vunpack.c.h.b16 %v163
  %v2461 = vunpack.c.l.b16 %v164
  %v2462 = vunpack.c.h.b16 %v164
  %v2463 = vunpack.c.l.b16 %v165
  %v2464 = vunpack.c.h.b16 %v165
  %v2465 = vunpack.c.l.b16 %v166
  %v2466 = vunpack.c.h.b16 %v166
  %v2467 = vunpack.c.l.b16 %v167
  %v2468 = vunpack.c.h.b16 %v167
  %v2469 = vunpack.c.l.b16 %v168
  %v2470 = vunpack.c.h.b16 %v168
  %v2471 = vunpack.c.l.b16 %v169
  %v2472 = vunpack.c.h.b16 %v169
  %v2473 = vunpack.c.l.b16 %v170
  %v2474 = vunpack.c.h.b16 %v170
  %v2475 = vunpack.c.l.b16 %v171
  %v2476 = vunpack.c.h.b16 %v171
  %v2477 = vunpack.c.l.b16 %v172
  %v2478 = vunpack.c.h.b16 %v172
  %v2479 = vunpack.c.l.b16 %v173
  %v2480 = vunpack.c.h.b16 %v173
  %v2481 = vunpack.c.l.b16 %v174
  %v2482 = vunpack.c.h.b16 %v174
  %v2483 = vunpack.c.l.b16 %v175
  %v2484 = vunpack.c.h.b16 %v175
  %v2485 = vunpack.c.l.b16 %v176
  %v2486 = vunpack.c.h.b16 %v176
  %v2487 = vunpack.c.l.b16 %v177
  %v2488 = vunpack.c.h.b16 %v177
  %v2489 = vunpack.c.l.b16 %v178
  %v2490 = vunpack.c.h.b16 %v178
  %v2491 = vunpack.c.l.b16 %v179
  %v2492 = vunpack.c.h.b16 %v179
  %v2493 = vunpack.c.l.b16 %v180
  %v2494 = vunpack.c.h.b16 %v180
  %v2495 = vunpack.c.l.b16 %v181
  %v2496 = vunpack.c.h.b16 %v181
  %v2497 = vunpack.c.l.b16 %v182
  %v2498 = vunpack.c.h.b16 %v182
  %v2499 = vunpack.c.l.b16 %v183
  %v2500 = vunpack.c.h.b16 %v183
  %v2501 = vunpack.c.l.b16 %v184
  %v2502 = vunpack.c.h.b16 %v184
  %v2503 = vunpack.c.l.b16 %v185
  %v2504 = vunpack.c.h.b16 %v185
  %v2505 = vunpack.c.l.b16 %v186
  %v2506 = vunpack.c.h.b16 %v186
  %v2507 = vunpack.c.l.b16 %v187
  %v2508 = vunpack.c.h.b16 %v187
  %v2509 = vunpack.c.l.b16 %v188
  %v2510 = vunpack.c.h.b16 %v188
  %v2511 = vunpack.c.l.b16 %v189
  %v2512 = vunpack.c.h.b16 %v189
  %v2513 = vunpack.c.l.b16 %v190
  %v2514 = vunpack.c.h.b16 %v190
  %v2515 = vunpack.c.l.b16 %v191
  %v2516 = vunpack.c.h.b16 %v191
  %v2517 = vunpack.c.l.b16 %v192
  %v2518 = vunpack.c.h.b16 %v192
  %v2519 = vunpack.c.l.b16 %v193
  %v2520 = vunpack.c.h.b16 %v193
  %v2521 = vunpack.c.l.b16 %v194
  %v2522 = vunpack.c.h.b16 %v194
  %v2523 = vunpack.c.l.b16 %v195
  %v2524 = vunpack.c.h.b16 %v195
  %v2525 = vunpack.c.l.b16 %v196
  %v2526 = vunpack.c.h.b16 %v196
  %v2527 = vunpack.c.l.b16 %v197
  %v2528 = vunpack.c.h.b16 %v197
  %v2529 = vunpack.c.l.b16 %v198
  %v2530 = vunpack.c.h.b16 %v198
  %v2531 = vunpack.c.l.b16 %v199
  %v2532 = vunpack.c.h.b16 %v199
  %v2533 = vunpack.c.l.b16 %v200
  %v2534 = vunpack.c.h.b16 %v200
  %v2535 = vunpack.c.l.b16 %v201
  %v2536 = vunpack.c.h.b16 %v201
  %v2537 = vunpack.c.l.b16 %v202
  %v2538 = vunpack.c.h.b16 %v202
  %v2539 = vunpack.c.l.b16 %v203
  %v2540 = vunpack.c.h.b16 %v203
  %v2541 = vunpack.c.l.b16 %v204
  %v2542 = vunpack.c.h.b16 %v204
  %v2543 = vunpack.c.l.b16 %v205
  %v2544 = vunpack.c.h.b16 %v205
  %v2545 = vunpack.c.l.b16 %v206
  %v2546 = vunpack.c.h.b16 %v206
  %v2547 = vunpack.c.l.b16 %v207
  %v2548 = vunpack.c.h.b16 %v207
  %v2549 = vunpack.c.l.b16 %v208
  %v2550 = vunpack.c.h.b16 %v208
  %v2551 = vunpack.c.l.b16 %v209
  %v2552 = vunpack.c.h.b16 %v209
  %v2553 = vunpack.c.l.b16 %v210
  %v2554 = vunpack.c.h.b16 %v210
  %v2555 = vunpack.c.l.b16 %v211
  %v2556 = vunpack.c.h.b16 %v211
  %v2557 = vunpack.c.l.b16 %v212
  %v2558 = vunpack.c.h.b16 %v212
  %v2559 = vunpack.c.l.b16 %v213
  %v2560 = vunpack.c.h.b16 %v213
  %v2561 = vunpack.c.l.b16 %v214
  %v2562 = vunpack.c.h.b16 %v214
  %v2563 = vunpack.c.l.b16 %v215
  %v2564 = vunpack.c.h.b16 %v215
  %v2565 = vunpack.c.l.b16 %v216
  %v2566 = vunpack.c.h.b16 %v216
  %v2567 = vunpack.c.l.b16 %v217
  %v2568 = vunpack.c.h.b16 %v217
  %v2569 = vunpack.c.l.b16 %v218
  %v2570 = vunpack.c.h.b16 %v218
  %v2571 = vunpack.c.l.b16 %v219
  %v2572 = vunpack.c.h.b16 %v219
  %v2573 = vunpack.c.l.b16 %v220
  %v2574 = vunpack.c.h.b16 %v220
  %v2575 = vunpack.c.l.b16 %v221
  %v2576 = vunpack.c.h.b16 %v221
  %v2577 = vunpack.c.l.b16 %v222
  %v2578 = vunpack.c.h.b16 %v222
  %v2579 = vunpack.c.l.b16 %v223
  %v2580 = vunpack.c.h.b16 %v223
  %v2581 = vunpack.c.l.b16 %v224
  %v2582 = vunpack.c.h.b16 %v224
  %v2583 = vunpack.c.l.b16 %v225
  %v2584 = vunpack.c.h.b16 %v225
  %v2585 = vunpack.c.l.b16 %v226
  %v2586 = vunpack.c.h.b16 %v226
  %v2587 = vunpack.c.l.b16 %v227
  %v2588 = vunpack.c.h.b16 %v227
  %v2589 = vunpack.c.l.b16 %v228
  %v2590 = vunpack.c.h.b16 %v228
  %v2591 = vunpack.c.l.b16 %v229
  %v2592 = vunpack.c.h.b16 %v229
  %v2593 = vunpack.c.l.b16 %v230
  %v2594 = vunpack.c.h.b16 %v230
  %v2595 = vunpack.c.l.b16 %v231
  %v2596 = vunpack.c.h.b16 %v231
  %v2597 = vunpack.c.l.b16 %v232
  %v2598 = vunpack.c.h.b16 %v232
  %v2599 = vunpack.c.l.b16 %v233
  %v2600 = vunpack.c.h.b16 %v233
  %v2601 = vunpack.c.l.b16 %v234
  %v2602 = vunpack.c.h.b16 %v234
  %v2603 = vunpack.c.l.b16 %v235
  %v2604 = vunpack.c.h.b16 %v235
  %v2605 = vunpack.c.l.b16 %v236
  %v2606 = vunpack.c.h.b16 %v236
  %v2607 = vunpack.c.l.b16 %v237
  %v2608 = vunpack.c.h.b16 %v237
  %v2609 = vunpack.c.l.b16 %v238
  %v2610 = vunpack.c.h.b16 %v238
  %v2611 = vunpack.c.l.b16 %v239
  %v2612 = vunpack.c.h.b16 %v239
  %v2613 = vunpack.c.l.b16 %v240
  %v2614 = vunpack.c.h.b16 %v240
  %v2615 = vunpack.c.l.b16 %v241
  %v2616 = vunpack.c.h.b16 %v241
  %v2617 = vunpack.c.l.b16 %v242
  %v2618 = vunpack.c.h.b16 %v242
  %v2619 = vunpack.c.l.b16 %v243
  %v2620 = vunpack.c.h.b16 %v243
  %v2621 = vunpack.c.l.b16 %v244
  %v2622 = vunpack.c.h.b16 %v244
  %v2623 = vunpack.c.l.b16 %v245
  %v2624 = vunpack.c.h.b16 %v245
  %v2625 = vunpack.c.l.b16 %v246
  %v2626 = vunpack.c.h.b16 %v246
  %v2627 = vunpack.c.l.b16 %v247
  %v2628 = vunpack.c.h.b16 %v247
  %v2629 = vunpack.c.l.b16 %v248
  %v2630 = vunpack.c.h.b16 %v248
  %v2631 = vunpack.c.l.b16 %v249
  %v2632 = vunpack.c.h.b16 %v249
  %v2633 = vunpack.c.l.b16 %v250
  %v2634 = vunpack.c.h.b16 %v250
  %v2635 = vunpack.c.l.b16 %v251
  %v2636 = vunpack.c.h.b16 %v251
  %v2637 = vunpack.c.l.b16 %v252
  %v2638 = vunpack.c.h.b16 %v252
  %v2639 = vunpack.c.l.b16 %v253
  %v2640 = vunpack.c.h.b16 %v253
  %v2641 = vunpack.c.l.b16 %v254
  %v2642 = vunpack.c.h.b16 %v254
  %v2643 = vunpack.c.l.b16 %v255
  %v2644 = vunpack.c.h.b16 %v255
  %v2645 = vunpack.c.l.b16 %v256
  %v2646 = vunpack.c.h.b16 %v256
  %v2647 = vunpack.c.l.b16 %v257
  %v2648 = vunpack.c.h.b16 %v257
  %v2649 = vunpack.c.l.b16 %v258
  %v2650 = vunpack.c.h.b16 %v258
  %v2651 = vunpack.c.l.b16 %v259
  %v2652 = vunpack.c.h.b16 %v259
  %v2653 = vunpack.c.l.b16 %v260
  %v2654 = vunpack.c.h.b16 %v260
  %v2655 = vunpack.c.l.b16 %v261
  %v2656 = vunpack.c.h.b16 %v261
  %v2657 = vunpack.c.l.b16 %v262
  %v2658 = vunpack.c.h.b16 %v262
  %v2659 = vunpack.c.l.b16 %v263
  %v2660 = vunpack.c.h.b16 %v263
  %v2661 = vunpack.c.l.b16 %v264
  %v2662 = vunpack.c.h.b16 %v264
  %v2663 = vunpack.c.l.b16 %v265
  %v2664 = vunpack.c.h.b16 %v265
  %v2665 = vunpack.c.l.b16 %v266
  %v2666 = vunpack.c.h.b16 %v266
  %v2667 = vunpack.c.l.b16 %v267
  %v2668 = vunpack.c.h.b16 %v267
  %v2669 = vunpack.c.l.b16 %v268
  %v2670 = vunpack.c.h.b16 %v268
  %v2671 = vunpack.c.l.b16 %v269
  %v2672 = vunpack.c.h.b16 %v269
  %v2673 = vunpack.c.l.b16 %v270
  %v2674 = vunpack.c.h.b16 %v270
  %v2675 = vunpack.c.l.b16 %v271
  %v2676 = vunpack.c.h.b16 %v271
  %v2677 = vunpack.c.l.b16 %v272
  %v2678 = vunpack.c.h.b16 %v272
  %v2679 = vunpack.c.l.b16 %v273
  %v2680 = vunpack.c.h.b16 %v273
  %v2681 = vunpack.c.l.b16 %v274
  %v2682 = vunpack.c.h.b16 %v274
  %v2683 = vunpack.c.l.b16 %v275
  %v2684 = vunpack.c.h.b16 %v275
  %v2685 = vunpack.c.l.b16 %v276
  %v2686 = vunpack.c.h.b16 %v276
  %v2687 = vunpack.c.l.b16 %v277
  %v2688 = vunpack.c.h.b16 %v277
  %v2689 = vunpack.c.l.b16 %v278
  %v2690 = vunpack.c.h.b16 %v278
  %v2691 = vunpack.c.l.b16 %v279
  %v2692 = vunpack.c.h.b16 %v279
  %v2693 = vunpack.c.l.b16 %v280
  %v2694 = vunpack.c.h.b16 %v280
  %v2695 = vunpack.c.l.b16 %v281
  %v2696 = vunpack.c.h.b16 %v281
  %v2697 = vunpack.c.l.b16 %v282
  %v2698 = vunpack.c.h.b16 %v282
  %v2699 = vunpack.c.l.b16 %v283
  %v2700 = vunpack.c.h.b16 %v283
  %v2701 = vunpack.c.l.b16 %v284
  %v2702 = vunpack.c.h.b16 %v284
  %v2703 = vunpack.c.l.b16 %v285
  %v2704 = vunpack.c.h.b16 %v285
  %v2705 = vunpack.c.l.b16 %v286
  %v2706 = vunpack.c.h.b16 %v286
  %v2707 = vunpack.c.l.b16 %v287
  %v2708 = vunpack.c.h.b16 %v287
  %v2709 = vunpack.c.l.b16 %v288
  %v2710 = vunpack.c.h.b16 %v288
  %v2711 = vunpack.c.l.b16 %v289
  %v2712 = vunpack.c.h.b16 %v289
  %v2713 = vunpack.c.l.b16 %v290
  %v2714 = vunpack.c.h.b16 %v290
  %v2715 = vunpack.c.l.b16 %v291
  %v2716 = vunpack.c.h.b16 %v291
  %v2717 = vunpack.c.l.b16 %v292
  %v2718 = vunpack.c.h.b16 %v292
  %v2719 = vunpack.c.l.b16 %v293
  %v2720 = vunpack.c.h.b16 %v293
  %v2721 = vunpack.c.l.b16 %v294
  %v2722 = vunpack.c.h.b16 %v294
  %v2723 = vunpack.c.l.b16 %v295
  %v2724 = vunpack.c.h.b16 %v295
  %v2725 = vunpack.c.l.b16 %v296
  %v2726 = vunpack.c.h.b16 %v296
  %v2727 = vunpack.c.l.b16 %v297
  %v2728 = vunpack.c.h.b16 %v297
  %v2729 = vunpack.c.l.b16 %v298
  %v2730 = vunpack.c.h.b16 %v298
  %v2731 = vunpack.c.l.b16 %v299
  %v2732 = vunpack.c.h.b16 %v299
  %v2733 = vunpack.c.l.b16 %v300
  %v2734 = vunpack.c.h.b16 %v300
  %v2735 = vunpack.c.l.b16 %v301
  %v2736 = vunpack.c.h.b16 %v301
  %v2737 = vunpack.c.l.b16 %v302
  %v2738 = vunpack.c.h.b16 %v302
  %v2739 = vunpack.c.l.b16 %v303
  %v2740 = vunpack.c.h.b16 %v303
  %v2741 = vunpack.c.l.b16 %v304
  %v2742 = vunpack.c.h.b16 %v304
  %v2743 = vunpack.c.l.b16 %v305
  %v2744 = vunpack.c.h.b16 %v305
  %v2745 = vunpack.c.l.b16 %v306
  %v2746 = vunpack.c.h.b16 %v306
  %v2747 = vunpack.c.l.b16 %v307
  %v2748 = vunpack.c.h.b16 %v307
  %v2749 = vunpack.c.l.b16 %v308
  %v2750 = vunpack.c.h.b16 %v308
  %v2751 = vunpack.c.l.b16 %v309
  %v2752 = vunpack.c.h.b16 %v309
  %v2753 = vunpack.c.l.b16 %v310
  %v2754 = vunpack.c.h.b16 %v310
  %v2755 = vunpack.c.l.b16 %v311
  %v2756 = vunpack.c.h.b16 %v311
  %v2757 = vunpack.c.l.b16 %v312
  %v2758 = vunpack.c.h.b16 %v312
  %v2759 = vunpack.c.l.b16 %v313
  %v2760 = vunpack.c.h.b16 %v313
  %v2761 = vunpack.c.l.b16 %v314
  %v2762 = vunpack.c.h.b16 %v314
  %v2763 = vunpack.c.l.b16 %v315
  %v2764 = vunpack.c.h.b16 %v315
  %v2765 = vunpack.c.l.b16 %v316
  %v2766 = vunpack.c.h.b16 %v316
  %v2767 = vunpack.c.l.b16 %v317
  %v2768 = vunpack.c.h.b16 %v317
  %v2769 = vunpack.c.l.b16 %v318
  %v2770 = vunpack.c.h.b16 %v318
  %v2771 = vunpack.c.l.b16 %v319
  %v2772 = vunpack.c.h.b16 %v319
  %v2773 = vunpack.c.l.b16 %v320
  %v2774 = vunpack.c.h.b16 %v320
  %v2775 = vunpack.c.l.b16 %v321
  %v2776 = vunpack.c.h.b16 %v321
  %v2777 = vunpack.c.l.b16 %v322
  %v2778 = vunpack.c.h.b16 %v322
  %v2779 = vunpack.c.l.b16 %v323
  %v2780 = vunpack.c.h.b16 %v323
  %v2781 = vunpack.c.l.b16 %v324
  %v2782 = vunpack.c.h.b16 %v324
  %v2783 = vunpack.c.l.b16 %v325
  %v2784 = vunpack.c.h.b16 %v325
  %v2785 = vunpack.c.l.b16 %v326
  %v2786 = vunpack.c.h.b16 %v326
  %v2787 = vunpack.c.l.b16 %v327
  %v2788 = vunpack.c.h.b16 %v327
  %v2789 = vunpack.c.l.b16 %v328
  %v2790 = vunpack.c.h.b16 %v328
  %v2791 = vunpack.c.l.b16 %v329
  %v2792 = vunpack.c.h.b16 %v329
  %v2793 = vunpack.c.l.b16 %v330
  %v2794 = vunpack.c.h.b16 %v330
  %v2795 = vunpack.c.l.b16 %v331
  %v2796 = vunpack.c.h.b16 %v331
  %v2797 = vunpack.c.l.b16 %v332
  %v2798 = vunpack.c.h.b16 %v332
  %v2799 = vunpack.c.l.b16 %v333
  %v2800 = vunpack.c.h.b16 %v333
  %v2801 = vunpack.c.l.b16 %v334
  %v2802 = vunpack.c.h.b16 %v334
  %v2803 = vunpack.c.l.b16 %v335
  %v2804 = vunpack.c.h.b16 %v335
  %v2805 = vunpack.c.l.b16 %v336
  %v2806 = vunpack.c.h.b16 %v336
  %v2807 = vunpack.c.l.b16 %v337
  %v2808 = vunpack.c.h.b16 %v337
  %v2809 = vunpack.c.l.b16 %v338
  %v2810 = vunpack.c.h.b16 %v338
  %v2811 = vunpack.c.l.b16 %v339
  %v2812 = vunpack.c.h.b16 %v339
  %v2813 = vunpack.c.l.b16 %v340
  %v2814 = vunpack.c.h.b16 %v340
  %v2815 = vunpack.c.l.b16 %v341
  %v2816 = vunpack.c.h.b16 %v341
  %v2817 = vunpack.c.l.b16 %v342
  %v2818 = vunpack.c.h.b16 %v342
  %v2819 = vunpack.c.l.b16 %v343
  %v2820 = vunpack.c.h.b16 %v343
  %v2821 = vunpack.c.l.b16 %v344
  %v2822 = vunpack.c.h.b16 %v344
  %v2823 = vunpack.c.l.b16 %v345
  %v2824 = vunpack.c.h.b16 %v345
  %v2825 = vunpack.c.l.b16 %v346
  %v2826 = vunpack.c.h.b16 %v346
  %v2827 = vunpack.c.l.b16 %v347
  %v2828 = vunpack.c.h.b16 %v347
  %v2829 = vunpack.c.l.b16 %v348
  %v2830 = vunpack.c.h.b16 %v348
  %v2831 = vunpack.c.l.b16 %v349
  %v2832 = vunpack.c.h.b16 %v349
  %v2833 = vunpack.c.l.b16 %v350
  %v2834 = vunpack.c.h.b16 %v350
  %v2835 = vunpack.c.l.b16 %v351
  %v2836 = vunpack.c.h.b16 %v351
  %v2837 = vunpack.c.l.b16 %v352
  %v2838 = vunpack.c.h.b16 %v352
  %v2839 = vunpack.c.l.b16 %v353
  %v2840 = vunpack.c.h.b16 %v353
  %v2841 = vunpack.c.l.b16 %v354
  %v2842 = vunpack.c.h.b16 %v354
  %v2843 = vunpack.c.l.b16 %v355
  %v2844 = vunpack.c.h.b16 %v355
  %v2845 = vunpack.c.l.b16 %v356
  %v2846 = vunpack.c.h.b16 %v356
  %v2847 = vunpack.c.l.b16 %v357
  %v2848 = vunpack.c.h.b16 %v357
  %v2849 = vunpack.c.l.b16 %v358
  %v2850 = vunpack.c.h.b16 %v358
  %v2851 = vunpack.c.l.b16 %v359
  %v2852 = vunpack.c.h.b16 %v359
  %v2853 = vunpack.c.l.b16 %v360
  %v2854 = vunpack.c.h.b16 %v360
  %v2855 = vunpack.c.l.b16 %v361
  %v2856 = vunpack.c.h.b16 %v361
  %v2857 = vunpack.c.l.b16 %v362
  %v2858 = vunpack.c.h.b16 %v362
  %v2859 = vunpack.c.l.b16 %v363
  %v2860 = vunpack.c.h.b16 %v363
  %v2861 = vunpack.c.l.b16 %v364
  %v2862 = vunpack.c.h.b16 %v364
  %v2863 = vunpack.c.l.b16 %v365
  %v2864 = vunpack.c.h.b16 %v365
  %v2865 = vunpack.c.l.b16 %v366
  %v2866 = vunpack.c.h.b16 %v366
  %v2867 = vunpack.c.l.b16 %v367
  %v2868 = vunpack.c.h.b16 %v367
  %v2869 = vunpack.c.l.b16 %v368
  %v2870 = vunpack.c.h.b16 %v368
  %v2871 = vunpack.c.l.b16 %v369
  %v2872 = vunpack.c.h.b16 %v369
  %v2873 = vunpack.c.l.b16 %v370
  %v2874 = vunpack.c.h.b16 %v370
  %v2875 = vunpack.c.l.b16 %v371
  %v2876 = vunpack.c.h.b16 %v371
  %v2877 = vunpack.c.l.b16 %v372
  %v2878 = vunpack.c.h.b16 %v372
  %v2879 = vunpack.c.l.b16 %v373
  %v2880 = vunpack.c.h.b16 %v373
  %v2881 = vunpack.c.l.b16 %v374
  %v2882 = vunpack.c.h.b16 %v374
  %v2883 = vunpack.c.l.b16 %v375
  %v2884 = vunpack.c.h.b16 %v375
  %v2885 = vunpack.c.l.b16 %v376
  %v2886 = vunpack.c.h.b16 %v376
  %v2887 = vunpack.c.l.b16 %v377
  %v2888 = vunpack.c.h.b16 %v377
  %v2889 = vunpack.c.l.b16 %v378
  %v2890 = vunpack.c.h.b16 %v378
  %v2891 = vunpack.c.l.b16 %v379
  %v2892 = vunpack.c.h.b16 %v379
  %v2893 = vunpack.c.l.b16 %v380
  %v2894 = vunpack.c.h.b16 %v380
  %v2895 = vunpack.c.l.b16 %v381
  %v2896 = vunpack.c.h.b16 %v381
  %v2897 = vunpack.c.l.b16 %v382
  %v2898 = vunpack.c.h.b16 %v382
  %v2899 = vunpack.c.l.b16 %v383
  %v2900 = vunpack.c.h.b16 %v383
  %v2901 = vunpack.c.l.b16 %v384
  %v2902 = vunpack.c.h.b16 %v384
  %v2903 = vunpack.c.l.b16 %v385
  %v2904 = vunpack.c.h.b16 %v385
  %v2905 = vunpack.c.l.b16 %v386
  %v2906 = vunpack.c.h.b16 %v386
  %v2907 = vunpack.c.l.b16 %v387
  %v2908 = vunpack.c.h.b16 %v387
  %v2909 = vunpack.c.l.b16 %v388
  %v2910 = vunpack.c.h.b16 %v388
  %v2911 = vunpack.c.l.b16 %v389
  %v2912 = vunpack.c.h.b16 %v389
  %v2913 = vunpack.c.l.b16 %v390
  %v2914 = vunpack.c.h.b16 %v390
  %v2915 = vunpack.c.l.b16 %v391
  %v2916 = vunpack.c.h.b16 %v391
  %v2917 = vunpack.c.l.b16 %v392
  %v2918 = vunpack.c.h.b16 %v392
  %v2919 = vunpack.c.l.b16 %v393
  %v2920 = vunpack.c.h.b16 %v393
  %v2921 = vunpack.c.l.b16 %v394
  %v2922 = vunpack.c.h.b16 %v394
  %v2923 = vunpack.c.l.b16 %v395
  %v2924 = vunpack.c.h.b16 %v395
  %v2925 = vunpack.c.l.b16 %v396
  %v2926 = vunpack.c.h.b16 %v396
  %v2927 = vunpack.c.l.b16 %v397
  %v2928 = vunpack.c.h.b16 %v397
  %v2929 = vunpack.c.l.b16 %v398
  %v2930 = vunpack.c.h.b16 %v398
  %v2931 = vunpack.c.l.b16 %v399
  %v2932 = vunpack.c.h.b16 %v399
  %v2933 = vunpack.c.l.b16 %v400
  %v2934 = vunpack.c.h.b16 %v400
  %v2935 = vunpack.c.l.b16 %v401
  %v2936 = vunpack.c.h.b16 %v401
  %v2937 = vunpack.c.l.b16 %v402
  %v2938 = vunpack.c.h.b16 %v402
  %v2939 = vunpack.c.l.b16 %v403
  %v2940 = vunpack.c.h.b16 %v403
  %v2941 = vunpack.c.l.b16 %v404
  %v2942 = vunpack.c.h.b16 %v404
  %v2943 = vunpack.c.l.b16 %v405
  %v2944 = vunpack.c.h.b16 %v405
  %v2945 = vunpack.c.l.b16 %v406
  %v2946 = vunpack.c.h.b16 %v406
  %v2947 = vunpack.c.l.b16 %v407
  %v2948 = vunpack.c.h.b16 %v407
  %v2949 = vunpack.c.l.b16 %v408
  %v2950 = vunpack.c.h.b16 %v408
  %v2951 = vunpack.c.l.b16 %v409
  %v2952 = vunpack.c.h.b16 %v409
  %v2953 = vunpack.c.l.b16 %v410
  %v2954 = vunpack.c.h.b16 %v410
  %v2955 = vunpack.c.l.b16 %v411
  %v2956 = vunpack.c.h.b16 %v411
  %v2957 = vunpack.c.l.b16 %v412
  %v2958 = vunpack.c.h.b16 %v412
  %v2959 = vunpack.c.l.b16 %v413
  %v2960 = vunpack.c.h.b16 %v413
  %v2961 = vunpack.c.l.b16 %v414
  %v2962 = vunpack.c.h.b16 %v414
  %v2963 = vunpack.c.l.b16 %v415
  %v2964 = vunpack.c.h.b16 %v415
  %v2965 = vunpack.c.l.b16 %v416
  %v2966 = vunpack.c.h.b16 %v416
  %v2967 = vunpack.c.l.b16 %v417
  %v2968 = vunpack.c.h.b16 %v417
  %v2969 = vunpack.c.l.b16 %v418
  %v2970 = vunpack.c.h.b16 %v418
  %v2971 = vunpack.c.l.b16 %v419
  %v2972 = vunpack.c.h.b16 %v419
  %v2973 = vunpack.c.l.b16 %v420
  %v2974 = vunpack.c.h.b16 %v420
  %v2975 = vunpack.c.l.b16 %v421
  %v2976 = vunpack.c.h.b16 %v421
  %v2977 = vunpack.c.l.b16 %v422
  %v2978 = vunpack.c.h.b16 %v422
  %v2979 = vunpack.c.l.b16 %v423
  %v2980 = vunpack.c.h.b16 %v423
  %v2981 = vunpack.c.l.b16 %v424
  %v2982 = vunpack.c.h.b16 %v424
  %v2983 = vunpack.c.l.b16 %v425
  %v2984 = vunpack.c.h.b16 %v425
  %v2985 = vunpack.c.l.b16 %v426
  %v2986 = vunpack.c.h.b16 %v426
  %v2987 = vunpack.c.l.b16 %v427
  %v2988 = vunpack.c.h.b16 %v427
  %v2989 = vunpack.c.l.b16 %v428
  %v2990 = vunpack.c.h.b16 %v428
  %v2991 = vunpack.c.l.b16 %v429
  %v2992 = vunpack.c.h.b16 %v429
  %v2993 = vunpack.c.l.b16 %v430
  %v2994 = vunpack.c.h.b16 %v430
  %v2995 = vunpack.c.l.b16 %v431
  %v2996 = vunpack.c.h.b16 %v431
  %v2997 = vunpack.c.l.b16 %v432
  %v2998 = vunpack.c.h.b16 %v432
  %v2999 = vunpack.c.l.b16 %v433
  %v3000 = vunpack.c.h.b16 %v433
  %v3001 = vunpack.c.l.b16 %v434
  %v3002 = vunpack.c.h.b16 %v434
  %v3003 = vunpack.c.l.b16 %v435
  %v3004 = vunpack.c.h.b16 %v435
  %v3005 = vunpack.c.l.b16 %v436
  %v3006 = vunpack.c.h.b16 %v436
  %v3007 = vunpack.c.l.b16 %v437
  %v3008 = vunpack.c.h.b16 %v437
  %v3009 = vunpack.c.l.b16 %v438
  %v3010 = vunpack.c.h.b16 %v438
  %v3011 = vunpack.c.l.b16 %v439
  %v3012 = vunpack.c.h.b16 %v439
  %v3013 = vunpack.c.l.b16 %v440
  %v3014 = vunpack.c.h.b16 %v440
  %v3015 = vunpack.c.l.b16 %v441
  %v3016 = vunpack.c.h.b16 %v441
  %v3017 = vunpack.c.l.b16 %v442
  %v3018 = vunpack.c.h.b16 %v442
  %v3019 = vunpack.c.l.b16 %v443
  %v3020 = vunpack.c.h.b16 %v443
  %v3021 = vunpack.c.l.b16 %v444
  %v3022 = vunpack.c.h.b16 %v444
  %v3023 = vunpack.c.l.b16 %v445
  %v3024 = vunpack.c.h.b16 %v445
  %v3025 = vunpack.c.l.b16 %v446
  %v3026 = vunpack.c.h.b16 %v446
  %v3027 = vunpack.c.l.b16 %v447
  %v3028 = vunpack.c.h.b16 %v447
  %v3029 = vunpack.c.l.b16 %v448
  %v3030 = vunpack.c.h.b16 %v448
  %v3031 = vunpack.c.l.b16 %v449
  %v3032 = vunpack.c.h.b16 %v449
  %v3033 = vunpack.c.l.b16 %v450
  %v3034 = vunpack.c.h.b16 %v450
  %v3035 = vunpack.c.l.b16 %v451
  %v3036 = vunpack.c.h.b16 %v451
  %v3037 = vunpack.c.l.b16 %v452
  %v3038 = vunpack.c.h.b16 %v452
  %v3039 = vunpack.c.l.b16 %v453
  %v3040 = vunpack.c.h.b16 %v453
  %v3041 = vunpack.c.l.b16 %v454
  %v3042 = vunpack.c.h.b16 %v454
  %v3043 = vunpack.c.l.b16 %v455
  %v3044 = vunpack.c.h.b16 %v455
  %v3045 = vunpack.c.l.b16 %v456
  %v3046 = vunpack.c.h.b16 %v456
  %v3047 = vunpack.c.l.b16 %v457
  %v3048 = vunpack.c.h.b16 %v457
  %v3049 = vunpack.c.l.b16 %v458
  %v3050 = vunpack.c.h.b16 %v458
  %v3051 = vunpack.c.l.b16 %v459
  %v3052 = vunpack.c.h.b16 %v459
  %v3053 = vunpack.c.l.b16 %v460
  %v3054 = vunpack.c.h.b16 %v460
  %v3055 = vunpack.c.l.b16 %v461
  %v3056 = vunpack.c.h.b16 %v461
  %v3057 = vunpack.c.l.b16 %v462
  %v3058 = vunpack.c.h.b16 %v462
  %v3059 = vunpack.c.l.b16 %v463
  %v3060 = vunpack.c.h.b16 %v463
  %v3061 = vunpack.c.l.b16 %v464
  %v3062 = vunpack.c.h.b16 %v464
  %v3063 = vunpack.c.l.b16 %v465
  %v3064 = vunpack.c.h.b16 %v465
  %v3065 = vunpack.c.l.b16 %v466
  %v3066 = vunpack.c.h.b16 %v466
  %v3067 = vunpack.c.l.b16 %v467
  %v3068 = vunpack.c.h.b16 %v467
  %v3069 = vunpack.c.l.b16 %v468
  %v3070 = vunpack.c.h.b16 %v468
  %v3071 = vunpack.c.l.b16 %v469
  %v3072 = vunpack.c.h.b16 %v469
  %v3073 = vunpack.c.l.b16 %v470
  %v3074 = vunpack.c.h.b16 %v470
  %v3075 = vunpack.c.l.b16 %v471
  %v3076 = vunpack.c.h.b16 %v471
  %v3077 = vunpack.c.l.b16 %v472
  %v3078 = vunpack.c.h.b16 %v472
  %v3079 = vunpack.c.l.b16 %v473
  %v3080 = vunpack.c.h.b16 %v473
  %v3081 = vunpack.c.l.b16 %v474
  %v3082 = vunpack.c.h.b16 %v474
  %v3083 = vunpack.c.l.b16 %v475
  %v3084 = vunpack.c.h.b16 %v475
  %v3085 = vunpack.c.l.b16 %v476
  %v3086 = vunpack.c.h.b16 %v476
  %v3087 = vunpack.c.l.b16 %v477
  %v3088 = vunpack.c.h.b16 %v477
  %v3089 = vunpack.c.l.b16 %v478
  %v3090 = vunpack.c.h.b16 %v478
  %v3091 = vunpack.c.l.b16 %v479
  %v3092 = vunpack.c.h.b16 %v479
  %v3093 = vunpack.c.l.b16 %v480
  %v3094 = vunpack.c.h.b16 %v480
  %v3095 = vunpack.c.l.b16 %v481
  %v3096 = vunpack.c.h.b16 %v481
  %v3097 = vunpack.c.l.b16 %v482
  %v3098 = vunpack.c.h.b16 %v482
  %v3099 = vunpack.c.l.b16 %v483
  %v3100 = vunpack.c.h.b16 %v483
  %v3101 = vunpack.c.l.b16 %v484
  %v3102 = vunpack.c.h.b16 %v484
  %v3103 = vunpack.c.l.b16 %v485
  %v3104 = vunpack.c.h.b16 %v485
  %v3105 = vunpack.c.l.b16 %v486
  %v3106 = vunpack.c.h.b16 %v486
  %v3107 = vunpack.c.l.b16 %v487
  %v3108 = vunpack.c.h.b16 %v487
  %v3109 = vunpack.c.l.b16 %v488
  %v3110 = vunpack.c.h.b16 %v488
  %v3111 = vunpack.c.l.b16 %v489
  %v3112 = vunpack.c.h.b16 %v489
  %v3113 = vunpack.c.l.b16 %v490
  %v3114 = vunpack.c.h.b16 %v490
  %v3115 = vunpack.c.l.b16 %v491
  %v3116 = vunpack.c.h.b16 %v491
  %v3117 = vunpack.c.l.b16 %v492
  %v3118 = vunpack.c.h.b16 %v492
  %v3119 = vunpack.c.l.b16 %v493
  %v3120 = vunpack.c.h.b16 %v493
  %v3121 = vunpack.c.l.b16 %v494
  %v3122 = vunpack.c.h.b16 %v494
  %v3123 = vunpack.c.l.b16 %v495
  %v3124 = vunpack.c.h.b16 %v495
  %v3125 = vunpack.c.l.b16 %v496
  %v3126 = vunpack.c.h.b16 %v496
  %v3127 = vunpack.c.l.b16 %v497
  %v3128 = vunpack.c.h.b16 %v497
  %v3129 = vunpack.c.l.b16 %v498
  %v3130 = vunpack.c.h.b16 %v498
  %v3131 = vunpack.c.l.b16 %v499
  %v3132 = vunpack.c.h.b16 %v499
  %v3133 = vunpack.c.l.b16 %v500
  %v3134 = vunpack.c.h.b16 %v500
  %v3135 = vunpack.c.l.b16 %v501
  %v3136 = vunpack.c.h.b16 %v501
  %v3137 = vunpack.c.l.b16 %v502
  %v3138 = vunpack.c.h.b16 %v502
  %v3139 = vunpack.c.l.b16 %v503
  %v3140 = vunpack.c.h.b16 %v503
  %v3141 = vunpack.c.l.b16 %v504
  %v3142 = vunpack.c.h.b16 %v504
  %v3143 = vunpack.c.l.b16 %v505
  %v3144 = vunpack.c.h.b16 %v505
  %v3145 = vunpack.c.l.b16 %v506
  %v3146 = vunpack.c.h.b16 %v506
  %v3147 = vunpack.c.l.b16 %v507
  %v3148 = vunpack.c.h.b16 %v507
  %v3149 = vunpack.c.l.b16 %v508
  %v3150 = vunpack.c.h.b16 %v508
  %v3151 = vunpack.c.l.b16 %v509
  %v3152 = vunpack.c.h.b16 %v509
  %v3153 = vunpack.c.l.b16 %v510
  %v3154 = vunpack.c.h.b16 %v510
  %v3155 = vunpack.c.l.b16 %v511
  %v3156 = vunpack.c.h.b16 %v511
  %v3157 = vunpack.c.l.b16 %v512
  %v3158 = vunpack.c.h.b16 %v512
  %v3159 = vunpack.c.l.b16 %v513
  %v3160 = vunpack.c.h.b16 %v513
  %v3161 = vunpack.c.l.b16 %v514
  %v3162 = vunpack.c.h.b16 %v514
  %v3163 = vunpack.c.l.b16 %v515
  %v3164 = vunpack.c.h.b16 %v515
  %v3165 = vunpack.c.l.b16 %v516
  %v3166 = vunpack.c.h.b16 %v516
  %v3167 = vunpack.c.l.b16 %v517
  %v3168 = vunpack.c.h.b16 %v517
  %v3169 = vunpack.c.l.b16 %v518
  %v3170 = vunpack.c.h.b16 %v518
  %v3171 = vunpack.c.l.b16 %v519
  %v3172 = vunpack.c.h.b16 %v519
  %v3173 = vunpack.c.l.b16 %v520
  %v3174 = vunpack.c.h.b16 %v520
  %v3175 = vunpack.c.l.b16 %v521
  %v3176 = vunpack.c.h.b16 %v521
  %v3177 = vunpack.c.l.b16 %v522
  %v3178 = vunpack.c.h.b16 %v522
  %v3179 = vunpack.c.l.b16 %v523
  %v3180 = vunpack.c.h.b16 %v523
  %v3181 = vunpack.c.l.b16 %v524
  %v3182 = vunpack.c.h.b16 %v524
  %v3183 = vunpack.c.l.b16 %v525
  %v3184 = vunpack.c.h.b16 %v525
  %v3185 = vunpack.c.l.b16 %v526
  %v3186 = vunpack.c.h.b16 %v526
  %v3187 = vunpack.c.l.b16 %v527
  %v3188 = vunpack.c.h.b16 %v527
  %v3189 = vunpack.c.l.b16 %v528
  %v3190 = vunpack.c.h.b16 %v528
  %v3191 = vunpack.c.l.b16 %v529
  %v3192 = vunpack.c.h.b16 %v529
  %v3193 = vunpack.c.l.b16 %v530
  %v3194 = vunpack.c.h.b16 %v530
  %v3195 = vunpack.c.l.b16 %v531
  %v3196 = vunpack.c.h.b16 %v531
  %v3197 = vunpack.c.l.b16 %v532
  %v3198 = vunpack.c.h.b16 %v532
  %v3199 = vunpack.c.l.b16 %v533
  %v3200 = vunpack.c.h.b16 %v533
  %v3201 = vunpack.c.l.b16 %v534
  %v3202 = vunpack.c.h.b16 %v534
  %v3203 = vunpack.c.l.b16 %v535
  %v3204 = vunpack.c.h.b16 %v535
  %v3205 = vunpack.c.l.b16 %v536
  %v3206 = vunpack.c.h.b16 %v536
  %v3207 = vunpack.c.l.b16 %v537
  %v3208 = vunpack.c.h.b16 %v537
  %v3209 = vunpack.c.l.b16 %v538
  %v3210 = vunpack.c.h.b16 %v538
  %v3211 = vunpack.c.l.b16 %v539
  %v3212 = vunpack.c.h.b16 %v539
  %v3213 = vunpack.c.l.b16 %v540
  %v3214 = vunpack.c.h.b16 %v540
  %v3215 = vunpack.c.l.b16 %v541
  %v3216 = vunpack.c.h.b16 %v541
  %v3217 = vunpack.c.l.b16 %v542
  %v3218 = vunpack.c.h.b16 %v542
  %v3219 = vunpack.c.l.b16 %v543
  %v3220 = vunpack.c.h.b16 %v543
  %v3221 = vunpack.c.l.b16 %v544
  %v3222 = vunpack.c.h.b16 %v544
  %v3223 = vunpack.c.l.b16 %v545
  %v3224 = vunpack.c.h.b16 %v545
  %v3225 = vunpack.c.l.b16 %v546
  %v3226 = vunpack.c.h.b16 %v546
  %v3227 = vunpack.c.l.b16 %v547
  %v3228 = vunpack.c.h.b16 %v547
  %v3229 = vunpack.c.l.b16 %v548
  %v3230 = vunpack.c.h.b16 %v548
  %v3231 = vunpack.c.l.b16 %v549
  %v3232 = vunpack.c.h.b16 %v549
  %v3233 = vunpack.c.l.b16 %v550
  %v3234 = vunpack.c.h.b16 %v550
  %v3235 = vunpack.c.l.b16 %v551
  %v3236 = vunpack.c.h.b16 %v551
  %v3237 = vunpack.c.l.b16 %v552
  %v3238 = vunpack.c.h.b16 %v552
  %v3239 = vunpack.c.l.b16 %v553
  %v3240 = vunpack.c.h.b16 %v553
  %v3241 = vunpack.c.l.b16 %v554
  %v3242 = vunpack.c.h.b16 %v554
  %v3243 = vunpack.c.l.b16 %v555
  %v3244 = vunpack.c.h.b16 %v555
  %v3245 = vunpack.c.l.b16 %v556
  %v3246 = vunpack.c.h.b16 %v556
  %v3247 = vunpack.c.l.b16 %v557
  %v3248 = vunpack.c.h.b16 %v557
  %v3249 = vunpack.c.l.b16 %v558
  %v3250 = vunpack.c.h.b16 %v558
  %v3251 = vunpack.c.l.b16 %v559
  %v3252 = vunpack.c.h.b16 %v559
  %v3253 = vunpack.c.l.b16 %v560
  %v3254 = vunpack.c.h.b16 %v560
  %v3255 = vunpack.c.l.b16 %v561
  %v3256 = vunpack.c.h.b16 %v561
  %v3257 = vunpack.c.l.b16 %v562
  %v3258 = vunpack.c.h.b16 %v562
  %v3259 = vunpack.c.l.b16 %v563
  %v3260 = vunpack.c.h.b16 %v563
  %v3261 = vunpack.c.l.b16 %v564
  %v3262 = vunpack.c.h.b16 %v564
  %v3263 = vunpack.c.l.b16 %v565
  %v3264 = vunpack.c.h.b16 %v565
  %v3265 = vunpack.c.l.b16 %v566
  %v3266 = vunpack.c.h.b16 %v566
  %v3267 = vunpack.c.l.b16 %v567
  %v3268 = vunpack.c.h.b16 %v567
  %v3269 = vunpack.c.l.b16 %v568
  %v3270 = vunpack.c.h.b16 %v568
  %v3271 = vunpack.c.l.b16 %v569
  %v3272 = vunpack.c.h.b16 %v569
  %v3273 = vunpack.c.l.b16 %v570
  %v3274 = vunpack.c.h.b16 %v570
  %v3275 = vunpack.c.l.b16 %v571
  %v3276 = vunpack.c.h.b16 %v571
  %v3277 = vunpack.c.l.b16 %v572
  %v3278 = vunpack.c.h.b16 %v572
  %v3279 = vunpack.c.l.b16 %v573
  %v3280 = vunpack.c.h.b16 %v573
  %v3281 = vunpack.c.l.b16 %v574
  %v3282 = vunpack.c.h.b16 %v574
  %v3283 = vunpack.c.l.b16 %v575
  %v3284 = vunpack.c.h.b16 %v575
  %v3285 = vunpack.c.l.b16 %v576
  %v3286 = vunpack.c.h.b16 %v576
  %v3287 = vunpack.c.l.b16 %v577
  %v3288 = vunpack.c.h.b16 %v577
  %v3289 = vunpack.c.l.b16 %v578
  %v3290 = vunpack.c.h.b16 %v578
  %v3291 = vunpack.c.l.b16 %v579
  %v3292 = vunpack.c.h.b16 %v579
  %v3293 = vunpack.c.l.b16 %v580
  %v3294 = vunpack.c.h.b16 %v580
  %v3295 = vunpack.c.l.b16 %v581
  %v3296 = vunpack.c.h.b16 %v581
  %v3297 = vunpack.c.l.b16 %v582
  %v3298 = vunpack.c.h.b16 %v582
  %v3299 = vunpack.c.l.b16 %v583
  %v3300 = vunpack.c.h.b16 %v583
  %v3301 = vunpack.c.l.b16 %v584
  %v3302 = vunpack.c.h.b16 %v584
  %v3303 = vunpack.c.l.b16 %v585
  %v3304 = vunpack.c.h.b16 %v585
  %v3305 = vunpack.c.l.b16 %v586
  %v3306 = vunpack.c.h.b16 %v586
  %v3307 = vunpack.c.l.b16 %v587
  %v3308 = vunpack.c.h.b16 %v587
  %v3309 = vunpack.c.l.b16 %v588
  %v3310 = vunpack.c.h.b16 %v588
  %v3311 = vunpack.c.l.b16 %v589
  %v3312 = vunpack.c.h.b16 %v589
  %v3313 = vunpack.c.l.b16 %v590
  %v3314 = vunpack.c.h.b16 %v590
  %v3315 = vunpack.c.l.b16 %v591
  %v3316 = vunpack.c.h.b16 %v591
  %v3317 = vunpack.c.l.b16 %v592
  %v3318 = vunpack.c.h.b16 %v592
  %v3319 = vunpack.c.l.b16 %v593
  %v3320 = vunpack.c.h.b16 %v593
  %v3321 = vunpack.c.l.b16 %v594
  %v3322 = vunpack.c.h.b16 %v594
  %v3323 = vunpack.c.l.b16 %v595
  %v3324 = vunpack.c.h.b16 %v595
  %v3325 = vunpack.c.l.b16 %v596
  %v3326 = vunpack.c.h.b16 %v596
  %v3327 = vunpack.c.l.b16 %v597
  %v3328 = vunpack.c.h.b16 %v597
  %v3329 = vunpack.c.l.b16 %v598
  %v3330 = vunpack.c.h.b16 %v598
  %v3331 = vunpack.c.l.b16 %v599
  %v3332 = vunpack.c.h.b16 %v599
  %v3333 = vunpack.c.l.b16 %v600
  %v3334 = vunpack.c.h.b16 %v600
  %v3335 = vunpack.c.l.b16 %v601
  %v3336 = vunpack.c.h.b16 %v601
  %v3337 = vunpack.c.l.b16 %v602
  %v3338 = vunpack.c.h.b16 %v602
  %v3339 = vunpack.c.l.b16 %v603
  %v3340 = vunpack.c.h.b16 %v603
  %v3341 = vunpack.c.l.b16 %v604
  %v3342 = vunpack.c.h.b16 %v604
  %v3343 = vunpack.c.l.b16 %v605
  %v3344 = vunpack.c.h.b16 %v605
  %v3345 = vunpack.c.l.b16 %v606
  %v3346 = vunpack.c.h.b16 %v606
  %v3347 = vunpack.c.l.b16 %v607
  %v3348 = vunpack.c.h.b16 %v607
  %v3349 = vunpack.c.l.b16 %v608
  %v3350 = vunpack.c.h.b16 %v608
  %v3351 = vunpack.c.l.b16 %v609
  %v3352 = vunpack.c.h.b16 %v609
  %v3353 = vunpack.c.l.b16 %v610
  %v3354 = vunpack.c.h.b16 %v610
  %v3355 = vunpack.c.l.b16 %v611
  %v3356 = vunpack.c.h.b16 %v611
  %v3357 = vunpack.c.l.b16 %v612
  %v3358 = vunpack.c.h.b16 %v612
  %v3359 = vunpack.c.l.b16 %v613
  %v3360 = vunpack.c.h.b16 %v613
  %v3361 = vunpack.c.l.b16 %v614
  %v3362 = vunpack.c.h.b16 %v614
  %v3363 = vunpack.c.l.b16 %v615
  %v3364 = vunpack.c.h.b16 %v615
  %v3365 = vunpack.c.l.b16 %v616
  %v3366 = vunpack.c.h.b16 %v616
  %v3367 = vunpack.c.l.b16 %v617
  %v3368 = vunpack.c.h.b16 %v617
  %v3369 = vunpack.c.l.b16 %v618
  %v3370 = vunpack.c.h.b16 %v618
  %v3371 = vunpack.c.l.b16 %v619
  %v3372 = vunpack.c.h.b16 %v619
  %v3373 = vunpack.c.l.b16 %v620
  %v3374 = vunpack.c.h.b16 %v620
  %v3375 = vunpack.c.l.b16 %v621
  %v3376 = vunpack.c.h.b16 %v621
  %v3377 = vunpack.c.l.b16 %v622
  %v3378 = vunpack.c.h.b16 %v622
  %v3379 = vunpack.c.l.b16 %v623
  %v3380 = vunpack.c.h.b16 %v623
  %v3381 = vunpack.c.l.b16 %v624
  %v3382 = vunpack.c.h.b16 %v624
  %v3383 = vunpack.c.l.b16 %v625
  %v3384 = vunpack.c.h.b16 %v625
  %v3385 = vunpack.c.l.b16 %v626
  %v3386 = vunpack.c.h.b16 %v626
  %v3387 = vunpack.c.l.b16 %v627
  %v3388 = vunpack.c.h.b16 %v627
  %v3389 = vunpack.c.l.b16 %v628
  %v3390 = vunpack.c.h.b16 %v628
  %v3391 = vunpack.c.l.b16 %v629
  %v3392 = vunpack.c.h.b16 %v629
  %v3393 = vunpack.c.l.b16 %v630
  %v3394 = vunpack.c.h.b16 %v630
  %v3395 = vunpack.c.l.b16 %v631
  %v3396 = vunpack.c.h.b16 %v631
  %v3397 = vunpack.c.l.b16 %v632
  %v3398 = vunpack.c.h.b16 %v632
  %v3399 = vunpack.c.l.b16 %v633
  %v3400 = vunpack.c.h.b16 %v633
  %v3401 = vunpack.c.l.b16 %v634
  %v3402 = vunpack.c.h.b16 %v634
  %v3403 = vunpack.c.l.b16 %v635
  %v3404 = vunpack.c.h.b16 %v635
  %v3405 = vunpack.c.l.b16 %v636
  %v3406 = vunpack.c.h.b16 %v636
  %v3407 = vunpack.c.l.b16 %v637
  %v3408 = vunpack.c.h.b16 %v637
  %v3409 = vunpack.c.l.b16 %v638
  %v3410 = vunpack.c.h.b16 %v638
  %v3411 = vunpack.c.l.b16 %v639
  %v3412 = vunpack.c.h.b16 %v639
  %v3413 = vunpack.c.l.b16 %v640
  %v3414 = vunpack.c.h.b16 %v640
  %v3415 = vunpack.c.l.b16 %v641
  %v3416 = vunpack.c.h.b16 %v641
  %v3417 = vunpack.c.l.b16 %v642
  %v3418 = vunpack.c.h.b16 %v642
  %v3419 = vunpack.c.l.b16 %v643
  %v3420 = vunpack.c.h.b16 %v643
  %v3421 = vunpack.c.l.b16 %v644
  %v3422 = vunpack.c.h.b16 %v644
  %v3423 = vunpack.c.l.b16 %v645
  %v3424 = vunpack.c.h.b16 %v645
  %v3425 = vunpack.c.l.b16 %v646
  %v3426 = vunpack.c.h.b16 %v646
  %v3427 = vunpack.c.l.b16 %v647
  %v3428 = vunpack.c.h.b16 %v647
  %v3429 = vunpack.c.l.b16 %v648
  %v3430 = vunpack.c.h.b16 %v648
  %v3431 = vunpack.c.l.b16 %v649
  %v3432 = vunpack.c.h.b16 %v649
  %v3433 = vunpack.c.l.b16 %v650
  %v3434 = vunpack.c.h.b16 %v650
  %v3435 = vunpack.c.l.b16 %v651
  %v3436 = vunpack.c.h.b16 %v651
  %v3437 = vunpack.c.l.b16 %v652
  %v3438 = vunpack.c.h.b16 %v652
  %v3439 = vunpack.c.l.b16 %v653
  %v3440 = vunpack.c.h.b16 %v653
  %v3441 = vunpack.c.l.b16 %v654
  %v3442 = vunpack.c.h.b16 %v654
  %v3443 = vunpack.c.l.b16 %v655
  %v3444 = vunpack.c.h.b16 %v655
  %v3445 = vunpack.c.l.b16 %v656
  %v3446 = vunpack.c.h.b16 %v656
  %v3447 = vunpack.c.l.b16 %v657
  %v3448 = vunpack.c.h.b16 %v657
  %v3449 = vunpack.c.l.b16 %v658
  %v3450 = vunpack.c.h.b16 %v658
  %v3451 = vunpack.c.l.b16 %v659
  %v3452 = vunpack.c.h.b16 %v659
  %v3453 = vunpack.c.l.b16 %v660
  %v3454 = vunpack.c.h.b16 %v660
  %v3455 = vunpack.c.l.b16 %v661
  %v3456 = vunpack.c.h.b16 %v661
  %v3457 = vunpack.c.l.b16 %v662
  %v3458 = vunpack.c.h.b16 %v662
  %v3459 = vunpack.c.l.b16 %v663
  %v3460 = vunpack.c.h.b16 %v663
  %v3461 = vunpack.c.l.b16 %v664
  %v3462 = vunpack.c.h.b16 %v664
  %v3463 = vunpack.c.l.b16 %v665
  %v3464 = vunpack.c.h.b16 %v665
  %v3465 = vunpack.c.l.b16 %v666
  %v3466 = vunpack.c.h.b16 %v666
  %v3467 = vunpack.c.l.b16 %v667
  %v3468 = vunpack.c.h.b16 %v667
  %v3469 = vunpack.c.l.b16 %v668
  %v3470 = vunpack.c.h.b16 %v668
  %v3471 = vunpack.c.l.b16 %v669
  %v3472 = vunpack.c.h.b16 %v669
  %v3473 = vunpack.c.l.b16 %v670
  %v3474 = vunpack.c.h.b16 %v670
  %v3475 = vunpack.c.l.b16 %v671
  %v3476 = vunpack.c.h.b16 %v671
  %v3477 = vunpack.c.l.b16 %v672
  %v3478 = vunpack.c.h.b16 %v672
  %v3479 = vunpack.c.l.b16 %v673
  %v3480 = vunpack.c.h.b16 %v673
  %v3481 = vunpack.c.l.b16 %v674
  %v3482 = vunpack.c.h.b16 %v674
  %v3483 = vunpack.c.l.b16 %v675
  %v3484 = vunpack.c.h.b16 %v675
  %v3485 = vunpack.c.l.b16 %v676
  %v3486 = vunpack.c.h.b16 %v676
  %v3487 = vunpack.c.l.b16 %v677
  %v3488 = vunpack.c.h.b16 %v677
  %v3489 = vunpack.c.l.b16 %v678
  %v3490 = vunpack.c.h.b16 %v678
  %v3491 = vunpack.c.l.b16 %v679
  %v3492 = vunpack.c.h.b16 %v679
  %v3493 = vunpack.c.l.b16 %v680
  %v3494 = vunpack.c.h.b16 %v680
  %v3495 = vunpack.c.l.b16 %v681
  %v3496 = vunpack.c.h.b16 %v681
  %v3497 = vunpack.c.l.b16 %v682
  %v3498 = vunpack.c.h.b16 %v682
  %v3499 = vunpack.c.l.b16 %v683
  %v3500 = vunpack.c.h.b16 %v683
  %v3501 = vunpack.c.l.b16 %v684
  %v3502 = vunpack.c.h.b16 %v684
  %v3503 = vunpack.c.l.b16 %v685
  %v3504 = vunpack.c.h.b16 %v685
  %v3505 = vunpack.c.l.b16 %v686
  %v3506 = vunpack.c.h.b16 %v686
  %v3507 = vunpack.c.l.b16 %v687
  %v3508 = vunpack.c.h.b16 %v687
  %v3509 = vunpack.c.l.b16 %v688
  %v3510 = vunpack.c.h.b16 %v688
  %v3511 = vunpack.c.l.b16 %v689
  %v3512 = vunpack.c.h.b16 %v689
  %v3513 = vunpack.c.l.b16 %v690
  %v3514 = vunpack.c.h.b16 %v690
  %v3515 = vunpack.c.l.b16 %v691
  %v3516 = vunpack.c.h.b16 %v691
  %v3517 = vunpack.c.l.b16 %v692
  %v3518 = vunpack.c.h.b16 %v692
  %v3519 = vunpack.c.l.b16 %v693
  %v3520 = vunpack.c.h.b16 %v693
  %v3521 = vunpack.c.l.b16 %v694
  %v3522 = vunpack.c.h.b16 %v694
  %v3523 = vunpack.c.l.b16 %v695
  %v3524 = vunpack.c.h.b16 %v695
  %v3525 = vunpack.c.l.b16 %v696
  %v3526 = vunpack.c.h.b16 %v696
  %v3527 = vunpack.c.l.b16 %v697
  %v3528 = vunpack.c.h.b16 %v697
  %v3529 = vunpack.c.l.b16 %v698
  %v3530 = vunpack.c.h.b16 %v698
  %v3531 = vunpack.c.l.b16 %v699
  %v3532 = vunpack.c.h.b16 %v699
  %v3533 = vunpack.c.l.b16 %v700
  %v3534 = vunpack.c.h.b16 %v700
  %v3535 = vunpack.c.l.b16 %v701
  %v3536 = vunpack.c.h.b16 %v701
  %v3537 = vunpack.c.l.b16 %v702
  %v3538 = vunpack.c.h.b16 %v702
  %v3539 = vunpack.c.l.b16 %v703
  %v3540 = vunpack.c.h.b16 %v703
  %v3541 = vunpack.c.l.b16 %v704
  %v3542 = vunpack.c.h.b16 %v704
  %v3543 = vunpack.c.l.b16 %v705
  %v3544 = vunpack.c.h.b16 %v705
  %v3545 = vunpack.c.l.b16 %v706
  %v3546 = vunpack.c.h.b16 %v706
  %v3547 = vunpack.c.l.b16 %v707
  %v3548 = vunpack.c.h.b16 %v707
  %v3549 = vunpack.c.l.b16 %v708
  %v3550 = vunpack.c.h.b16 %v708
  %v3551 = vunpack.c.l.b16 %v709
  %v3552 = vunpack.c.h.b16 %v709
  %v3553 = vunpack.c.l.b16 %v710
  %v3554 = vunpack.c.h.b16 %v710
  %v3555 = vunpack.c.l.b16 %v711
  %v3556 = vunpack.c.h.b16 %v711
  %v3557 = vunpack.c.l.b16 %v712
  %v3558 = vunpack.c.h.b16 %v712
  %v3559 = vunpack.c.l.b16 %v713
  %v3560 = vunpack.c.h.b16 %v713
  %v3561 = vunpack.c.l.b16 %v714
  %v3562 = vunpack.c.h.b16 %v714
  %v3563 = vunpack.c.l.b16 %v715
  %v3564 = vunpack.c.h.b16 %v715
  %v3565 = vunpack.c.l.b16 %v716
  %v3566 = vunpack.c.h.b16 %v716
  %v3567 = vunpack.c.l.b16 %v717
  %v3568 = vunpack.c.h.b16 %v717
  %v3569 = vunpack.c.l.b16 %v718
  %v3570 = vunpack.c.h.b16 %v718
  %v3571 = vunpack.c.l.b16 %v719
  %v3572 = vunpack.c.h.b16 %v719
  %v3573 = vunpack.c.l.b16 %v720
  %v3574 = vunpack.c.h.b16 %v720
  %v3575 = vunpack.c.l.b16 %v721
  %v3576 = vunpack.c.h.b16 %v721
  %v3577 = vunpack.c.l.b16 %v722
  %v3578 = vunpack.c.h.b16 %v722
  %v3579 = vunpack.c.l.b16 %v723
  %v3580 = vunpack.c.h.b16 %v723
  %v3581 = vunpack.c.l.b16 %v724
  %v3582 = vunpack.c.h.b16 %v724
  %v3583 = vunpack.c.l.b16 %v725
  %v3584 = vunpack.c.h.b16 %v725
  %v3585 = vunpack.c.l.b16 %v726
  %v3586 = vunpack.c.h.b16 %v726
  %v3587 = vunpack.c.l.b16 %v727
  %v3588 = vunpack.c.h.b16 %v727
  %v3589 = vunpack.c.l.b16 %v728
  %v3590 = vunpack.c.h.b16 %v728
  %v3591 = vunpack.c.l.b16 %v729
  %v3592 = vunpack.c.h.b16 %v729
  %v3593 = vunpack.c.l.b16 %v730
  %v3594 = vunpack.c.h.b16 %v730
  %v3595 = vunpack.c.l.b16 %v731
  %v3596 = vunpack.c.h.b16 %v731
  %v3597 = vunpack.c.l.b16 %v732
  %v3598 = vunpack.c.h.b16 %v732
  %v3599 = vunpack.c.l.b16 %v733
  %v3600 = vunpack.c.h.b16 %v733
  %v3601 = vunpack.c.l.b16 %v734
  %v3602 = vunpack.c.h.b16 %v734
  %v3603 = vunpack.c.l.b16 %v735
  %v3604 = vunpack.c.h.b16 %v735
  %v3605 = vunpack.c.l.b16 %v736
  %v3606 = vunpack.c.h.b16 %v736
  %v3607 = vunpack.c.l.b16 %v737
  %v3608 = vunpack.c.h.b16 %v737
  %v3609 = vunpack.c.l.b16 %v738
  %v3610 = vunpack.c.h.b16 %v738
  %v3611 = vunpack.c.l.b16 %v739
  %v3612 = vunpack.c.h.b16 %v739
  %v3613 = vunpack.c.l.b16 %v740
  %v3614 = vunpack.c.h.b16 %v740
  %v3615 = vunpack.c.l.b16 %v741
  %v3616 = vunpack.c.h.b16 %v741
  %v3617 = vunpack.c.l.b16 %v742
  %v3618 = vunpack.c.h.b16 %v742
  %v3619 = vunpack.c.l.b16 %v743
  %v3620 = vunpack.c.h.b16 %v743
  %v3621 = vunpack.c.l.b16 %v744
  %v3622 = vunpack.c.h.b16 %v744
  %v3623 = vunpack.c.l.b16 %v745
  %v3624 = vunpack.c.h.b16 %v745
  %v3625 = vunpack.c.l.b16 %v746
  %v3626 = vunpack.c.h.b16 %v746
  %v3627 = vunpack.c.l.b16 %v747
  %v3628 = vunpack.c.h.b16 %v747
  %v3629 = vunpack.c.l.b16 %v748
  %v3630 = vunpack.c.h.b16 %v748
  %v3631 = vunpack.c.l.b16 %v749
  %v3632 = vunpack.c.h.b16 %v749
  %v3633 = vunpack.c.l.b16 %v750
  %v3634 = vunpack.c.h.b16 %v750
  %v3635 = vunpack.c.l.b16 %v751
  %v3636 = vunpack.c.h.b16 %v751
  %v3637 = vunpack.c.l.b16 %v752
  %v3638 = vunpack.c.h.b16 %v752
  %v3639 = vunpack.c.l.b16 %v753
  %v3640 = vunpack.c.h.b16 %v753
  %v3641 = vunpack.c.l.b16 %v754
  %v3642 = vunpack.c.h.b16 %v754
  %v3643 = vunpack.c.l.b16 %v755
  %v3644 = vunpack.c.h.b16 %v755
  %v3645 = vunpack.c.l.b16 %v756
  %v3646 = vunpack.c.h.b16 %v756
  %v3647 = vunpack.c.l.b16 %v757
  %v3648 = vunpack.c.h.b16 %v757
  %v3649 = vunpack.c.l.b16 %v758
  %v3650 = vunpack.c.h.b16 %v758
  %v3651 = vunpack.c.l.b16 %v759
  %v3652 = vunpack.c.h.b16 %v759
  %v3653 = vunpack.c.l.b16 %v760
  %v3654 = vunpack.c.h.b16 %v760
  %v3655 = vunpack.c.l.b16 %v761
  %v3656 = vunpack.c.h.b16 %v761
  %v3657 = vunpack.c.l.b16 %v762
  %v3658 = vunpack.c.h.b16 %v762
  %v3659 = vunpack.c.l.b16 %v763
  %v3660 = vunpack.c.h.b16 %v763
  %v3661 = vunpack.c.l.b16 %v764
  %v3662 = vunpack.c.h.b16 %v764
  %v3663 = vunpack.c.l.b16 %v765
  %v3664 = vunpack.c.h.b16 %v765
  %v3665 = vunpack.c.l.b16 %v766
  %v3666 = vunpack.c.h.b16 %v766
  %v3667 = vunpack.c.l.b16 %v767
  %v3668 = vunpack.c.h.b16 %v767
  %v3669 = vunpack.c.l.b16 %v768
  %v3670 = vunpack.c.h.b16 %v768
  %v3671 = vunpack.c.l.b16 %v769
  %v3672 = vunpack.c.h.b16 %v769
  %v3673 = vunpack.c.l.b16 %v770
  %v3674 = vunpack.c.h.b16 %v770
  %v3675 = vunpack.c.l.b16 %v771
  %v3676 = vunpack.c.h.b16 %v771
  %v3677 = vunpack.c.l.b16 %v772
  %v3678 = vunpack.c.h.b16 %v772
  %v3679 = vunpack.c.l.b16 %v773
  %v3680 = vunpack.c.h.b16 %v773
  %v3681 = vunpack.c.l.b16 %v774
  %v3682 = vunpack.c.h.b16 %v774
  %v3683 = vunpack.c.l.b16 %v775
  %v3684 = vunpack.c.h.b16 %v775
  %v3685 = vunpack.c.l.b16 %v776
  %v3686 = vunpack.c.h.b16 %v776
  %v3687 = vunpack.c.l.b16 %v777
  %v3688 = vunpack.c.h.b16 %v777
  %v3689 = vunpack.c.l.b16 %v778
  %v3690 = vunpack.c.h.b16 %v778
  %v3691 = vunpack.c.l.b16 %v779
  %v3692 = vunpack.c.h.b16 %v779
  %v3693 = vunpack.c.l.b16 %v780
  %v3694 = vunpack.c.h.b16 %v780
  %v3695 = vunpack.c.l.b16 %v781
  %v3696 = vunpack.c.h.b16 %v781
  %v3697 = vunpack.c.l.b16 %v782
  %v3698 = vunpack.c.h.b16 %v782
  %v3699 = vunpack.c.l.b16 %v783
  %v3700 = vunpack.c.h.b16 %v783
  %v3701 = vunpack.c.l.b16 %v784
  %v3702 = vunpack.c.h.b16 %v784
  %v3703 = vunpack.c.l.b16 %v785
  %v3704 = vunpack.c.h.b16 %v785
  %v3705 = vunpack.c.l.b16 %v786
  %v3706 = vunpack.c.h.b16 %v786
  %v3707 = vunpack.c.l.b16 %v787
  %v3708 = vunpack.c.h.b16 %v787
  %v3709 = vunpack.c.l.b16 %v788
  %v3710 = vunpack.c.h.b16 %v788
  %v3711 = vunpack.c.l.b16 %v789
  %v3712 = vunpack.c.h.b16 %v789
  %v3713 = vunpack.c.l.b16 %v790
  %v3714 = vunpack.c.h.b16 %v790
  %v3715 = vunpack.c.l.b16 %v791
  %v3716 = vunpack.c.h.b16 %v791
  %v3717 = vunpack.c.l.b16 %v792
  %v3718 = vunpack.c.h.b16 %v792
  %v3719 = vunpack.c.l.b16 %v793
  %v3720 = vunpack.c.h.b16 %v793
  %v3721 = vunpack.c.l.b16 %v794
  %v3722 = vunpack.c.h.b16 %v794
  %v3723 = vunpack.c.l.b16 %v795
  %v3724 = vunpack.c.h.b16 %v795
  %v3725 = vunpack.c.l.b16 %v796
  %v3726 = vunpack.c.h.b16 %v796
  %v3727 = vunpack.c.l.b16 %v797
  %v3728 = vunpack.c.h.b16 %v797
  %v3729 = vunpack.c.l.b16 %v798
  %v3730 = vunpack.c.h.b16 %v798
  %v3731 = vunpack.c.l.b16 %v799
  %v3732 = vunpack.c.h.b16 %v799
  %v3733 = vunpack.c.l.b16 %v800
  %v3734 = vunpack.c.h.b16 %v800
  %v3735 = vunpack.c.l.b16 %v801
  %v3736 = vunpack.c.h.b16 %v801
  %v3737 = vunpack.c.l.b16 %v802
  %v3738 = vunpack.c.h.b16 %v802
  %v3739 = vunpack.c.l.b16 %v803
  %v3740 = vunpack.c.h.b16 %v803
  %v3741 = vunpack.c.l.b16 %v804
  %v3742 = vunpack.c.h.b16 %v804
  %v3743 = vunpack.c.l.b16 %v805
  %v3744 = vunpack.c.h.b16 %v805
  %v3745 = vunpack.c.l.b16 %v806
  %v3746 = vunpack.c.h.b16 %v806
  %v3747 = vunpack.c.l.b16 %v807
  %v3748 = vunpack.c.h.b16 %v807
  %v3749 = vunpack.c.l.b16 %v808
  %v3750 = vunpack.c.h.b16 %v808
  %v3751 = vunpack.c.l.b16 %v809
  %v3752 = vunpack.c.h.b16 %v809
  %v3753 = vunpack.c.l.b16 %v810
  %v3754 = vunpack.c.h.b16 %v810
  %v3755 = vunpack.c.l.b16 %v811
  %v3756 = vunpack.c.h.b16 %v811
  %v3757 = vunpack.c.l.b16 %v812
  %v3758 = vunpack.c.h.b16 %v812
  %v3759 = vunpack.c.l.b16 %v813
  %v3760 = vunpack.c.h.b16 %v813
  %v3761 = vunpack.c.l.b16 %v814
  %v3762 = vunpack.c.h.b16 %v814
  %v3763 = vunpack.c.l.b16 %v815
  %v3764 = vunpack.c.h.b16 %v815
  %v3765 = vunpack.c.l.b16 %v816
  %v3766 = vunpack.c.h.b16 %v816
  %v3767 = vunpack.c.l.b16 %v817
  %v3768 = vunpack.c.h.b16 %v817
  %v3769 = vunpack.c.l.b16 %v818
  %v3770 = vunpack.c.h.b16 %v818
  %v3771 = vunpack.c.l.b16 %v819
  %v3772 = vunpack.c.h.b16 %v819
  %v3773 = vunpack.c.l.b16 %v820
  %v3774 = vunpack.c.h.b16 %v820
  %v3775 = vunpack.c.l.b16 %v821
  %v3776 = vunpack.c.h.b16 %v821
  %v3777 = vunpack.c.l.b16 %v822
  %v3778 = vunpack.c.h.b16 %v822
  %v3779 = vunpack.c.l.b16 %v823
  %v3780 = vunpack.c.h.b16 %v823
  %v3781 = vunpack.c.l.b16 %v824
  %v3782 = vunpack.c.h.b16 %v824
  %v3783 = vunpack.c.l.b16 %v825
  %v3784 = vunpack.c.h.b16 %v825
  %v3785 = vunpack.c.l.b16 %v826
  %v3786 = vunpack.c.h.b16 %v826
  %v3787 = vunpack.c.l.b16 %v827
  %v3788 = vunpack.c.h.b16 %v827
  %v3789 = vunpack.c.l.b16 %v828
  %v3790 = vunpack.c.h.b16 %v828
  %v3791 = vunpack.c.l.b16 %v829
  %v3792 = vunpack.c.h.b16 %v829
  %v3793 = vunpack.c.l.b16 %v830
  %v3794 = vunpack.c.h.b16 %v830
  %v3795 = vunpack.c.l.b16 %v831
  %v3796 = vunpack.c.h.b16 %v831
  %v3797 = vunpack.c.l.b16 %v832
  %v3798 = vunpack.c.h.b16 %v832
  %v3799 = vunpack.c.l.b16 %v833
  %v3800 = vunpack.c.h.b16 %v833
  %v3801 = vunpack.c.l.b16 %v834
  %v3802 = vunpack.c.h.b16 %v834
  %v3803 = vunpack.c.l.b16 %v835
  %v3804 = vunpack.c.h.b16 %v835
  %v3805 = vunpack.c.l.b16 %v836
  %v3806 = vunpack.c.h.b16 %v836
  %v3807 = vunpack.c.l.b16 %v837
  %v3808 = vunpack.c.h.b16 %v837
  %v3809 = vunpack.c.l.b16 %v838
  %v3810 = vunpack.c.h.b16 %v838
  %v3811 = vunpack.c.l.b16 %v839
  %v3812 = vunpack.c.h.b16 %v839
  %v3813 = vunpack.c.l.b16 %v840
  %v3814 = vunpack.c.h.b16 %v840
  %v3815 = vunpack.c.l.b16 %v841
  %v3816 = vunpack.c.h.b16 %v841
  %v3817 = vunpack.c.l.b16 %v842
  %v3818 = vunpack.c.h.b16 %v842
  %v3819 = vunpack.c.l.b16 %v843
  %v3820 = vunpack.c.h.b16 %v843
  %v3821 = vunpack.c.l.b16 %v844
  %v3822 = vunpack.c.h.b16 %v844
  %v3823 = vunpack.c.l.b16 %v845
  %v3824 = vunpack.c.h.b16 %v845
  %v3825 = vunpack.c.l.b16 %v846
  %v3826 = vunpack.c.h.b16 %v846
  %v3827 = vunpack.c.l.b16 %v847
  %v3828 = vunpack.c.h.b16 %v847
  %v3829 = vunpack.c.l.b16 %v848
  %v3830 = vunpack.c.h.b16 %v848
  %v3831 = vunpack.c.l.b16 %v849
  %v3832 = vunpack.c.h.b16 %v849
  %v3833 = vunpack.c.l.b16 %v850
  %v3834 = vunpack.c.h.b16 %v850
  %v3835 = vunpack.c.l.b16 %v851
  %v3836 = vunpack.c.h.b16 %v851
  %v3837 = vunpack.c.l.b16 %v852
  %v3838 = vunpack.c.h.b16 %v852
  %v3839 = vunpack.c.l.b16 %v853
  %v3840 = vunpack.c.h.b16 %v853
  %v3841 = vunpack.c.l.b16 %v854
  %v3842 = vunpack.c.h.b16 %v854
  %v3843 = vunpack.c.l.b16 %v855
  %v3844 = vunpack.c.h.b16 %v855
  %v3845 = vunpack.c.l.b16 %v856
  %v3846 = vunpack.c.h.b16 %v856
  %v3847 = vunpack.c.l.b16 %v857
  %v3848 = vunpack.c.h.b16 %v857
  %v3849 = vunpack.c.l.b16 %v858
  %v3850 = vunpack.c.h.b16 %v858
  %v3851 = vunpack.c.l.b16 %v859
  %v3852 = vunpack.c.h.b16 %v859
  %v3853 = vunpack.c.l.b16 %v860
  %v3854 = vunpack.c.h.b16 %v860
  %v3855 = vunpack.c.l.b16 %v861
  %v3856 = vunpack.c.h.b16 %v861
  %v3857 = vunpack.c.l.b16 %v862
  %v3858 = vunpack.c.h.b16 %v862
  %v3859 = vunpack.c.l.b16 %v863
  %v3860 = vunpack.c.h.b16 %v863
  %v3861 = vunpack.c.l.b16 %v864
  %v3862 = vunpack.c.h.b16 %v864
  %v3863 = vunpack.c.l.b16 %v865
  %v3864 = vunpack.c.h.b16 %v865
  %v3865 = vunpack.c.l.b16 %v866
  %v3866 = vunpack.c.h.b16 %v866
  %v3867 = vunpack.c.l.b16 %v867
  %v3868 = vunpack.c.h.b16 %v867
  %v3869 = vunpack.c.l.b16 %v868
  %v3870 = vunpack.c.h.b16 %v868
  %v3871 = vunpack.c.l.b16 %v869
  %v3872 = vunpack.c.h.b16 %v869
  %v3873 = vunpack.c.l.b16 %v870
  %v3874 = vunpack.c.h.b16 %v870
  %v3875 = vunpack.c.l.b16 %v871
  %v3876 = vunpack.c.h.b16 %v871
  %v3877 = vunpack.c.l.b16 %v872
  %v3878 = vunpack.c.h.b16 %v872
  %v3879 = vunpack.c.l.b16 %v873
  %v3880 = vunpack.c.h.b16 %v873
  %v3881 = vunpack.c.l.b16 %v874
  %v3882 = vunpack.c.h.b16 %v874
  %v3883 = vunpack.c.l.b16 %v875
  %v3884 = vunpack.c.h.b16 %v875
  %v3885 = vunpack.c.l.b16 %v876
  %v3886 = vunpack.c.h.b16 %v876
  %v3887 = vunpack.c.l.b16 %v877
  %v3888 = vunpack.c.h.b16 %v877
  %v3889 = vunpack.c.l.b16 %v878
  %v3890 = vunpack.c.h.b16 %v878
  %v3891 = vunpack.c.l.b16 %v879
  %v3892 = vunpack.c.h.b16 %v879
  %v3893 = vunpack.c.l.b16 %v880
  %v3894 = vunpack.c.h.b16 %v880
  %v3895 = vunpack.c.l.b16 %v881
  %v3896 = vunpack.c.h.b16 %v881
  %v3897 = vunpack.c.l.b16 %v882
  %v3898 = vunpack.c.h.b16 %v882
  %v3899 = vunpack.c.l.b16 %v883
  %v3900 = vunpack.c.h.b16 %v883
  %v3901 = vunpack.c.l.b16 %v884
  %v3902 = vunpack.c.h.b16 %v884
  %v3903 = vunpack.c.l.b16 %v885
  %v3904 = vunpack.c.h.b16 %v885
  %v3905 = vunpack.c.l.b16 %v886
  %v3906 = vunpack.c.h.b16 %v886
  %v3907 = vunpack.c.l.b16 %v887
  %v3908 = vunpack.c.h.b16 %v887
  %v3909 = vunpack.c.l.b16 %v888
  %v3910 = vunpack.c.h.b16 %v888
  %v3911 = vunpack.c.l.b16 %v889
  %v3912 = vunpack.c.h.b16 %v889
  %v3913 = vunpack.c.l.b16 %v890
  %v3914 = vunpack.c.h.b16 %v890
  %v3915 = vunpack.c.l.b16 %v891
  %v3916 = vunpack.c.h.b16 %v891
  %v3917 = vunpack.c.l.b16 %v892
  %v3918 = vunpack.c.h.b16 %v892
  %v3919 = vunpack.c.l.b16 %v893
  %v3920 = vunpack.c.h.b16 %v893
  %v3921 = vunpack.c.l.b16 %v894
  %v3922 = vunpack.c.h.b16 %v894
  %v3923 = vunpack.c.l.b16 %v895
  %v3924 = vunpack.c.h.b16 %v895
  %v3925 = vunpack.c.l.b16 %v896
  %v3926 = vunpack.c.h.b16 %v896
  %v3927 = vunpack.c.l.b16 %v897
  %v3928 = vunpack.c.h.b16 %v897
  %v3929 = vunpack.c.l.b16 %v898
  %v3930 = vunpack.c.h.b16 %v898
  %v3931 = vunpack.c.l.b16 %v899
  %v3932 = vunpack.c.h.b16 %v899
  %v3933 = vunpack.c.l.b16 %v900
  %v3934 = vunpack.c.h.b16 %v900
  %v3935 = vunpack.c.l.b16 %v901
  %v3936 = vunpack.c.h.b16 %v901
  %v3937 = vunpack.c.l.b16 %v902
  %v3938 = vunpack.c.h.b16 %v902
  %v3939 = vunpack.c.l.b16 %v903
  %v3940 = vunpack.c.h.b16 %v903
  %v3941 = vunpack.c.l.b16 %v904
  %v3942 = vunpack.c.h.b16 %v904
  %v3943 = vunpack.c.l.b16 %v905
  %v3944 = vunpack.c.h.b16 %v905
  %v3945 = vunpack.c.l.b16 %v906
  %v3946 = vunpack.c.h.b16 %v906
  %v3947 = vunpack.c.l.b16 %v907
  %v3948 = vunpack.c.h.b16 %v907
  %v3949 = vunpack.c.l.b16 %v908
  %v3950 = vunpack.c.h.b16 %v908
  %v3951 = vunpack.c.l.b16 %v909
  %v3952 = vunpack.c.h.b16 %v909
  %v3953 = vunpack.c.l.b16 %v910
  %v3954 = vunpack.c.h.b16 %v910
  %v3955 = vunpack.c.l.b16 %v911
  %v3956 = vunpack.c.h.b16 %v911
  %v3957 = vunpack.c.l.b16 %v912
  %v3958 = vunpack.c.h.b16 %v912
  %v3959 = vunpack.c.l.b16 %v913
  %v3960 = vunpack.c.h.b16 %v913
  %v3961 = vunpack.c.l.b16 %v914
  %v3962 = vunpack.c.h.b16 %v914
  %v3963 = vunpack.c.l.b16 %v915
  %v3964 = vunpack.c.h.b16 %v915
  %v3965 = vunpack.c.l.b16 %v916
  %v3966 = vunpack.c.h.b16 %v916
  %v3967 = vunpack.c.l.b16 %v917
  %v3968 = vunpack.c.h.b16 %v917
  %v3969 = vunpack.c.l.b16 %v918
  %v3970 = vunpack.c.h.b16 %v918
  %v3971 = vunpack.c.l.b16 %v919
  %v3972 = vunpack.c.h.b16 %v919
  %v3973 = vunpack.c.l.b16 %v920
  %v3974 = vunpack.c.h.b16 %v920
  %v3975 = vunpack.c.l.b16 %v921
  %v3976 = vunpack.c.h.b16 %v921
  %v3977 = vunpack.c.l.b16 %v922
  %v3978 = vunpack.c.h.b16 %v922
  %v3979 = vunpack.c.l.b16 %v923
  %v3980 = vunpack.c.h.b16 %v923
  %v3981 = vunpack.c.l.b16 %v924
  %v3982 = vunpack.c.h.b16 %v924
  %v3983 = vunpack.c.l.b16 %v925
  %v3984 = vunpack.c.h.b16 %v925
  %v3985 = vunpack.c.l.b16 %v926
  %v3986 = vunpack.c.h.b16 %v926
  %v3987 = vunpack.c.l.b16 %v927
  %v3988 = vunpack.c.h.b16 %v927
  %v3989 = vunpack.c.l.b16 %v928
  %v3990 = vunpack.c.h.b16 %v928
  %v3991 = vunpack.c.l.b16 %v929
  %v3992 = vunpack.c.h.b16 %v929
  %v3993 = vunpack.c.l.b16 %v930
  %v3994 = vunpack.c.h.b16 %v930
  %v3995 = vunpack.c.l.b16 %v931
  %v3996 = vunpack.c.h.b16 %v931
  %v3997 = vunpack.c.l.b16 %v932
  %v3998 = vunpack.c.h.b16 %v932
  %v3999 = vunpack.c.l.b16 %v933
  %v4000 = vunpack.c.h.b16 %v933
  %v4001 = vunpack.c.l.b16 %v934
  %v4002 = vunpack.c.h.b16 %v934
  %v4003 = vunpack.c.l.b16 %v935
  %v4004 = vunpack.c.h.b16 %v935
  %v4005 = vunpack.c.l.b16 %v936
  %v4006 = vunpack.c.h.b16 %v936
  %v4007 = vunpack.c.l.b16 %v937
  %v4008 = vunpack.c.h.b16 %v937
  %v4009 = vunpack.c.l.b16 %v938
  %v4010 = vunpack.c.h.b16 %v938
  %v4011 = vunpack.c.l.b16 %v939
  %v4012 = vunpack.c.h.b16 %v939
  %v4013 = vunpack.c.l.b16 %v940
  %v4014 = vunpack.c.h.b16 %v940
  %v4015 = vunpack.c.l.b16 %v941
  %v4016 = vunpack.c.h.b16 %v941
  %v4017 = vunpack.c.l.b16 %v942
  %v4018 = vunpack.c.h.b16 %v942
  %v4019 = vunpack.c.l.b16 %v943
  %v4020 = vunpack.c.h.b16 %v943
  %v4021 = vunpack.c.l.b16 %v944
  %v4022 = vunpack.c.h.b16 %v944
  %v4023 = vunpack.c.l.b16 %v945
  %v4024 = vunpack.c.h.b16 %v945
  %v4025 = vunpack.c.l.b16 %v946
  %v4026 = vunpack.c.h.b16 %v946
  %v4027 = vunpack.c.l.b16 %v947
  %v4028 = vunpack.c.h.b16 %v947
  %v4029 = vunpack.c.l.b16 %v948
  %v4030 = vunpack.c.h.b16 %v948
  %v4031 = vunpack.c.l.b16 %v949
  %v4032 = vunpack.c.h.b16 %v949
  %v4033 = vunpack.c.l.b16 %v950
  %v4034 = vunpack.c.h.b16 %v950
  %v4035 = vunpack.c.l.b16 %v951
  %v4036 = vunpack.c.h.b16 %v951
  %v4037 = vunpack.c.l.b16 %v952
  %v4038 = vunpack.c.h.b16 %v952
  %v4039 = vunpack.c.l.b16 %v953
  %v4040 = vunpack.c.h.b16 %v953
  %v4041 = vunpack.c.l.b16 %v954
  %v4042 = vunpack.c.h.b16 %v954
  %v4043 = vunpack.c.l.b16 %v955
  %v4044 = vunpack.c.h.b16 %v955
  %v4045 = vunpack.c.l.b16 %v956
  %v4046 = vunpack.c.h.b16 %v956
  %v4047 = vunpack.c.l.b16 %v957
  %v4048 = vunpack.c.h.b16 %v957
  %v4049 = vunpack.c.l.b16 %v958
  %v4050 = vunpack.c.h.b16 %v958
  %v4051 = vunpack.c.l.b16 %v959
  %v4052 = vunpack.c.h.b16 %v959
  %v4053 = vunpack.c.l.b16 %v960
  %v4054 = vunpack.c.h.b16 %v960
  %v4055 = vunpack.c.l.b16 %v961
  %v4056 = vunpack.c.h.b16 %v961
  %v4057 = vunpack.c.l.b16 %v962
  %v4058 = vunpack.c.h.b16 %v962
  %v4059 = vunpack.c.l.b16 %v963
  %v4060 = vunpack.c.h.b16 %v963
  %v4061 = vunpack.c.l.b16 %v964
  %v4062 = vunpack.c.h.b16 %v964
  %v4063 = vunpack.c.l.b16 %v965
  %v4064 = vunpack.c.h.b16 %v965
  %v4065 = vunpack.c.l.b16 %v966
  %v4066 = vunpack.c.h.b16 %v966
  %v4067 = vunpack.c.l.b16 %v967
  %v4068 = vunpack.c.h.b16 %v967
  %v4069 = vunpack.c.l.b16 %v968
  %v4070 = vunpack.c.h.b16 %v968
  %v4071 = vunpack.c.l.b16 %v969
  %v4072 = vunpack.c.h.b16 %v969
  %v4073 = vunpack.c.l.b16 %v970
  %v4074 = vunpack.c.h.b16 %v970
  %v4075 = vunpack.c.l.b16 %v971
  %v4076 = vunpack.c.h.b16 %v971
  %v4077 = vunpack.c.l.b16 %v972
  %v4078 = vunpack.c.h.b16 %v972
  %v4079 = vunpack.c.l.b16 %v973
  %v4080 = vunpack.c.h.b16 %v973
  %v4081 = vunpack.c.l.b16 %v974
  %v4082 = vunpack.c.h.b16 %v974
  %v4083 = vunpack.c.l.b16 %v975
  %v4084 = vunpack.c.h.b16 %v975
  %v4085 = vunpack.c.l.b16 %v976
  %v4086 = vunpack.c.h.b16 %v976
  %v4087 = vunpack.c.l.b16 %v977
  %v4088 = vunpack.c.h.b16 %v977
  %v4089 = vunpack.c.l.b16 %v978
  %v4090 = vunpack.c.h.b16 %v978
  %v4091 = vunpack.c.l.b16 %v979
  %v4092 = vunpack.c.h.b16 %v979
  %v4093 = vunpack.c.l.b16 %v980
  %v4094 = vunpack.c.h.b16 %v980
  %v4095 = vunpack.c.l.b16 %v981
  %v4096 = vunpack.c.h.b16 %v981
  %v4097 = vunpack.c.l.b16 %v982
  %v4098 = vunpack.c.h.b16 %v982
  %v4099 = vunpack.c.l.b16 %v983
  %v4100 = vunpack.c.h.b16 %v983
  %v4101 = vunpack.c.l.b16 %v984
  %v4102 = vunpack.c.h.b16 %v984
  %v4103 = vunpack.c.l.b16 %v985
  %v4104 = vunpack.c.h.b16 %v985
  %v4105 = vunpack.c.l.b16 %v986
  %v4106 = vunpack.c.h.b16 %v986
  %v4107 = vunpack.c.l.b16 %v987
  %v4108 = vunpack.c.h.b16 %v987
  %v4109 = vunpack.c.l.b16 %v988
  %v4110 = vunpack.c.h.b16 %v988
  %v4111 = vunpack.c.l.b16 %v989
  %v4112 = vunpack.c.h.b16 %v989
  %v4113 = vunpack.c.l.b16 %v990
  %v4114 = vunpack.c.h.b16 %v990
  %v4115 = vunpack.c.l.b16 %v991
  %v4116 = vunpack.c.h.b16 %v991
  %v4117 = vunpack.c.l.b16 %v992
  %v4118 = vunpack.c.h.b16 %v992
  %v4119 = vunpack.c.l.b16 %v993
  %v4120 = vunpack.c.h.b16 %v993
  %v4121 = vunpack.c.l.b16 %v994
  %v4122 = vunpack.c.h.b16 %v994
  %v4123 = vunpack.c.l.b16 %v995
  %v4124 = vunpack.c.h.b16 %v995
  %v4125 = vunpack.c.l.b16 %v996
  %v4126 = vunpack.c.h.b16 %v996
  %v4127 = vunpack.c.l.b16 %v997
  %v4128 = vunpack.c.h.b16 %v997
  %v4129 = vunpack.c.l.b16 %v998
  %v4130 = vunpack.c.h.b16 %v998
  %v4131 = vunpack.c.l.b16 %v999
  %v4132 = vunpack.c.h.b16 %v999
  %v4133 = vunpack.c.l.b16 %v1000
  %v4134 = vunpack.c.h.b16 %v1000
  %v4135 = vunpack.c.l.b16 %v1001
  %v4136 = vunpack.c.h.b16 %v1001
  %v4137 = vunpack.c.l.b16 %v1002
  %v4138 = vunpack.c.h.b16 %v1002
  %v4139 = vunpack.c.l.b16 %v1003
  %v4140 = vunpack.c.h.b16 %v1003
  %v4141 = vunpack.c.l.b16 %v1004
  %v4142 = vunpack.c.h.b16 %v1004
  %v4143 = vunpack.c.l.b16 %v1005
  %v4144 = vunpack.c.h.b16 %v1005
  %v4145 = vunpack.c.l.b16 %v1006
  %v4146 = vunpack.c.h.b16 %v1006
  %v4147 = vunpack.c.l.b16 %v1007
  %v4148 = vunpack.c.h.b16 %v1007
  %v4149 = vunpack.c.l.b16 %v1008
  %v4150 = vunpack.c.h.b16 %v1008
  %v4151 = vunpack.c.l.b16 %v1009
  %v4152 = vunpack.c.h.b16 %v1009
  %v4153 = vunpack.c.l.b16 %v1010
  %v4154 = vunpack.c.h.b16 %v1010
  %v4155 = vunpack.c.l.b16 %v1011
  %v4156 = vunpack.c.h.b16 %v1011
  %v4157 = vunpack.c.l.b16 %v1012
  %v4158 = vunpack.c.h.b16 %v1012
  %v4159 = vunpack.c.l.b16 %v1013
  %v4160 = vunpack.c.h.b16 %v1013
  %v4161 = vunpack.c.l.b16 %v1014
  %v4162 = vunpack.c.h.b16 %v1014
  %v4163 = vunpack.c.l.b16 %v1015
  %v4164 = vunpack.c.h.b16 %v1015
  %v4165 = vunpack.c.l.b16 %v1016
  %v4166 = vunpack.c.h.b16 %v1016
  %v4167 = vunpack.c.l.b16 %v1017
  %v4168 = vunpack.c.h.b16 %v1017
  %v4169 = vunpack.c.l.b16 %v1018
  %v4170 = vunpack.c.h.b16 %v1018
  %v4171 = vunpack.c.l.b16 %v1019
  %v4172 = vunpack.c.h.b16 %v1019
  %v4173 = vunpack.c.l.b16 %v1020
  %v4174 = vunpack.c.h.b16 %v1020
  %v4175 = vunpack.c.l.b16 %v1021
  %v4176 = vunpack.c.h.b16 %v1021
  %v4177 = vunpack.c.l.b16 %v1022
  %v4178 = vunpack.c.h.b16 %v1022
  %v4179 = vunpack.c.l.b16 %v1023
  %v4180 = vunpack.c.h.b16 %v1023
  %v4181 = vunpack.c.l.b16 %v1024
  %v4182 = vunpack.c.h.b16 %v1024
  %v4183 = vunpack.c.l.b16 %v1025
  %v4184 = vunpack.c.h.b16 %v1025
  %v4185 = vunpack.c.l.b16 %v1026
  %v4186 = vunpack.c.h.b16 %v1026
  %v4187 = vunpack.c.l.b16 %v1027
  %v4188 = vunpack.c.h.b16 %v1027
  %v4189 = vunpack.c.l.b16 %v1028
  %v4190 = vunpack.c.h.b16 %v1028
  %v4191 = vunpack.c.l.b16 %v1029
  %v4192 = vunpack.c.h.b16 %v1029
  %v4193 = vunpack.c.l.b16 %v1030
  %v4194 = vunpack.c.h.b16 %v1030
  %v4195 = vunpack.c.l.b16 %v1031
  %v4196 = vunpack.c.h.b16 %v1031
  %v4197 = vunpack.c.l.b16 %v1032
  %v4198 = vunpack.c.h.b16 %v1032
  %v4199 = vunpack.c.l.b16 %v1033
  %v4200 = vunpack.c.h.b16 %v1033
  %v4201 = vunpack.c.l.b16 %v1034
  %v4202 = vunpack.c.h.b16 %v1034
  %v4203 = vunpack.c.l.b16 %v1035
  %v4204 = vunpack.c.h.b16 %v1035
  %v4205 = vunpack.c.l.b16 %v1036
  %v4206 = vunpack.c.h.b16 %v1036
  %v4207 = vunpack.c.l.b16 %v1037
  %v4208 = vunpack.c.h.b16 %v1037
  %v4209 = vunpack.c.l.b16 %v1038
  %v4210 = vunpack.c.h.b16 %v1038
  %v4211 = vunpack.c.l.b16 %v1039
  %v4212 = vunpack.c.h.b16 %v1039
  %v4213 = vunpack.c.l.b16 %v1040
  %v4214 = vunpack.c.h.b16 %v1040
  %v4215 = vunpack.c.l.b16 %v1041
  %v4216 = vunpack.c.h.b16 %v1041
  %v4217 = vunpack.c.l.b16 %v1042
  %v4218 = vunpack.c.h.b16 %v1042
  %v4219 = vunpack.c.l.b16 %v1043
  %v4220 = vunpack.c.h.b16 %v1043
  %v4221 = vunpack.c.l.b16 %v1044
  %v4222 = vunpack.c.h.b16 %v1044
  %v4223 = vunpack.c.l.b16 %v1045
  %v4224 = vunpack.c.h.b16 %v1045
  %v4225 = vunpack.c.l.b16 %v1046
  %v4226 = vunpack.c.h.b16 %v1046
  %v4227 = vunpack.c.l.b16 %v1047
  %v4228 = vunpack.c.h.b16 %v1047
  %v4229 = vunpack.c.l.b16 %v1048
  %v4230 = vunpack.c.h.b16 %v1048
  %v4231 = vunpack.c.l.b16 %v1049
  %v4232 = vunpack.c.h.b16 %v1049
  %v4233 = vunpack.c.l.b16 %v1050
  %v4234 = vunpack.c.h.b16 %v1050
  %v4235 = vunpack.c.l.b16 %v1051
  %v4236 = vunpack.c.h.b16 %v1051
  %v4237 = vunpack.c.l.b16 %v1052
  %v4238 = vunpack.c.h.b16 %v1052
  %v4239 = vunpack.c.l.b16 %v1053
  %v4240 = vunpack.c.h.b16 %v1053
  %v4241 = vunpack.c.l.b16 %v1054
  %v4242 = vunpack.c.h.b16 %v1054
  %v4243 = vunpack.c.l.b16 %v1055
  %v4244 = vunpack.c.h.b16 %v1055
  %v4245 = vunpack.c.l.b16 %v1056
  %v4246 = vunpack.c.h.b16 %v1056
  %v4247 = vunpack.c.l.b16 %v1057
  %v4248 = vunpack.c.h.b16 %v1057
  %v4249 = vunpack.c.l.b16 %v1058
  %v4250 = vunpack.c.h.b16 %v1058
  %v4251 = vunpack.c.l.b16 %v1059
  %v4252 = vunpack.c.h.b16 %v1059
  %v4253 = vunpack.c.l.b16 %v1060
  %v4254 = vunpack.c.h.b16 %v1060
  %v4255 = vunpack.c.l.b16 %v1061
  %v4256 = vunpack.c.h.b16 %v1061
  %v4257 = vunpack.c.l.b16 %v1062
  %v4258 = vunpack.c.h.b16 %v1062
  %v4259 = vunpack.c.l.b16 %v1063
  %v4260 = vunpack.c.h.b16 %v1063
  %v4261 = vunpack.c.l.b16 %v1064
  %v4262 = vunpack.c.h.b16 %v1064
  %v4263 = vunpack.c.l.b16 %v1065
  %v4264 = vunpack.c.h.b16 %v1065
  %v4265 = vunpack.c.l.b16 %v1066
  %v4266 = vunpack.c.h.b16 %v1066
  %v4267 = vunpack.c.l.b16 %v1067
  %v4268 = vunpack.c.h.b16 %v1067
  %v4269 = vunpack.c.l.b16 %v1068
  %v4270 = vunpack.c.h.b16 %v1068
  %v4271 = vunpack.c.l.b16 %v1069
  %v4272 = vunpack.c.h.b16 %v1069
  %v4273 = vunpack.c.l.b16 %v1070
  %v4274 = vunpack.c.h.b16 %v1070
  %v4275 = vunpack.c.l.b16 %v1071
  %v4276 = vunpack.c.h.b16 %v1071
  %v4277 = vunpack.c.l.b16 %v1072
  %v4278 = vunpack.c.h.b16 %v1072
  %v4279 = vpack.c.b16 %v2235, %v2231
  %v4280 = vpack.c.b16 %v2236, %v2232
  %v4281 = vpack.c.b16 %v2237, %v2233
  %v4282 = vpack.c.b16 %v2238, %v2234
  %v4283 = vpack.c.b16 %v2243, %v2239
  %v4284 = vpack.c.b16 %v2244, %v2240
  %v4285 = vpack.c.b16 %v2245, %v2241
  %v4286 = vpack.c.b16 %v2246, %v2242
  %v4287 = vpack.c.b16 %v2251, %v2247
  %v4288 = vpack.c.b16 %v2252, %v2248
  %v4289 = vpack.c.b16 %v2253, %v2249
  %v4290 = vpack.c.b16 %v2254, %v2250
  %v4291 = vpack.c.b16 %v2259, %v2255
  %v4292 = vpack.c.b16 %v2260, %v2256
  %v4293 = vpack.c.b16 %v2261, %v2257
  %v4294 = vpack.c.b16 %v2262, %v2258
  %v4295 = vpack.c.b16 %v2267, %v2263
  %v4296 = vpack.c.b16 %v2268, %v2264
  %v4297 = vpack.c.b16 %v2269, %v2265
  %v4298 = vpack.c.b16 %v2270, %v2266
  %v4299 = vpack.c.b16 %v2275, %v2271
  %v4300 = vpack.c.b16 %v2276, %v2272
  %v4301 = vpack.c.b16 %v2277, %v2273
  %v4302 = vpack.c.b16 %v2278, %v2274
  %v4303 = vpack.c.b16 %v2283, %v2279
  %v4304 = vpack.c.b16 %v2284, %v2280
  %v4305 = vpack.c.b16 %v2285, %v2281
  %v4306 = vpack.c.b16 %v2286, %v2282
  %v4307 = vpack.c.b16 %v2291, %v2287
  %v4308 = vpack.c.b16 %v2292, %v2288
  %v4309 = vpack.c.b16 %v2293, %v2289
  %v4310 = vpack.c.b16 %v2294, %v2290
  %v4311 = vpack.c.b16 %v2299, %v2295
  %v4312 = vpack.c.b16 %v2300, %v2296
  %v4313 = vpack.c.b16 %v2301, %v2297
  %v4314 = vpack.c.b16 %v2302, %v2298
  %v4315 = vpack.c.b16 %v2307, %v2303
  %v4316 = vpack.c.b16 %v2308, %v2304
  %v4317 = vpack.c.b16 %v2309, %v2305
  %v4318 = vpack.c.b16 %v2310, %v2306
  %v4319 = vpack.c.b16 %v2315, %v2311
  %v4320 = vpack.c.b16 %v2316, %v2312
  %v4321 = vpack.c.b16 %v2317, %v2313
  %v4322 = vpack.c.b16 %v2318, %v2314
  %v4323 = vpack.c.b16 %v2323, %v2319
  %v4324 = vpack.c.b16 %v2324, %v2320
  %v4325 = vpack.c.b16 %v2325, %v2321
  %v4326 = vpack.c.b16 %v2326, %v2322
  %v4327 = vpack.c.b16 %v2331, %v2327
  %v4328 = vpack.c.b16 %v2332, %v2328
  %v4329 = vpack.c.b16 %v2333, %v2329
  %v4330 = vpack.c.b16 %v2334, %v2330
  %v4331 = vpack.c.b16 %v2339, %v2335
  %v4332 = vpack.c.b16 %v2340, %v2336
  %v4333 = vpack.c.b16 %v2341, %v2337
  %v4334 = vpack.c.b16 %v2342, %v2338
  %v4335 = vpack.c.b16 %v2347, %v2343
  %v4336 = vpack.c.b16 %v2348, %v2344
  %v4337 = vpack.c.b16 %v2349, %v2345
  %v4338 = vpack.c.b16 %v2350, %v2346
  %v4339 = vpack.c.b16 %v2355, %v2351
  %v4340 = vpack.c.b16 %v2356, %v2352
  %v4341 = vpack.c.b16 %v2357, %v2353
  %v4342 = vpack.c.b16 %v2358, %v2354
  %v4343 = vpack.c.b16 %v2363, %v2359
  %v4344 = vpack.c.b16 %v2364, %v2360
  %v4345 = vpack.c.b16 %v2365, %v2361
  %v4346 = vpack.c.b16 %v2366, %v2362
  %v4347 = vpack.c.b16 %v2371, %v2367
  %v4348 = vpack.c.b16 %v2372, %v2368
  %v4349 = vpack.c.b16 %v2373, %v2369
  %v4350 = vpack.c.b16 %v2374, %v2370
  %v4351 = vpack.c.b16 %v2379, %v2375
  %v4352 = vpack.c.b16 %v2380, %v2376
  %v4353 = vpack.c.b16 %v2381, %v2377
  %v4354 = vpack.c.b16 %v2382, %v2378
  %v4355 = vpack.c.b16 %v2387, %v2383
  %v4356 = vpack.c.b16 %v2388, %v2384
  %v4357 = vpack.c.b16 %v2389, %v2385
  %v4358 = vpack.c.b16 %v2390, %v2386
  %v4359 = vpack.c.b16 %v2395, %v2391
  %v4360 = vpack.c.b16 %v2396, %v2392
  %v4361 = vpack.c.b16 %v2397, %v2393
  %v4362 = vpack.c.b16 %v2398, %v2394
  %v4363 = vpack.c.b16 %v2403, %v2399
  %v4364 = vpack.c.b16 %v2404, %v2400
  %v4365 = vpack.c.b16 %v2405, %v2401
  %v4366 = vpack.c.b16 %v2406, %v2402
  %v4367 = vpack.c.b16 %v2411, %v2407
  %v4368 = vpack.c.b16 %v2412, %v2408
  %v4369 = vpack.c.b16 %v2413, %v2409
  %v4370 = vpack.c.b16 %v2414, %v2410
  %v4371 = vpack.c.b16 %v2419, %v2415
  %v4372 = vpack.c.b16 %v2420, %v2416
  %v4373 = vpack.c.b16 %v2421, %v2417
  %v4374 = vpack.c.b16 %v2422, %v2418
  %v4375 = vpack.c.b16 %v2427, %v2423
  %v4376 = vpack.c.b16 %v2428, %v2424
  %v4377 = vpack.c.b16 %v2429, %v2425
  %v4378 = vpack.c.b16 %v2430, %v2426
  %v4379 = vpack.c.b16 %v2435, %v2431
  %v4380 = vpack.c.b16 %v2436, %v2432
  %v4381 = vpack.c.b16 %v2437, %v2433
  %v4382 = vpack.c.b16 %v2438, %v2434
  %v4383 = vpack.c.b16 %v2443, %v2439
  %v4384 = vpack.c.b16 %v2444, %v2440
  %v4385 = vpack.c.b16 %v2445, %v2441
  %v4386 = vpack.c.b16 %v2446, %v2442
  %v4387 = vpack.c.b16 %v2451, %v2447
  %v4388 = vpack.c.b16 %v2452, %v2448
  %v4389 = vpack.c.b16 %v2453, %v2449
  %v4390 = vpack.c.b16 %v2454, %v2450
  %v4391 = vpack.c.b16 %v2459, %v2455
  %v4392 = vpack.c.b16 %v2460, %v2456
  %v4393 = vpack.c.b16 %v2461, %v2457
  %v4394 = vpack.c.b16 %v2462, %v2458
  %v4395 = vpack.c.b16 %v2467, %v2463
  %v4396 = vpack.c.b16 %v2468, %v2464
  %v4397 = vpack.c.b16 %v2469, %v2465
  %v4398 = vpack.c.b16 %v2470, %v2466
  %v4399 = vpack.c.b16 %v2475, %v2471
  %v4400 = vpack.c.b16 %v2476, %v2472
  %v4401 = vpack.c.b16 %v2477, %v2473
  %v4402 = vpack.c.b16 %v2478, %v2474
  %v4403 = vpack.c.b16 %v2483, %v2479
  %v4404 = vpack.c.b16 %v2484, %v2480
  %v4405 = vpack.c.b16 %v2485, %v2481
  %v4406 = vpack.c.b16 %v2486, %v2482
  %v4407 = vpack.c.b16 %v2491, %v2487
  %v4408 = vpack.c.b16 %v2492, %v2488
  %v4409 = vpack.c.b16 %v2493, %v2489
  %v4410 = vpack.c.b16 %v2494, %v2490
  %v4411 = vpack.c.b16 %v2499, %v2495
  %v4412 = vpack.c.b16 %v2500, %v2496
  %v4413 = vpack.c.b16 %v2501, %v2497
  %v4414 = vpack.c.b16 %v2502, %v2498
  %v4415 = vpack.c.b16 %v2507, %v2503
  %v4416 = vpack.c.b16 %v2508, %v2504
  %v4417 = vpack.c.b16 %v2509, %v2505
  %v4418 = vpack.c.b16 %v2510, %v2506
  %v4419 = vpack.c.b16 %v2515, %v2511
  %v4420 = vpack.c.b16 %v2516, %v2512
  %v4421 = vpack.c.b16 %v2517, %v2513
  %v4422 = vpack.c.b16 %v2518, %v2514
  %v4423 = vpack.c.b16 %v2523, %v2519
  %v4424 = vpack.c.b16 %v2524, %v2520
  %v4425 = vpack.c.b16 %v2525, %v2521
  %v4426 = vpack.c.b16 %v2526, %v2522
  %v4427 = vpack.c.b16 %v2531, %v2527
  %v4428 = vpack.c.b16 %v2532, %v2528
  %v4429 = vpack.c.b16 %v2533, %v2529
  %v4430 = vpack.c.b16 %v2534, %v2530
  %v4431 = vpack.c.b16 %v2539, %v2535
  %v4432 = vpack.c.b16 %v2540, %v2536
  %v4433 = vpack.c.b16 %v2541, %v2537
  %v4434 = vpack.c.b16 %v2542, %v2538
  %v4435 = vpack.c.b16 %v2547, %v2543
  %v4436 = vpack.c.b16 %v2548, %v2544
  %v4437 = vpack.c.b16 %v2549, %v2545
  %v4438 = vpack.c.b16 %v2550, %v2546
  %v4439 = vpack.c.b16 %v2555, %v2551
  %v4440 = vpack.c.b16 %v2556, %v2552
  %v4441 = vpack.c.b16 %v2557, %v2553
  %v4442 = vpack.c.b16 %v2558, %v2554
  %v4443 = vpack.c.b16 %v2563, %v2559
  %v4444 = vpack.c.b16 %v2564, %v2560
  %v4445 = vpack.c.b16 %v2565, %v2561
  %v4446 = vpack.c.b16 %v2566, %v2562
  %v4447 = vpack.c.b16 %v2571, %v2567
  %v4448 = vpack.c.b16 %v2572, %v2568
  %v4449 = vpack.c.b16 %v2573, %v2569
  %v4450 = vpack.c.b16 %v2574, %v2570
  %v4451 = vpack.c.b16 %v2579, %v2575
  %v4452 = vpack.c.b16 %v2580, %v2576
  %v4453 = vpack.c.b16 %v2581, %v2577
  %v4454 = vpack.c.b16 %v2582, %v2578
  %v4455 = vpack.c.b16 %v2587, %v2583
  %v4456 = vpack.c.b16 %v2588, %v2584
  %v4457 = vpack.c.b16 %v2589, %v2585
  %v4458 = vpack.c.b16 %v2590, %v2586
  %v4459 = vpack.c.b16 %v2595, %v2591
  %v4460 = vpack.c.b16 %v2596, %v2592
  %v4461 = vpack.c.b16 %v2597, %v2593
  %v4462 = vpack.c.b16 %v2598, %v2594
  %v4463 = vpack.c.b16 %v2603, %v2599
  %v4464 = vpack.c.b16 %v2604, %v2600
  %v4465 = vpack.c.b16 %v2605, %v2601
  %v4466 = vpack.c.b16 %v2606, %v2602
  %v4467 = vpack.c.b16 %v2611, %v2607
  %v4468 = vpack.c.b16 %v2612, %v2608
  %v4469 = vpack.c.b16 %v2613, %v2609
  %v4470 = vpack.c.b16 %v2614, %v2610
  %v4471 = vpack.c.b16 %v2619, %v2615
  %v4472 = vpack.c.b16 %v2620, %v2616
  %v4473 = vpack.c.b16 %v2621, %v2617
  %v4474 = vpack.c.b16 %v2622, %v2618
  %v4475 = vpack.c.b16 %v2627, %v2623
  %v4476 = vpack.c.b16 %v2628, %v2624
  %v4477 = vpack.c.b16 %v2629, %v2625
  %v4478 = vpack.c.b16 %v2630, %v2626
  %v4479 = vpack.c.b16 %v2635, %v2631
  %v4480 = vpack.c.b16 %v2636, %v2632
  %v4481 = vpack.c.b16 %v2637, %v2633
  %v4482 = vpack.c.b16 %v2638, %v2634
  %v4483 = vpack.c.b16 %v2643, %v2639
  %v4484 = vpack.c.b16 %v2644, %v2640
  %v4485 = vpack.c.b16 %v2645, %v2641
  %v4486 = vpack.c.b16 %v2646, %v2642
  %v4487 = vpack.c.b16 %v2651, %v2647
  %v4488 = vpack.c.b16 %v2652, %v2648
  %v4489 = vpack.c.b16 %v2653, %v2649
  %v4490 = vpack.c.b16 %v2654, %v2650
  %v4491 = vpack.c.b16 %v2659, %v2655
  %v4492 = vpack.c.b16 %v2660, %v2656
  %v4493 = vpack.c.b16 %v2661, %v2657
  %v4494 = vpack.c.b16 %v2662, %v2658
  %v4495 = vpack.c.b16 %v2667, %v2663
  %v4496 = vpack.c.b16 %v2668, %v2664
  %v4497 = vpack.c.b16 %v2669, %v2665
  %v4498 = vpack.c.b16 %v2670, %v2666
  %v4499 = vpack.c.b16 %v2675, %v2671
  %v4500 = vpack.c.b16 %v2676, %v2672
  %v4501 = vpack.c.b16 %v2677, %v2673
  %v4502 = vpack.c.b16 %v2678, %v2674
  %v4503 = vpack.c.b16 %v2683, %v2679
  %v4504 = vpack.c.b16 %v2684, %v2680
  %v4505 = vpack.c.b16 %v2685, %v2681
  %v4506 = vpack.c.b16 %v2686, %v2682
  %v4507 = vpack.c.b16 %v2691, %v2687
  %v4508 = vpack.c.b16 %v2692, %v2688
  %v4509 = vpack.c.b16 %v2693, %v2689
  %v4510 = vpack.c.b16 %v2694, %v2690
  %v4511 = vpack.c.b16 %v2699, %v2695
  %v4512 = vpack.c.b16 %v2700, %v2696
  %v4513 = vpack.c.b16 %v2701, %v2697
  %v4514 = vpack.c.b16 %v2702, %v2698
  %v4515 = vpack.c.b16 %v2707, %v2703
  %v4516 = vpack.c.b16 %v2708, %v2704
  %v4517 = vpack.c.b16 %v2709, %v2705
  %v4518 = vpack.c.b16 %v2710, %v2706
  %v4519 = vpack.c.b16 %v2715, %v2711
  %v4520 = vpack.c.b16 %v2716, %v2712
  %v4521 = vpack.c.b16 %v2717, %v2713
  %v4522 = vpack.c.b16 %v2718, %v2714
  %v4523 = vpack.c.b16 %v2723, %v2719
  %v4524 = vpack.c.b16 %v2724, %v2720
  %v4525 = vpack.c.b16 %v2725, %v2721
  %v4526 = vpack.c.b16 %v2726, %v2722
  %v4527 = vpack.c.b16 %v2731, %v2727
  %v4528 = vpack.c.b16 %v2732, %v2728
  %v4529 = vpack.c.b16 %v2733, %v2729
  %v4530 = vpack.c.b16 %v2734, %v2730
  %v4531 = vpack.c.b16 %v2739, %v2735
  %v4532 = vpack.c.b16 %v2740, %v2736
  %v4533 = vpack.c.b16 %v2741, %v2737
  %v4534 = vpack.c.b16 %v2742, %v2738
  %v4535 = vpack.c.b16 %v2747, %v2743
  %v4536 = vpack.c.b16 %v2748, %v2744
  %v4537 = vpack.c.b16 %v2749, %v2745
  %v4538 = vpack.c.b16 %v2750, %v2746
  %v4539 = vpack.c.b16 %v2755, %v2751
  %v4540 = vpack.c.b16 %v2756, %v2752
  %v4541 = vpack.c.b16 %v2757, %v2753
  %v4542 = vpack.c.b16 %v2758, %v2754
  %v4543 = vpack.c.b16 %v2763, %v2759
  %v4544 = vpack.c.b16 %v2764, %v2760
  %v4545 = vpack.c.b16 %v2765, %v2761
  %v4546 = vpack.c.b16 %v2766, %v2762
  %v4547 = vpack.c.b16 %v2771, %v2767
  %v4548 = vpack.c.b16 %v2772, %v2768
  %v4549 = vpack.c.b16 %v2773, %v2769
  %v4550 = vpack.c.b16 %v2774, %v2770
  %v4551 = vpack.c.b16 %v2779, %v2775
  %v4552 = vpack.c.b16 %v2780, %v2776
  %v4553 = vpack.c.b16 %v2781, %v2777
  %v4554 = vpack.c.b16 %v2782, %v2778
  %v4555 = vpack.c.b16 %v2787, %v2783
  %v4556 = vpack.c.b16 %v2788, %v2784
  %v4557 = vpack.c.b16 %v2789, %v2785
  %v4558 = vpack.c.b16 %v2790, %v2786
  %v4559 = vpack.c.b16 %v2795, %v2791
  %v4560 = vpack.c.b16 %v2796, %v2792
  %v4561 = vpack.c.b16 %v2797, %v2793
  %v4562 = vpack.c.b16 %v2798, %v2794
  %v4563 = vpack.c.b16 %v2803, %v2799
  %v4564 = vpack.c.b16 %v2804, %v2800
  %v4565 = vpack.c.b16 %v2805, %v2801
  %v4566 = vpack.c.b16 %v2806, %v2802
  %v4567 = vpack.c.b16 %v2811, %v2807
  %v4568 = vpack.c.b16 %v2812, %v2808
  %v4569 = vpack.c.b16 %v2813, %v2809
  %v4570 = vpack.c.b16 %v2814, %v2810
  %v4571 = vpack.c.b16 %v2819, %v2815
  %v4572 = vpack.c.b16 %v2820, %v2816
  %v4573 = vpack.c.b16 %v2821, %v2817
  %v4574 = vpack.c.b16 %v2822, %v2818
  %v4575 = vpack.c.b16 %v2827, %v2823
  %v4576 = vpack.c.b16 %v2828, %v2824
  %v4577 = vpack.c.b16 %v2829, %v2825
  %v4578 = vpack.c.b16 %v2830, %v2826
  %v4579 = vpack.c.b16 %v2835, %v2831
  %v4580 = vpack.c.b16 %v2836, %v2832
  %v4581 = vpack.c.b16 %v2837, %v2833
  %v4582 = vpack.c.b16 %v2838, %v2834
  %v4583 = vpack.c.b16 %v2843, %v2839
  %v4584 = vpack.c.b16 %v2844, %v2840
  %v4585 = vpack.c.b16 %v2845, %v2841
  %v4586 = vpack.c.b16 %v2846, %v2842
  %v4587 = vpack.c.b16 %v2851, %v2847
  %v4588 = vpack.c.b16 %v2852, %v2848
  %v4589 = vpack.c.b16 %v2853, %v2849
  %v4590 = vpack.c.b16 %v2854, %v2850
  %v4591 = vpack.c.b16 %v2859, %v2855
  %v4592 = vpack.c.b16 %v2860, %v2856
  %v4593 = vpack.c.b16 %v2861, %v2857
  %v4594 = vpack.c.b16 %v2862, %v2858
  %v4595 = vpack.c.b16 %v2867, %v2863
  %v4596 = vpack.c.b16 %v2868, %v2864
  %v4597 = vpack.c.b16 %v2869, %v2865
  %v4598 = vpack.c.b16 %v2870, %v2866
  %v4599 = vpack.c.b16 %v2875, %v2871
  %v4600 = vpack.c.b16 %v2876, %v2872
  %v4601 = vpack.c.b16 %v2877, %v2873
  %v4602 = vpack.c.b16 %v2878, %v2874
  %v4603 = vpack.c.b16 %v2883, %v2879
  %v4604 = vpack.c.b16 %v2884, %v2880
  %v4605 = vpack.c.b16 %v2885, %v2881
  %v4606 = vpack.c.b16 %v2886, %v2882
  %v4607 = vpack.c.b16 %v2891, %v2887
  %v4608 = vpack.c.b16 %v2892, %v2888
  %v4609 = vpack.c.b16 %v2893, %v2889
  %v4610 = vpack.c.b16 %v2894, %v2890
  %v4611 = vpack.c.b16 %v2899, %v2895
  %v4612 = vpack.c.b16 %v2900, %v2896
  %v4613 = vpack.c.b16 %v2901, %v2897
  %v4614 = vpack.c.b16 %v2902, %v2898
  %v4615 = vpack.c.b16 %v2907, %v2903
  %v4616 = vpack.c.b16 %v2908, %v2904
  %v4617 = vpack.c.b16 %v2909, %v2905
  %v4618 = vpack.c.b16 %v2910, %v2906
  %v4619 = vpack.c.b16 %v2915, %v2911
  %v4620 = vpack.c.b16 %v2916, %v2912
  %v4621 = vpack.c.b16 %v2917, %v2913
  %v4622 = vpack.c.b16 %v2918, %v2914
  %v4623 = vpack.c.b16 %v2923, %v2919
  %v4624 = vpack.c.b16 %v2924, %v2920
  %v4625 = vpack.c.b16 %v2925, %v2921
  %v4626 = vpack.c.b16 %v2926, %v2922
  %v4627 = vpack.c.b16 %v2931, %v2927
  %v4628 = vpack.c.b16 %v2932, %v2928
  %v4629 = vpack.c.b16 %v2933, %v2929
  %v4630 = vpack.c.b16 %v2934, %v2930
  %v4631 = vpack.c.b16 %v2939, %v2935
  %v4632 = vpack.c.b16 %v2940, %v2936
  %v4633 = vpack.c.b16 %v2941, %v2937
  %v4634 = vpack.c.b16 %v2942, %v2938
  %v4635 = vpack.c.b16 %v2947, %v2943
  %v4636 = vpack.c.b16 %v2948, %v2944
  %v4637 = vpack.c.b16 %v2949, %v2945
  %v4638 = vpack.c.b16 %v2950, %v2946
  %v4639 = vpack.c.b16 %v2955, %v2951
  %v4640 = vpack.c.b16 %v2956, %v2952
  %v4641 = vpack.c.b16 %v2957, %v2953
  %v4642 = vpack.c.b16 %v2958, %v2954
  %v4643 = vpack.c.b16 %v2963, %v2959
  %v4644 = vpack.c.b16 %v2964, %v2960
  %v4645 = vpack.c.b16 %v2965, %v2961
  %v4646 = vpack.c.b16 %v2966, %v2962
  %v4647 = vpack.c.b16 %v2971, %v2967
  %v4648 = vpack.c.b16 %v2972, %v2968
  %v4649 = vpack.c.b16 %v2973, %v2969
  %v4650 = vpack.c.b16 %v2974, %v2970
  %v4651 = vpack.c.b16 %v2979, %v2975
  %v4652 = vpack.c.b16 %v2980, %v2976
  %v4653 = vpack.c.b16 %v2981, %v2977
  %v4654 = vpack.c.b16 %v2982, %v2978
  %v4655 = vpack.c.b16 %v2987, %v2983
  %v4656 = vpack.c.b16 %v2988, %v2984
  %v4657 = vpack.c.b16 %v2989, %v2985
  %v4658 = vpack.c.b16 %v2990, %v2986
  %v4659 = vpack.c.b16 %v2995, %v2991
  %v4660 = vpack.c.b16 %v2996, %v2992
  %v4661 = vpack.c.b16 %v2997, %v2993
  %v4662 = vpack.c.b16 %v2998, %v2994
  %v4663 = vpack.c.b16 %v3003, %v2999
  %v4664 = vpack.c.b16 %v3004, %v3000
  %v4665 = vpack.c.b16 %v3005, %v3001
  %v4666 = vpack.c.b16 %v3006, %v3002
  %v4667 = vpack.c.b16 %v3011, %v3007
  %v4668 = vpack.c.b16 %v3012, %v3008
  %v4669 = vpack.c.b16 %v3013, %v3009
  %v4670 = vpack.c.b16 %v3014, %v3010
  %v4671 = vpack.c.b16 %v3019, %v3015
  %v4672 = vpack.c.b16 %v3020, %v3016
  %v4673 = vpack.c.b16 %v3021, %v3017
  %v4674 = vpack.c.b16 %v3022, %v3018
  %v4675 = vpack.c.b16 %v3027, %v3023
  %v4676 = vpack.c.b16 %v3028, %v3024
  %v4677 = vpack.c.b16 %v3029, %v3025
  %v4678 = vpack.c.b16 %v3030, %v3026
  %v4679 = vpack.c.b16 %v3035, %v3031
  %v4680 = vpack.c.b16 %v3036, %v3032
  %v4681 = vpack.c.b16 %v3037, %v3033
  %v4682 = vpack.c.b16 %v3038, %v3034
  %v4683 = vpack.c.b16 %v3043, %v3039
  %v4684 = vpack.c.b16 %v3044, %v3040
  %v4685 = vpack.c.b16 %v3045, %v3041
  %v4686 = vpack.c.b16 %v3046, %v3042
  %v4687 = vpack.c.b16 %v3051, %v3047
  %v4688 = vpack.c.b16 %v3052, %v3048
  %v4689 = vpack.c.b16 %v3053, %v3049
  %v4690 = vpack.c.b16 %v3054, %v3050
  %v4691 = vpack.c.b16 %v3059, %v3055
  %v4692 = vpack.c.b16 %v3060, %v3056
  %v4693 = vpack.c.b16 %v3061, %v3057
  %v4694 = vpack.c.b16 %v3062, %v3058
  %v4695 = vpack.c.b16 %v3067, %v3063
  %v4696 = vpack.c.b16 %v3068, %v3064
  %v4697 = vpack.c.b16 %v3069, %v3065
  %v4698 = vpack.c.b16 %v3070, %v3066
  %v4699 = vpack.c.b16 %v3075, %v3071
  %v4700 = vpack.c.b16 %v3076, %v3072
  %v4701 = vpack.c.b16 %v3077, %v3073
  %v4702 = vpack.c.b16 %v3078, %v3074
  %v4703 = vpack.c.b16 %v3083, %v3079
  %v4704 = vpack.c.b16 %v3084, %v3080
  %v4705 = vpack.c.b16 %v3085, %v3081
  %v4706 = vpack.c.b16 %v3086, %v3082
  %v4707 = vpack.c.b16 %v3091, %v3087
  %v4708 = vpack.c.b16 %v3092, %v3088
  %v4709 = vpack.c.b16 %v3093, %v3089
  %v4710 = vpack.c.b16 %v3094, %v3090
  %v4711 = vpack.c.b16 %v3099, %v3095
  %v4712 = vpack.c.b16 %v3100, %v3096
  %v4713 = vpack.c.b16 %v3101, %v3097
  %v4714 = vpack.c.b16 %v3102, %v3098
  %v4715 = vpack.c.b16 %v3107, %v3103
  %v4716 = vpack.c.b16 %v3108, %v3104
  %v4717 = vpack.c.b16 %v3109, %v3105
  %v4718 = vpack.c.b16 %v3110, %v3106
  %v4719 = vpack.c.b16 %v3115, %v3111
  %v4720 = vpack.c.b16 %v3116, %v3112
  %v4721 = vpack.c.b16 %v3117, %v3113
  %v4722 = vpack.c.b16 %v3118, %v3114
  %v4723 = vpack.c.b16 %v3123, %v3119
  %v4724 = vpack.c.b16 %v3124, %v3120
  %v4725 = vpack.c.b16 %v3125, %v3121
  %v4726 = vpack.c.b16 %v3126, %v3122
  %v4727 = vpack.c.b16 %v3131, %v3127
  %v4728 = vpack.c.b16 %v3132, %v3128
  %v4729 = vpack.c.b16 %v3133, %v3129
  %v4730 = vpack.c.b16 %v3134, %v3130
  %v4731 = vpack.c.b16 %v3139, %v3135
  %v4732 = vpack.c.b16 %v3140, %v3136
  %v4733 = vpack.c.b16 %v3141, %v3137
  %v4734 = vpack.c.b16 %v3142, %v3138
  %v4735 = vpack.c.b16 %v3147, %v3143
  %v4736 = vpack.c.b16 %v3148, %v3144
  %v4737 = vpack.c.b16 %v3149, %v3145
  %v4738 = vpack.c.b16 %v3150, %v3146
  %v4739 = vpack.c.b16 %v3155, %v3151
  %v4740 = vpack.c.b16 %v3156, %v3152
  %v4741 = vpack.c.b16 %v3157, %v3153
  %v4742 = vpack.c.b16 %v3158, %v3154
  %v4743 = vpack.c.b16 %v3163, %v3159
  %v4744 = vpack.c.b16 %v3164, %v3160
  %v4745 = vpack.c.b16 %v3165, %v3161
  %v4746 = vpack.c.b16 %v3166, %v3162
  %v4747 = vpack.c.b16 %v3171, %v3167
  %v4748 = vpack.c.b16 %v3172, %v3168
  %v4749 = vpack.c.b16 %v3173, %v3169
  %v4750 = vpack.c.b16 %v3174, %v3170
  %v4751 = vpack.c.b16 %v3179, %v3175
  %v4752 = vpack.c.b16 %v3180, %v3176
  %v4753 = vpack.c.b16 %v3181, %v3177
  %v4754 = vpack.c.b16 %v3182, %v3178
  %v4755 = vpack.c.b16 %v3187, %v3183
  %v4756 = vpack.c.b16 %v3188, %v3184
  %v4757 = vpack.c.b16 %v3189, %v3185
  %v4758 = vpack.c.b16 %v3190, %v3186
  %v4759 = vpack.c.b16 %v3195, %v3191
  %v4760 = vpack.c.b16 %v3196, %v3192
  %v4761 = vpack.c.b16 %v3197, %v3193
  %v4762 = vpack.c.b16 %v3198, %v3194
  %v4763 = vpack.c.b16 %v3203, %v3199
  %v4764 = vpack.c.b16 %v3204, %v3200
  %v4765 = vpack.c.b16 %v3205, %v3201
  %v4766 = vpack.c.b16 %v3206, %v3202
  %v4767 = vpack.c.b16 %v3211, %v3207
  %v4768 = vpack.c.b16 %v3212, %v3208
  %v4769 = vpack.c.b16 %v3213, %v3209
  %v4770 = vpack.c.b16 %v3214, %v3210
  %v4771 = vpack.c.b16 %v3219, %v3215
  %v4772 = vpack.c.b16 %v3220, %v3216
  %v4773 = vpack.c.b16 %v3221, %v3217
  %v4774 = vpack.c.b16 %v3222, %v3218
  %v4775 = vpack.c.b16 %v3227, %v3223
  %v4776 = vpack.c.b16 %v3228, %v3224
  %v4777 = vpack.c.b16 %v3229, %v3225
  %v4778 = vpack.c.b16 %v3230, %v3226
  %v4779 = vpack.c.b16 %v3235, %v3231
  %v4780 = vpack.c.b16 %v3236, %v3232
  %v4781 = vpack.c.b16 %v3237, %v3233
  %v4782 = vpack.c.b16 %v3238, %v3234
  %v4783 = vpack.c.b16 %v3243, %v3239
  %v4784 = vpack.c.b16 %v3244, %v3240
  %v4785 = vpack.c.b16 %v3245, %v3241
  %v4786 = vpack.c.b16 %v3246, %v3242
  %v4787 = vpack.c.b16 %v3251, %v3247
  %v4788 = vpack.c.b16 %v3252, %v3248
  %v4789 = vpack.c.b16 %v3253, %v3249
  %v4790 = vpack.c.b16 %v3254, %v3250
  %v4791 = vpack.c.b16 %v3259, %v3255
  %v4792 = vpack.c.b16 %v3260, %v3256
  %v4793 = vpack.c.b16 %v3261, %v3257
  %v4794 = vpack.c.b16 %v3262, %v3258
  %v4795 = vpack.c.b16 %v3267, %v3263
  %v4796 = vpack.c.b16 %v3268, %v3264
  %v4797 = vpack.c.b16 %v3269, %v3265
  %v4798 = vpack.c.b16 %v3270, %v3266
  %v4799 = vpack.c.b16 %v3275, %v3271
  %v4800 = vpack.c.b16 %v3276, %v3272
  %v4801 = vpack.c.b16 %v3277, %v3273
  %v4802 = vpack.c.b16 %v3278, %v3274
  %v4803 = vpack.c.b16 %v3283, %v3279
  %v4804 = vpack.c.b16 %v3284, %v3280
  %v4805 = vpack.c.b16 %v3285, %v3281
  %v4806 = vpack.c.b16 %v3286, %v3282
  %v4807 = vpack.c.b16 %v3291, %v3287
  %v4808 = vpack.c.b16 %v3292, %v3288
  %v4809 = vpack.c.b16 %v3293, %v3289
  %v4810 = vpack.c.b16 %v3294, %v3290
  %v4811 = vpack.c.b16 %v3299, %v3295
  %v4812 = vpack.c.b16 %v3300, %v3296
  %v4813 = vpack.c.b16 %v3301, %v3297
  %v4814 = vpack.c.b16 %v3302, %v3298
  %v4815 = vpack.c.b16 %v3307, %v3303
  %v4816 = vpack.c.b16 %v3308, %v3304
  %v4817 = vpack.c.b16 %v3309, %v3305
  %v4818 = vpack.c.b16 %v3310, %v3306
  %v4819 = vpack.c.b16 %v3315, %v3311
  %v4820 = vpack.c.b16 %v3316, %v3312
  %v4821 = vpack.c.b16 %v3317, %v3313
  %v4822 = vpack.c.b16 %v3318, %v3314
  %v4823 = vpack.c.b16 %v3323, %v3319
  %v4824 = vpack.c.b16 %v3324, %v3320
  %v4825 = vpack.c.b16 %v3325, %v3321
  %v4826 = vpack.c.b16 %v3326, %v3322
  %v4827 = vpack.c.b16 %v3331, %v3327
  %v4828 = vpack.c.b16 %v3332, %v3328
  %v4829 = vpack.c.b16 %v3333, %v3329
  %v4830 = vpack.c.b16 %v3334, %v3330
  %v4831 = vpack.c.b16 %v3339, %v3335
  %v4832 = vpack.c.b16 %v3340, %v3336
  %v4833 = vpack.c.b16 %v3341, %v3337
  %v4834 = vpack.c.b16 %v3342, %v3338
  %v4835 = vpack.c.b16 %v3347, %v3343
  %v4836 = vpack.c.b16 %v3348, %v3344
  %v4837 = vpack.c.b16 %v3349, %v3345
  %v4838 = vpack.c.b16 %v3350, %v3346
  %v4839 = vpack.c.b16 %v3355, %v3351
  %v4840 = vpack.c.b16 %v3356, %v3352
  %v4841 = vpack.c.b16 %v3357, %v3353
  %v4842 = vpack.c.b16 %v3358, %v3354
  %v4843 = vpack.c.b16 %v3363, %v3359
  %v4844 = vpack.c.b16 %v3364, %v3360
  %v4845 = vpack.c.b16 %v3365, %v3361
  %v4846 = vpack.c.b16 %v3366, %v3362
  %v4847 = vpack.c.b16 %v3371, %v3367
  %v4848 = vpack.c.b16 %v3372, %v3368
  %v4849 = vpack.c.b16 %v3373, %v3369
  %v4850 = vpack.c.b16 %v3374, %v3370
  %v4851 = vpack.c.b16 %v3379, %v3375
  %v4852 = vpack.c.b16 %v3380, %v3376
  %v4853 = vpack.c.b16 %v3381, %v3377
  %v4854 = vpack.c.b16 %v3382, %v3378
  %v4855 = vpack.c.b16 %v3387, %v3383
  %v4856 = vpack.c.b16 %v3388, %v3384
  %v4857 = vpack.c.b16 %v3389, %v3385
  %v4858 = vpack.c.b16 %v3390, %v3386
  %v4859 = vpack.c.b16 %v3395, %v3391
  %v4860 = vpack.c.b16 %v3396, %v3392
  %v4861 = vpack.c.b16 %v3397, %v3393
  %v4862 = vpack.c.b16 %v3398, %v3394
  %v4863 = vpack.c.b16 %v3403, %v3399
  %v4864 = vpack.c.b16 %v3404, %v3400
  %v4865 = vpack.c.b16 %v3405, %v3401
  %v4866 = vpack.c.b16 %v3406, %v3402
  %v4867 = vpack.c.b16 %v3411, %v3407
  %v4868 = vpack.c.b16 %v3412, %v3408
  %v4869 = vpack.c.b16 %v3413, %v3409
  %v4870 = vpack.c.b16 %v3414, %v3410
  %v4871 = vpack.c.b16 %v3419, %v3415
  %v4872 = vpack.c.b16 %v3420, %v3416
  %v4873 = vpack.c.b16 %v3421, %v3417
  %v4874 = vpack.c.b16 %v3422, %v3418
  %v4875 = vpack.c.b16 %v3427, %v3423
  %v4876 = vpack.c.b16 %v3428, %v3424
  %v4877 = vpack.c.b16 %v3429, %v3425
  %v4878 = vpack.c.b16 %v3430, %v3426
  %v4879 = vpack.c.b16 %v3435, %v3431
  %v4880 = vpack.c.b16 %v3436, %v3432
  %v4881 = vpack.c.b16 %v3437, %v3433
  %v4882 = vpack.c.b16 %v3438, %v3434
  %v4883 = vpack.c.b16 %v3443, %v3439
  %v4884 = vpack.c.b16 %v3444, %v3440
  %v4885 = vpack.c.b16 %v3445, %v3441
  %v4886 = vpack.c.b16 %v3446, %v3442
  %v4887 = vpack.c.b16 %v3451, %v3447
  %v4888 = vpack.c.b16 %v3452, %v3448
  %v4889 = vpack.c.b16 %v3453, %v3449
  %v4890 = vpack.c.b16 %v3454, %v3450
  %v4891 = vpack.c.b16 %v3459, %v3455
  %v4892 = vpack.c.b16 %v3460, %v3456
  %v4893 = vpack.c.b16 %v3461, %v3457
  %v4894 = vpack.c.b16 %v3462, %v3458
  %v4895 = vpack.c.b16 %v3467, %v3463
  %v4896 = vpack.c.b16 %v3468, %v3464
  %v4897 = vpack.c.b16 %v3469, %v3465
  %v4898 = vpack.c.b16 %v3470, %v3466
  %v4899 = vpack.c.b16 %v3475, %v3471
  %v4900 = vpack.c.b16 %v3476, %v3472
  %v4901 = vpack.c.b16 %v3477, %v3473
  %v4902 = vpack.c.b16 %v3478, %v3474
  %v4903 = vpack.c.b16 %v3483, %v3479
  %v4904 = vpack.c.b16 %v3484, %v3480
  %v4905 = vpack.c.b16 %v3485, %v3481
  %v4906 = vpack.c.b16 %v3486, %v3482
  %v4907 = vpack.c.b16 %v3491, %v3487
  %v4908 = vpack.c.b16 %v3492, %v3488
  %v4909 = vpack.c.b16 %v3493, %v3489
  %v4910 = vpack.c.b16 %v3494, %v3490
  %v4911 = vpack.c.b16 %v3499, %v3495
  %v4912 = vpack.c.b16 %v3500, %v3496
  %v4913 = vpack.c.b16 %v3501, %v3497
  %v4914 = vpack.c.b16 %v3502, %v3498
  %v4915 = vpack.c.b16 %v3507, %v3503
  %v4916 = vpack.c.b16 %v3508, %v3504
  %v4917 = vpack.c.b16 %v3509, %v3505
  %v4918 = vpack.c.b16 %v3510, %v3506
  %v4919 = vpack.c.b16 %v3515, %v3511
  %v4920 = vpack.c.b16 %v3516, %v3512
  %v4921 = vpack.c.b16 %v3517, %v3513
  %v4922 = vpack.c.b16 %v3518, %v3514
  %v4923 = vpack.c.b16 %v3523, %v3519
  %v4924 = vpack.c.b16 %v3524, %v3520
  %v4925 = vpack.c.b16 %v3525, %v3521
  %v4926 = vpack.c.b16 %v3526, %v3522
  %v4927 = vpack.c.b16 %v3531, %v3527
  %v4928 = vpack.c.b16 %v3532, %v3528
  %v4929 = vpack.c.b16 %v3533, %v3529
  %v4930 = vpack.c.b16 %v3534, %v3530
  %v4931 = vpack.c.b16 %v3539, %v3535
  %v4932 = vpack.c.b16 %v3540, %v3536
  %v4933 = vpack.c.b16 %v3541, %v3537
  %v4934 = vpack.c.b16 %v3542, %v3538
  %v4935 = vpack.c.b16 %v3547, %v3543
  %v4936 = vpack.c.b16 %v3548, %v3544
  %v4937 = vpack.c.b16 %v3549, %v3545
  %v4938 = vpack.c.b16 %v3550, %v3546
  %v4939 = vpack.c.b16 %v3555, %v3551
  %v4940 = vpack.c.b16 %v3556, %v3552
  %v4941 = vpack.c.b16 %v3557, %v3553
  %v4942 = vpack.c.b16 %v3558, %v3554
  %v4943 = vpack.c.b16 %v3563, %v3559
  %v4944 = vpack.c.b16 %v3564, %v3560
  %v4945 = vpack.c.b16 %v3565, %v3561
  %v4946 = vpack.c.b16 %v3566, %v3562
  %v4947 = vpack.c.b16 %v3571, %v3567
  %v4948 = vpack.c.b16 %v3572, %v3568
  %v4949 = vpack.c.b16 %v3573, %v3569
  %v4950 = vpack.c.b16 %v3574, %v3570
  %v4951 = vpack.c.b16 %v3579, %v3575
  %v4952 = vpack.c.b16 %v3580, %v3576
  %v4953 = vpack.c.b16 %v3581, %v3577
  %v4954 = vpack.c.b16 %v3582, %v3578
  %v4955 = vpack.c.b16 %v3587, %v3583
  %v4956 = vpack.c.b16 %v3588, %v3584
  %v4957 = vpack.c.b16 %v3589, %v3585
  %v4958 = vpack.c.b16 %v3590, %v3586
  %v4959 = vpack.c.b16 %v3595, %v3591
  %v4960 = vpack.c.b16 %v3596, %v3592
  %v4961 = vpack.c.b16 %v3597, %v3593
  %v4962 = vpack.c.b16 %v3598, %v3594
  %v4963 = vpack.c.b16 %v3603, %v3599
  %v4964 = vpack.c.b16 %v3604, %v3600
  %v4965 = vpack.c.b16 %v3605, %v3601
  %v4966 = vpack.c.b16 %v3606, %v3602
  %v4967 = vpack.c.b16 %v3611, %v3607
  %v4968 = vpack.c.b16 %v3612, %v3608
  %v4969 = vpack.c.b16 %v3613, %v3609
  %v4970 = vpack.c.b16 %v3614, %v3610
  %v4971 = vpack.c.b16 %v3619, %v3615
  %v4972 = vpack.c.b16 %v3620, %v3616
  %v4973 = vpack.c.b16 %v3621, %v3617
  %v4974 = vpack.c.b16 %v3622, %v3618
  %v4975 = vpack.c.b16 %v3627, %v3623
  %v4976 = vpack.c.b16 %v3628, %v3624
  %v4977 = vpack.c.b16 %v3629, %v3625
  %v4978 = vpack.c.b16 %v3630, %v3626
  %v4979 = vpack.c.b16 %v3635, %v3631
  %v4980 = vpack.c.b16 %v3636, %v3632
  %v4981 = vpack.c.b16 %v3637, %v3633
  %v4982 = vpack.c.b16 %v3638, %v3634
  %v4983 = vpack.c.b16 %v3643, %v3639
  %v4984 = vpack.c.b16 %v3644, %v3640
  %v4985 = vpack.c.b16 %v3645, %v3641
  %v4986 = vpack.c.b16 %v3646, %v3642
  %v4987 = vpack.c.b16 %v3651, %v3647
  %v4988 = vpack.c.b16 %v3652, %v3648
  %v4989 = vpack.c.b16 %v3653, %v3649
  %v4990 = vpack.c.b16 %v3654, %v3650
  %v4991 = vpack.c.b16 %v3659, %v3655
  %v4992 = vpack.c.b16 %v3660, %v3656
  %v4993 = vpack.c.b16 %v3661, %v3657
  %v4994 = vpack.c.b16 %v3662, %v3658
  %v4995 = vpack.c.b16 %v3667, %v3663
  %v4996 = vpack.c.b16 %v3668, %v3664
  %v4997 = vpack.c.b16 %v3669, %v3665
  %v4998 = vpack.c.b16 %v3670, %v3666
  %v4999 = vpack.c.b16 %v3675, %v3671
  %v5000 = vpack.c.b16 %v3676, %v3672
  %v5001 = vpack.c.b16 %v3677, %v3673
  %v5002 = vpack.c.b16 %v3678, %v3674
  %v5003 = vpack.c.b16 %v3683, %v3679
  %v5004 = vpack.c.b16 %v3684, %v3680
  %v5005 = vpack.c.b16 %v3685, %v3681
  %v5006 = vpack.c.b16 %v3686, %v3682
  %v5007 = vpack.c.b16 %v3691, %v3687
  %v5008 = vpack.c.b16 %v3692, %v3688
  %v5009 = vpack.c.b16 %v3693, %v3689
  %v5010 = vpack.c.b16 %v3694, %v3690
  %v5011 = vpack.c.b16 %v3699, %v3695
  %v5012 = vpack.c.b16 %v3700, %v3696
  %v5013 = vpack.c.b16 %v3701, %v3697
  %v5014 = vpack.c.b16 %v3702, %v3698
  %v5015 = vpack.c.b16 %v3707, %v3703
  %v5016 = vpack.c.b16 %v3708, %v3704
  %v5017 = vpack.c.b16 %v3709, %v3705
  %v5018 = vpack.c.b16 %v3710, %v3706
  %v5019 = vpack.c.b16 %v3715, %v3711
  %v5020 = vpack.c.b16 %v3716, %v3712
  %v5021 = vpack.c.b16 %v3717, %v3713
  %v5022 = vpack.c.b16 %v3718, %v3714
  %v5023 = vpack.c.b16 %v3723, %v3719
  %v5024 = vpack.c.b16 %v3724, %v3720
  %v5025 = vpack.c.b16 %v3725, %v3721
  %v5026 = vpack.c.b16 %v3726, %v3722
  %v5027 = vpack.c.b16 %v3731, %v3727
  %v5028 = vpack.c.b16 %v3732, %v3728
  %v5029 = vpack.c.b16 %v3733, %v3729
  %v5030 = vpack.c.b16 %v3734, %v3730
  %v5031 = vpack.c.b16 %v3739, %v3735
  %v5032 = vpack.c.b16 %v3740, %v3736
  %v5033 = vpack.c.b16 %v3741, %v3737
  %v5034 = vpack.c.b16 %v3742, %v3738
  %v5035 = vpack.c.b16 %v3747, %v3743
  %v5036 = vpack.c.b16 %v3748, %v3744
  %v5037 = vpack.c.b16 %v3749, %v3745
  %v5038 = vpack.c.b16 %v3750, %v3746
  %v5039 = vpack.c.b16 %v3755, %v3751
  %v5040 = vpack.c.b16 %v3756, %v3752
  %v5041 = vpack.c.b16 %v3757, %v3753
  %v5042 = vpack.c.b16 %v3758, %v3754
  %v5043 = vpack.c.b16 %v3763, %v3759
  %v5044 = vpack.c.b16 %v3764, %v3760
  %v5045 = vpack.c.b16 %v3765, %v3761
  %v5046 = vpack.c.b16 %v3766, %v3762
  %v5047 = vpack.c.b16 %v3771, %v3767
  %v5048 = vpack.c.b16 %v3772, %v3768
  %v5049 = vpack.c.b16 %v3773, %v3769
  %v5050 = vpack.c.b16 %v3774, %v3770
  %v5051 = vpack.c.b16 %v3779, %v3775
  %v5052 = vpack.c.b16 %v3780, %v3776
  %v5053 = vpack.c.b16 %v3781, %v3777
  %v5054 = vpack.c.b16 %v3782, %v3778
  %v5055 = vpack.c.b16 %v3787, %v3783
  %v5056 = vpack.c.b16 %v3788, %v3784
  %v5057 = vpack.c.b16 %v3789, %v3785
  %v5058 = vpack.c.b16 %v3790, %v3786
  %v5059 = vpack.c.b16 %v3795, %v3791
  %v5060 = vpack.c.b16 %v3796, %v3792
  %v5061 = vpack.c.b16 %v3797, %v3793
  %v5062 = vpack.c.b16 %v3798, %v3794
  %v5063 = vpack.c.b16 %v3803, %v3799
  %v5064 = vpack.c.b16 %v3804, %v3800
  %v5065 = vpack.c.b16 %v3805, %v3801
  %v5066 = vpack.c.b16 %v3806, %v3802
  %v5067 = vpack.c.b16 %v3811, %v3807
  %v5068 = vpack.c.b16 %v3812, %v3808
  %v5069 = vpack.c.b16 %v3813, %v3809
  %v5070 = vpack.c.b16 %v3814, %v3810
  %v5071 = vpack.c.b16 %v3819, %v3815
  %v5072 = vpack.c.b16 %v3820, %v3816
  %v5073 = vpack.c.b16 %v3821, %v3817
  %v5074 = vpack.c.b16 %v3822, %v3818
  %v5075 = vpack.c.b16 %v3827, %v3823
  %v5076 = vpack.c.b16 %v3828, %v3824
  %v5077 = vpack.c.b16 %v3829, %v3825
  %v5078 = vpack.c.b16 %v3830, %v3826
  %v5079 = vpack.c.b16 %v3835, %v3831
  %v5080 = vpack.c.b16 %v3836, %v3832
  %v5081 = vpack.c.b16 %v3837, %v3833
  %v5082 = vpack.c.b16 %v3838, %v3834
  %v5083 = vpack.c.b16 %v3843, %v3839
  %v5084 = vpack.c.b16 %v3844, %v3840
  %v5085 = vpack.c.b16 %v3845, %v3841
  %v5086 = vpack.c.b16 %v3846, %v3842
  %v5087 = vpack.c.b16 %v3851, %v3847
  %v5088 = vpack.c.b16 %v3852, %v3848
  %v5089 = vpack.c.b16 %v3853, %v3849
  %v5090 = vpack.c.b16 %v3854, %v3850
  %v5091 = vpack.c.b16 %v3859, %v3855
  %v5092 = vpack.c.b16 %v3860, %v3856
  %v5093 = vpack.c.b16 %v3861, %v3857
  %v5094 = vpack.c.b16 %v3862, %v3858
  %v5095 = vpack.c.b16 %v3867, %v3863
  %v5096 = vpack.c.b16 %v3868, %v3864
  %v5097 = vpack.c.b16 %v3869, %v3865
  %v5098 = vpack.c.b16 %v3870, %v3866
  %v5099 = vpack.c.b16 %v3875, %v3871
  %v5100 = vpack.c.b16 %v3876, %v3872
  %v5101 = vpack.c.b16 %v3877, %v3873
  %v5102 = vpack.c.b16 %v3878, %v3874
  %v5103 = vpack.c.b16 %v3883, %v3879
  %v5104 = vpack.c.b16 %v3884, %v3880
  %v5105 = vpack.c.b16 %v3885, %v3881
  %v5106 = vpack.c.b16 %v3886, %v3882
  %v5107 = vpack.c.b16 %v3891, %v3887
  %v5108 = vpack.c.b16 %v3892, %v3888
  %v5109 = vpack.c.b16 %v3893, %v3889
  %v5110 = vpack.c.b16 %v3894, %v3890
  %v5111 = vpack.c.b16 %v3899, %v3895
  %v5112 = vpack.c.b16 %v3900, %v3896
  %v5113 = vpack.c.b16 %v3901, %v3897
  %v5114 = vpack.c.b16 %v3902, %v3898
  %v5115 = vpack.c.b16 %v3907, %v3903
  %v5116 = vpack.c.b16 %v3908, %v3904
  %v5117 = vpack.c.b16 %v3909, %v3905
  %v5118 = vpack.c.b16 %v3910, %v3906
  %v5119 = vpack.c.b16 %v3915, %v3911
  %v5120 = vpack.c.b16 %v3916, %v3912
  %v5121 = vpack.c.b16 %v3917, %v3913
  %v5122 = vpack.c.b16 %v3918, %v3914
  %v5123 = vpack.c.b16 %v3923, %v3919
  %v5124 = vpack.c.b16 %v3924, %v3920
  %v5125 = vpack.c.b16 %v3925, %v3921
  %v5126 = vpack.c.b16 %v3926, %v3922
  %v5127 = vpack.c.b16 %v3931, %v3927
  %v5128 = vpack.c.b16 %v3932, %v3928
  %v5129 = vpack.c.b16 %v3933, %v3929
  %v5130 = vpack.c.b16 %v3934, %v3930
  %v5131 = vpack.c.b16 %v3939, %v3935
  %v5132 = vpack.c.b16 %v3940, %v3936
  %v5133 = vpack.c.b16 %v3941, %v3937
  %v5134 = vpack.c.b16 %v3942, %v3938
  %v5135 = vpack.c.b16 %v3947, %v3943
  %v5136 = vpack.c.b16 %v3948, %v3944
  %v5137 = vpack.c.b16 %v3949, %v3945
  %v5138 = vpack.c.b16 %v3950, %v3946
  %v5139 = vpack.c.b16 %v3955, %v3951
  %v5140 = vpack.c.b16 %v3956, %v3952
  %v5141 = vpack.c.b16 %v3957, %v3953
  %v5142 = vpack.c.b16 %v3958, %v3954
  %v5143 = vpack.c.b16 %v3963, %v3959
  %v5144 = vpack.c.b16 %v3964, %v3960
  %v5145 = vpack.c.b16 %v3965, %v3961
  %v5146 = vpack.c.b16 %v3966, %v3962
  %v5147 = vpack.c.b16 %v3971, %v3967
  %v5148 = vpack.c.b16 %v3972, %v3968
  %v5149 = vpack.c.b16 %v3973, %v3969
  %v5150 = vpack.c.b16 %v3974, %v3970
  %v5151 = vpack.c.b16 %v3979, %v3975
  %v5152 = vpack.c.b16 %v3980, %v3976
  %v5153 = vpack.c.b16 %v3981, %v3977
  %v5154 = vpack.c.b16 %v3982, %v3978
  %v5155 = vpack.c.b16 %v3987, %v3983
  %v5156 = vpack.c.b16 %v3988, %v3984
  %v5157 = vpack.c.b16 %v3989, %v3985
  %v5158 = vpack.c.b16 %v3990, %v3986
  %v5159 = vpack.c.b16 %v3995, %v3991
  %v5160 = vpack.c.b16 %v3996, %v3992
  %v5161 = vpack.c.b16 %v3997, %v3993
  %v5162 = vpack.c.b16 %v3998, %v3994
  %v5163 = vpack.c.b16 %v4003, %v3999
  %v5164 = vpack.c.b16 %v4004, %v4000
  %v5165 = vpack.c.b16 %v4005, %v4001
  %v5166 = vpack.c.b16 %v4006, %v4002
  %v5167 = vpack.c.b16 %v4011, %v4007
  %v5168 = vpack.c.b16 %v4012, %v4008
  %v5169 = vpack.c.b16 %v4013, %v4009
  %v5170 = vpack.c.b16 %v4014, %v4010
  %v5171 = vpack.c.b16 %v4019, %v4015
  %v5172 = vpack.c.b16 %v4020, %v4016
  %v5173 = vpack.c.b16 %v4021, %v4017
  %v5174 = vpack.c.b16 %v4022, %v4018
  %v5175 = vpack.c.b16 %v4027, %v4023
  %v5176 = vpack.c.b16 %v4028, %v4024
  %v5177 = vpack.c.b16 %v4029, %v4025
  %v5178 = vpack.c.b16 %v4030, %v4026
  %v5179 = vpack.c.b16 %v4035, %v4031
  %v5180 = vpack.c.b16 %v4036, %v4032
  %v5181 = vpack.c.b16 %v4037, %v4033
  %v5182 = vpack.c.b16 %v4038, %v4034
  %v5183 = vpack.c.b16 %v4043, %v4039
  %v5184 = vpack.c.b16 %v4044, %v4040
  %v5185 = vpack.c.b16 %v4045, %v4041
  %v5186 = vpack.c.b16 %v4046, %v4042
  %v5187 = vpack.c.b16 %v4051, %v4047
  %v5188 = vpack.c.b16 %v4052, %v4048
  %v5189 = vpack.c.b16 %v4053, %v4049
  %v5190 = vpack.c.b16 %v4054, %v4050
  %v5191 = vpack.c.b16 %v4059, %v4055
  %v5192 = vpack.c.b16 %v4060, %v4056
  %v5193 = vpack.c.b16 %v4061, %v4057
  %v5194 = vpack.c.b16 %v4062, %v4058
  %v5195 = vpack.c.b16 %v4067, %v4063
  %v5196 = vpack.c.b16 %v4068, %v4064
  %v5197 = vpack.c.b16 %v4069, %v4065
  %v5198 = vpack.c.b16 %v4070, %v4066
  %v5199 = vpack.c.b16 %v4075, %v4071
  %v5200 = vpack.c.b16 %v4076, %v4072
  %v5201 = vpack.c.b16 %v4077, %v4073
  %v5202 = vpack.c.b16 %v4078, %v4074
  %v5203 = vpack.c.b16 %v4083, %v4079
  %v5204 = vpack.c.b16 %v4084, %v4080
  %v5205 = vpack.c.b16 %v4085, %v4081
  %v5206 = vpack.c.b16 %v4086, %v4082
  %v5207 = vpack.c.b16 %v4091, %v4087
  %v5208 = vpack.c.b16 %v4092, %v4088
  %v5209 = vpack.c.b16 %v4093, %v4089
  %v5210 = vpack.c.b16 %v4094, %v4090
  %v5211 = vpack.c.b16 %v4099, %v4095
  %v5212 = vpack.c.b16 %v4100, %v4096
  %v5213 = vpack.c.b16 %v4101, %v4097
  %v5214 = vpack.c.b16 %v4102, %v4098
  %v5215 = vpack.c.b16 %v4107, %v4103
  %v5216 = vpack.c.b16 %v4108, %v4104
  %v5217 = vpack.c.b16 %v4109, %v4105
  %v5218 = vpack.c.b16 %v4110, %v4106
  %v5219 = vpack.c.b16 %v4115, %v4111
  %v5220 = vpack.c.b16 %v4116, %v4112
  %v5221 = vpack.c.b16 %v4117, %v4113
  %v5222 = vpack.c.b16 %v4118, %v4114
  %v5223 = vpack.c.b16 %v4123, %v4119
  %v5224 = vpack.c.b16 %v4124, %v4120
  %v5225 = vpack.c.b16 %v4125, %v4121
  %v5226 = vpack.c.b16 %v4126, %v4122
  %v5227 = vpack.c.b16 %v4131, %v4127
  %v5228 = vpack.c.b16 %v4132, %v4128
  %v5229 = vpack.c.b16 %v4133, %v4129
  %v5230 = vpack.c.b16 %v4134, %v4130
  %v5231 = vpack.c.b16 %v4139, %v4135
  %v5232 = vpack.c.b16 %v4140, %v4136
  %v5233 = vpack.c.b16 %v4141, %v4137
  %v5234 = vpack.c.b16 %v4142, %v4138
  %v5235 = vpack.c.b16 %v4147, %v4143
  %v5236 = vpack.c.b16 %v4148, %v4144
  %v5237 = vpack.c.b16 %v4149, %v4145
  %v5238 = vpack.c.b16 %v4150, %v4146
  %v5239 = vpack.c.b16 %v4155, %v4151
  %v5240 = vpack.c.b16 %v4156, %v4152
  %v5241 = vpack.c.b16 %v4157, %v4153
  %v5242 = vpack.c.b16 %v4158, %v4154
  %v5243 = vpack.c.b16 %v4163, %v4159
  %v5244 = vpack.c.b16 %v4164, %v4160
  %v5245 = vpack.c.b16 %v4165, %v4161
  %v5246 = vpack.c.b16 %v4166, %v4162
  %v5247 = vpack.c.b16 %v4171, %v4167
  %v5248 = vpack.c.b16 %v4172, %v4168
  %v5249 = vpack.c.b16 %v4173, %v4169
  %v5250 = vpack.c.b16 %v4174, %v4170
  %v5251 = vpack.c.b16 %v4179, %v4175
  %v5252 = vpack.c.b16 %v4180, %v4176
  %v5253 = vpack.c.b16 %v4181, %v4177
  %v5254 = vpack.c.b16 %v4182, %v4178
  %v5255 = vpack.c.b16 %v4187, %v4183
  %v5256 = vpack.c.b16 %v4188, %v4184
  %v5257 = vpack.c.b16 %v4189, %v4185
  %v5258 = vpack.c.b16 %v4190, %v4186
  %v5259 = vpack.c.b16 %v4195, %v4191
  %v5260 = vpack.c.b16 %v4196, %v4192
  %v5261 = vpack.c.b16 %v4197, %v4193
  %v5262 = vpack.c.b16 %v4198, %v4194
  %v5263 = vpack.c.b16 %v4203, %v4199
  %v5264 = vpack.c.b16 %v4204, %v4200
  %v5265 = vpack.c.b16 %v4205, %v4201
  %v5266 = vpack.c.b16 %v4206, %v4202
  %v5267 = vpack.c.b16 %v4211, %v4207
  %v5268 = vpack.c.b16 %v4212, %v4208
  %v5269 = vpack.c.b16 %v4213, %v4209
  %v5270 = vpack.c.b16 %v4214, %v4210
  %v5271 = vpack.c.b16 %v4219, %v4215
  %v5272 = vpack.c.b16 %v4220, %v4216
  %v5273 = vpack.c.b16 %v4221, %v4217
  %v5274 = vpack.c.b16 %v4222, %v4218
  %v5275 = vpack.c.b16 %v4227, %v4223
  %v5276 = vpack.c.b16 %v4228, %v4224
  %v5277 = vpack.c.b16 %v4229, %v4225
  %v5278 = vpack.c.b16 %v4230, %v4226
  %v5279 = vpack.c.b16 %v4235, %v4231
  %v5280 = vpack.c.b16 %v4236, %v4232
  %v5281 = vpack.c.b16 %v4237, %v4233
  %v5282 = vpack.c.b16 %v4238, %v4234
  %v5283 = vpack.c.b16 %v4243, %v4239
  %v5284 = vpack.c.b16 %v4244, %v4240
  %v5285 = vpack.c.b16 %v4245, %v4241
  %v5286 = vpack.c.b16 %v4246, %v4242
  %v5287 = vpack.c.b16 %v4251, %v4247
  %v5288 = vpack.c.b16 %v4252, %v4248
  %v5289 = vpack.c.b16 %v4253, %v4249
  %v5290 = vpack.c.b16 %v4254, %v4250
  %v5291 = vpack.c.b16 %v4259, %v4255
  %v5292 = vpack.c.b16 %v4260, %v4256
  %v5293 = vpack.c.b16 %v4261, %v4257
  %v5294 = vpack.c.b16 %v4262, %v4258
  %v5295 = vpack.c.b16 %v4267, %v4263
  %v5296 = vpack.c.b16 %v4268, %v4264
  %v5297 = vpack.c.b16 %v4269, %v4265
  %v5298 = vpack.c.b16 %v4270, %v4266
  %v5299 = vpack.c.b16 %v4275, %v4271
  %v5300 = vpack.c.b16 %v4276, %v4272
  %v5301 = vpack.c.b16 %v4277, %v4273
  %v5302 = vpack.c.b16 %v4278, %v4274
  %6327 = vmatprep.subr.bf16.mxu0 %v4308
  %6328 = vmatpush1.bf16.msra.mxu0 %v4307
  %6329 = vmatprep.subr.bf16.mxu0 %v4304
  %6330 = vmatpush1.bf16.msra.mxu0 %v4303
  %6331 = vmatprep.subr.bf16.mxu0 %v4300
  %6332 = vmatpush1.bf16.msra.mxu0 %v4299
  %6333 = vmatprep.subr.bf16.mxu0 %v4296
  %6334 = vmatpush1.bf16.msra.mxu0 %v4295
  %6335 = vmatprep.subr.bf16.mxu0 %v4292
  %6336 = vmatpush1.bf16.msra.mxu0 %v4291
  %6337 = vmatprep.subr.bf16.mxu0 %v4288
  %6338 = vmatpush1.bf16.msra.mxu0 %v4287
  %6339 = vmatprep.subr.bf16.mxu0 %v4284
  %6340 = vmatpush1.bf16.msra.mxu0 %v4283
  %6341 = vmatprep.subr.bf16.mxu0 %v4280
  %6342 = vmatpush1.bf16.msra.mxu0 %v4279
  %6343 = vmatprep.subr.bf16.mxu0 %v4340
  %6344 = vmatpush2.bf16.msra.mxu0 %v4339
  %6345 = vmatprep.subr.bf16.mxu0 %v4336
  %6346 = vmatpush2.bf16.msra.mxu0 %v4335
  %6347 = vmatprep.subr.bf16.mxu0 %v4332
  %6348 = vmatpush2.bf16.msra.mxu0 %v4331
  %6349 = vmatprep.subr.bf16.mxu0 %v4328
  %6350 = vmatpush2.bf16.msra.mxu0 %v4327
  %6351 = vmatprep.subr.bf16.mxu0 %v4324
  %6352 = vmatpush2.bf16.msra.mxu0 %v4323
  %6353 = vmatprep.subr.bf16.mxu0 %v4320
  %6354 = vmatpush2.bf16.msra.mxu0 %v4319
  %6355 = vmatprep.subr.bf16.mxu0 %v4316
  %6356 = vmatpush2.bf16.msra.mxu0 %v4315
  %6357 = vmatprep.subr.bf16.mxu0 %v4312
  %6358 = vmatpush2.bf16.msra.mxu0 %v4311
  %6359 = vmatprep.mubr.bf16.mxu0 %v1144
  %6360 = vmatmul.mubr.bf16.gmra.mxu0 %v1143
  %v6361 = vpop.f32.mrf.mxu0
  %v6362 = vadd.f32 %v1078, %v6361
  %v6363 = vpop.f32.mrf.mxu0
  %v6364 = vadd.f32 %v1082, %v6363
  %v6365 = vpop.f32.mrf.mxu0
  %v6366 = vpop.f32.mrf.mxu0
  %6367 = vdwg.mxu0
  %6368 = vmatprep.subr.bf16.mxu0 %v4372
  %6369 = vmatpush1.bf16.msra.mxu0 %v4371
  %6370 = vmatprep.subr.bf16.mxu0 %v4368
  %6371 = vmatpush1.bf16.msra.mxu0 %v4367
  %6372 = vmatprep.subr.bf16.mxu0 %v4364
  %6373 = vmatpush1.bf16.msra.mxu0 %v4363
  %6374 = vmatprep.subr.bf16.mxu0 %v4360
  %6375 = vmatpush1.bf16.msra.mxu0 %v4359
  %6376 = vmatprep.subr.bf16.mxu0 %v4356
  %6377 = vmatpush1.bf16.msra.mxu0 %v4355
  %6378 = vmatprep.subr.bf16.mxu0 %v4352
  %6379 = vmatpush1.bf16.msra.mxu0 %v4351
  %6380 = vmatprep.subr.bf16.mxu0 %v4348
  %6381 = vmatpush1.bf16.msra.mxu0 %v4347
  %6382 = vmatprep.subr.bf16.mxu0 %v4344
  %6383 = vmatpush1.bf16.msra.mxu0 %v4343
  %6384 = vmatprep.subr.bf16.mxu0 %v4404
  %6385 = vmatpush2.bf16.msra.mxu0 %v4403
  %6386 = vmatprep.subr.bf16.mxu0 %v4400
  %6387 = vmatpush2.bf16.msra.mxu0 %v4399
  %6388 = vmatprep.subr.bf16.mxu0 %v4396
  %6389 = vmatpush2.bf16.msra.mxu0 %v4395
  %6390 = vmatprep.subr.bf16.mxu0 %v4392
  %6391 = vmatpush2.bf16.msra.mxu0 %v4391
  %6392 = vmatprep.subr.bf16.mxu0 %v4388
  %6393 = vmatpush2.bf16.msra.mxu0 %v4387
  %6394 = vmatprep.subr.bf16.mxu0 %v4384
  %6395 = vmatpush2.bf16.msra.mxu0 %v4383
  %6396 = vmatprep.subr.bf16.mxu0 %v4380
  %6397 = vmatpush2.bf16.msra.mxu0 %v4379
  %6398 = vmatprep.subr.bf16.mxu0 %v4376
  %6399 = vmatpush2.bf16.msra.mxu0 %v4375
  %6400 = vmatprep.mubr.bf16.mxu0 %v1146
  %6401 = vmatmul.mubr.bf16.gmra.mxu0 %v1145
  %v6402 = vpop.f32.mrf.mxu0
  %v6403 = vadd.f32 %v6362, %v6402
  %v6404 = vpop.f32.mrf.mxu0
  %v6405 = vadd.f32 %v6364, %v6404
  %v6406 = vpop.f32.mrf.mxu0
  %v6407 = vpop.f32.mrf.mxu0
  %6408 = vdwg.mxu0
  %6409 = vmatprep.subr.bf16.mxu0 %v4436
  %6410 = vmatpush1.bf16.msra.mxu0 %v4435
  %6411 = vmatprep.subr.bf16.mxu0 %v4432
  %6412 = vmatpush1.bf16.msra.mxu0 %v4431
  %6413 = vmatprep.subr.bf16.mxu0 %v4428
  %6414 = vmatpush1.bf16.msra.mxu0 %v4427
  %6415 = vmatprep.subr.bf16.mxu0 %v4424
  %6416 = vmatpush1.bf16.msra.mxu0 %v4423
  %6417 = vmatprep.subr.bf16.mxu0 %v4420
  %6418 = vmatpush1.bf16.msra.mxu0 %v4419
  %6419 = vmatprep.subr.bf16.mxu0 %v4416
  %6420 = vmatpush1.bf16.msra.mxu0 %v4415
  %6421 = vmatprep.subr.bf16.mxu0 %v4412
  %6422 = vmatpush1.bf16.msra.mxu0 %v4411
  %6423 = vmatprep.subr.bf16.mxu0 %v4408
  %6424 = vmatpush1.bf16.msra.mxu0 %v4407
  %6425 = vmatprep.subr.bf16.mxu0 %v4468
  %6426 = vmatpush2.bf16.msra.mxu0 %v4467
  %6427 = vmatprep.subr.bf16.mxu0 %v4464
  %6428 = vmatpush2.bf16.msra.mxu0 %v4463
  %6429 = vmatprep.subr.bf16.mxu0 %v4460
  %6430 = vmatpush2.bf16.msra.mxu0 %v4459
  %6431 = vmatprep.subr.bf16.mxu0 %v4456
  %6432 = vmatpush2.bf16.msra.mxu0 %v4455
  %6433 = vmatprep.subr.bf16.mxu0 %v4452
  %6434 = vmatpush2.bf16.msra.mxu0 %v4451
  %6435 = vmatprep.subr.bf16.mxu0 %v4448
  %6436 = vmatpush2.bf16.msra.mxu0 %v4447
  %6437 = vmatprep.subr.bf16.mxu0 %v4444
  %6438 = vmatpush2.bf16.msra.mxu0 %v4443
  %6439 = vmatprep.subr.bf16.mxu0 %v4440
  %6440 = vmatpush2.bf16.msra.mxu0 %v4439
  %6441 = vmatprep.mubr.bf16.mxu0 %v1148
  %6442 = vmatmul.mubr.bf16.gmra.mxu0 %v1147
  %v6443 = vpop.f32.mrf.mxu0
  %v6444 = vadd.f32 %v6403, %v6443
  %v6445 = vpop.f32.mrf.mxu0
  %v6446 = vadd.f32 %v6405, %v6445
  %v6447 = vpop.f32.mrf.mxu0
  %v6448 = vpop.f32.mrf.mxu0
  %6449 = vdwg.mxu0
  %6450 = vmatprep.subr.bf16.mxu0 %v4500
  %6451 = vmatpush1.bf16.msra.mxu0 %v4499
  %6452 = vmatprep.subr.bf16.mxu0 %v4496
  %6453 = vmatpush1.bf16.msra.mxu0 %v4495
  %6454 = vmatprep.subr.bf16.mxu0 %v4492
  %6455 = vmatpush1.bf16.msra.mxu0 %v4491
  %6456 = vmatprep.subr.bf16.mxu0 %v4488
  %6457 = vmatpush1.bf16.msra.mxu0 %v4487
  %6458 = vmatprep.subr.bf16.mxu0 %v4484
  %6459 = vmatpush1.bf16.msra.mxu0 %v4483
  %6460 = vmatprep.subr.bf16.mxu0 %v4480
  %6461 = vmatpush1.bf16.msra.mxu0 %v4479
  %6462 = vmatprep.subr.bf16.mxu0 %v4476
  %6463 = vmatpush1.bf16.msra.mxu0 %v4475
  %6464 = vmatprep.subr.bf16.mxu0 %v4472
  %6465 = vmatpush1.bf16.msra.mxu0 %v4471
  %6466 = vmatprep.subr.bf16.mxu0 %v4532
  %6467 = vmatpush2.bf16.msra.mxu0 %v4531
  %6468 = vmatprep.subr.bf16.mxu0 %v4528
  %6469 = vmatpush2.bf16.msra.mxu0 %v4527
  %6470 = vmatprep.subr.bf16.mxu0 %v4524
  %6471 = vmatpush2.bf16.msra.mxu0 %v4523
  %6472 = vmatprep.subr.bf16.mxu0 %v4520
  %6473 = vmatpush2.bf16.msra.mxu0 %v4519
  %6474 = vmatprep.subr.bf16.mxu0 %v4516
  %6475 = vmatpush2.bf16.msra.mxu0 %v4515
  %6476 = vmatprep.subr.bf16.mxu0 %v4512
  %6477 = vmatpush2.bf16.msra.mxu0 %v4511
  %6478 = vmatprep.subr.bf16.mxu0 %v4508
  %6479 = vmatpush2.bf16.msra.mxu0 %v4507
  %6480 = vmatprep.subr.bf16.mxu0 %v4504
  %6481 = vmatpush2.bf16.msra.mxu0 %v4503
  %6482 = vmatprep.mubr.bf16.mxu0 %v1150
  %6483 = vmatmul.mubr.bf16.gmra.mxu0 %v1149
  %v6484 = vpop.f32.mrf.mxu0
  %v6485 = vadd.f32 %v6444, %v6484
  %v6486 = vpop.f32.mrf.mxu0
  %v6487 = vadd.f32 %v6446, %v6486
  %v6488 = vpop.f32.mrf.mxu0
  %v6489 = vpop.f32.mrf.mxu0
  %6490 = vdwg.mxu0
  %6491 = vmatprep.subr.bf16.mxu0 %v4564
  %6492 = vmatpush1.bf16.msra.mxu0 %v4563
  %6493 = vmatprep.subr.bf16.mxu0 %v4560
  %6494 = vmatpush1.bf16.msra.mxu0 %v4559
  %6495 = vmatprep.subr.bf16.mxu0 %v4556
  %6496 = vmatpush1.bf16.msra.mxu0 %v4555
  %6497 = vmatprep.subr.bf16.mxu0 %v4552
  %6498 = vmatpush1.bf16.msra.mxu0 %v4551
  %6499 = vmatprep.subr.bf16.mxu0 %v4548
  %6500 = vmatpush1.bf16.msra.mxu0 %v4547
  %6501 = vmatprep.subr.bf16.mxu0 %v4544
  %6502 = vmatpush1.bf16.msra.mxu0 %v4543
  %6503 = vmatprep.subr.bf16.mxu0 %v4540
  %6504 = vmatpush1.bf16.msra.mxu0 %v4539
  %6505 = vmatprep.subr.bf16.mxu0 %v4536
  %6506 = vmatpush1.bf16.msra.mxu0 %v4535
  %6507 = vmatprep.subr.bf16.mxu0 %v4596
  %6508 = vmatpush2.bf16.msra.mxu0 %v4595
  %6509 = vmatprep.subr.bf16.mxu0 %v4592
  %6510 = vmatpush2.bf16.msra.mxu0 %v4591
  %6511 = vmatprep.subr.bf16.mxu0 %v4588
  %6512 = vmatpush2.bf16.msra.mxu0 %v4587
  %6513 = vmatprep.subr.bf16.mxu0 %v4584
  %6514 = vmatpush2.bf16.msra.mxu0 %v4583
  %6515 = vmatprep.subr.bf16.mxu0 %v4580
  %6516 = vmatpush2.bf16.msra.mxu0 %v4579
  %6517 = vmatprep.subr.bf16.mxu0 %v4576
  %6518 = vmatpush2.bf16.msra.mxu0 %v4575
  %6519 = vmatprep.subr.bf16.mxu0 %v4572
  %6520 = vmatpush2.bf16.msra.mxu0 %v4571
  %6521 = vmatprep.subr.bf16.mxu0 %v4568
  %6522 = vmatpush2.bf16.msra.mxu0 %v4567
  %6523 = vmatprep.mubr.bf16.mxu0 %v1152
  %6524 = vmatmul.mubr.bf16.gmra.mxu0 %v1151
  %v6525 = vpop.f32.mrf.mxu0
  %v6526 = vadd.f32 %v6485, %v6525
  %v6527 = vpop.f32.mrf.mxu0
  %v6528 = vadd.f32 %v6487, %v6527
  %v6529 = vpop.f32.mrf.mxu0
  %v6530 = vpop.f32.mrf.mxu0
  %6531 = vdwg.mxu0
  %6532 = vmatprep.subr.bf16.mxu0 %v4628
  %6533 = vmatpush1.bf16.msra.mxu0 %v4627
  %6534 = vmatprep.subr.bf16.mxu0 %v4624
  %6535 = vmatpush1.bf16.msra.mxu0 %v4623
  %6536 = vmatprep.subr.bf16.mxu0 %v4620
  %6537 = vmatpush1.bf16.msra.mxu0 %v4619
  %6538 = vmatprep.subr.bf16.mxu0 %v4616
  %6539 = vmatpush1.bf16.msra.mxu0 %v4615
  %6540 = vmatprep.subr.bf16.mxu0 %v4612
  %6541 = vmatpush1.bf16.msra.mxu0 %v4611
  %6542 = vmatprep.subr.bf16.mxu0 %v4608
  %6543 = vmatpush1.bf16.msra.mxu0 %v4607
  %6544 = vmatprep.subr.bf16.mxu0 %v4604
  %6545 = vmatpush1.bf16.msra.mxu0 %v4603
  %6546 = vmatprep.subr.bf16.mxu0 %v4600
  %6547 = vmatpush1.bf16.msra.mxu0 %v4599
  %6548 = vmatprep.subr.bf16.mxu0 %v4660
  %6549 = vmatpush2.bf16.msra.mxu0 %v4659
  %6550 = vmatprep.subr.bf16.mxu0 %v4656
  %6551 = vmatpush2.bf16.msra.mxu0 %v4655
  %6552 = vmatprep.subr.bf16.mxu0 %v4652
  %6553 = vmatpush2.bf16.msra.mxu0 %v4651
  %6554 = vmatprep.subr.bf16.mxu0 %v4648
  %6555 = vmatpush2.bf16.msra.mxu0 %v4647
  %6556 = vmatprep.subr.bf16.mxu0 %v4644
  %6557 = vmatpush2.bf16.msra.mxu0 %v4643
  %6558 = vmatprep.subr.bf16.mxu0 %v4640
  %6559 = vmatpush2.bf16.msra.mxu0 %v4639
  %6560 = vmatprep.subr.bf16.mxu0 %v4636
  %6561 = vmatpush2.bf16.msra.mxu0 %v4635
  %6562 = vmatprep.subr.bf16.mxu0 %v4632
  %6563 = vmatpush2.bf16.msra.mxu0 %v4631
  %6564 = vmatprep.mubr.bf16.mxu0 %v1154
  %6565 = vmatmul.mubr.bf16.gmra.mxu0 %v1153
  %v6566 = vpop.f32.mrf.mxu0
  %v6567 = vadd.f32 %v6526, %v6566
  %v6568 = vpop.f32.mrf.mxu0
  %v6569 = vadd.f32 %v6528, %v6568
  %v6570 = vpop.f32.mrf.mxu0
  %v6571 = vpop.f32.mrf.mxu0
  %6572 = vdwg.mxu0
  %6573 = vmatprep.subr.bf16.mxu0 %v4692
  %6574 = vmatpush1.bf16.msra.mxu0 %v4691
  %6575 = vmatprep.subr.bf16.mxu0 %v4688
  %6576 = vmatpush1.bf16.msra.mxu0 %v4687
  %6577 = vmatprep.subr.bf16.mxu0 %v4684
  %6578 = vmatpush1.bf16.msra.mxu0 %v4683
  %6579 = vmatprep.subr.bf16.mxu0 %v4680
  %6580 = vmatpush1.bf16.msra.mxu0 %v4679
  %6581 = vmatprep.subr.bf16.mxu0 %v4676
  %6582 = vmatpush1.bf16.msra.mxu0 %v4675
  %6583 = vmatprep.subr.bf16.mxu0 %v4672
  %6584 = vmatpush1.bf16.msra.mxu0 %v4671
  %6585 = vmatprep.subr.bf16.mxu0 %v4668
  %6586 = vmatpush1.bf16.msra.mxu0 %v4667
  %6587 = vmatprep.subr.bf16.mxu0 %v4664
  %6588 = vmatpush1.bf16.msra.mxu0 %v4663
  %6589 = vmatprep.subr.bf16.mxu0 %v4724
  %6590 = vmatpush2.bf16.msra.mxu0 %v4723
  %6591 = vmatprep.subr.bf16.mxu0 %v4720
  %6592 = vmatpush2.bf16.msra.mxu0 %v4719
  %6593 = vmatprep.subr.bf16.mxu0 %v4716
  %6594 = vmatpush2.bf16.msra.mxu0 %v4715
  %6595 = vmatprep.subr.bf16.mxu0 %v4712
  %6596 = vmatpush2.bf16.msra.mxu0 %v4711
  %6597 = vmatprep.subr.bf16.mxu0 %v4708
  %6598 = vmatpush2.bf16.msra.mxu0 %v4707
  %6599 = vmatprep.subr.bf16.mxu0 %v4704
  %6600 = vmatpush2.bf16.msra.mxu0 %v4703
  %6601 = vmatprep.subr.bf16.mxu0 %v4700
  %6602 = vmatpush2.bf16.msra.mxu0 %v4699
  %6603 = vmatprep.subr.bf16.mxu0 %v4696
  %6604 = vmatpush2.bf16.msra.mxu0 %v4695
  %6605 = vmatprep.mubr.bf16.mxu0 %v1156
  %6606 = vmatmul.mubr.bf16.gmra.mxu0 %v1155
  %v6607 = vpop.f32.mrf.mxu0
  %v6608 = vadd.f32 %v6567, %v6607
  %v6609 = vpop.f32.mrf.mxu0
  %v6610 = vadd.f32 %v6569, %v6609
  %v6611 = vpop.f32.mrf.mxu0
  %v6612 = vpop.f32.mrf.mxu0
  %6613 = vdwg.mxu0
  %6614 = vmatprep.subr.bf16.mxu0 %v4756
  %6615 = vmatpush1.bf16.msra.mxu0 %v4755
  %6616 = vmatprep.subr.bf16.mxu0 %v4752
  %6617 = vmatpush1.bf16.msra.mxu0 %v4751
  %6618 = vmatprep.subr.bf16.mxu0 %v4748
  %6619 = vmatpush1.bf16.msra.mxu0 %v4747
  %6620 = vmatprep.subr.bf16.mxu0 %v4744
  %6621 = vmatpush1.bf16.msra.mxu0 %v4743
  %6622 = vmatprep.subr.bf16.mxu0 %v4740
  %6623 = vmatpush1.bf16.msra.mxu0 %v4739
  %6624 = vmatprep.subr.bf16.mxu0 %v4736
  %6625 = vmatpush1.bf16.msra.mxu0 %v4735
  %6626 = vmatprep.subr.bf16.mxu0 %v4732
  %6627 = vmatpush1.bf16.msra.mxu0 %v4731
  %6628 = vmatprep.subr.bf16.mxu0 %v4728
  %6629 = vmatpush1.bf16.msra.mxu0 %v4727
  %6630 = vmatprep.subr.bf16.mxu0 %v4788
  %6631 = vmatpush2.bf16.msra.mxu0 %v4787
  %6632 = vmatprep.subr.bf16.mxu0 %v4784
  %6633 = vmatpush2.bf16.msra.mxu0 %v4783
  %6634 = vmatprep.subr.bf16.mxu0 %v4780
  %6635 = vmatpush2.bf16.msra.mxu0 %v4779
  %6636 = vmatprep.subr.bf16.mxu0 %v4776
  %6637 = vmatpush2.bf16.msra.mxu0 %v4775
  %6638 = vmatprep.subr.bf16.mxu0 %v4772
  %6639 = vmatpush2.bf16.msra.mxu0 %v4771
  %6640 = vmatprep.subr.bf16.mxu0 %v4768
  %6641 = vmatpush2.bf16.msra.mxu0 %v4767
  %6642 = vmatprep.subr.bf16.mxu0 %v4764
  %6643 = vmatpush2.bf16.msra.mxu0 %v4763
  %6644 = vmatprep.subr.bf16.mxu0 %v4760
  %6645 = vmatpush2.bf16.msra.mxu0 %v4759
  %6646 = vmatprep.mubr.bf16.mxu0 %v1158
  %6647 = vmatmul.mubr.bf16.gmra.mxu0 %v1157
  %v6648 = vpop.f32.mrf.mxu0
  %v6649 = vadd.f32 %v6608, %v6648
  %v6650 = vpop.f32.mrf.mxu0
  %v6651 = vadd.f32 %v6610, %v6650
  %v6652 = vpop.f32.mrf.mxu0
  %v6653 = vpop.f32.mrf.mxu0
  %6654 = vdwg.mxu0
  %6655 = vmatprep.subr.bf16.mxu0 %v4820
  %6656 = vmatpush1.bf16.msra.mxu0 %v4819
  %6657 = vmatprep.subr.bf16.mxu0 %v4816
  %6658 = vmatpush1.bf16.msra.mxu0 %v4815
  %6659 = vmatprep.subr.bf16.mxu0 %v4812
  %6660 = vmatpush1.bf16.msra.mxu0 %v4811
  %6661 = vmatprep.subr.bf16.mxu0 %v4808
  %6662 = vmatpush1.bf16.msra.mxu0 %v4807
  %6663 = vmatprep.subr.bf16.mxu0 %v4804
  %6664 = vmatpush1.bf16.msra.mxu0 %v4803
  %6665 = vmatprep.subr.bf16.mxu0 %v4800
  %6666 = vmatpush1.bf16.msra.mxu0 %v4799
  %6667 = vmatprep.subr.bf16.mxu0 %v4796
  %6668 = vmatpush1.bf16.msra.mxu0 %v4795
  %6669 = vmatprep.subr.bf16.mxu0 %v4792
  %6670 = vmatpush1.bf16.msra.mxu0 %v4791
  %6671 = vmatprep.subr.bf16.mxu0 %v4852
  %6672 = vmatpush2.bf16.msra.mxu0 %v4851
  %6673 = vmatprep.subr.bf16.mxu0 %v4848
  %6674 = vmatpush2.bf16.msra.mxu0 %v4847
  %6675 = vmatprep.subr.bf16.mxu0 %v4844
  %6676 = vmatpush2.bf16.msra.mxu0 %v4843
  %6677 = vmatprep.subr.bf16.mxu0 %v4840
  %6678 = vmatpush2.bf16.msra.mxu0 %v4839
  %6679 = vmatprep.subr.bf16.mxu0 %v4836
  %6680 = vmatpush2.bf16.msra.mxu0 %v4835
  %6681 = vmatprep.subr.bf16.mxu0 %v4832
  %6682 = vmatpush2.bf16.msra.mxu0 %v4831
  %6683 = vmatprep.subr.bf16.mxu0 %v4828
  %6684 = vmatpush2.bf16.msra.mxu0 %v4827
  %6685 = vmatprep.subr.bf16.mxu0 %v4824
  %6686 = vmatpush2.bf16.msra.mxu0 %v4823
  %6687 = vmatprep.mubr.bf16.mxu0 %v1160
  %6688 = vmatmul.mubr.bf16.gmra.mxu0 %v1159
  %v6689 = vpop.f32.mrf.mxu0
  %v6690 = vadd.f32 %v6649, %v6689
  %v6691 = vpop.f32.mrf.mxu0
  %v6692 = vadd.f32 %v6651, %v6691
  %v6693 = vpop.f32.mrf.mxu0
  %v6694 = vpop.f32.mrf.mxu0
  %6695 = vdwg.mxu0
  %6696 = vmatprep.subr.bf16.mxu0 %v4884
  %6697 = vmatpush1.bf16.msra.mxu0 %v4883
  %6698 = vmatprep.subr.bf16.mxu0 %v4880
  %6699 = vmatpush1.bf16.msra.mxu0 %v4879
  %6700 = vmatprep.subr.bf16.mxu0 %v4876
  %6701 = vmatpush1.bf16.msra.mxu0 %v4875
  %6702 = vmatprep.subr.bf16.mxu0 %v4872
  %6703 = vmatpush1.bf16.msra.mxu0 %v4871
  %6704 = vmatprep.subr.bf16.mxu0 %v4868
  %6705 = vmatpush1.bf16.msra.mxu0 %v4867
  %6706 = vmatprep.subr.bf16.mxu0 %v4864
  %6707 = vmatpush1.bf16.msra.mxu0 %v4863
  %6708 = vmatprep.subr.bf16.mxu0 %v4860
  %6709 = vmatpush1.bf16.msra.mxu0 %v4859
  %6710 = vmatprep.subr.bf16.mxu0 %v4856
  %6711 = vmatpush1.bf16.msra.mxu0 %v4855
  %6712 = vmatprep.subr.bf16.mxu0 %v4916
  %6713 = vmatpush2.bf16.msra.mxu0 %v4915
  %6714 = vmatprep.subr.bf16.mxu0 %v4912
  %6715 = vmatpush2.bf16.msra.mxu0 %v4911
  %6716 = vmatprep.subr.bf16.mxu0 %v4908
  %6717 = vmatpush2.bf16.msra.mxu0 %v4907
  %6718 = vmatprep.subr.bf16.mxu0 %v4904
  %6719 = vmatpush2.bf16.msra.mxu0 %v4903
  %6720 = vmatprep.subr.bf16.mxu0 %v4900
  %6721 = vmatpush2.bf16.msra.mxu0 %v4899
  %6722 = vmatprep.subr.bf16.mxu0 %v4896
  %6723 = vmatpush2.bf16.msra.mxu0 %v4895
  %6724 = vmatprep.subr.bf16.mxu0 %v4892
  %6725 = vmatpush2.bf16.msra.mxu0 %v4891
  %6726 = vmatprep.subr.bf16.mxu0 %v4888
  %6727 = vmatpush2.bf16.msra.mxu0 %v4887
  %6728 = vmatprep.mubr.bf16.mxu0 %v1162
  %6729 = vmatmul.mubr.bf16.gmra.mxu0 %v1161
  %v6730 = vpop.f32.mrf.mxu0
  %v6731 = vadd.f32 %v6690, %v6730
  %v6732 = vpop.f32.mrf.mxu0
  %v6733 = vadd.f32 %v6692, %v6732
  %v6734 = vpop.f32.mrf.mxu0
  %v6735 = vpop.f32.mrf.mxu0
  %6736 = vdwg.mxu0
  %6737 = vmatprep.subr.bf16.mxu0 %v4948
  %6738 = vmatpush1.bf16.msra.mxu0 %v4947
  %6739 = vmatprep.subr.bf16.mxu0 %v4944
  %6740 = vmatpush1.bf16.msra.mxu0 %v4943
  %6741 = vmatprep.subr.bf16.mxu0 %v4940
  %6742 = vmatpush1.bf16.msra.mxu0 %v4939
  %6743 = vmatprep.subr.bf16.mxu0 %v4936
  %6744 = vmatpush1.bf16.msra.mxu0 %v4935
  %6745 = vmatprep.subr.bf16.mxu0 %v4932
  %6746 = vmatpush1.bf16.msra.mxu0 %v4931
  %6747 = vmatprep.subr.bf16.mxu0 %v4928
  %6748 = vmatpush1.bf16.msra.mxu0 %v4927
  %6749 = vmatprep.subr.bf16.mxu0 %v4924
  %6750 = vmatpush1.bf16.msra.mxu0 %v4923
  %6751 = vmatprep.subr.bf16.mxu0 %v4920
  %6752 = vmatpush1.bf16.msra.mxu0 %v4919
  %6753 = vmatprep.subr.bf16.mxu0 %v4980
  %6754 = vmatpush2.bf16.msra.mxu0 %v4979
  %6755 = vmatprep.subr.bf16.mxu0 %v4976
  %6756 = vmatpush2.bf16.msra.mxu0 %v4975
  %6757 = vmatprep.subr.bf16.mxu0 %v4972
  %6758 = vmatpush2.bf16.msra.mxu0 %v4971
  %6759 = vmatprep.subr.bf16.mxu0 %v4968
  %6760 = vmatpush2.bf16.msra.mxu0 %v4967
  %6761 = vmatprep.subr.bf16.mxu0 %v4964
  %6762 = vmatpush2.bf16.msra.mxu0 %v4963
  %6763 = vmatprep.subr.bf16.mxu0 %v4960
  %6764 = vmatpush2.bf16.msra.mxu0 %v4959
  %6765 = vmatprep.subr.bf16.mxu0 %v4956
  %6766 = vmatpush2.bf16.msra.mxu0 %v4955
  %6767 = vmatprep.subr.bf16.mxu0 %v4952
  %6768 = vmatpush2.bf16.msra.mxu0 %v4951
  %6769 = vmatprep.mubr.bf16.mxu0 %v1164
  %6770 = vmatmul.mubr.bf16.gmra.mxu0 %v1163
  %v6771 = vpop.f32.mrf.mxu0
  %v6772 = vadd.f32 %v6731, %v6771
  %v6773 = vpop.f32.mrf.mxu0
  %v6774 = vadd.f32 %v6733, %v6773
  %v6775 = vpop.f32.mrf.mxu0
  %v6776 = vpop.f32.mrf.mxu0
  %6777 = vdwg.mxu0
  %6778 = vmatprep.subr.bf16.mxu0 %v5012
  %6779 = vmatpush1.bf16.msra.mxu0 %v5011
  %6780 = vmatprep.subr.bf16.mxu0 %v5008
  %6781 = vmatpush1.bf16.msra.mxu0 %v5007
  %6782 = vmatprep.subr.bf16.mxu0 %v5004
  %6783 = vmatpush1.bf16.msra.mxu0 %v5003
  %6784 = vmatprep.subr.bf16.mxu0 %v5000
  %6785 = vmatpush1.bf16.msra.mxu0 %v4999
  %6786 = vmatprep.subr.bf16.mxu0 %v4996
  %6787 = vmatpush1.bf16.msra.mxu0 %v4995
  %6788 = vmatprep.subr.bf16.mxu0 %v4992
  %6789 = vmatpush1.bf16.msra.mxu0 %v4991
  %6790 = vmatprep.subr.bf16.mxu0 %v4988
  %6791 = vmatpush1.bf16.msra.mxu0 %v4987
  %6792 = vmatprep.subr.bf16.mxu0 %v4984
  %6793 = vmatpush1.bf16.msra.mxu0 %v4983
  %6794 = vmatprep.subr.bf16.mxu0 %v5044
  %6795 = vmatpush2.bf16.msra.mxu0 %v5043
  %6796 = vmatprep.subr.bf16.mxu0 %v5040
  %6797 = vmatpush2.bf16.msra.mxu0 %v5039
  %6798 = vmatprep.subr.bf16.mxu0 %v5036
  %6799 = vmatpush2.bf16.msra.mxu0 %v5035
  %6800 = vmatprep.subr.bf16.mxu0 %v5032
  %6801 = vmatpush2.bf16.msra.mxu0 %v5031
  %6802 = vmatprep.subr.bf16.mxu0 %v5028
  %6803 = vmatpush2.bf16.msra.mxu0 %v5027
  %6804 = vmatprep.subr.bf16.mxu0 %v5024
  %6805 = vmatpush2.bf16.msra.mxu0 %v5023
  %6806 = vmatprep.subr.bf16.mxu0 %v5020
  %6807 = vmatpush2.bf16.msra.mxu0 %v5019
  %6808 = vmatprep.subr.bf16.mxu0 %v5016
  %6809 = vmatpush2.bf16.msra.mxu0 %v5015
  %6810 = vmatprep.mubr.bf16.mxu0 %v1166
  %6811 = vmatmul.mubr.bf16.gmra.mxu0 %v1165
  %v6812 = vpop.f32.mrf.mxu0
  %v6813 = vadd.f32 %v6772, %v6812
  %v6814 = vpop.f32.mrf.mxu0
  %v6815 = vadd.f32 %v6774, %v6814
  %v6816 = vpop.f32.mrf.mxu0
  %v6817 = vpop.f32.mrf.mxu0
  %6818 = vdwg.mxu0
  %6819 = vmatprep.subr.bf16.mxu0 %v5076
  %6820 = vmatpush1.bf16.msra.mxu0 %v5075
  %6821 = vmatprep.subr.bf16.mxu0 %v5072
  %6822 = vmatpush1.bf16.msra.mxu0 %v5071
  %6823 = vmatprep.subr.bf16.mxu0 %v5068
  %6824 = vmatpush1.bf16.msra.mxu0 %v5067
  %6825 = vmatprep.subr.bf16.mxu0 %v5064
  %6826 = vmatpush1.bf16.msra.mxu0 %v5063
  %6827 = vmatprep.subr.bf16.mxu0 %v5060
  %6828 = vmatpush1.bf16.msra.mxu0 %v5059
  %6829 = vmatprep.subr.bf16.mxu0 %v5056
  %6830 = vmatpush1.bf16.msra.mxu0 %v5055
  %6831 = vmatprep.subr.bf16.mxu0 %v5052
  %6832 = vmatpush1.bf16.msra.mxu0 %v5051
  %6833 = vmatprep.subr.bf16.mxu0 %v5048
  %6834 = vmatpush1.bf16.msra.mxu0 %v5047
  %6835 = vmatprep.subr.bf16.mxu0 %v5108
  %6836 = vmatpush2.bf16.msra.mxu0 %v5107
  %6837 = vmatprep.subr.bf16.mxu0 %v5104
  %6838 = vmatpush2.bf16.msra.mxu0 %v5103
  %6839 = vmatprep.subr.bf16.mxu0 %v5100
  %6840 = vmatpush2.bf16.msra.mxu0 %v5099
  %6841 = vmatprep.subr.bf16.mxu0 %v5096
  %6842 = vmatpush2.bf16.msra.mxu0 %v5095
  %6843 = vmatprep.subr.bf16.mxu0 %v5092
  %6844 = vmatpush2.bf16.msra.mxu0 %v5091
  %6845 = vmatprep.subr.bf16.mxu0 %v5088
  %6846 = vmatpush2.bf16.msra.mxu0 %v5087
  %6847 = vmatprep.subr.bf16.mxu0 %v5084
  %6848 = vmatpush2.bf16.msra.mxu0 %v5083
  %6849 = vmatprep.subr.bf16.mxu0 %v5080
  %6850 = vmatpush2.bf16.msra.mxu0 %v5079
  %6851 = vmatprep.mubr.bf16.mxu0 %v1168
  %6852 = vmatmul.mubr.bf16.gmra.mxu0 %v1167
  %v6853 = vpop.f32.mrf.mxu0
  %v6854 = vadd.f32 %v6813, %v6853
  %v6855 = vpop.f32.mrf.mxu0
  %v6856 = vadd.f32 %v6815, %v6855
  %v6857 = vpop.f32.mrf.mxu0
  %v6858 = vpop.f32.mrf.mxu0
  %6859 = vdwg.mxu0
  %6860 = vmatprep.subr.bf16.mxu0 %v5140
  %6861 = vmatpush1.bf16.msra.mxu0 %v5139
  %6862 = vmatprep.subr.bf16.mxu0 %v5136
  %6863 = vmatpush1.bf16.msra.mxu0 %v5135
  %6864 = vmatprep.subr.bf16.mxu0 %v5132
  %6865 = vmatpush1.bf16.msra.mxu0 %v5131
  %6866 = vmatprep.subr.bf16.mxu0 %v5128
  %6867 = vmatpush1.bf16.msra.mxu0 %v5127
  %6868 = vmatprep.subr.bf16.mxu0 %v5124
  %6869 = vmatpush1.bf16.msra.mxu0 %v5123
  %6870 = vmatprep.subr.bf16.mxu0 %v5120
  %6871 = vmatpush1.bf16.msra.mxu0 %v5119
  %6872 = vmatprep.subr.bf16.mxu0 %v5116
  %6873 = vmatpush1.bf16.msra.mxu0 %v5115
  %6874 = vmatprep.subr.bf16.mxu0 %v5112
  %6875 = vmatpush1.bf16.msra.mxu0 %v5111
  %6876 = vmatprep.subr.bf16.mxu0 %v5172
  %6877 = vmatpush2.bf16.msra.mxu0 %v5171
  %6878 = vmatprep.subr.bf16.mxu0 %v5168
  %6879 = vmatpush2.bf16.msra.mxu0 %v5167
  %6880 = vmatprep.subr.bf16.mxu0 %v5164
  %6881 = vmatpush2.bf16.msra.mxu0 %v5163
  %6882 = vmatprep.subr.bf16.mxu0 %v5160
  %6883 = vmatpush2.bf16.msra.mxu0 %v5159
  %6884 = vmatprep.subr.bf16.mxu0 %v5156
  %6885 = vmatpush2.bf16.msra.mxu0 %v5155
  %6886 = vmatprep.subr.bf16.mxu0 %v5152
  %6887 = vmatpush2.bf16.msra.mxu0 %v5151
  %6888 = vmatprep.subr.bf16.mxu0 %v5148
  %6889 = vmatpush2.bf16.msra.mxu0 %v5147
  %6890 = vmatprep.subr.bf16.mxu0 %v5144
  %6891 = vmatpush2.bf16.msra.mxu0 %v5143
  %6892 = vmatprep.mubr.bf16.mxu0 %v1170
  %6893 = vmatmul.mubr.bf16.gmra.mxu0 %v1169
  %v6894 = vpop.f32.mrf.mxu0
  %v6895 = vadd.f32 %v6854, %v6894
  %v6896 = vpop.f32.mrf.mxu0
  %v6897 = vadd.f32 %v6856, %v6896
  %v6898 = vpop.f32.mrf.mxu0
  %v6899 = vpop.f32.mrf.mxu0
  %6900 = vdwg.mxu0
  %6901 = vmatprep.subr.bf16.mxu0 %v5204
  %6902 = vmatpush1.bf16.msra.mxu0 %v5203
  %6903 = vmatprep.subr.bf16.mxu0 %v5200
  %6904 = vmatpush1.bf16.msra.mxu0 %v5199
  %6905 = vmatprep.subr.bf16.mxu0 %v5196
  %6906 = vmatpush1.bf16.msra.mxu0 %v5195
  %6907 = vmatprep.subr.bf16.mxu0 %v5192
  %6908 = vmatpush1.bf16.msra.mxu0 %v5191
  %6909 = vmatprep.subr.bf16.mxu0 %v5188
  %6910 = vmatpush1.bf16.msra.mxu0 %v5187
  %6911 = vmatprep.subr.bf16.mxu0 %v5184
  %6912 = vmatpush1.bf16.msra.mxu0 %v5183
  %6913 = vmatprep.subr.bf16.mxu0 %v5180
  %6914 = vmatpush1.bf16.msra.mxu0 %v5179
  %6915 = vmatprep.subr.bf16.mxu0 %v5176
  %6916 = vmatpush1.bf16.msra.mxu0 %v5175
  %6917 = vmatprep.subr.bf16.mxu0 %v5236
  %6918 = vmatpush2.bf16.msra.mxu0 %v5235
  %6919 = vmatprep.subr.bf16.mxu0 %v5232
  %6920 = vmatpush2.bf16.msra.mxu0 %v5231
  %6921 = vmatprep.subr.bf16.mxu0 %v5228
  %6922 = vmatpush2.bf16.msra.mxu0 %v5227
  %6923 = vmatprep.subr.bf16.mxu0 %v5224
  %6924 = vmatpush2.bf16.msra.mxu0 %v5223
  %6925 = vmatprep.subr.bf16.mxu0 %v5220
  %6926 = vmatpush2.bf16.msra.mxu0 %v5219
  %6927 = vmatprep.subr.bf16.mxu0 %v5216
  %6928 = vmatpush2.bf16.msra.mxu0 %v5215
  %6929 = vmatprep.subr.bf16.mxu0 %v5212
  %6930 = vmatpush2.bf16.msra.mxu0 %v5211
  %6931 = vmatprep.subr.bf16.mxu0 %v5208
  %6932 = vmatpush2.bf16.msra.mxu0 %v5207
  %6933 = vmatprep.mubr.bf16.mxu0 %v1172
  %6934 = vmatmul.mubr.bf16.gmra.mxu0 %v1171
  %v6935 = vpop.f32.mrf.mxu0
  %v6936 = vadd.f32 %v6895, %v6935
  %v6937 = vpop.f32.mrf.mxu0
  %v6938 = vadd.f32 %v6897, %v6937
  %v6939 = vpop.f32.mrf.mxu0
  %v6940 = vpop.f32.mrf.mxu0
  %6941 = vdwg.mxu0
  %6942 = vmatprep.subr.bf16.mxu0 %v5268
  %6943 = vmatpush1.bf16.msra.mxu0 %v5267
  %6944 = vmatprep.subr.bf16.mxu0 %v5264
  %6945 = vmatpush1.bf16.msra.mxu0 %v5263
  %6946 = vmatprep.subr.bf16.mxu0 %v5260
  %6947 = vmatpush1.bf16.msra.mxu0 %v5259
  %6948 = vmatprep.subr.bf16.mxu0 %v5256
  %6949 = vmatpush1.bf16.msra.mxu0 %v5255
  %6950 = vmatprep.subr.bf16.mxu0 %v5252
  %6951 = vmatpush1.bf16.msra.mxu0 %v5251
  %6952 = vmatprep.subr.bf16.mxu0 %v5248
  %6953 = vmatpush1.bf16.msra.mxu0 %v5247
  %6954 = vmatprep.subr.bf16.mxu0 %v5244
  %6955 = vmatpush1.bf16.msra.mxu0 %v5243
  %6956 = vmatprep.subr.bf16.mxu0 %v5240
  %6957 = vmatpush1.bf16.msra.mxu0 %v5239
  %6958 = vmatprep.subr.bf16.mxu0 %v5300
  %6959 = vmatpush2.bf16.msra.mxu0 %v5299
  %6960 = vmatprep.subr.bf16.mxu0 %v5296
  %6961 = vmatpush2.bf16.msra.mxu0 %v5295
  %6962 = vmatprep.subr.bf16.mxu0 %v5292
  %6963 = vmatpush2.bf16.msra.mxu0 %v5291
  %6964 = vmatprep.subr.bf16.mxu0 %v5288
  %6965 = vmatpush2.bf16.msra.mxu0 %v5287
  %6966 = vmatprep.subr.bf16.mxu0 %v5284
  %6967 = vmatpush2.bf16.msra.mxu0 %v5283
  %6968 = vmatprep.subr.bf16.mxu0 %v5280
  %6969 = vmatpush2.bf16.msra.mxu0 %v5279
  %6970 = vmatprep.subr.bf16.mxu0 %v5276
  %6971 = vmatpush2.bf16.msra.mxu0 %v5275
  %6972 = vmatprep.subr.bf16.mxu0 %v5272
  %6973 = vmatpush2.bf16.msra.mxu0 %v5271
  %6974 = vmatprep.mubr.bf16.mxu0 %v1174
  %6975 = vmatmul.mubr.bf16.gmra.mxu0 %v1173
  %v6976 = vpop.f32.mrf.mxu0
  %v6977 = vadd.f32 %v6936, %v6976
  %v6978 = vpop.f32.mrf.mxu0
  %v6979 = vadd.f32 %v6938, %v6978
  %v6980 = vpop.f32.mrf.mxu0
  %v6981 = vpop.f32.mrf.mxu0
  %6982 = vdwg.mxu0
  %6983 = vmatprep.subr.bf16.mxu0 %v4310
  %6984 = vmatpush1.bf16.msra.mxu0 %v4309
  %6985 = vmatprep.subr.bf16.mxu0 %v4306
  %6986 = vmatpush1.bf16.msra.mxu0 %v4305
  %6987 = vmatprep.subr.bf16.mxu0 %v4302
  %6988 = vmatpush1.bf16.msra.mxu0 %v4301
  %6989 = vmatprep.subr.bf16.mxu0 %v4298
  %6990 = vmatpush1.bf16.msra.mxu0 %v4297
  %6991 = vmatprep.subr.bf16.mxu0 %v4294
  %6992 = vmatpush1.bf16.msra.mxu0 %v4293
  %6993 = vmatprep.subr.bf16.mxu0 %v4290
  %6994 = vmatpush1.bf16.msra.mxu0 %v4289
  %6995 = vmatprep.subr.bf16.mxu0 %v4286
  %6996 = vmatpush1.bf16.msra.mxu0 %v4285
  %6997 = vmatprep.subr.bf16.mxu0 %v4282
  %6998 = vmatpush1.bf16.msra.mxu0 %v4281
  %6999 = vmatprep.subr.bf16.mxu0 %v4342
  %7000 = vmatpush2.bf16.msra.mxu0 %v4341
  %7001 = vmatprep.subr.bf16.mxu0 %v4338
  %7002 = vmatpush2.bf16.msra.mxu0 %v4337
  %7003 = vmatprep.subr.bf16.mxu0 %v4334
  %7004 = vmatpush2.bf16.msra.mxu0 %v4333
  %7005 = vmatprep.subr.bf16.mxu0 %v4330
  %7006 = vmatpush2.bf16.msra.mxu0 %v4329
  %7007 = vmatprep.subr.bf16.mxu0 %v4326
  %7008 = vmatpush2.bf16.msra.mxu0 %v4325
  %7009 = vmatprep.subr.bf16.mxu0 %v4322
  %7010 = vmatpush2.bf16.msra.mxu0 %v4321
  %7011 = vmatprep.subr.bf16.mxu0 %v4318
  %7012 = vmatpush2.bf16.msra.mxu0 %v4317
  %7013 = vmatprep.subr.bf16.mxu0 %v4314
  %7014 = vmatpush2.bf16.msra.mxu0 %v4313
  %7015 = vmatprep.mubr.bf16.mxu0 %v1144
  %7016 = vmatmul.mubr.bf16.gmra.mxu0 %v1143
  %v7017 = vpop.f32.mrf.mxu0
  %v7018 = vadd.f32 %v1086, %v7017
  %v7019 = vpop.f32.mrf.mxu0
  %v7020 = vadd.f32 %v1090, %v7019
  %v7021 = vpop.f32.mrf.mxu0
  %v7022 = vpop.f32.mrf.mxu0
  %7023 = vdwg.mxu0
  %7024 = vmatprep.subr.bf16.mxu0 %v4374
  %7025 = vmatpush1.bf16.msra.mxu0 %v4373
  %7026 = vmatprep.subr.bf16.mxu0 %v4370
  %7027 = vmatpush1.bf16.msra.mxu0 %v4369
  %7028 = vmatprep.subr.bf16.mxu0 %v4366
  %7029 = vmatpush1.bf16.msra.mxu0 %v4365
  %7030 = vmatprep.subr.bf16.mxu0 %v4362
  %7031 = vmatpush1.bf16.msra.mxu0 %v4361
  %7032 = vmatprep.subr.bf16.mxu0 %v4358
  %7033 = vmatpush1.bf16.msra.mxu0 %v4357
  %7034 = vmatprep.subr.bf16.mxu0 %v4354
  %7035 = vmatpush1.bf16.msra.mxu0 %v4353
  %7036 = vmatprep.subr.bf16.mxu0 %v4350
  %7037 = vmatpush1.bf16.msra.mxu0 %v4349
  %7038 = vmatprep.subr.bf16.mxu0 %v4346
  %7039 = vmatpush1.bf16.msra.mxu0 %v4345
  %7040 = vmatprep.subr.bf16.mxu0 %v4406
  %7041 = vmatpush2.bf16.msra.mxu0 %v4405
  %7042 = vmatprep.subr.bf16.mxu0 %v4402
  %7043 = vmatpush2.bf16.msra.mxu0 %v4401
  %7044 = vmatprep.subr.bf16.mxu0 %v4398
  %7045 = vmatpush2.bf16.msra.mxu0 %v4397
  %7046 = vmatprep.subr.bf16.mxu0 %v4394
  %7047 = vmatpush2.bf16.msra.mxu0 %v4393
  %7048 = vmatprep.subr.bf16.mxu0 %v4390
  %7049 = vmatpush2.bf16.msra.mxu0 %v4389
  %7050 = vmatprep.subr.bf16.mxu0 %v4386
  %7051 = vmatpush2.bf16.msra.mxu0 %v4385
  %7052 = vmatprep.subr.bf16.mxu0 %v4382
  %7053 = vmatpush2.bf16.msra.mxu0 %v4381
  %7054 = vmatprep.subr.bf16.mxu0 %v4378
  %7055 = vmatpush2.bf16.msra.mxu0 %v4377
  %7056 = vmatprep.mubr.bf16.mxu0 %v1146
  %7057 = vmatmul.mubr.bf16.gmra.mxu0 %v1145
  %v7058 = vpop.f32.mrf.mxu0
  %v7059 = vadd.f32 %v7018, %v7058
  %v7060 = vpop.f32.mrf.mxu0
  %v7061 = vadd.f32 %v7020, %v7060
  %v7062 = vpop.f32.mrf.mxu0
  %v7063 = vpop.f32.mrf.mxu0
  %7064 = vdwg.mxu0
  %7065 = vmatprep.subr.bf16.mxu0 %v4438
  %7066 = vmatpush1.bf16.msra.mxu0 %v4437
  %7067 = vmatprep.subr.bf16.mxu0 %v4434
  %7068 = vmatpush1.bf16.msra.mxu0 %v4433
  %7069 = vmatprep.subr.bf16.mxu0 %v4430
  %7070 = vmatpush1.bf16.msra.mxu0 %v4429
  %7071 = vmatprep.subr.bf16.mxu0 %v4426
  %7072 = vmatpush1.bf16.msra.mxu0 %v4425
  %7073 = vmatprep.subr.bf16.mxu0 %v4422
  %7074 = vmatpush1.bf16.msra.mxu0 %v4421
  %7075 = vmatprep.subr.bf16.mxu0 %v4418
  %7076 = vmatpush1.bf16.msra.mxu0 %v4417
  %7077 = vmatprep.subr.bf16.mxu0 %v4414
  %7078 = vmatpush1.bf16.msra.mxu0 %v4413
  %7079 = vmatprep.subr.bf16.mxu0 %v4410
  %7080 = vmatpush1.bf16.msra.mxu0 %v4409
  %7081 = vmatprep.subr.bf16.mxu0 %v4470
  %7082 = vmatpush2.bf16.msra.mxu0 %v4469
  %7083 = vmatprep.subr.bf16.mxu0 %v4466
  %7084 = vmatpush2.bf16.msra.mxu0 %v4465
  %7085 = vmatprep.subr.bf16.mxu0 %v4462
  %7086 = vmatpush2.bf16.msra.mxu0 %v4461
  %7087 = vmatprep.subr.bf16.mxu0 %v4458
  %7088 = vmatpush2.bf16.msra.mxu0 %v4457
  %7089 = vmatprep.subr.bf16.mxu0 %v4454
  %7090 = vmatpush2.bf16.msra.mxu0 %v4453
  %7091 = vmatprep.subr.bf16.mxu0 %v4450
  %7092 = vmatpush2.bf16.msra.mxu0 %v4449
  %7093 = vmatprep.subr.bf16.mxu0 %v4446
  %7094 = vmatpush2.bf16.msra.mxu0 %v4445
  %7095 = vmatprep.subr.bf16.mxu0 %v4442
  %7096 = vmatpush2.bf16.msra.mxu0 %v4441
  %7097 = vmatprep.mubr.bf16.mxu0 %v1148
  %7098 = vmatmul.mubr.bf16.gmra.mxu0 %v1147
  %v7099 = vpop.f32.mrf.mxu0
  %v7100 = vadd.f32 %v7059, %v7099
  %v7101 = vpop.f32.mrf.mxu0
  %v7102 = vadd.f32 %v7061, %v7101
  %v7103 = vpop.f32.mrf.mxu0
  %v7104 = vpop.f32.mrf.mxu0
  %7105 = vdwg.mxu0
  %7106 = vmatprep.subr.bf16.mxu0 %v4502
  %7107 = vmatpush1.bf16.msra.mxu0 %v4501
  %7108 = vmatprep.subr.bf16.mxu0 %v4498
  %7109 = vmatpush1.bf16.msra.mxu0 %v4497
  %7110 = vmatprep.subr.bf16.mxu0 %v4494
  %7111 = vmatpush1.bf16.msra.mxu0 %v4493
  %7112 = vmatprep.subr.bf16.mxu0 %v4490
  %7113 = vmatpush1.bf16.msra.mxu0 %v4489
  %7114 = vmatprep.subr.bf16.mxu0 %v4486
  %7115 = vmatpush1.bf16.msra.mxu0 %v4485
  %7116 = vmatprep.subr.bf16.mxu0 %v4482
  %7117 = vmatpush1.bf16.msra.mxu0 %v4481
  %7118 = vmatprep.subr.bf16.mxu0 %v4478
  %7119 = vmatpush1.bf16.msra.mxu0 %v4477
  %7120 = vmatprep.subr.bf16.mxu0 %v4474
  %7121 = vmatpush1.bf16.msra.mxu0 %v4473
  %7122 = vmatprep.subr.bf16.mxu0 %v4534
  %7123 = vmatpush2.bf16.msra.mxu0 %v4533
  %7124 = vmatprep.subr.bf16.mxu0 %v4530
  %7125 = vmatpush2.bf16.msra.mxu0 %v4529
  %7126 = vmatprep.subr.bf16.mxu0 %v4526
  %7127 = vmatpush2.bf16.msra.mxu0 %v4525
  %7128 = vmatprep.subr.bf16.mxu0 %v4522
  %7129 = vmatpush2.bf16.msra.mxu0 %v4521
  %7130 = vmatprep.subr.bf16.mxu0 %v4518
  %7131 = vmatpush2.bf16.msra.mxu0 %v4517
  %7132 = vmatprep.subr.bf16.mxu0 %v4514
  %7133 = vmatpush2.bf16.msra.mxu0 %v4513
  %7134 = vmatprep.subr.bf16.mxu0 %v4510
  %7135 = vmatpush2.bf16.msra.mxu0 %v4509
  %7136 = vmatprep.subr.bf16.mxu0 %v4506
  %7137 = vmatpush2.bf16.msra.mxu0 %v4505
  %7138 = vmatprep.mubr.bf16.mxu0 %v1150
  %7139 = vmatmul.mubr.bf16.gmra.mxu0 %v1149
  %v7140 = vpop.f32.mrf.mxu0
  %v7141 = vadd.f32 %v7100, %v7140
  %v7142 = vpop.f32.mrf.mxu0
  %v7143 = vadd.f32 %v7102, %v7142
  %v7144 = vpop.f32.mrf.mxu0
  %v7145 = vpop.f32.mrf.mxu0
  %7146 = vdwg.mxu0
  %7147 = vmatprep.subr.bf16.mxu0 %v4566
  %7148 = vmatpush1.bf16.msra.mxu0 %v4565
  %7149 = vmatprep.subr.bf16.mxu0 %v4562
  %7150 = vmatpush1.bf16.msra.mxu0 %v4561
  %7151 = vmatprep.subr.bf16.mxu0 %v4558
  %7152 = vmatpush1.bf16.msra.mxu0 %v4557
  %7153 = vmatprep.subr.bf16.mxu0 %v4554
  %7154 = vmatpush1.bf16.msra.mxu0 %v4553
  %7155 = vmatprep.subr.bf16.mxu0 %v4550
  %7156 = vmatpush1.bf16.msra.mxu0 %v4549
  %7157 = vmatprep.subr.bf16.mxu0 %v4546
  %7158 = vmatpush1.bf16.msra.mxu0 %v4545
  %7159 = vmatprep.subr.bf16.mxu0 %v4542
  %7160 = vmatpush1.bf16.msra.mxu0 %v4541
  %7161 = vmatprep.subr.bf16.mxu0 %v4538
  %7162 = vmatpush1.bf16.msra.mxu0 %v4537
  %7163 = vmatprep.subr.bf16.mxu0 %v4598
  %7164 = vmatpush2.bf16.msra.mxu0 %v4597
  %7165 = vmatprep.subr.bf16.mxu0 %v4594
  %7166 = vmatpush2.bf16.msra.mxu0 %v4593
  %7167 = vmatprep.subr.bf16.mxu0 %v4590
  %7168 = vmatpush2.bf16.msra.mxu0 %v4589
  %7169 = vmatprep.subr.bf16.mxu0 %v4586
  %7170 = vmatpush2.bf16.msra.mxu0 %v4585
  %7171 = vmatprep.subr.bf16.mxu0 %v4582
  %7172 = vmatpush2.bf16.msra.mxu0 %v4581
  %7173 = vmatprep.subr.bf16.mxu0 %v4578
  %7174 = vmatpush2.bf16.msra.mxu0 %v4577
  %7175 = vmatprep.subr.bf16.mxu0 %v4574
  %7176 = vmatpush2.bf16.msra.mxu0 %v4573
  %7177 = vmatprep.subr.bf16.mxu0 %v4570
  %7178 = vmatpush2.bf16.msra.mxu0 %v4569
  %7179 = vmatprep.mubr.bf16.mxu0 %v1152
  %7180 = vmatmul.mubr.bf16.gmra.mxu0 %v1151
  %v7181 = vpop.f32.mrf.mxu0
  %v7182 = vadd.f32 %v7141, %v7181
  %v7183 = vpop.f32.mrf.mxu0
  %v7184 = vadd.f32 %v7143, %v7183
  %v7185 = vpop.f32.mrf.mxu0
  %v7186 = vpop.f32.mrf.mxu0
  %7187 = vdwg.mxu0
  %7188 = vmatprep.subr.bf16.mxu0 %v4630
  %7189 = vmatpush1.bf16.msra.mxu0 %v4629
  %7190 = vmatprep.subr.bf16.mxu0 %v4626
  %7191 = vmatpush1.bf16.msra.mxu0 %v4625
  %7192 = vmatprep.subr.bf16.mxu0 %v4622
  %7193 = vmatpush1.bf16.msra.mxu0 %v4621
  %7194 = vmatprep.subr.bf16.mxu0 %v4618
  %7195 = vmatpush1.bf16.msra.mxu0 %v4617
  %7196 = vmatprep.subr.bf16.mxu0 %v4614
  %7197 = vmatpush1.bf16.msra.mxu0 %v4613
  %7198 = vmatprep.subr.bf16.mxu0 %v4610
  %7199 = vmatpush1.bf16.msra.mxu0 %v4609
  %7200 = vmatprep.subr.bf16.mxu0 %v4606
  %7201 = vmatpush1.bf16.msra.mxu0 %v4605
  %7202 = vmatprep.subr.bf16.mxu0 %v4602
  %7203 = vmatpush1.bf16.msra.mxu0 %v4601
  %7204 = vmatprep.subr.bf16.mxu0 %v4662
  %7205 = vmatpush2.bf16.msra.mxu0 %v4661
  %7206 = vmatprep.subr.bf16.mxu0 %v4658
  %7207 = vmatpush2.bf16.msra.mxu0 %v4657
  %7208 = vmatprep.subr.bf16.mxu0 %v4654
  %7209 = vmatpush2.bf16.msra.mxu0 %v4653
  %7210 = vmatprep.subr.bf16.mxu0 %v4650
  %7211 = vmatpush2.bf16.msra.mxu0 %v4649
  %7212 = vmatprep.subr.bf16.mxu0 %v4646
  %7213 = vmatpush2.bf16.msra.mxu0 %v4645
  %7214 = vmatprep.subr.bf16.mxu0 %v4642
  %7215 = vmatpush2.bf16.msra.mxu0 %v4641
  %7216 = vmatprep.subr.bf16.mxu0 %v4638
  %7217 = vmatpush2.bf16.msra.mxu0 %v4637
  %7218 = vmatprep.subr.bf16.mxu0 %v4634
  %7219 = vmatpush2.bf16.msra.mxu0 %v4633
  %7220 = vmatprep.mubr.bf16.mxu0 %v1154
  %7221 = vmatmul.mubr.bf16.gmra.mxu0 %v1153
  %v7222 = vpop.f32.mrf.mxu0
  %v7223 = vadd.f32 %v7182, %v7222
  %v7224 = vpop.f32.mrf.mxu0
  %v7225 = vadd.f32 %v7184, %v7224
  %v7226 = vpop.f32.mrf.mxu0
  %v7227 = vpop.f32.mrf.mxu0
  %7228 = vdwg.mxu0
  %7229 = vmatprep.subr.bf16.mxu0 %v4694
  %7230 = vmatpush1.bf16.msra.mxu0 %v4693
  %7231 = vmatprep.subr.bf16.mxu0 %v4690
  %7232 = vmatpush1.bf16.msra.mxu0 %v4689
  %7233 = vmatprep.subr.bf16.mxu0 %v4686
  %7234 = vmatpush1.bf16.msra.mxu0 %v4685
  %7235 = vmatprep.subr.bf16.mxu0 %v4682
  %7236 = vmatpush1.bf16.msra.mxu0 %v4681
  %7237 = vmatprep.subr.bf16.mxu0 %v4678
  %7238 = vmatpush1.bf16.msra.mxu0 %v4677
  %7239 = vmatprep.subr.bf16.mxu0 %v4674
  %7240 = vmatpush1.bf16.msra.mxu0 %v4673
  %7241 = vmatprep.subr.bf16.mxu0 %v4670
  %7242 = vmatpush1.bf16.msra.mxu0 %v4669
  %7243 = vmatprep.subr.bf16.mxu0 %v4666
  %7244 = vmatpush1.bf16.msra.mxu0 %v4665
  %7245 = vmatprep.subr.bf16.mxu0 %v4726
  %7246 = vmatpush2.bf16.msra.mxu0 %v4725
  %7247 = vmatprep.subr.bf16.mxu0 %v4722
  %7248 = vmatpush2.bf16.msra.mxu0 %v4721
  %7249 = vmatprep.subr.bf16.mxu0 %v4718
  %7250 = vmatpush2.bf16.msra.mxu0 %v4717
  %7251 = vmatprep.subr.bf16.mxu0 %v4714
  %7252 = vmatpush2.bf16.msra.mxu0 %v4713
  %7253 = vmatprep.subr.bf16.mxu0 %v4710
  %7254 = vmatpush2.bf16.msra.mxu0 %v4709
  %7255 = vmatprep.subr.bf16.mxu0 %v4706
  %7256 = vmatpush2.bf16.msra.mxu0 %v4705
  %7257 = vmatprep.subr.bf16.mxu0 %v4702
  %7258 = vmatpush2.bf16.msra.mxu0 %v4701
  %7259 = vmatprep.subr.bf16.mxu0 %v4698
  %7260 = vmatpush2.bf16.msra.mxu0 %v4697
  %7261 = vmatprep.mubr.bf16.mxu0 %v1156
  %7262 = vmatmul.mubr.bf16.gmra.mxu0 %v1155
  %v7263 = vpop.f32.mrf.mxu0
  %v7264 = vadd.f32 %v7223, %v7263
  %v7265 = vpop.f32.mrf.mxu0
  %v7266 = vadd.f32 %v7225, %v7265
  %v7267 = vpop.f32.mrf.mxu0
  %v7268 = vpop.f32.mrf.mxu0
  %7269 = vdwg.mxu0
  %7270 = vmatprep.subr.bf16.mxu0 %v4758
  %7271 = vmatpush1.bf16.msra.mxu0 %v4757
  %7272 = vmatprep.subr.bf16.mxu0 %v4754
  %7273 = vmatpush1.bf16.msra.mxu0 %v4753
  %7274 = vmatprep.subr.bf16.mxu0 %v4750
  %7275 = vmatpush1.bf16.msra.mxu0 %v4749
  %7276 = vmatprep.subr.bf16.mxu0 %v4746
  %7277 = vmatpush1.bf16.msra.mxu0 %v4745
  %7278 = vmatprep.subr.bf16.mxu0 %v4742
  %7279 = vmatpush1.bf16.msra.mxu0 %v4741
  %7280 = vmatprep.subr.bf16.mxu0 %v4738
  %7281 = vmatpush1.bf16.msra.mxu0 %v4737
  %7282 = vmatprep.subr.bf16.mxu0 %v4734
  %7283 = vmatpush1.bf16.msra.mxu0 %v4733
  %7284 = vmatprep.subr.bf16.mxu0 %v4730
  %7285 = vmatpush1.bf16.msra.mxu0 %v4729
  %7286 = vmatprep.subr.bf16.mxu0 %v4790
  %7287 = vmatpush2.bf16.msra.mxu0 %v4789
  %7288 = vmatprep.subr.bf16.mxu0 %v4786
  %7289 = vmatpush2.bf16.msra.mxu0 %v4785
  %7290 = vmatprep.subr.bf16.mxu0 %v4782
  %7291 = vmatpush2.bf16.msra.mxu0 %v4781
  %7292 = vmatprep.subr.bf16.mxu0 %v4778
  %7293 = vmatpush2.bf16.msra.mxu0 %v4777
  %7294 = vmatprep.subr.bf16.mxu0 %v4774
  %7295 = vmatpush2.bf16.msra.mxu0 %v4773
  %7296 = vmatprep.subr.bf16.mxu0 %v4770
  %7297 = vmatpush2.bf16.msra.mxu0 %v4769
  %7298 = vmatprep.subr.bf16.mxu0 %v4766
  %7299 = vmatpush2.bf16.msra.mxu0 %v4765
  %7300 = vmatprep.subr.bf16.mxu0 %v4762
  %7301 = vmatpush2.bf16.msra.mxu0 %v4761
  %7302 = vmatprep.mubr.bf16.mxu0 %v1158
  %7303 = vmatmul.mubr.bf16.gmra.mxu0 %v1157
  %v7304 = vpop.f32.mrf.mxu0
  %v7305 = vadd.f32 %v7264, %v7304
  %v7306 = vpop.f32.mrf.mxu0
  %v7307 = vadd.f32 %v7266, %v7306
  %v7308 = vpop.f32.mrf.mxu0
  %v7309 = vpop.f32.mrf.mxu0
  %7310 = vdwg.mxu0
  %7311 = vmatprep.subr.bf16.mxu0 %v4822
  %7312 = vmatpush1.bf16.msra.mxu0 %v4821
  %7313 = vmatprep.subr.bf16.mxu0 %v4818
  %7314 = vmatpush1.bf16.msra.mxu0 %v4817
  %7315 = vmatprep.subr.bf16.mxu0 %v4814
  %7316 = vmatpush1.bf16.msra.mxu0 %v4813
  %7317 = vmatprep.subr.bf16.mxu0 %v4810
  %7318 = vmatpush1.bf16.msra.mxu0 %v4809
  %7319 = vmatprep.subr.bf16.mxu0 %v4806
  %7320 = vmatpush1.bf16.msra.mxu0 %v4805
  %7321 = vmatprep.subr.bf16.mxu0 %v4802
  %7322 = vmatpush1.bf16.msra.mxu0 %v4801
  %7323 = vmatprep.subr.bf16.mxu0 %v4798
  %7324 = vmatpush1.bf16.msra.mxu0 %v4797
  %7325 = vmatprep.subr.bf16.mxu0 %v4794
  %7326 = vmatpush1.bf16.msra.mxu0 %v4793
  %7327 = vmatprep.subr.bf16.mxu0 %v4854
  %7328 = vmatpush2.bf16.msra.mxu0 %v4853
  %7329 = vmatprep.subr.bf16.mxu0 %v4850
  %7330 = vmatpush2.bf16.msra.mxu0 %v4849
  %7331 = vmatprep.subr.bf16.mxu0 %v4846
  %7332 = vmatpush2.bf16.msra.mxu0 %v4845
  %7333 = vmatprep.subr.bf16.mxu0 %v4842
  %7334 = vmatpush2.bf16.msra.mxu0 %v4841
  %7335 = vmatprep.subr.bf16.mxu0 %v4838
  %7336 = vmatpush2.bf16.msra.mxu0 %v4837
  %7337 = vmatprep.subr.bf16.mxu0 %v4834
  %7338 = vmatpush2.bf16.msra.mxu0 %v4833
  %7339 = vmatprep.subr.bf16.mxu0 %v4830
  %7340 = vmatpush2.bf16.msra.mxu0 %v4829
  %7341 = vmatprep.subr.bf16.mxu0 %v4826
  %7342 = vmatpush2.bf16.msra.mxu0 %v4825
  %7343 = vmatprep.mubr.bf16.mxu0 %v1160
  %7344 = vmatmul.mubr.bf16.gmra.mxu0 %v1159
  %v7345 = vpop.f32.mrf.mxu0
  %v7346 = vadd.f32 %v7305, %v7345
  %v7347 = vpop.f32.mrf.mxu0
  %v7348 = vadd.f32 %v7307, %v7347
  %v7349 = vpop.f32.mrf.mxu0
  %v7350 = vpop.f32.mrf.mxu0
  %7351 = vdwg.mxu0
  %7352 = vmatprep.subr.bf16.mxu0 %v4886
  %7353 = vmatpush1.bf16.msra.mxu0 %v4885
  %7354 = vmatprep.subr.bf16.mxu0 %v4882
  %7355 = vmatpush1.bf16.msra.mxu0 %v4881
  %7356 = vmatprep.subr.bf16.mxu0 %v4878
  %7357 = vmatpush1.bf16.msra.mxu0 %v4877
  %7358 = vmatprep.subr.bf16.mxu0 %v4874
  %7359 = vmatpush1.bf16.msra.mxu0 %v4873
  %7360 = vmatprep.subr.bf16.mxu0 %v4870
  %7361 = vmatpush1.bf16.msra.mxu0 %v4869
  %7362 = vmatprep.subr.bf16.mxu0 %v4866
  %7363 = vmatpush1.bf16.msra.mxu0 %v4865
  %7364 = vmatprep.subr.bf16.mxu0 %v4862
  %7365 = vmatpush1.bf16.msra.mxu0 %v4861
  %7366 = vmatprep.subr.bf16.mxu0 %v4858
  %7367 = vmatpush1.bf16.msra.mxu0 %v4857
  %7368 = vmatprep.subr.bf16.mxu0 %v4918
  %7369 = vmatpush2.bf16.msra.mxu0 %v4917
  %7370 = vmatprep.subr.bf16.mxu0 %v4914
  %7371 = vmatpush2.bf16.msra.mxu0 %v4913
  %7372 = vmatprep.subr.bf16.mxu0 %v4910
  %7373 = vmatpush2.bf16.msra.mxu0 %v4909
  %7374 = vmatprep.subr.bf16.mxu0 %v4906
  %7375 = vmatpush2.bf16.msra.mxu0 %v4905
  %7376 = vmatprep.subr.bf16.mxu0 %v4902
  %7377 = vmatpush2.bf16.msra.mxu0 %v4901
  %7378 = vmatprep.subr.bf16.mxu0 %v4898
  %7379 = vmatpush2.bf16.msra.mxu0 %v4897
  %7380 = vmatprep.subr.bf16.mxu0 %v4894
  %7381 = vmatpush2.bf16.msra.mxu0 %v4893
  %7382 = vmatprep.subr.bf16.mxu0 %v4890
  %7383 = vmatpush2.bf16.msra.mxu0 %v4889
  %7384 = vmatprep.mubr.bf16.mxu0 %v1162
  %7385 = vmatmul.mubr.bf16.gmra.mxu0 %v1161
  %v7386 = vpop.f32.mrf.mxu0
  %v7387 = vadd.f32 %v7346, %v7386
  %v7388 = vpop.f32.mrf.mxu0
  %v7389 = vadd.f32 %v7348, %v7388
  %v7390 = vpop.f32.mrf.mxu0
  %v7391 = vpop.f32.mrf.mxu0
  %7392 = vdwg.mxu0
  %7393 = vmatprep.subr.bf16.mxu0 %v4950
  %7394 = vmatpush1.bf16.msra.mxu0 %v4949
  %7395 = vmatprep.subr.bf16.mxu0 %v4946
  %7396 = vmatpush1.bf16.msra.mxu0 %v4945
  %7397 = vmatprep.subr.bf16.mxu0 %v4942
  %7398 = vmatpush1.bf16.msra.mxu0 %v4941
  %7399 = vmatprep.subr.bf16.mxu0 %v4938
  %7400 = vmatpush1.bf16.msra.mxu0 %v4937
  %7401 = vmatprep.subr.bf16.mxu0 %v4934
  %7402 = vmatpush1.bf16.msra.mxu0 %v4933
  %7403 = vmatprep.subr.bf16.mxu0 %v4930
  %7404 = vmatpush1.bf16.msra.mxu0 %v4929
  %7405 = vmatprep.subr.bf16.mxu0 %v4926
  %7406 = vmatpush1.bf16.msra.mxu0 %v4925
  %7407 = vmatprep.subr.bf16.mxu0 %v4922
  %7408 = vmatpush1.bf16.msra.mxu0 %v4921
  %7409 = vmatprep.subr.bf16.mxu0 %v4982
  %7410 = vmatpush2.bf16.msra.mxu0 %v4981
  %7411 = vmatprep.subr.bf16.mxu0 %v4978
  %7412 = vmatpush2.bf16.msra.mxu0 %v4977
  %7413 = vmatprep.subr.bf16.mxu0 %v4974
  %7414 = vmatpush2.bf16.msra.mxu0 %v4973
  %7415 = vmatprep.subr.bf16.mxu0 %v4970
  %7416 = vmatpush2.bf16.msra.mxu0 %v4969
  %7417 = vmatprep.subr.bf16.mxu0 %v4966
  %7418 = vmatpush2.bf16.msra.mxu0 %v4965
  %7419 = vmatprep.subr.bf16.mxu0 %v4962
  %7420 = vmatpush2.bf16.msra.mxu0 %v4961
  %7421 = vmatprep.subr.bf16.mxu0 %v4958
  %7422 = vmatpush2.bf16.msra.mxu0 %v4957
  %7423 = vmatprep.subr.bf16.mxu0 %v4954
  %7424 = vmatpush2.bf16.msra.mxu0 %v4953
  %7425 = vmatprep.mubr.bf16.mxu0 %v1164
  %7426 = vmatmul.mubr.bf16.gmra.mxu0 %v1163
  %v7427 = vpop.f32.mrf.mxu0
  %v7428 = vadd.f32 %v7387, %v7427
  %v7429 = vpop.f32.mrf.mxu0
  %v7430 = vadd.f32 %v7389, %v7429
  %v7431 = vpop.f32.mrf.mxu0
  %v7432 = vpop.f32.mrf.mxu0
  %7433 = vdwg.mxu0
  %7434 = vmatprep.subr.bf16.mxu0 %v5014
  %7435 = vmatpush1.bf16.msra.mxu0 %v5013
  %7436 = vmatprep.subr.bf16.mxu0 %v5010
  %7437 = vmatpush1.bf16.msra.mxu0 %v5009
  %7438 = vmatprep.subr.bf16.mxu0 %v5006
  %7439 = vmatpush1.bf16.msra.mxu0 %v5005
  %7440 = vmatprep.subr.bf16.mxu0 %v5002
  %7441 = vmatpush1.bf16.msra.mxu0 %v5001
  %7442 = vmatprep.subr.bf16.mxu0 %v4998
  %7443 = vmatpush1.bf16.msra.mxu0 %v4997
  %7444 = vmatprep.subr.bf16.mxu0 %v4994
  %7445 = vmatpush1.bf16.msra.mxu0 %v4993
  %7446 = vmatprep.subr.bf16.mxu0 %v4990
  %7447 = vmatpush1.bf16.msra.mxu0 %v4989
  %7448 = vmatprep.subr.bf16.mxu0 %v4986
  %7449 = vmatpush1.bf16.msra.mxu0 %v4985
  %7450 = vmatprep.subr.bf16.mxu0 %v5046
  %7451 = vmatpush2.bf16.msra.mxu0 %v5045
  %7452 = vmatprep.subr.bf16.mxu0 %v5042
  %7453 = vmatpush2.bf16.msra.mxu0 %v5041
  %7454 = vmatprep.subr.bf16.mxu0 %v5038
  %7455 = vmatpush2.bf16.msra.mxu0 %v5037
  %7456 = vmatprep.subr.bf16.mxu0 %v5034
  %7457 = vmatpush2.bf16.msra.mxu0 %v5033
  %7458 = vmatprep.subr.bf16.mxu0 %v5030
  %7459 = vmatpush2.bf16.msra.mxu0 %v5029
  %7460 = vmatprep.subr.bf16.mxu0 %v5026
  %7461 = vmatpush2.bf16.msra.mxu0 %v5025
  %7462 = vmatprep.subr.bf16.mxu0 %v5022
  %7463 = vmatpush2.bf16.msra.mxu0 %v5021
  %7464 = vmatprep.subr.bf16.mxu0 %v5018
  %7465 = vmatpush2.bf16.msra.mxu0 %v5017
  %7466 = vmatprep.mubr.bf16.mxu0 %v1166
  %7467 = vmatmul.mubr.bf16.gmra.mxu0 %v1165
  %v7468 = vpop.f32.mrf.mxu0
  %v7469 = vadd.f32 %v7428, %v7468
  %v7470 = vpop.f32.mrf.mxu0
  %v7471 = vadd.f32 %v7430, %v7470
  %v7472 = vpop.f32.mrf.mxu0
  %v7473 = vpop.f32.mrf.mxu0
  %7474 = vdwg.mxu0
  %7475 = vmatprep.subr.bf16.mxu0 %v5078
  %7476 = vmatpush1.bf16.msra.mxu0 %v5077
  %7477 = vmatprep.subr.bf16.mxu0 %v5074
  %7478 = vmatpush1.bf16.msra.mxu0 %v5073
  %7479 = vmatprep.subr.bf16.mxu0 %v5070
  %7480 = vmatpush1.bf16.msra.mxu0 %v5069
  %7481 = vmatprep.subr.bf16.mxu0 %v5066
  %7482 = vmatpush1.bf16.msra.mxu0 %v5065
  %7483 = vmatprep.subr.bf16.mxu0 %v5062
  %7484 = vmatpush1.bf16.msra.mxu0 %v5061
  %7485 = vmatprep.subr.bf16.mxu0 %v5058
  %7486 = vmatpush1.bf16.msra.mxu0 %v5057
  %7487 = vmatprep.subr.bf16.mxu0 %v5054
  %7488 = vmatpush1.bf16.msra.mxu0 %v5053
  %7489 = vmatprep.subr.bf16.mxu0 %v5050
  %7490 = vmatpush1.bf16.msra.mxu0 %v5049
  %7491 = vmatprep.subr.bf16.mxu0 %v5110
  %7492 = vmatpush2.bf16.msra.mxu0 %v5109
  %7493 = vmatprep.subr.bf16.mxu0 %v5106
  %7494 = vmatpush2.bf16.msra.mxu0 %v5105
  %7495 = vmatprep.subr.bf16.mxu0 %v5102
  %7496 = vmatpush2.bf16.msra.mxu0 %v5101
  %7497 = vmatprep.subr.bf16.mxu0 %v5098
  %7498 = vmatpush2.bf16.msra.mxu0 %v5097
  %7499 = vmatprep.subr.bf16.mxu0 %v5094
  %7500 = vmatpush2.bf16.msra.mxu0 %v5093
  %7501 = vmatprep.subr.bf16.mxu0 %v5090
  %7502 = vmatpush2.bf16.msra.mxu0 %v5089
  %7503 = vmatprep.subr.bf16.mxu0 %v5086
  %7504 = vmatpush2.bf16.msra.mxu0 %v5085
  %7505 = vmatprep.subr.bf16.mxu0 %v5082
  %7506 = vmatpush2.bf16.msra.mxu0 %v5081
  %7507 = vmatprep.mubr.bf16.mxu0 %v1168
  %7508 = vmatmul.mubr.bf16.gmra.mxu0 %v1167
  %v7509 = vpop.f32.mrf.mxu0
  %v7510 = vadd.f32 %v7469, %v7509
  %v7511 = vpop.f32.mrf.mxu0
  %v7512 = vadd.f32 %v7471, %v7511
  %v7513 = vpop.f32.mrf.mxu0
  %v7514 = vpop.f32.mrf.mxu0
  %7515 = vdwg.mxu0
  %7516 = vmatprep.subr.bf16.mxu0 %v5142
  %7517 = vmatpush1.bf16.msra.mxu0 %v5141
  %7518 = vmatprep.subr.bf16.mxu0 %v5138
  %7519 = vmatpush1.bf16.msra.mxu0 %v5137
  %7520 = vmatprep.subr.bf16.mxu0 %v5134
  %7521 = vmatpush1.bf16.msra.mxu0 %v5133
  %7522 = vmatprep.subr.bf16.mxu0 %v5130
  %7523 = vmatpush1.bf16.msra.mxu0 %v5129
  %7524 = vmatprep.subr.bf16.mxu0 %v5126
  %7525 = vmatpush1.bf16.msra.mxu0 %v5125
  %7526 = vmatprep.subr.bf16.mxu0 %v5122
  %7527 = vmatpush1.bf16.msra.mxu0 %v5121
  %7528 = vmatprep.subr.bf16.mxu0 %v5118
  %7529 = vmatpush1.bf16.msra.mxu0 %v5117
  %7530 = vmatprep.subr.bf16.mxu0 %v5114
  %7531 = vmatpush1.bf16.msra.mxu0 %v5113
  %7532 = vmatprep.subr.bf16.mxu0 %v5174
  %7533 = vmatpush2.bf16.msra.mxu0 %v5173
  %7534 = vmatprep.subr.bf16.mxu0 %v5170
  %7535 = vmatpush2.bf16.msra.mxu0 %v5169
  %7536 = vmatprep.subr.bf16.mxu0 %v5166
  %7537 = vmatpush2.bf16.msra.mxu0 %v5165
  %7538 = vmatprep.subr.bf16.mxu0 %v5162
  %7539 = vmatpush2.bf16.msra.mxu0 %v5161
  %7540 = vmatprep.subr.bf16.mxu0 %v5158
  %7541 = vmatpush2.bf16.msra.mxu0 %v5157
  %7542 = vmatprep.subr.bf16.mxu0 %v5154
  %7543 = vmatpush2.bf16.msra.mxu0 %v5153
  %7544 = vmatprep.subr.bf16.mxu0 %v5150
  %7545 = vmatpush2.bf16.msra.mxu0 %v5149
  %7546 = vmatprep.subr.bf16.mxu0 %v5146
  %7547 = vmatpush2.bf16.msra.mxu0 %v5145
  %7548 = vmatprep.mubr.bf16.mxu0 %v1170
  %7549 = vmatmul.mubr.bf16.gmra.mxu0 %v1169
  %v7550 = vpop.f32.mrf.mxu0
  %v7551 = vadd.f32 %v7510, %v7550
  %v7552 = vpop.f32.mrf.mxu0
  %v7553 = vadd.f32 %v7512, %v7552
  %v7554 = vpop.f32.mrf.mxu0
  %v7555 = vpop.f32.mrf.mxu0
  %7556 = vdwg.mxu0
  %7557 = vmatprep.subr.bf16.mxu0 %v5206
  %7558 = vmatpush1.bf16.msra.mxu0 %v5205
  %7559 = vmatprep.subr.bf16.mxu0 %v5202
  %7560 = vmatpush1.bf16.msra.mxu0 %v5201
  %7561 = vmatprep.subr.bf16.mxu0 %v5198
  %7562 = vmatpush1.bf16.msra.mxu0 %v5197
  %7563 = vmatprep.subr.bf16.mxu0 %v5194
  %7564 = vmatpush1.bf16.msra.mxu0 %v5193
  %7565 = vmatprep.subr.bf16.mxu0 %v5190
  %7566 = vmatpush1.bf16.msra.mxu0 %v5189
  %7567 = vmatprep.subr.bf16.mxu0 %v5186
  %7568 = vmatpush1.bf16.msra.mxu0 %v5185
  %7569 = vmatprep.subr.bf16.mxu0 %v5182
  %7570 = vmatpush1.bf16.msra.mxu0 %v5181
  %7571 = vmatprep.subr.bf16.mxu0 %v5178
  %7572 = vmatpush1.bf16.msra.mxu0 %v5177
  %7573 = vmatprep.subr.bf16.mxu0 %v5238
  %7574 = vmatpush2.bf16.msra.mxu0 %v5237
  %7575 = vmatprep.subr.bf16.mxu0 %v5234
  %7576 = vmatpush2.bf16.msra.mxu0 %v5233
  %7577 = vmatprep.subr.bf16.mxu0 %v5230
  %7578 = vmatpush2.bf16.msra.mxu0 %v5229
  %7579 = vmatprep.subr.bf16.mxu0 %v5226
  %7580 = vmatpush2.bf16.msra.mxu0 %v5225
  %7581 = vmatprep.subr.bf16.mxu0 %v5222
  %7582 = vmatpush2.bf16.msra.mxu0 %v5221
  %7583 = vmatprep.subr.bf16.mxu0 %v5218
  %7584 = vmatpush2.bf16.msra.mxu0 %v5217
  %7585 = vmatprep.subr.bf16.mxu0 %v5214
  %7586 = vmatpush2.bf16.msra.mxu0 %v5213
  %7587 = vmatprep.subr.bf16.mxu0 %v5210
  %7588 = vmatpush2.bf16.msra.mxu0 %v5209
  %7589 = vmatprep.mubr.bf16.mxu0 %v1172
  %7590 = vmatmul.mubr.bf16.gmra.mxu0 %v1171
  %v7591 = vpop.f32.mrf.mxu0
  %v7592 = vadd.f32 %v7551, %v7591
  %v7593 = vpop.f32.mrf.mxu0
  %v7594 = vadd.f32 %v7553, %v7593
  %v7595 = vpop.f32.mrf.mxu0
  %v7596 = vpop.f32.mrf.mxu0
  %7597 = vdwg.mxu0
  %7598 = vmatprep.subr.bf16.mxu0 %v5270
  %7599 = vmatpush1.bf16.msra.mxu0 %v5269
  %7600 = vmatprep.subr.bf16.mxu0 %v5266
  %7601 = vmatpush1.bf16.msra.mxu0 %v5265
  %7602 = vmatprep.subr.bf16.mxu0 %v5262
  %7603 = vmatpush1.bf16.msra.mxu0 %v5261
  %7604 = vmatprep.subr.bf16.mxu0 %v5258
  %7605 = vmatpush1.bf16.msra.mxu0 %v5257
  %7606 = vmatprep.subr.bf16.mxu0 %v5254
  %7607 = vmatpush1.bf16.msra.mxu0 %v5253
  %7608 = vmatprep.subr.bf16.mxu0 %v5250
  %7609 = vmatpush1.bf16.msra.mxu0 %v5249
  %7610 = vmatprep.subr.bf16.mxu0 %v5246
  %7611 = vmatpush1.bf16.msra.mxu0 %v5245
  %7612 = vmatprep.subr.bf16.mxu0 %v5242
  %7613 = vmatpush1.bf16.msra.mxu0 %v5241
  %7614 = vmatprep.subr.bf16.mxu0 %v5302
  %7615 = vmatpush2.bf16.msra.mxu0 %v5301
  %7616 = vmatprep.subr.bf16.mxu0 %v5298
  %7617 = vmatpush2.bf16.msra.mxu0 %v5297
  %7618 = vmatprep.subr.bf16.mxu0 %v5294
  %7619 = vmatpush2.bf16.msra.mxu0 %v5293
  %7620 = vmatprep.subr.bf16.mxu0 %v5290
  %7621 = vmatpush2.bf16.msra.mxu0 %v5289
  %7622 = vmatprep.subr.bf16.mxu0 %v5286
  %7623 = vmatpush2.bf16.msra.mxu0 %v5285
  %7624 = vmatprep.subr.bf16.mxu0 %v5282
  %7625 = vmatpush2.bf16.msra.mxu0 %v5281
  %7626 = vmatprep.subr.bf16.mxu0 %v5278
  %7627 = vmatpush2.bf16.msra.mxu0 %v5277
  %7628 = vmatprep.subr.bf16.mxu0 %v5274
  %7629 = vmatpush2.bf16.msra.mxu0 %v5273
  %7630 = vmatprep.mubr.bf16.mxu0 %v1174
  %7631 = vmatmul.mubr.bf16.gmra.mxu0 %v1173
  %v7632 = vpop.f32.mrf.mxu0
  %v7633 = vadd.f32 %v7592, %v7632
  %v7634 = vpop.f32.mrf.mxu0
  %v7635 = vadd.f32 %v7594, %v7634
  %v7636 = vpop.f32.mrf.mxu0
  %v7637 = vpop.f32.mrf.mxu0
  %7638 = vdwg.mxu0
  %v7639 = vmax.f32 %v6977, 0.0
  %v7640 = vmax.f32 %v6979, 0.0
  %v7641 = vmax.f32 %v7633, 0.0
  %v7642 = vmax.f32 %v7635, 0.0
  %v7643 = vpack.c.bf16 %v7639, %v7639
  %v7644 = vpack.c.bf16 %v7640, %v7640
  %v7645 = vpack.c.bf16 %v7641, %v7641
  %v7646 = vpack.c.bf16 %v7642, %v7642
  %v7647 = vld [vmem:[%s3] sm:$0xf]
  %v7648 = vld [vmem:[%s3 + $0x4] sm:$0xf]
  %v7649 = vld [vmem:[%s3 + $0x8] sm:$0xf]
  %v7650 = vld [vmem:[%s3 + $0xc] sm:$0xf]
  %v7651 = vld [vmem:[%s3 + $0x10] sm:$0xf]
  %v7652 = vld [vmem:[%s3 + $0x14] sm:$0xf]
  %v7653 = vld [vmem:[%s3 + $0x18] sm:$0xf]
  %v7654 = vld [vmem:[%s3 + $0x1c] sm:$0xf]
  %v7655 = vld [vmem:[%s3 + $0x20] sm:$0xf]
  %v7656 = vld [vmem:[%s3 + $0x24] sm:$0xf]
  %v7657 = vld [vmem:[%s3 + $0x28] sm:$0xf]
  %v7658 = vld [vmem:[%s3 + $0x2c] sm:$0xf]
  %v7659 = vld [vmem:[%s3 + $0x30] sm:$0xf]
  %v7660 = vld [vmem:[%s3 + $0x34] sm:$0xf]
  %v7661 = vld [vmem:[%s3 + $0x38] sm:$0xf]
  %v7662 = vld [vmem:[%s3 + $0x3c] sm:$0xf]
  %v7663 = vld [vmem:[%s3 + $0x40] sm:$0xf]
  %v7664 = vld [vmem:[%s3 + $0x44] sm:$0xf]
  %v7665 = vld [vmem:[%s3 + $0x48] sm:$0xf]
  %v7666 = vld [vmem:[%s3 + $0x4c] sm:$0xf]
  %v7667 = vld [vmem:[%s3 + $0x50] sm:$0xf]
  %v7668 = vld [vmem:[%s3 + $0x54] sm:$0xf]
  %v7669 = vld [vmem:[%s3 + $0x58] sm:$0xf]
  %v7670 = vld [vmem:[%s3 + $0x5c] sm:$0xf]
  %v7671 = vld [vmem:[%s3 + $0x60] sm:$0xf]
  %v7672 = vld [vmem:[%s3 + $0x64] sm:$0xf]
  %v7673 = vld [vmem:[%s3 + $0x68] sm:$0xf]
  %v7674 = vld [vmem:[%s3 + $0x6c] sm:$0xf]
  %v7675 = vld [vmem:[%s3 + $0x70] sm:$0xf]
  %v7676 = vld [vmem:[%s3 + $0x74] sm:$0xf]
  %v7677 = vld [vmem:[%s3 + $0x78] sm:$0xf]
  %v7678 = vld [vmem:[%s3 + $0x7c] sm:$0xf]
  %v7679 = vld [vmem:[%s3 + $0x80] sm:$0xf]
  %v7680 = vld [vmem:[%s3 + $0x84] sm:$0xf]
  %v7681 = vld [vmem:[%s3 + $0x88] sm:$0xf]
  %v7682 = vld [vmem:[%s3 + $0x8c] sm:$0xf]
  %v7683 = vld [vmem:[%s3 + $0x90] sm:$0xf]
  %v7684 = vld [vmem:[%s3 + $0x94] sm:$0xf]
  %v7685 = vld [vmem:[%s3 + $0x98] sm:$0xf]
  %v7686 = vld [vmem:[%s3 + $0x9c] sm:$0xf]
  %v7687 = vld [vmem:[%s3 + $0xa0] sm:$0xf]
  %v7688 = vld [vmem:[%s3 + $0xa4] sm:$0xf]
  %v7689 = vld [vmem:[%s3 + $0xa8] sm:$0xf]
  %v7690 = vld [vmem:[%s3 + $0xac] sm:$0xf]
  %v7691 = vld [vmem:[%s3 + $0xb0] sm:$0xf]
  %v7692 = vld [vmem:[%s3 + $0xb4] sm:$0xf]
  %v7693 = vld [vmem:[%s3 + $0xb8] sm:$0xf]
  %v7694 = vld [vmem:[%s3 + $0xbc] sm:$0xf]
  %v7695 = vld [vmem:[%s3 + $0xc0] sm:$0xf]
  %v7696 = vld [vmem:[%s3 + $0xc4] sm:$0xf]
  %v7697 = vld [vmem:[%s3 + $0xc8] sm:$0xf]
  %v7698 = vld [vmem:[%s3 + $0xcc] sm:$0xf]
  %v7699 = vld [vmem:[%s3 + $0xd0] sm:$0xf]
  %v7700 = vld [vmem:[%s3 + $0xd4] sm:$0xf]
  %v7701 = vld [vmem:[%s3 + $0xd8] sm:$0xf]
  %v7702 = vld [vmem:[%s3 + $0xdc] sm:$0xf]
  %v7703 = vld [vmem:[%s3 + $0xe0] sm:$0xf]
  %v7704 = vld [vmem:[%s3 + $0xe4] sm:$0xf]
  %v7705 = vld [vmem:[%s3 + $0xe8] sm:$0xf]
  %v7706 = vld [vmem:[%s3 + $0xec] sm:$0xf]
  %v7707 = vld [vmem:[%s3 + $0xf0] sm:$0xf]
  %v7708 = vld [vmem:[%s3 + $0xf4] sm:$0xf]
  %v7709 = vld [vmem:[%s3 + $0xf8] sm:$0xf]
  %v7710 = vld [vmem:[%s3 + $0xfc] sm:$0xf]
  %v7711 = vld [vmem:[%s4] sm:$0x1]
  %v7713 = vlaneseq
  %v7714 = vshrl.u32 %v7713, 7
  %v7715 = vsub.s32 0, %v7714
  %v7716 = vrot.slane %v7711, %v7715
  %v7782 = vunpack.c.l.b16 %v7647
  %v7783 = vunpack.c.l.b16 %v7648
  %v7784 = vunpack.c.l.b16 %v7649
  %v7785 = vunpack.c.l.b16 %v7650
  %v7786 = vunpack.c.l.b16 %v7651
  %v7787 = vunpack.c.l.b16 %v7652
  %v7788 = vunpack.c.l.b16 %v7653
  %v7789 = vunpack.c.l.b16 %v7654
  %v7790 = vunpack.c.l.b16 %v7655
  %v7791 = vunpack.c.l.b16 %v7656
  %v7792 = vunpack.c.l.b16 %v7657
  %v7793 = vunpack.c.l.b16 %v7658
  %v7794 = vunpack.c.l.b16 %v7659
  %v7795 = vunpack.c.l.b16 %v7660
  %v7796 = vunpack.c.l.b16 %v7661
  %v7797 = vunpack.c.l.b16 %v7662
  %v7798 = vunpack.c.l.b16 %v7663
  %v7799 = vunpack.c.l.b16 %v7664
  %v7800 = vunpack.c.l.b16 %v7665
  %v7801 = vunpack.c.l.b16 %v7666
  %v7802 = vunpack.c.l.b16 %v7667
  %v7803 = vunpack.c.l.b16 %v7668
  %v7804 = vunpack.c.l.b16 %v7669
  %v7805 = vunpack.c.l.b16 %v7670
  %v7806 = vunpack.c.l.b16 %v7671
  %v7807 = vunpack.c.l.b16 %v7672
  %v7808 = vunpack.c.l.b16 %v7673
  %v7809 = vunpack.c.l.b16 %v7674
  %v7810 = vunpack.c.l.b16 %v7675
  %v7811 = vunpack.c.l.b16 %v7676
  %v7812 = vunpack.c.l.b16 %v7677
  %v7813 = vunpack.c.l.b16 %v7678
  %v7814 = vunpack.c.l.b16 %v7679
  %v7815 = vunpack.c.l.b16 %v7680
  %v7816 = vunpack.c.l.b16 %v7681
  %v7817 = vunpack.c.l.b16 %v7682
  %v7818 = vunpack.c.l.b16 %v7683
  %v7819 = vunpack.c.l.b16 %v7684
  %v7820 = vunpack.c.l.b16 %v7685
  %v7821 = vunpack.c.l.b16 %v7686
  %v7822 = vunpack.c.l.b16 %v7687
  %v7823 = vunpack.c.l.b16 %v7688
  %v7824 = vunpack.c.l.b16 %v7689
  %v7825 = vunpack.c.l.b16 %v7690
  %v7826 = vunpack.c.l.b16 %v7691
  %v7827 = vunpack.c.l.b16 %v7692
  %v7828 = vunpack.c.l.b16 %v7693
  %v7829 = vunpack.c.l.b16 %v7694
  %v7830 = vunpack.c.l.b16 %v7695
  %v7831 = vunpack.c.l.b16 %v7696
  %v7832 = vunpack.c.l.b16 %v7697
  %v7833 = vunpack.c.l.b16 %v7698
  %v7834 = vunpack.c.l.b16 %v7699
  %v7835 = vunpack.c.l.b16 %v7700
  %v7836 = vunpack.c.l.b16 %v7701
  %v7837 = vunpack.c.l.b16 %v7702
  %v7838 = vunpack.c.l.b16 %v7703
  %v7839 = vunpack.c.l.b16 %v7704
  %v7840 = vunpack.c.l.b16 %v7705
  %v7841 = vunpack.c.l.b16 %v7706
  %v7842 = vunpack.c.l.b16 %v7707
  %v7843 = vunpack.c.l.b16 %v7708
  %v7844 = vunpack.c.l.b16 %v7709
  %v7845 = vunpack.c.l.b16 %v7710
  %v7846 = vpack.c.b16 %v7783, %v7782
  %v7847 = vpack.c.b16 %v7785, %v7784
  %v7848 = vpack.c.b16 %v7787, %v7786
  %v7849 = vpack.c.b16 %v7789, %v7788
  %v7850 = vpack.c.b16 %v7791, %v7790
  %v7851 = vpack.c.b16 %v7793, %v7792
  %v7852 = vpack.c.b16 %v7795, %v7794
  %v7853 = vpack.c.b16 %v7797, %v7796
  %v7854 = vpack.c.b16 %v7799, %v7798
  %v7855 = vpack.c.b16 %v7801, %v7800
  %v7856 = vpack.c.b16 %v7803, %v7802
  %v7857 = vpack.c.b16 %v7805, %v7804
  %v7858 = vpack.c.b16 %v7807, %v7806
  %v7859 = vpack.c.b16 %v7809, %v7808
  %v7860 = vpack.c.b16 %v7811, %v7810
  %v7861 = vpack.c.b16 %v7813, %v7812
  %v7862 = vpack.c.b16 %v7815, %v7814
  %v7863 = vpack.c.b16 %v7817, %v7816
  %v7864 = vpack.c.b16 %v7819, %v7818
  %v7865 = vpack.c.b16 %v7821, %v7820
  %v7866 = vpack.c.b16 %v7823, %v7822
  %v7867 = vpack.c.b16 %v7825, %v7824
  %v7868 = vpack.c.b16 %v7827, %v7826
  %v7869 = vpack.c.b16 %v7829, %v7828
  %v7870 = vpack.c.b16 %v7831, %v7830
  %v7871 = vpack.c.b16 %v7833, %v7832
  %v7872 = vpack.c.b16 %v7835, %v7834
  %v7873 = vpack.c.b16 %v7837, %v7836
  %v7874 = vpack.c.b16 %v7839, %v7838
  %v7875 = vpack.c.b16 %v7841, %v7840
  %v7876 = vpack.c.b16 %v7843, %v7842
  %v7877 = vpack.c.b16 %v7845, %v7844
  %7910 = vmatprep.subr.bf16.mxu0 0
  %7911 = vmatpush1.bf16.msra.mxu0 %v7853
  %7912 = vmatprep.subr.bf16.mxu0 0
  %7913 = vmatpush1.bf16.msra.mxu0 %v7852
  %7914 = vmatprep.subr.bf16.mxu0 0
  %7915 = vmatpush1.bf16.msra.mxu0 %v7851
  %7916 = vmatprep.subr.bf16.mxu0 0
  %7917 = vmatpush1.bf16.msra.mxu0 %v7850
  %7918 = vmatprep.subr.bf16.mxu0 0
  %7919 = vmatpush1.bf16.msra.mxu0 %v7849
  %7920 = vmatprep.subr.bf16.mxu0 0
  %7921 = vmatpush1.bf16.msra.mxu0 %v7848
  %7922 = vmatprep.subr.bf16.mxu0 0
  %7923 = vmatpush1.bf16.msra.mxu0 %v7847
  %7924 = vmatprep.subr.bf16.mxu0 0
  %7925 = vmatpush1.bf16.msra.mxu0 %v7846
  %7926 = vmatprep.subr.bf16.mxu0 0
  %7927 = vmatpush2.bf16.msra.mxu0 %v7861
  %7928 = vmatprep.subr.bf16.mxu0 0
  %7929 = vmatpush2.bf16.msra.mxu0 %v7860
  %7930 = vmatprep.subr.bf16.mxu0 0
  %7931 = vmatpush2.bf16.msra.mxu0 %v7859
  %7932 = vmatprep.subr.bf16.mxu0 0
  %7933 = vmatpush2.bf16.msra.mxu0 %v7858
  %7934 = vmatprep.subr.bf16.mxu0 0
  %7935 = vmatpush2.bf16.msra.mxu0 %v7857
  %7936 = vmatprep.subr.bf16.mxu0 0
  %7937 = vmatpush2.bf16.msra.mxu0 %v7856
  %7938 = vmatprep.subr.bf16.mxu0 0
  %7939 = vmatpush2.bf16.msra.mxu0 %v7855
  %7940 = vmatprep.subr.bf16.mxu0 0
  %7941 = vmatpush2.bf16.msra.mxu0 %v7854
  %7942 = vmatprep.mubr.bf16.mxu0 %v7644
  %7943 = vmatmul.mubr.bf16.gmra.mxu0 %v7643
  %v7944 = vpop.f32.mrf.mxu0
  %v7945 = vadd.f32 %v7716, %v7944
  %v7946 = vpop.f32.mrf.mxu0
  %v7947 = vpop.f32.mrf.mxu0
  %v7948 = vpop.f32.mrf.mxu0
  %7949 = vdwg.mxu0
  %7950 = vmatprep.subr.bf16.mxu0 0
  %7951 = vmatpush1.bf16.msra.mxu0 %v7869
  %7952 = vmatprep.subr.bf16.mxu0 0
  %7953 = vmatpush1.bf16.msra.mxu0 %v7868
  %7954 = vmatprep.subr.bf16.mxu0 0
  %7955 = vmatpush1.bf16.msra.mxu0 %v7867
  %7956 = vmatprep.subr.bf16.mxu0 0
  %7957 = vmatpush1.bf16.msra.mxu0 %v7866
  %7958 = vmatprep.subr.bf16.mxu0 0
  %7959 = vmatpush1.bf16.msra.mxu0 %v7865
  %7960 = vmatprep.subr.bf16.mxu0 0
  %7961 = vmatpush1.bf16.msra.mxu0 %v7864
  %7962 = vmatprep.subr.bf16.mxu0 0
  %7963 = vmatpush1.bf16.msra.mxu0 %v7863
  %7964 = vmatprep.subr.bf16.mxu0 0
  %7965 = vmatpush1.bf16.msra.mxu0 %v7862
  %7966 = vmatprep.subr.bf16.mxu0 0
  %7967 = vmatpush2.bf16.msra.mxu0 %v7877
  %7968 = vmatprep.subr.bf16.mxu0 0
  %7969 = vmatpush2.bf16.msra.mxu0 %v7876
  %7970 = vmatprep.subr.bf16.mxu0 0
  %7971 = vmatpush2.bf16.msra.mxu0 %v7875
  %7972 = vmatprep.subr.bf16.mxu0 0
  %7973 = vmatpush2.bf16.msra.mxu0 %v7874
  %7974 = vmatprep.subr.bf16.mxu0 0
  %7975 = vmatpush2.bf16.msra.mxu0 %v7873
  %7976 = vmatprep.subr.bf16.mxu0 0
  %7977 = vmatpush2.bf16.msra.mxu0 %v7872
  %7978 = vmatprep.subr.bf16.mxu0 0
  %7979 = vmatpush2.bf16.msra.mxu0 %v7871
  %7980 = vmatprep.subr.bf16.mxu0 0
  %7981 = vmatpush2.bf16.msra.mxu0 %v7870
  %7982 = vmatprep.mubr.bf16.mxu0 %v7646
  %7983 = vmatmul.mubr.bf16.gmra.mxu0 %v7645
  %v7984 = vpop.f32.mrf.mxu0
  %v7985 = vadd.f32 %v7945, %v7984
  %v7986 = vpop.f32.mrf.mxu0
  %v7987 = vpop.f32.mrf.mxu0
  %v7988 = vpop.f32.mrf.mxu0
  %7989 = vdwg.mxu0
  %v7990 = vtanh.pop %v7985
  %v7991 = vpack.c.bf16 %v7990, %v7990
  %v7992 = vld [vmem:[%s5] sm:$0xf]
  %v7993 = vld [vmem:[%s5 + $0x4] sm:$0xf]
  %v7994 = vld [vmem:[%s5 + $0x8] sm:$0xf]
  %v7995 = vld [vmem:[%s5 + $0xc] sm:$0xf]
  %v7996 = vld [vmem:[%s5 + $0x10] sm:$0xf]
  %v7997 = vld [vmem:[%s5 + $0x14] sm:$0xf]
  %v7998 = vld [vmem:[%s5 + $0x18] sm:$0xf]
  %v7999 = vld [vmem:[%s5 + $0x1c] sm:$0xf]
  %v8000 = vld [vmem:[%s5 + $0x20] sm:$0xf]
  %v8001 = vld [vmem:[%s5 + $0x24] sm:$0xf]
  %v8002 = vld [vmem:[%s5 + $0x28] sm:$0xf]
  %v8003 = vld [vmem:[%s5 + $0x2c] sm:$0xf]
  %v8004 = vld [vmem:[%s5 + $0x30] sm:$0xf]
  %v8005 = vld [vmem:[%s5 + $0x34] sm:$0xf]
  %v8006 = vld [vmem:[%s5 + $0x38] sm:$0xf]
  %v8007 = vld [vmem:[%s5 + $0x3c] sm:$0xf]
  %v8008 = vld [vmem:[%s6] sm:$0x1]
  %v8010 = vlaneseq
  %v8011 = vshrl.u32 %v8010, 7
  %v8012 = vsub.s32 0, %v8011
  %v8013 = vrot.slane %v8008, %v8012
  %v8031 = vunpack.c.l.b16 %v7992
  %v8032 = vunpack.c.l.b16 %v7993
  %v8033 = vunpack.c.l.b16 %v7994
  %v8034 = vunpack.c.l.b16 %v7995
  %v8035 = vunpack.c.l.b16 %v7996
  %v8036 = vunpack.c.l.b16 %v7997
  %v8037 = vunpack.c.l.b16 %v7998
  %v8038 = vunpack.c.l.b16 %v7999
  %v8039 = vunpack.c.l.b16 %v8000
  %v8040 = vunpack.c.l.b16 %v8001
  %v8041 = vunpack.c.l.b16 %v8002
  %v8042 = vunpack.c.l.b16 %v8003
  %v8043 = vunpack.c.l.b16 %v8004
  %v8044 = vunpack.c.l.b16 %v8005
  %v8045 = vunpack.c.l.b16 %v8006
  %v8046 = vunpack.c.l.b16 %v8007
  %v8047 = vpack.c.b16 %v8032, %v8031
  %v8048 = vpack.c.b16 %v8034, %v8033
  %v8049 = vpack.c.b16 %v8036, %v8035
  %v8050 = vpack.c.b16 %v8038, %v8037
  %v8051 = vpack.c.b16 %v8040, %v8039
  %v8052 = vpack.c.b16 %v8042, %v8041
  %v8053 = vpack.c.b16 %v8044, %v8043
  %v8054 = vpack.c.b16 %v8046, %v8045
  %8063 = vmatprep.subr.bf16.mxu0 0
  %8064 = vmatpush1.bf16.msra.mxu0 %v8054
  %8065 = vmatprep.subr.bf16.mxu0 0
  %8066 = vmatpush1.bf16.msra.mxu0 %v8053
  %8067 = vmatprep.subr.bf16.mxu0 0
  %8068 = vmatpush1.bf16.msra.mxu0 %v8052
  %8069 = vmatprep.subr.bf16.mxu0 0
  %8070 = vmatpush1.bf16.msra.mxu0 %v8051
  %8071 = vmatprep.subr.bf16.mxu0 0
  %8072 = vmatpush1.bf16.msra.mxu0 %v8050
  %8073 = vmatprep.subr.bf16.mxu0 0
  %8074 = vmatpush1.bf16.msra.mxu0 %v8049
  %8075 = vmatprep.subr.bf16.mxu0 0
  %8076 = vmatpush1.bf16.msra.mxu0 %v8048
  %8077 = vmatprep.subr.bf16.mxu0 0
  %8078 = vmatpush1.bf16.msra.mxu0 %v8047
  %8079 = vmatprep.subr.bf16.mxu0 0
  %8080 = vmatpush2.bf16.msra.mxu0 0
  %8081 = vmatprep.subr.bf16.mxu0 0
  %8082 = vmatpush2.bf16.msra.mxu0 0
  %8083 = vmatprep.subr.bf16.mxu0 0
  %8084 = vmatpush2.bf16.msra.mxu0 0
  %8085 = vmatprep.subr.bf16.mxu0 0
  %8086 = vmatpush2.bf16.msra.mxu0 0
  %8087 = vmatprep.subr.bf16.mxu0 0
  %8088 = vmatpush2.bf16.msra.mxu0 0
  %8089 = vmatprep.subr.bf16.mxu0 0
  %8090 = vmatpush2.bf16.msra.mxu0 0
  %8091 = vmatprep.subr.bf16.mxu0 0
  %8092 = vmatpush2.bf16.msra.mxu0 0
  %8093 = vmatprep.subr.bf16.mxu0 0
  %8094 = vmatpush2.bf16.msra.mxu0 0
  %8095 = vmatprep.mubr.bf16.mxu0 0
  %8096 = vmatmul.mubr.bf16.gmra.mxu0 %v7991
  %v8097 = vpop.f32.mrf.mxu0
  %v8098 = vadd.f32 %v8013, %v8097
  %v8099 = vpop.f32.mrf.mxu0
  %v8100 = vpop.f32.mrf.mxu0
  %v8101 = vpop.f32.mrf.mxu0
  %8102 = vdwg.mxu0
  %v8103 = vtanh.pop %v8098
  %v8104 = vpack.c.bf16 %v8103, %v8103
  %v8105 = vld [vmem:[%s7] sm:$0xf]
  %v8106 = vld [vmem:[%s7 + $0x4] sm:$0xf]
  %v8107 = vld [vmem:[%s7 + $0x8] sm:$0xf]
  %v8108 = vld [vmem:[%s7 + $0xc] sm:$0xf]
  %v8109 = vld [vmem:[%s7 + $0x10] sm:$0xf]
  %v8110 = vld [vmem:[%s7 + $0x14] sm:$0xf]
  %v8111 = vld [vmem:[%s7 + $0x18] sm:$0xf]
  %v8112 = vld [vmem:[%s7 + $0x1c] sm:$0xf]
  %v8113 = vld [vmem:[%s7 + $0x20] sm:$0xf]
  %v8114 = vld [vmem:[%s7 + $0x24] sm:$0xf]
  %v8115 = vld [vmem:[%s7 + $0x28] sm:$0xf]
  %v8116 = vld [vmem:[%s7 + $0x2c] sm:$0xf]
  %v8117 = vld [vmem:[%s7 + $0x30] sm:$0xf]
  %v8118 = vld [vmem:[%s7 + $0x34] sm:$0xf]
  %v8119 = vld [vmem:[%s7 + $0x38] sm:$0xf]
  %v8120 = vld [vmem:[%s7 + $0x3c] sm:$0xf]
  %v8121 = vld [vmem:[%s8] sm:$0x1]
  %v8123 = vlaneseq
  %v8124 = vshrl.u32 %v8123, 7
  %v8125 = vsub.s32 0, %v8124
  %v8126 = vrot.slane %v8121, %v8125
  %v8144 = vunpack.c.l.b16 %v8105
  %v8145 = vunpack.c.l.b16 %v8106
  %v8146 = vunpack.c.l.b16 %v8107
  %v8147 = vunpack.c.l.b16 %v8108
  %v8148 = vunpack.c.l.b16 %v8109
  %v8149 = vunpack.c.l.b16 %v8110
  %v8150 = vunpack.c.l.b16 %v8111
  %v8151 = vunpack.c.l.b16 %v8112
  %v8152 = vunpack.c.l.b16 %v8113
  %v8153 = vunpack.c.l.b16 %v8114
  %v8154 = vunpack.c.l.b16 %v8115
  %v8155 = vunpack.c.l.b16 %v8116
  %v8156 = vunpack.c.l.b16 %v8117
  %v8157 = vunpack.c.l.b16 %v8118
  %v8158 = vunpack.c.l.b16 %v8119
  %v8159 = vunpack.c.l.b16 %v8120
  %v8160 = vpack.c.b16 %v8145, %v8144
  %v8161 = vpack.c.b16 %v8147, %v8146
  %v8162 = vpack.c.b16 %v8149, %v8148
  %v8163 = vpack.c.b16 %v8151, %v8150
  %v8164 = vpack.c.b16 %v8153, %v8152
  %v8165 = vpack.c.b16 %v8155, %v8154
  %v8166 = vpack.c.b16 %v8157, %v8156
  %v8167 = vpack.c.b16 %v8159, %v8158
  %8176 = vmatprep.subr.bf16.mxu0 0
  %8177 = vmatpush1.bf16.msra.mxu0 %v8167
  %8178 = vmatprep.subr.bf16.mxu0 0
  %8179 = vmatpush1.bf16.msra.mxu0 %v8166
  %8180 = vmatprep.subr.bf16.mxu0 0
  %8181 = vmatpush1.bf16.msra.mxu0 %v8165
  %8182 = vmatprep.subr.bf16.mxu0 0
  %8183 = vmatpush1.bf16.msra.mxu0 %v8164
  %8184 = vmatprep.subr.bf16.mxu0 0
  %8185 = vmatpush1.bf16.msra.mxu0 %v8163
  %8186 = vmatprep.subr.bf16.mxu0 0
  %8187 = vmatpush1.bf16.msra.mxu0 %v8162
  %8188 = vmatprep.subr.bf16.mxu0 0
  %8189 = vmatpush1.bf16.msra.mxu0 %v8161
  %8190 = vmatprep.subr.bf16.mxu0 0
  %8191 = vmatpush1.bf16.msra.mxu0 %v8160
  %8192 = vmatprep.subr.bf16.mxu0 0
  %8193 = vmatpush2.bf16.msra.mxu0 0
  %8194 = vmatprep.subr.bf16.mxu0 0
  %8195 = vmatpush2.bf16.msra.mxu0 0
  %8196 = vmatprep.subr.bf16.mxu0 0
  %8197 = vmatpush2.bf16.msra.mxu0 0
  %8198 = vmatprep.subr.bf16.mxu0 0
  %8199 = vmatpush2.bf16.msra.mxu0 0
  %8200 = vmatprep.subr.bf16.mxu0 0
  %8201 = vmatpush2.bf16.msra.mxu0 0
  %8202 = vmatprep.subr.bf16.mxu0 0
  %8203 = vmatpush2.bf16.msra.mxu0 0
  %8204 = vmatprep.subr.bf16.mxu0 0
  %8205 = vmatpush2.bf16.msra.mxu0 0
  %8206 = vmatprep.subr.bf16.mxu0 0
  %8207 = vmatpush2.bf16.msra.mxu0 0
  %8208 = vmatprep.mubr.bf16.mxu0 0
  %8209 = vmatmul.mubr.bf16.gmra.mxu0 %v8104
  %v8210 = vpop.f32.mrf.mxu0
  %v8211 = vadd.f32 %v8126, %v8210
  %v8212 = vpop.f32.mrf.mxu0
  %v8213 = vpop.f32.mrf.mxu0
  %v8214 = vpop.f32.mrf.mxu0
  %8215 = vdwg.mxu0
  %v8216 = vtanh.pop %v8211
  %8217 = vst [vmem:[%s9] sm:$0xff] %v8216
  // Predicated region
  $region38: #{red_or_green_forward.7} parent=0 // pred_check
    _
  $region39: #{red_or_green_forward.7} parent=0 // pred_check_branch
    %8219 = sbr.rel (0) target = $region41
  $region40: #{red_or_green_forward.7} parent=0 // pred_region
    _
  $region41: #{red_or_green_forward.7} parent=0 // pred_fallthru
    _
  // Predicated region
  $region42: #{red_or_green_forward.7} parent=0 // pred_check
    _
  $region43: #{red_or_green_forward.7} parent=0 // pred_check_branch
    %8221 = sbr.rel (0) target = $region45
  $region44: #{red_or_green_forward.7} parent=0 // pred_region
    _
  $region45: #{red_or_green_forward.7} parent=0 // pred_fallthru
    _

</llo_original>
